<compile_context>
chip_gen: v7x
topology: tpu7x:2x2x1
jax: 0.10.0
libtpu: 0.0.40
codegen_flags: <defaults>
</compile_context>

<pallas_src>
import functools
import math

import jax
import jax.numpy as jnp
from jax.experimental import pallas as pl
from jax.experimental.pallas import tpu as pltpu


# ---------------------------------------------------------------------------
# small helpers shared by kernels
# ---------------------------------------------------------------------------

def _mm(a, b):
    return jnp.dot(a, b, preferred_element_type=jnp.float32)


def _ln(v, g, b, eps=1e-5):
    """LayerNorm over the last dim (biased variance, like torch.nn.LayerNorm)."""
    mu = jnp.mean(v, axis=-1, keepdims=True)
    d = v - mu
    var = jnp.mean(d * d, axis=-1, keepdims=True)
    return d * jax.lax.rsqrt(var + eps) * g + b


def _bias_layout(dx, de, dy, H, ffX, ffE, ffy):
    """Static layout of the packed per-layer bias / LayerNorm vector."""
    sizes = [
        ('bqkv', 3 * dx), ('b_e', 2 * H), ('bye', 2 * H), ('byx', 2 * dx),
        ('bny', dy), ('bxo', dx), ('beo', de), ('byo0', dy), ('byo1', dy),
        ('gX1', dx), ('bX1', dx), ('gE1', de), ('bE1', de),
        ('gy1', dy), ('by1', dy),
        ('bfx1', ffX), ('bfx2', dx), ('bfe1', ffE), ('bfe2', de),
        ('bfy1', ffy), ('bfy2', dy),
        ('gX2', dx), ('bX2', dx), ('gE2', de), ('bE2', de),
        ('gy2', dy), ('by2', dy),
    ]
    off, o = {}, 0
    for name, s in sizes:
        off[name] = (o, s)
        o += s
    return off, o


# ---------------------------------------------------------------------------
# fused per-layer kernel: attention + edge update + y update + all FFNs/norms
# (grid over batch, one sample per step)
# ---------------------------------------------------------------------------

def _layer_kernel(mcol_ref, mrow_ref, x_ref, e_ref, y_ref,
                  wdx_ref, wde_ref, wdy_ref, wst_ref, weo_ref,
                  wfx2_ref, wfe2_ref, wfy2_ref, bias_ref,
                  xo_ref, eo_ref, yo_ref, *,
                  n, dx, de, dy, H, ffX, ffE, ffy, boff):
    df = dx // H
    n2 = n * n
    inv_sqrt_df = 1.0 / math.sqrt(df)
    f32 = jnp.float32

    def bvec(name):                      # packed bias slice, shape (1, size)
        off, sz = boff[name]
        return bias_ref[:, off:off + sz]

    mcol = mcol_ref[0]                   # (n, 1)  node mask column
    mrow = mrow_ref[0]                   # (1, n)  node mask row
    X = x_ref[0]                         # (n, dx)
    E = e_ref[0]                         # (n2, de) flat edges (row = i*n + j)
    yv = y_ref[0]                        # (1, dy)

    # ---- iota-built selector matrices (no HBM traffic, no reshapes) ----
    r2 = jax.lax.broadcasted_iota(jnp.int32, (n2, n), 0)
    c2 = jax.lax.broadcasted_iota(jnp.int32, (n2, n), 1)
    # Rsel[k, i] = 1 iff flat row k belongs to query i (k // n == i)
    Rsel = ((r2 >= c2 * n) & (r2 < (c2 + 1) * n)).astype(f32)      # (n2, n)
    rT = jax.lax.broadcasted_iota(jnp.int32, (n, n2), 0)
    cT = jax.lax.broadcasted_iota(jnp.int32, (n, n2), 1)
    RT = ((cT >= rT * n) & (cT < (rT + 1) * n)).astype(f32)        # (n, n2)
    rh = jax.lax.broadcasted_iota(jnp.int32, (dx, H), 0)
    ch = jax.lax.broadcasted_iota(jnp.int32, (dx, H), 1)
    Hsel = ((rh >= ch * df) & (rh < (ch + 1) * df)).astype(f32)    # (dx, H)
    rh2 = jax.lax.broadcasted_iota(jnp.int32, (H, dx), 0)
    ch2 = jax.lax.broadcasted_iota(jnp.int32, (H, dx), 1)
    HT = ((ch2 >= rh2 * df) & (ch2 < (rh2 + 1) * df)).astype(f32)  # (H, dx)

    # flat-layout masks (derived in-kernel, no extra DMAs)
    mcol_f = jnp.sum(Rsel * mrow, axis=1, keepdims=True)           # mask[i(k)]
    mrow_f = jnp.concatenate([mcol] * n, axis=0)                   # mask[j(k)]
    emask = mcol_f * mrow_f                                         # (n2, 1)

    # ---- fused Q/K/V projection (single matmul, 3*dx lanes) ----
    qkv = _mm(X, wdx_ref[:, 0:3 * dx]) + bvec('bqkv')
    Q = qkv[:, 0:dx] * mcol
    K = qkv[:, dx:2 * dx] * mcol
    V = qkv[:, 2 * dx:3 * dx] * mcol

    # broadcast node features to edge rows (head-last flat layout)
    Qe = _mm(Rsel, Q)                                              # Q[i(k), :]
    Ke = jnp.concatenate([K] * n, axis=0)                          # K[j(k), :]
    Ve = jnp.concatenate([V] * n, axis=0)                          # V[j(k), :]

    # scores S[i*n+j, h] = <Q_i, K_j>_head h / sqrt(df)
    S = _mm(Qe * Ke, Hsel) * inv_sqrt_df                           # (n2, H)

    # ---- edge FiLM terms (flat, no blockified weights) ----
    ee = _mm(E, wde_ref[:, 0:2 * H]) + bvec('b_e')                 # (n2, 2H)
    E1 = ee[:, 0:H] * emask
    E2 = ee[:, H:2 * H] * emask
    Yf = S * (E1 + 1.0) + E2                                       # (n2, H)

    # ---- global-feature FiLM scalars ----
    o_yx = 2 * H
    o_yy = o_yx + 2 * dx
    o_yo0 = o_yy + dy
    o_yo1 = o_yo0 + dy
    o_fy1 = o_yo1 + dy
    ye = _mm(yv, wdy_ref[:, 0:2 * H]) + bvec('bye')                # (1, 2H)
    yx = _mm(yv, wdy_ref[:, o_yx:o_yx + 2 * dx]) + bvec('byx')     # (1, 2dx)

    # ---- edge update (e_out + mask + normE1 + edge FFN + normE2, fused) ----
    newE = ye[:, 0:H] + (ye[:, H:2 * H] + 1.0) * Yf                # (n2, H)
    newE = (_mm(newE, weo_ref[...]) + bvec('beo')) * emask         # (n2, de)
    E1n = _ln(E + newE, bvec('gE1'), bvec('bE1'))
    he = jnp.maximum(_mm(E1n, wde_ref[:, 2 * H:2 * H + ffE]) + bvec('bfe1'),
                     0.0)
    Eout = _ln(E1n + _mm(he, wfe2_ref[...]) + bvec('bfe2'),
               bvec('gE2'), bvec('bE2'))

    # ---- attention (masked softmax over keys, head-last layout) ----
    logits = jnp.where(mrow_f > 0.0, Yf, -1e30)
    gmax = jnp.max(logits, axis=0, keepdims=True)       # per-head max (exact softmax)
    p = jnp.exp(logits - gmax)                          # (n2, H)
    denom = _mm(RT, p)                                  # (n, H) per-(query, head) sum
    inv = jnp.where(denom > 0.0, 1.0 / denom, 0.0)
    attn = p * _mm(Rsel, inv)                           # (n2, H)
    # weighted V: wV[i, h*df+d] = sum_j attn[i,j,h] * V[j, h*df+d]
    wV = _mm(RT, _mm(attn, HT) * Ve)                    # (n, dx)

    newX = yx[:, 0:dx] + (yx[:, dx:2 * dx] + 1.0) * wV
    newX = (_mm(newX, wdx_ref[:, 3 * dx:4 * dx]) + bvec('bxo')) * mcol

    # ---- global y update: y_y(y) + Xtoy(X) + Etoy(E), unmasked pooling ----
    xm = jnp.mean(X, axis=0, keepdims=True)
    xmi = jnp.min(X, axis=0, keepdims=True)
    xma = jnp.max(X, axis=0, keepdims=True)
    xs = jnp.sqrt(jnp.sum((X - xm) ** 2, axis=0, keepdims=True) / (n - 1.0))
    em = jnp.mean(E, axis=0, keepdims=True)
    emi = jnp.min(E, axis=0, keepdims=True)
    ema = jnp.max(E, axis=0, keepdims=True)
    es = jnp.sqrt(jnp.sum((E - em) ** 2, axis=0, keepdims=True) / (n2 - 1.0))
    stats = jnp.concatenate([xm, xmi, xma, xs, em, emi, ema, es], axis=1)
    new_y = (_mm(yv, wdy_ref[:, o_yy:o_yy + dy]) + _mm(stats, wst_ref[...])
             + bvec('bny'))
    hy = jnp.maximum(_mm(new_y, wdy_ref[:, o_yo0:o_yo0 + dy]) + bvec('byo0'),
                     0.0)
    new_y = _mm(hy, wdy_ref[:, o_yo1:o_yo1 + dy]) + bvec('byo1')

    # ---- residual + norm1 + FFN + residual + norm2 for X and y ----
    X1 = _ln(X + newX, bvec('gX1'), bvec('bX1'))
    y1 = _ln(yv + new_y, bvec('gy1'), bvec('by1'))
    hx = jnp.maximum(_mm(X1, wdx_ref[:, 4 * dx:4 * dx + ffX]) + bvec('bfx1'),
                     0.0)
    Xout = _ln(X1 + _mm(hx, wfx2_ref[...]) + bvec('bfx2'),
               bvec('gX2'), bvec('bX2'))
    hyf = jnp.maximum(_mm(y1, wdy_ref[:, o_fy1:o_fy1 + ffy]) + bvec('bfy1'),
                      0.0)
    yout = _ln(y1 + _mm(hyf, wfy2_ref[...]) + bvec('bfy2'),
               bvec('gy2'), bvec('by2'))

    xo_ref[0] = Xout
    eo_ref[0] = Eout
    yo_ref[0] = yout


# ---------------------------------------------------------------------------
# fused input MLPs (X / E / y) + post-MLP masking, one pallas_call
# ---------------------------------------------------------------------------

def _in_mlp_kernel(x_ref, e_ref, y_ref, mn_ref, me_ref,
                   wx1_ref, bx1_ref, wx2_ref, bx2_ref,
                   we1_ref, be1_ref, we2_ref, be2_ref,
                   wy1_ref, by1_ref, wy2_ref, by2_ref,
                   xo_ref, eo_ref, yo_ref, *, e_in_is_one):
    hx = jnp.maximum(_mm(x_ref[...], wx1_ref[...]) + bx1_ref[...], 0.0)
    X = jnp.maximum(_mm(hx, wx2_ref[...]) + bx2_ref[...], 0.0)
    xo_ref[...] = X * mn_ref[...]

    if e_in_is_one:                     # degenerate K == 1 contraction
        he = jnp.maximum(e_ref[...] * we1_ref[...] + be1_ref[...], 0.0)
    else:
        he = jnp.maximum(_mm(e_ref[...], we1_ref[...]) + be1_ref[...], 0.0)
    E = jnp.maximum(_mm(he, we2_ref[...]) + be2_ref[...], 0.0)
    eo_ref[...] = E * me_ref[...]

    hy = jnp.maximum(_mm(y_ref[...], wy1_ref[...]) + by1_ref[...], 0.0)
    yo_ref[...] = jnp.maximum(_mm(hy, wy2_ref[...]) + by2_ref[...], 0.0)


# ---------------------------------------------------------------------------
# fused output MLPs + diag zeroing + edge softmax + final masking
# ---------------------------------------------------------------------------

def _out_mlp_kernel(x_ref, e_ref, y_ref, mn_ref, me_ref, dg_ref,
                    wx1_ref, bx1_ref, wx2_ref, bx2_ref,
                    we1_ref, be1_ref, we2_ref, be2_ref,
                    wy1_ref, by1_ref, wy2_ref, by2_ref,
                    xo_ref, eo_ref, yo_ref):
    hx = jnp.maximum(_mm(x_ref[...], wx1_ref[...]) + bx1_ref[...], 0.0)
    Xo = _mm(hx, wx2_ref[...]) + bx2_ref[...]
    xo_ref[...] = Xo * mn_ref[...]

    he = jnp.maximum(_mm(e_ref[...], we1_ref[...]) + be1_ref[...], 0.0)
    Eo = _mm(he, we2_ref[...]) + be2_ref[...]
    Eo = Eo * (1.0 - dg_ref[...])                  # zero diagonal before softmax
    mx = jnp.max(Eo, axis=-1, keepdims=True)
    pe = jnp.exp(Eo - mx)
    probs = pe / jnp.sum(pe, axis=-1, keepdims=True)
    eo_ref[...] = probs * me_ref[...]

    hy = jnp.maximum(_mm(y_ref[...], wy1_ref[...]) + by1_ref[...], 0.0)
    yo_ref[...] = _mm(hy, wy2_ref[...]) + by2_ref[...]


# ---------------------------------------------------------------------------
# per-layer weight packing (few refs, concatenated by input dimension)
# ---------------------------------------------------------------------------

def _pack_layer(lp):
    ap = lp['attn']
    wdx = jnp.concatenate([ap['q'][0], ap['k'][0], ap['v'][0],
                           ap['x_out'][0], lp['linX1'][0]], axis=1)
    wde = jnp.concatenate([ap['e_mul'][0], ap['e_add'][0], lp['linE1'][0]],
                          axis=1)
    wdy = jnp.concatenate([ap['y_e_add'][0], ap['y_e_mul'][0],
                           ap['y_x_add'][0], ap['y_x_mul'][0],
                           ap['y_y'][0], ap['y_out0'][0], ap['y_out1'][0],
                           lp['lin_y1'][0]], axis=1)
    wst = jnp.concatenate([ap['x_y'][0], ap['e_y'][0]], axis=0)
    weo = ap['e_out'][0]
    wfx2 = lp['linX2'][0]
    wfe2 = lp['linE2'][0]
    wfy2 = lp['lin_y2'][0]
    bny = ap['y_y'][1] + ap['x_y'][1] + ap['e_y'][1]   # folded y-update biases
    bias = jnp.concatenate([
        ap['q'][1], ap['k'][1], ap['v'][1],
        ap['e_mul'][1], ap['e_add'][1],
        ap['y_e_add'][1], ap['y_e_mul'][1],
        ap['y_x_add'][1], ap['y_x_mul'][1],
        bny, ap['x_out'][1], ap['e_out'][1],
        ap['y_out0'][1], ap['y_out1'][1],
        lp['normX1'][0], lp['normX1'][1],
        lp['normE1'][0], lp['normE1'][1],
        lp['norm_y1'][0], lp['norm_y1'][1],
        lp['linX1'][1], lp['linX2'][1],
        lp['linE1'][1], lp['linE2'][1],
        lp['lin_y1'][1], lp['lin_y2'][1],
        lp['normX2'][0], lp['normX2'][1],
        lp['normE2'][0], lp['normE2'][1],
        lp['norm_y2'][0], lp['norm_y2'][1],
    ]).reshape(1, -1)
    return [wdx, wde, wdy, wst, weo, wfx2, wfe2, wfy2, bias]


# ---------------------------------------------------------------------------
# one transformer layer = ONE pallas_call over grid=(batch,)
# ---------------------------------------------------------------------------

def transformer_layer(lp, X, Ef, y3, mcol, mrow, n, dims):
    bs = X.shape[0]
    dx, de, dy, H = dims['dx'], dims['de'], dims['dy'], dims['n_head']
    ffX, ffE, ffy = dims['dim_ffX'], dims['dim_ffE'], dims['dim_ffy']
    n2 = n * n
    packed = _pack_layer(lp)
    boff, _ = _bias_layout(dx, de, dy, H, ffX, ffE, ffy)

    data_specs = [
        pl.BlockSpec((1, n, 1), lambda b: (b, 0, 0)),
        pl.BlockSpec((1, 1, n), lambda b: (b, 0, 0)),
        pl.BlockSpec((1, n, dx), lambda b: (b, 0, 0)),
        pl.BlockSpec((1, n2, de), lambda b: (b, 0, 0)),
        pl.BlockSpec((1, 1, dy), lambda b: (b, 0, 0)),
    ]
    w_specs = [pl.BlockSpec(w.shape, lambda b: (0, 0)) for w in packed]
    out_specs = [
        pl.BlockSpec((1, n, dx), lambda b: (b, 0, 0)),
        pl.BlockSpec((1, n2, de), lambda b: (b, 0, 0)),
        pl.BlockSpec((1, 1, dy), lambda b: (b, 0, 0)),
    ]
    out_shape = [
        jax.ShapeDtypeStruct((bs, n, dx), jnp.float32),
        jax.ShapeDtypeStruct((bs, n2, de), jnp.float32),
        jax.ShapeDtypeStruct((bs, 1, dy), jnp.float32),
    ]
    return pl.pallas_call(
        functools.partial(_layer_kernel, n=n, dx=dx, de=de, dy=dy, H=H,
                          ffX=ffX, ffE=ffE, ffy=ffy, boff=boff),
        grid=(bs,),
        in_specs=data_specs + w_specs,
        out_specs=out_specs,
        out_shape=out_shape,
        compiler_params=pltpu.CompilerParams(
            dimension_semantics=("parallel",)),
    )(mcol, mrow, X, Ef, y3, *packed)


# ---------------------------------------------------------------------------
# fused input / output MLP calls
# ---------------------------------------------------------------------------

def _input_mlps(params, Xf, E0f, y_t, mnode, emask):
    wx1, bx1 = params['mlp_in_X0']
    wx2, bx2 = params['mlp_in_X1']
    we1, be1 = params['mlp_in_E0']
    we2, be2 = params['mlp_in_E1']
    wy1, by1 = params['mlp_in_y0']
    wy2, by2 = params['mlp_in_y1']
    out_shape = (
        jax.ShapeDtypeStruct((Xf.shape[0], wx2.shape[1]), jnp.float32),
        jax.ShapeDtypeStruct((E0f.shape[0], we2.shape[1]), jnp.float32),
        jax.ShapeDtypeStruct((y_t.shape[0], wy2.shape[1]), jnp.float32),
    )
    return pl.pallas_call(
        functools.partial(_in_mlp_kernel, e_in_is_one=(we1.shape[0] == 1)),
        out_shape=out_shape,
    )(Xf, E0f, y_t, mnode, emask,
      wx1, bx1.reshape(1, -1), wx2, bx2.reshape(1, -1),
      we1, be1.reshape(1, -1), we2, be2.reshape(1, -1),
      wy1, by1.reshape(1, -1), wy2, by2.reshape(1, -1))


def _output_mlps(params, Xf, Ef, yv, mnode, emask, diag_col):
    wx1, bx1 = params['mlp_out_X0']
    wx2, bx2 = params['mlp_out_X1']
    we1, be1 = params['mlp_out_E0']
    we2, be2 = params['mlp_out_E1']
    wy1, by1 = params['mlp_out_y0']
    wy2, by2 = params['mlp_out_y1']
    out_shape = (
        jax.ShapeDtypeStruct((Xf.shape[0], wx2.shape[1]), jnp.float32),
        jax.ShapeDtypeStruct((Ef.shape[0], we2.shape[1]), jnp.float32),
        jax.ShapeDtypeStruct((yv.shape[0], wy2.shape[1]), jnp.float32),
    )
    return pl.pallas_call(
        _out_mlp_kernel,
        out_shape=out_shape,
    )(Xf, Ef, yv, mnode, emask, diag_col,
      wx1, bx1.reshape(1, -1), wx2, bx2.reshape(1, -1),
      we1, be1.reshape(1, -1), we2, be2.reshape(1, -1),
      wy1, by1.reshape(1, -1), wy2, by2.reshape(1, -1))


# ---------------------------------------------------------------------------
# full forward
# ---------------------------------------------------------------------------

@jax.jit
def _forward(params, X_t, E_t, y_t, node_mask):
    bs, n, _ = X_t.shape
    n2 = n * n
    l0 = params['layers'][0]
    dims = dict(dx=l0['attn']['q'][0].shape[0],
                de=l0['attn']['e_mul'][0].shape[0],
                dy=l0['attn']['y_y'][0].shape[0],
                n_head=l0['attn']['e_mul'][0].shape[1],
                dim_ffX=l0['linX1'][0].shape[1],
                dim_ffE=l0['linE1'][0].shape[1],
                dim_ffy=l0['lin_y1'][0].shape[1])

    nm = node_mask
    mcol = nm[:, :, None]                                    # (bs, n, 1)
    mrow = nm[:, None, :]                                    # (bs, 1, n)
    mnode_col = nm.reshape(bs * n, 1)
    emask_col = (nm[:, :, None] * nm[:, None, :]).reshape(bs * n2, 1)
    eye = jnp.eye(n, dtype=jnp.float32)
    diag_col = jnp.tile(eye.reshape(n2, 1), (bs, 1))         # (bs*n2, 1)

    # TODO(synk): GraphAttention_Encode (self.GAT) is not defined in the
    # reference source; node features pass through to mlp_in_X unchanged here.

    E0 = E_t[:, :, :, 1] * (1.0 - eye)[None, :, :]           # zero diagonal
    E0f = E0.reshape(bs * n2, 1)

    # input MLPs + PlaceHolder.mask (one fused kernel)
    X, Ef, yh = _input_mlps(params, X_t.reshape(bs * n, -1), E0f, y_t,
                            mnode_col, emask_col)
    X = X.reshape(bs, n, -1)
    Ef = Ef.reshape(bs, n2, -1)
    y3 = yh[:, None, :]                                      # (bs, 1, dy)

    for lp in params['layers']:
        X, Ef, y3 = transformer_layer(lp, X, Ef, y3, mcol, mrow, n, dims)

    # output MLPs + diag zeroing + edge softmax + final masking (one kernel)
    Xo, probs_E, yo = _output_mlps(params, X.reshape(bs * n, -1),
                                   Ef.reshape(bs * n2, -1), y3[:, 0, :],
                                   mnode_col, emask_col, diag_col)
    return (Xo.reshape(bs, n, -1),
            probs_E.reshape(bs, n, n, -1),
            yo)


def dignet_forward(params, noisy_data, key_par):
    assert not key_par['Flag_reg'] and not key_par['Flag_llm']
    node_mask = noisy_data['node_mask'].astype(jnp.float32)
    return _forward(params, noisy_data['X_t'], noisy_data['E_t'],
                    noisy_data['y_t'], node_mask)


# ---------------------------------------------------------------------------
# deterministic parameter init (mirrors the PyTorch module structure)
# ---------------------------------------------------------------------------

def init_linear(key, din, dout, scale=0.1):
    kw, kb = jax.random.split(key)
    W = jax.random.normal(kw, (din, dout), jnp.float32) * scale
    b = jax.random.normal(kb, (dout,), jnp.float32) * scale
    return (W, b)


def init_params(key, idims, hmlp, hdims, odims, n_layers):
    keys = iter(jax.random.split(key, 256))
    dx, de, dy, H = hdims['dx'], hdims['de'], hdims['dy'], hdims['n_head']
    P = {}
    P['mlp_in_X0'] = init_linear(next(keys), idims['X'], hmlp['X'])
    P['mlp_in_X1'] = init_linear(next(keys), hmlp['X'], dx)
    P['mlp_in_E0'] = init_linear(next(keys), idims['E'], hmlp['E'])
    P['mlp_in_E1'] = init_linear(next(keys), hmlp['E'], de)
    P['mlp_in_y0'] = init_linear(next(keys), idims['y'], hmlp['y'])
    P['mlp_in_y1'] = init_linear(next(keys), hmlp['y'], dy)
    P['layers'] = []
    attn_dims = dict(q=(dx, dx), k=(dx, dx), v=(dx, dx),
                     e_add=(de, H), e_mul=(de, H),
                     y_e_add=(dy, H), y_e_mul=(dy, H),
                     y_x_add=(dy, dx), y_x_mul=(dy, dx),
                     y_y=(dy, dy), x_y=(4 * dx, dy), e_y=(4 * de, dy),
                     x_out=(dx, dx), e_out=(H, de),
                     y_out0=(dy, dy), y_out1=(dy, dy))
    for _ in range(n_layers):
        ap = {}
        for name, (di, do) in attn_dims.items():
            ap[name] = init_linear(next(keys), di, do)
        lp = {'attn': ap}
        lp['linX1'] = init_linear(next(keys), dx, hdims['dim_ffX'])
        lp['linX2'] = init_linear(next(keys), hdims['dim_ffX'], dx)
        lp['linE1'] = init_linear(next(keys), de, hdims['dim_ffE'])
        lp['linE2'] = init_linear(next(keys), hdims['dim_ffE'], de)
        lp['lin_y1'] = init_linear(next(keys), dy, hdims['dim_ffy'])
        lp['lin_y2'] = init_linear(next(keys), hdims['dim_ffy'], dy)
        for nm, d in [('normX1', dx), ('normX2', dx), ('normE1', de),
                      ('normE2', de), ('norm_y1', dy), ('norm_y2', dy)]:
            lp[nm] = (jnp.ones((d,), jnp.float32), jnp.zeros((d,), jnp.float32))
        P['layers'].append(lp)
    P['mlp_out_X0'] = init_linear(next(keys), dx, hmlp['X'])
    P['mlp_out_X1'] = init_linear(next(keys), hmlp['X'], odims['X'])
    P['mlp_out_E0'] = init_linear(next(keys), de, hmlp['E'])
    P['mlp_out_E1'] = init_linear(next(keys), hmlp['E'], odims['E'])
    P['mlp_out_y0'] = init_linear(next(keys), dy, hmlp['y'])
    P['mlp_out_y1'] = init_linear(next(keys), hmlp['y'], odims['y'])
    return P


# ---------------------------------------------------------------------------
# main
# ---------------------------------------------------------------------------

if __name__ == "__main__":
    bs, n = 2, 8
    input_dims = {'X': 4, 'E': 1, 'y': 5, 'LLM': 1}
    hidden_mlp_dims = {'X': 16, 'E': 8, 'y': 16}
    hidden_dims = {'dx': 32, 'de': 16, 'dy': 16, 'n_head': 4,
                   'dim_ffX': 64, 'dim_ffE': 32, 'dim_ffy': 2048}
    output_dims = {'X': 4, 'E': 2, 'y': 5}
    n_layers = 2

    root = jax.random.PRNGKey(0)
    kp, kx, ke, ky = jax.random.split(root, 4)
    params = init_params(kp, input_dims, hidden_mlp_dims, hidden_dims,
                         output_dims, n_layers)

    X_t = jax.random.normal(kx, (bs, n, input_dims['X']), jnp.float32)
    E_t = jax.random.normal(ke, (bs, n, n, 2), jnp.float32)
    E_t = 0.5 * (E_t + jnp.swapaxes(E_t, 1, 2))              # symmetric edges
    y_t = jax.random.uniform(ky, (bs, input_dims['y']), jnp.float32)
    node_mask = jnp.array([[1, 1, 1, 1, 1, 1, 0, 0],
                           [1, 1, 1, 1, 1, 1, 1, 1]], jnp.float32)

    noisy_data = {'X_t': X_t, 'E_t': E_t, 'y_t': y_t, 'node_mask': node_mask,
                  'E_reg': None, 'gene_LLM_embedding': None}
    key_par = {'Flag_reg': False, 'Flag_llm': False}

    Xo, Eo, yo = dignet_forward(params, noisy_data, key_par)
    jax.block_until_ready((Xo, Eo, yo))
    assert Xo.shape == (bs, n, output_dims['X'])
    assert Eo.shape == (bs, n, n, output_dims['E'])
    assert yo.shape == (bs, output_dims['y'])
    assert bool(jnp.all(jnp.isfinite(Xo)) & jnp.all(jnp.isfinite(Eo)) &
                jnp.all(jnp.isfinite(yo)))
    print("KERNEL_OK")
</pallas_src>

<mosaic_0001>
module attributes {stable_mosaic.version = 11 : i64} {
  func.func @_in_mlp_kernel(%arg0: memref<16x4xf32, #tpu.memory_space<vmem>>, %arg1: memref<128x1xf32, #tpu.memory_space<vmem>>, %arg2: memref<2x5xf32, #tpu.memory_space<vmem>>, %arg3: memref<16x1xf32, #tpu.memory_space<vmem>>, %arg4: memref<128x1xf32, #tpu.memory_space<vmem>>, %arg5: memref<4x16xf32, #tpu.memory_space<vmem>>, %arg6: memref<1x16xf32, #tpu.memory_space<vmem>>, %arg7: memref<16x32xf32, #tpu.memory_space<vmem>>, %arg8: memref<1x32xf32, #tpu.memory_space<vmem>>, %arg9: memref<1x8xf32, #tpu.memory_space<vmem>>, %arg10: memref<1x8xf32, #tpu.memory_space<vmem>>, %arg11: memref<8x16xf32, #tpu.memory_space<vmem>>, %arg12: memref<1x16xf32, #tpu.memory_space<vmem>>, %arg13: memref<5x16xf32, #tpu.memory_space<vmem>>, %arg14: memref<1x16xf32, #tpu.memory_space<vmem>>, %arg15: memref<16x16xf32, #tpu.memory_space<vmem>>, %arg16: memref<1x16xf32, #tpu.memory_space<vmem>>, %arg17: memref<16x32xf32, #tpu.memory_space<vmem>>, %arg18: memref<128x16xf32, #tpu.memory_space<vmem>>, %arg19: memref<2x16xf32, #tpu.memory_space<vmem>>) attributes {dimension_semantics = [], scalar_prefetch = 0 : i64, scratch_operands = 0 : i64, tpu.core_type = #tpu.core_type<tc>} {
    %c0 = arith.constant 0 : index
    %c0_0 = arith.constant 0 : index
    %0 = vector.load %arg0[%c0, %c0_0] : memref<16x4xf32, #tpu.memory_space<vmem>>, vector<16x4xf32>
    %c0_1 = arith.constant 0 : index
    %c0_2 = arith.constant 0 : index
    %1 = vector.load %arg5[%c0_1, %c0_2] : memref<4x16xf32, #tpu.memory_space<vmem>>, vector<4x16xf32>
    %cst = arith.constant dense<0.000000e+00> : vector<16x16xf32>
    %2 = tpu.matmul %0, %1, %cst {dimension_numbers = #tpu.dot_dimension_numbers<[1], [0], [0], [1], [0, 0, 1, 1], [], []>} : vector<16x4xf32>, vector<4x16xf32>, vector<16x16xf32> -> vector<16x16xf32>
    %c0_3 = arith.constant 0 : index
    %c0_4 = arith.constant 0 : index
    %3 = vector.load %arg6[%c0_3, %c0_4] : memref<1x16xf32, #tpu.memory_space<vmem>>, vector<1x16xf32>
    %4 = vector.broadcast %3 : vector<1x16xf32> to vector<16x16xf32>
    %5 = arith.addf %2, %4 : vector<16x16xf32>
    %cst_5 = arith.constant 0.000000e+00 : f32
    %6 = vector.broadcast %cst_5 : f32 to vector<16x16xf32>
    %7 = arith.maximumf %5, %6 : vector<16x16xf32>
    %c0_6 = arith.constant 0 : index
    %c0_7 = arith.constant 0 : index
    %8 = vector.load %arg7[%c0_6, %c0_7] : memref<16x32xf32, #tpu.memory_space<vmem>>, vector<16x32xf32>
    %cst_8 = arith.constant dense<0.000000e+00> : vector<16x32xf32>
    %9 = tpu.matmul %7, %8, %cst_8 {dimension_numbers = #tpu.dot_dimension_numbers<[1], [0], [0], [1], [0, 0, 1, 1], [], []>} : vector<16x16xf32>, vector<16x32xf32>, vector<16x32xf32> -> vector<16x32xf32>
    %c0_9 = arith.constant 0 : index
    %c0_10 = arith.constant 0 : index
    %10 = vector.load %arg8[%c0_9, %c0_10] : memref<1x32xf32, #tpu.memory_space<vmem>>, vector<1x32xf32>
    %11 = vector.broadcast %10 : vector<1x32xf32> to vector<16x32xf32>
    %12 = arith.addf %9, %11 : vector<16x32xf32>
    %cst_11 = arith.constant 0.000000e+00 : f32
    %13 = vector.broadcast %cst_11 : f32 to vector<16x32xf32>
    %14 = arith.maximumf %12, %13 : vector<16x32xf32>
    %c0_12 = arith.constant 0 : index
    %c0_13 = arith.constant 0 : index
    %15 = vector.load %arg3[%c0_12, %c0_13] : memref<16x1xf32, #tpu.memory_space<vmem>>, vector<16x1xf32>
    %16 = vector.broadcast %15 : vector<16x1xf32> to vector<16x32xf32>
    %17 = arith.mulf %14, %16 : vector<16x32xf32>
    %c0_14 = arith.constant 0 : index
    %c0_15 = arith.constant 0 : index
    %18 = vector.load %arg17[%c0_14, %c0_15] : memref<16x32xf32, #tpu.memory_space<vmem>>, vector<16x32xf32>
    tpu.vector_store %arg17[%c0_14, %c0_15], %17 {strides = array<i32>} : memref<16x32xf32, #tpu.memory_space<vmem>>, vector<16x32xf32>,
    %c0_16 = arith.constant 0 : index
    %c0_17 = arith.constant 0 : index
    %19 = vector.load %arg1[%c0_16, %c0_17] : memref<128x1xf32, #tpu.memory_space<vmem>>, vector<128x1xf32>
    %c0_18 = arith.constant 0 : index
    %c0_19 = arith.constant 0 : index
    %20 = vector.load %arg9[%c0_18, %c0_19] : memref<1x8xf32, #tpu.memory_space<vmem>>, vector<1x8xf32>
    %21 = vector.broadcast %19 : vector<128x1xf32> to vector<128x8xf32>
    %22 = vector.broadcast %20 : vector<1x8xf32> to vector<128x8xf32>
    %23 = arith.mulf %21, %22 : vector<128x8xf32>
    %c0_20 = arith.constant 0 : index
    %c0_21 = arith.constant 0 : index
    %24 = vector.load %arg10[%c0_20, %c0_21] : memref<1x8xf32, #tpu.memory_space<vmem>>, vector<1x8xf32>
    %25 = vector.broadcast %24 : vector<1x8xf32> to vector<128x8xf32>
    %26 = arith.addf %23, %25 : vector<128x8xf32>
    %cst_22 = arith.constant 0.000000e+00 : f32
    %27 = vector.broadcast %cst_22 : f32 to vector<128x8xf32>
    %28 = arith.maximumf %26, %27 : vector<128x8xf32>
    %c0_23 = arith.constant 0 : index
    %c0_24 = arith.constant 0 : index
    %29 = vector.load %arg11[%c0_23, %c0_24] : memref<8x16xf32, #tpu.memory_space<vmem>>, vector<8x16xf32>
    %cst_25 = arith.constant dense<0.000000e+00> : vector<128x16xf32>
    %30 = tpu.matmul %28, %29, %cst_25 {dimension_numbers = #tpu.dot_dimension_numbers<[1], [0], [0], [1], [0, 0, 1, 1], [], []>} : vector<128x8xf32>, vector<8x16xf32>, vector<128x16xf32> -> vector<128x16xf32>
    %c0_26 = arith.constant 0 : index
    %c0_27 = arith.constant 0 : index
    %31 = vector.load %arg12[%c0_26, %c0_27] : memref<1x16xf32, #tpu.memory_space<vmem>>, vector<1x16xf32>
    %32 = vector.broadcast %31 : vector<1x16xf32> to vector<128x16xf32>
    %33 = arith.addf %30, %32 : vector<128x16xf32>
    %cst_28 = arith.constant 0.000000e+00 : f32
    %34 = vector.broadcast %cst_28 : f32 to vector<128x16xf32>
    %35 = arith.maximumf %33, %34 : vector<128x16xf32>
    %c0_29 = arith.constant 0 : index
    %c0_30 = arith.constant 0 : index
    %36 = vector.load %arg4[%c0_29, %c0_30] : memref<128x1xf32, #tpu.memory_space<vmem>>, vector<128x1xf32>
    %37 = vector.broadcast %36 : vector<128x1xf32> to vector<128x16xf32>
    %38 = arith.mulf %35, %37 : vector<128x16xf32>
    %c0_31 = arith.constant 0 : index
    %c0_32 = arith.constant 0 : index
    %39 = vector.load %arg18[%c0_31, %c0_32] : memref<128x16xf32, #tpu.memory_space<vmem>>, vector<128x16xf32>
    tpu.vector_store %arg18[%c0_31, %c0_32], %38 {strides = array<i32>} : memref<128x16xf32, #tpu.memory_space<vmem>>, vector<128x16xf32>,
    %c0_33 = arith.constant 0 : index
    %c0_34 = arith.constant 0 : index
    %40 = vector.load %arg2[%c0_33, %c0_34] : memref<2x5xf32, #tpu.memory_space<vmem>>, vector<2x5xf32>
    %c0_35 = arith.constant 0 : index
    %c0_36 = arith.constant 0 : index
    %41 = vector.load %arg13[%c0_35, %c0_36] : memref<5x16xf32, #tpu.memory_space<vmem>>, vector<5x16xf32>
    %cst_37 = arith.constant dense<0.000000e+00> : vector<2x16xf32>
    %42 = tpu.matmul %40, %41, %cst_37 {dimension_numbers = #tpu.dot_dimension_numbers<[1], [0], [0], [1], [0, 0, 1, 1], [], []>} : vector<2x5xf32>, vector<5x16xf32>, vector<2x16xf32> -> vector<2x16xf32>
    %c0_38 = arith.constant 0 : index
    %c0_39 = arith.constant 0 : index
    %43 = vector.load %arg14[%c0_38, %c0_39] : memref<1x16xf32, #tpu.memory_space<vmem>>, vector<1x16xf32>
    %44 = vector.broadcast %43 : vector<1x16xf32> to vector<2x16xf32>
    %45 = arith.addf %42, %44 : vector<2x16xf32>
    %cst_40 = arith.constant 0.000000e+00 : f32
    %46 = vector.broadcast %cst_40 : f32 to vector<2x16xf32>
    %47 = arith.maximumf %45, %46 : vector<2x16xf32>
    %c0_41 = arith.constant 0 : index
    %c0_42 = arith.constant 0 : index
    %48 = vector.load %arg15[%c0_41, %c0_42] : memref<16x16xf32, #tpu.memory_space<vmem>>, vector<16x16xf32>
    %cst_43 = arith.constant dense<0.000000e+00> : vector<2x16xf32>
    %49 = tpu.matmul %47, %48, %cst_43 {dimension_numbers = #tpu.dot_dimension_numbers<[1], [0], [0], [1], [0, 0, 1, 1], [], []>} : vector<2x16xf32>, vector<16x16xf32>, vector<2x16xf32> -> vector<2x16xf32>
    %c0_44 = arith.constant 0 : index
    %c0_45 = arith.constant 0 : index
    %50 = vector.load %arg16[%c0_44, %c0_45] : memref<1x16xf32, #tpu.memory_space<vmem>>, vector<1x16xf32>
    %51 = vector.broadcast %50 : vector<1x16xf32> to vector<2x16xf32>
    %52 = arith.addf %49, %51 : vector<2x16xf32>
    %cst_46 = arith.constant 0.000000e+00 : f32
    %53 = vector.broadcast %cst_46 : f32 to vector<2x16xf32>
    %54 = arith.maximumf %52, %53 : vector<2x16xf32>
    %c0_47 = arith.constant 0 : index
    %c0_48 = arith.constant 0 : index
    %55 = vector.load %arg19[%c0_47, %c0_48] : memref<2x16xf32, #tpu.memory_space<vmem>>, vector<2x16xf32>
    tpu.vector_store %arg19[%c0_47, %c0_48], %54 {strides = array<i32>} : memref<2x16xf32, #tpu.memory_space<vmem>>, vector<2x16xf32>,
    return
  }
}

module attributes {stable_mosaic.version = 11 : i64} {
  func.func @_layer_kernel(%arg0: i32, %arg1: memref<1x8x1xf32, #tpu.memory_space<vmem>>, %arg2: memref<1x1x8xf32, #tpu.memory_space<vmem>>, %arg3: memref<1x8x32xf32, #tpu.memory_space<vmem>>, %arg4: memref<1x64x16xf32, #tpu.memory_space<vmem>>, %arg5: memref<1x1x16xf32, #tpu.memory_space<vmem>>, %arg6: memref<32x192xf32, #tpu.memory_space<vmem>>, %arg7: memref<16x40xf32, #tpu.memory_space<vmem>>, %arg8: memref<16x2168xf32, #tpu.memory_space<vmem>>, %arg9: memref<192x16xf32, #tpu.memory_space<vmem>>, %arg10: memref<4x16xf32, #tpu.memory_space<vmem>>, %arg11: memref<64x32xf32, #tpu.memory_space<vmem>>, %arg12: memref<32x16xf32, #tpu.memory_space<vmem>>, %arg13: memref<2048x16xf32, #tpu.memory_space<vmem>>, %arg14: memref<1x2736xf32, #tpu.memory_space<vmem>>, %arg15: memref<1x8x32xf32, #tpu.memory_space<vmem>>, %arg16: memref<1x64x16xf32, #tpu.memory_space<vmem>>, %arg17: memref<1x1x16xf32, #tpu.memory_space<vmem>>) attributes {dimension_semantics = [#tpu.dimension_semantics<parallel>], iteration_bounds = array<i64: 2>, scalar_prefetch = 0 : i64, scratch_operands = 0 : i64, tpu.core_type = #tpu.core_type<tc>, window_params = [{transform_indices = @transform_0, window_bounds = array<i64: 1, 8, 1>}, {transform_indices = @transform_1, window_bounds = array<i64: 1, 1, 8>}, {transform_indices = @transform_2, window_bounds = array<i64: 1, 8, 32>}, {transform_indices = @transform_3, window_bounds = array<i64: 1, 64, 16>}, {transform_indices = @transform_4, window_bounds = array<i64: 1, 1, 16>}, {pipeline_mode = #tpu.pipeline_mode<synchronous>, transform_indices = @transform_5, window_bounds = array<i64: 32, 192>}, {pipeline_mode = #tpu.pipeline_mode<synchronous>, transform_indices = @transform_6, window_bounds = array<i64: 16, 40>}, {pipeline_mode = #tpu.pipeline_mode<synchronous>, transform_indices = @transform_7, window_bounds = array<i64: 16, 2168>}, {pipeline_mode = #tpu.pipeline_mode<synchronous>, transform_indices = @transform_8, window_bounds = array<i64: 192, 16>}, {pipeline_mode = #tpu.pipeline_mode<synchronous>, transform_indices = @transform_9, window_bounds = array<i64: 4, 16>}, {pipeline_mode = #tpu.pipeline_mode<synchronous>, transform_indices = @transform_10, window_bounds = array<i64: 64, 32>}, {pipeline_mode = #tpu.pipeline_mode<synchronous>, transform_indices = @transform_11, window_bounds = array<i64: 32, 16>}, {pipeline_mode = #tpu.pipeline_mode<synchronous>, transform_indices = @transform_12, window_bounds = array<i64: 2048, 16>}, {pipeline_mode = #tpu.pipeline_mode<synchronous>, transform_indices = @transform_13, window_bounds = array<i64: 1, 2736>}, {transform_indices = @transform_14, window_bounds = array<i64: 1, 8, 32>}, {transform_indices = @transform_15, window_bounds = array<i64: 1, 64, 16>}, {transform_indices = @transform_16, window_bounds = array<i64: 1, 1, 16>}]} {
    %c0 = arith.constant 0 : index
    %c0_0 = arith.constant 0 : index
    %c0_1 = arith.constant 0 : index
    %0 = vector.load %arg1[%c0, %c0_0, %c0_1] : memref<1x8x1xf32, #tpu.memory_space<vmem>>, vector<1x8x1xf32>
    %1 = vector.shape_cast %0 : vector<1x8x1xf32> to vector<8x1xf32>
    %c0_2 = arith.constant 0 : index
    %c0_3 = arith.constant 0 : index
    %c0_4 = arith.constant 0 : index
    %2 = vector.load %arg2[%c0_2, %c0_3, %c0_4] : memref<1x1x8xf32, #tpu.memory_space<vmem>>, vector<1x1x8xf32>
    %3 = vector.shape_cast %2 : vector<1x1x8xf32> to vector<1x8xf32>
    %c0_5 = arith.constant 0 : index
    %c0_6 = arith.constant 0 : index
    %c0_7 = arith.constant 0 : index
    %4 = vector.load %arg3[%c0_5, %c0_6, %c0_7] : memref<1x8x32xf32, #tpu.memory_space<vmem>>, vector<1x8x32xf32>
    %5 = vector.shape_cast %4 : vector<1x8x32xf32> to vector<8x32xf32>
    %c0_8 = arith.constant 0 : index
    %c0_9 = arith.constant 0 : index
    %c0_10 = arith.constant 0 : index
    %6 = vector.load %arg4[%c0_8, %c0_9, %c0_10] : memref<1x64x16xf32, #tpu.memory_space<vmem>>, vector<1x64x16xf32>
    %7 = vector.shape_cast %6 : vector<1x64x16xf32> to vector<64x16xf32>
    %c0_11 = arith.constant 0 : index
    %c0_12 = arith.constant 0 : index
    %c0_13 = arith.constant 0 : index
    %8 = vector.load %arg5[%c0_11, %c0_12, %c0_13] : memref<1x1x16xf32, #tpu.memory_space<vmem>>, vector<1x1x16xf32>
    %9 = vector.shape_cast %8 : vector<1x1x16xf32> to vector<1x16xf32>
    %10 = tpu.iota {dimensions = array<i32: 0>} : vector<64x8xi32>
    %11 = tpu.iota {dimensions = array<i32: 1>} : vector<64x8xi32>
    %c8_i32 = arith.constant 8 : i32
    %12 = vector.broadcast %c8_i32 : i32 to vector<64x8xi32>
    %13 = arith.muli %11, %12 : vector<64x8xi32>
    %14 = arith.cmpi sge, %10, %13 : vector<64x8xi32>
    %c1_i32 = arith.constant 1 : i32
    %15 = vector.broadcast %c1_i32 : i32 to vector<64x8xi32>
    %16 = arith.addi %11, %15 : vector<64x8xi32>
    %c8_i32_14 = arith.constant 8 : i32
    %17 = vector.broadcast %c8_i32_14 : i32 to vector<64x8xi32>
    %18 = arith.muli %16, %17 : vector<64x8xi32>
    %19 = arith.cmpi slt, %10, %18 : vector<64x8xi32>
    %20 = arith.andi %14, %19 : vector<64x8xi1>
    %21 = arith.extui %20 : vector<64x8xi1> to vector<64x8xi32>
    %22 = arith.sitofp %21 : vector<64x8xi32> to vector<64x8xf32>
    %23 = tpu.iota {dimensions = array<i32: 0>} : vector<8x64xi32>
    %24 = tpu.iota {dimensions = array<i32: 1>} : vector<8x64xi32>
    %c8_i32_15 = arith.constant 8 : i32
    %25 = vector.broadcast %c8_i32_15 : i32 to vector<8x64xi32>
    %26 = arith.muli %23, %25 : vector<8x64xi32>
    %27 = arith.cmpi sge, %24, %26 : vector<8x64xi32>
    %c1_i32_16 = arith.constant 1 : i32
    %28 = vector.broadcast %c1_i32_16 : i32 to vector<8x64xi32>
    %29 = arith.addi %23, %28 : vector<8x64xi32>
    %c8_i32_17 = arith.constant 8 : i32
    %30 = vector.broadcast %c8_i32_17 : i32 to vector<8x64xi32>
    %31 = arith.muli %29, %30 : vector<8x64xi32>
    %32 = arith.cmpi slt, %24, %31 : vector<8x64xi32>
    %33 = arith.andi %27, %32 : vector<8x64xi1>
    %34 = arith.extui %33 : vector<8x64xi1> to vector<8x64xi32>
    %35 = arith.sitofp %34 : vector<8x64xi32> to vector<8x64xf32>
    %36 = tpu.iota {dimensions = array<i32: 0>} : vector<32x4xi32>
    %37 = tpu.iota {dimensions = array<i32: 1>} : vector<32x4xi32>
    %c8_i32_18 = arith.constant 8 : i32
    %38 = vector.broadcast %c8_i32_18 : i32 to vector<32x4xi32>
    %39 = arith.muli %37, %38 : vector<32x4xi32>
    %40 = arith.cmpi sge, %36, %39 : vector<32x4xi32>
    %c1_i32_19 = arith.constant 1 : i32
    %41 = vector.broadcast %c1_i32_19 : i32 to vector<32x4xi32>
    %42 = arith.addi %37, %41 : vector<32x4xi32>
    %c8_i32_20 = arith.constant 8 : i32
    %43 = vector.broadcast %c8_i32_20 : i32 to vector<32x4xi32>
    %44 = arith.muli %42, %43 : vector<32x4xi32>
    %45 = arith.cmpi slt, %36, %44 : vector<32x4xi32>
    %46 = arith.andi %40, %45 : vector<32x4xi1>
    %47 = arith.extui %46 : vector<32x4xi1> to vector<32x4xi32>
    %48 = arith.sitofp %47 : vector<32x4xi32> to vector<32x4xf32>
    %49 = tpu.iota {dimensions = array<i32: 0>} : vector<4x32xi32>
    %50 = tpu.iota {dimensions = array<i32: 1>} : vector<4x32xi32>
    %c8_i32_21 = arith.constant 8 : i32
    %51 = vector.broadcast %c8_i32_21 : i32 to vector<4x32xi32>
    %52 = arith.muli %49, %51 : vector<4x32xi32>
    %53 = arith.cmpi sge, %50, %52 : vector<4x32xi32>
    %c1_i32_22 = arith.constant 1 : i32
    %54 = vector.broadcast %c1_i32_22 : i32 to vector<4x32xi32>
    %55 = arith.addi %49, %54 : vector<4x32xi32>
    %c8_i32_23 = arith.constant 8 : i32
    %56 = vector.broadcast %c8_i32_23 : i32 to vector<4x32xi32>
    %57 = arith.muli %55, %56 : vector<4x32xi32>
    %58 = arith.cmpi slt, %50, %57 : vector<4x32xi32>
    %59 = arith.andi %53, %58 : vector<4x32xi1>
    %60 = arith.extui %59 : vector<4x32xi1> to vector<4x32xi32>
    %61 = arith.sitofp %60 : vector<4x32xi32> to vector<4x32xf32>
    %62 = vector.broadcast %3 : vector<1x8xf32> to vector<64x8xf32>
    %63 = arith.mulf %22, %62 : vector<64x8xf32>
    %cst = arith.constant dense<0.000000e+00> : vector<64xf32>
    %64 = vector.multi_reduction <add>, %63, %cst [1] : vector<64x8xf32> to vector<64xf32>
    %65 = vector.shape_cast %64 : vector<64xf32> to vector<64x1xf32>
    %66 = tpu.concatenate %1, %1, %1, %1, %1, %1, %1, %1 in 0 : vector<8x1xf32>, vector<8x1xf32>, vector<8x1xf32>, vector<8x1xf32>, vector<8x1xf32>, vector<8x1xf32>, vector<8x1xf32>, vector<8x1xf32> -> vector<64x1xf32>
    %67 = arith.mulf %65, %66 : vector<64x1xf32>
    %c0_24 = arith.constant 0 : index
    %c0_25 = arith.constant 0 : index
    %68 = vector.load %arg6[%c0_24, %c0_25] : memref<32x192xf32, #tpu.memory_space<vmem>>, vector<32x96xf32>
    %cst_26 = arith.constant dense<0.000000e+00> : vector<8x96xf32>
    %69 = tpu.matmul %5, %68, %cst_26 {dimension_numbers = #tpu.dot_dimension_numbers<[1], [0], [0], [1], [0, 0, 1, 1], [], []>} : vector<8x32xf32>, vector<32x96xf32>, vector<8x96xf32> -> vector<8x96xf32>
    %c0_27 = arith.constant 0 : index
    %c0_28 = arith.constant 0 : index
    %70 = vector.load %arg14[%c0_27, %c0_28] : memref<1x2736xf32, #tpu.memory_space<vmem>>, vector<1x96xf32>
    %71 = vector.broadcast %70 : vector<1x96xf32> to vector<8x96xf32>
    %72 = arith.addf %69, %71 : vector<8x96xf32>
    %73 = vector.extract_strided_slice %72 {offsets = [0, 0], sizes = [8, 32], strides = [1, 1]} : vector<8x96xf32> to vector<8x32xf32>
    %74 = vector.broadcast %1 : vector<8x1xf32> to vector<8x32xf32>
    %75 = arith.mulf %73, %74 : vector<8x32xf32>
    %76 = vector.extract_strided_slice %72 {offsets = [0, 32], sizes = [8, 32], strides = [1, 1]} : vector<8x96xf32> to vector<8x32xf32>
    %77 = vector.broadcast %1 : vector<8x1xf32> to vector<8x32xf32>
    %78 = arith.mulf %76, %77 : vector<8x32xf32>
    %79 = vector.extract_strided_slice %72 {offsets = [0, 64], sizes = [8, 32], strides = [1, 1]} : vector<8x96xf32> to vector<8x32xf32>
    %80 = vector.broadcast %1 : vector<8x1xf32> to vector<8x32xf32>
    %81 = arith.mulf %79, %80 : vector<8x32xf32>
    %cst_29 = arith.constant dense<0.000000e+00> : vector<64x32xf32>
    %82 = tpu.matmul %22, %75, %cst_29 {dimension_numbers = #tpu.dot_dimension_numbers<[1], [0], [0], [1], [0, 0, 1, 1], [], []>} : vector<64x8xf32>, vector<8x32xf32>, vector<64x32xf32> -> vector<64x32xf32>
    %83 = tpu.concatenate %78, %78, %78, %78, %78, %78, %78, %78 in 0 : vector<8x32xf32>, vector<8x32xf32>, vector<8x32xf32>, vector<8x32xf32>, vector<8x32xf32>, vector<8x32xf32>, vector<8x32xf32>, vector<8x32xf32> -> vector<64x32xf32>
    %84 = tpu.concatenate %81, %81, %81, %81, %81, %81, %81, %81 in 0 : vector<8x32xf32>, vector<8x32xf32>, vector<8x32xf32>, vector<8x32xf32>, vector<8x32xf32>, vector<8x32xf32>, vector<8x32xf32>, vector<8x32xf32> -> vector<64x32xf32>
    %85 = arith.mulf %82, %83 : vector<64x32xf32>
    %cst_30 = arith.constant dense<0.000000e+00> : vector<64x4xf32>
    %86 = tpu.matmul %85, %48, %cst_30 {dimension_numbers = #tpu.dot_dimension_numbers<[1], [0], [0], [1], [0, 0, 1, 1], [], []>} : vector<64x32xf32>, vector<32x4xf32>, vector<64x4xf32> -> vector<64x4xf32>
    %cst_31 = arith.constant 0.353553385 : f32
    %87 = vector.broadcast %cst_31 : f32 to vector<64x4xf32>
    %88 = arith.mulf %86, %87 : vector<64x4xf32>
    %c0_32 = arith.constant 0 : index
    %c0_33 = arith.constant 0 : index
    %89 = vector.load %arg7[%c0_32, %c0_33] : memref<16x40xf32, #tpu.memory_space<vmem>>, vector<16x8xf32>
    %cst_34 = arith.constant dense<0.000000e+00> : vector<64x8xf32>
    %90 = tpu.matmul %7, %89, %cst_34 {dimension_numbers = #tpu.dot_dimension_numbers<[1], [0], [0], [1], [0, 0, 1, 1], [], []>} : vector<64x16xf32>, vector<16x8xf32>, vector<64x8xf32> -> vector<64x8xf32>
    %c0_35 = arith.constant 0 : index
    %c96 = arith.constant 96 : index
    %91 = vector.load %arg14[%c0_35, %c96] : memref<1x2736xf32, #tpu.memory_space<vmem>>, vector<1x8xf32>
    %92 = vector.broadcast %91 : vector<1x8xf32> to vector<64x8xf32>
    %93 = arith.addf %90, %92 : vector<64x8xf32>
    %94 = vector.extract_strided_slice %93 {offsets = [0, 0], sizes = [64, 4], strides = [1, 1]} : vector<64x8xf32> to vector<64x4xf32>
    %95 = vector.broadcast %67 : vector<64x1xf32> to vector<64x4xf32>
    %96 = arith.mulf %94, %95 : vector<64x4xf32>
    %97 = vector.extract_strided_slice %93 {offsets = [0, 4], sizes = [64, 4], strides = [1, 1]} : vector<64x8xf32> to vector<64x4xf32>
    %98 = vector.broadcast %67 : vector<64x1xf32> to vector<64x4xf32>
    %99 = arith.mulf %97, %98 : vector<64x4xf32>
    %cst_36 = arith.constant 1.000000e+00 : f32
    %100 = vector.broadcast %cst_36 : f32 to vector<64x4xf32>
    %101 = arith.addf %96, %100 : vector<64x4xf32>
    %102 = arith.mulf %88, %101 : vector<64x4xf32>
    %103 = arith.addf %102, %99 : vector<64x4xf32>
    %c0_37 = arith.constant 0 : index
    %c0_38 = arith.constant 0 : index
    %104 = vector.load %arg8[%c0_37, %c0_38] : memref<16x2168xf32, #tpu.memory_space<vmem>>, vector<16x8xf32>
    %cst_39 = arith.constant dense<0.000000e+00> : vector<1x8xf32>
    %105 = tpu.matmul %9, %104, %cst_39 {dimension_numbers = #tpu.dot_dimension_numbers<[1], [0], [0], [1], [0, 0, 1, 1], [], []>} : vector<1x16xf32>, vector<16x8xf32>, vector<1x8xf32> -> vector<1x8xf32>
    %c0_40 = arith.constant 0 : index
    %c104 = arith.constant 104 : index
    %106 = vector.load %arg14[%c0_40, %c104] : memref<1x2736xf32, #tpu.memory_space<vmem>>, vector<1x8xf32>
    %107 = arith.addf %105, %106 : vector<1x8xf32>
    %c0_41 = arith.constant 0 : index
    %c8 = arith.constant 8 : index
    %108 = vector.load %arg8[%c0_41, %c8] : memref<16x2168xf32, #tpu.memory_space<vmem>>, vector<16x64xf32>
    %cst_42 = arith.constant dense<0.000000e+00> : vector<1x64xf32>
    %109 = tpu.matmul %9, %108, %cst_42 {dimension_numbers = #tpu.dot_dimension_numbers<[1], [0], [0], [1], [0, 0, 1, 1], [], []>} : vector<1x16xf32>, vector<16x64xf32>, vector<1x64xf32> -> vector<1x64xf32>
    %c0_43 = arith.constant 0 : index
    %c112 = arith.constant 112 : index
    %110 = vector.load %arg14[%c0_43, %c112] : memref<1x2736xf32, #tpu.memory_space<vmem>>, vector<1x64xf32>
    %111 = arith.addf %109, %110 : vector<1x64xf32>
    %112 = vector.extract_strided_slice %107 {offsets = [0, 0], sizes = [1, 4], strides = [1, 1]} : vector<1x8xf32> to vector<1x4xf32>
    %113 = vector.extract_strided_slice %107 {offsets = [0, 4], sizes = [1, 4], strides = [1, 1]} : vector<1x8xf32> to vector<1x4xf32>
    %cst_44 = arith.constant 1.000000e+00 : f32
    %114 = vector.broadcast %cst_44 : f32 to vector<1x4xf32>
    %115 = arith.addf %113, %114 : vector<1x4xf32>
    %116 = vector.broadcast %115 : vector<1x4xf32> to vector<64x4xf32>
    %117 = arith.mulf %116, %103 : vector<64x4xf32>
    %118 = vector.broadcast %112 : vector<1x4xf32> to vector<64x4xf32>
    %119 = arith.addf %118, %117 : vector<64x4xf32>
    %c0_45 = arith.constant 0 : index
    %c0_46 = arith.constant 0 : index
    %120 = vector.load %arg10[%c0_45, %c0_46] : memref<4x16xf32, #tpu.memory_space<vmem>>, vector<4x16xf32>
    %cst_47 = arith.constant dense<0.000000e+00> : vector<64x16xf32>
    %121 = tpu.matmul %119, %120, %cst_47 {dimension_numbers = #tpu.dot_dimension_numbers<[1], [0], [0], [1], [0, 0, 1, 1], [], []>} : vector<64x4xf32>, vector<4x16xf32>, vector<64x16xf32> -> vector<64x16xf32>
    %c0_48 = arith.constant 0 : index
    %c224 = arith.constant 224 : index
    %122 = vector.load %arg14[%c0_48, %c224] : memref<1x2736xf32, #tpu.memory_space<vmem>>, vector<1x16xf32>
    %123 = vector.broadcast %122 : vector<1x16xf32> to vector<64x16xf32>
    %124 = arith.addf %121, %123 : vector<64x16xf32>
    %125 = vector.broadcast %67 : vector<64x1xf32> to vector<64x16xf32>
    %126 = arith.mulf %124, %125 : vector<64x16xf32>
    %127 = arith.addf %7, %126 : vector<64x16xf32>
    %c0_49 = arith.constant 0 : index
    %c336 = arith.constant 336 : index
    %128 = vector.load %arg14[%c0_49, %c336] : memref<1x2736xf32, #tpu.memory_space<vmem>>, vector<1x16xf32>
    %c0_50 = arith.constant 0 : index
    %c352 = arith.constant 352 : index
    %129 = vector.load %arg14[%c0_50, %c352] : memref<1x2736xf32, #tpu.memory_space<vmem>>, vector<1x16xf32>
    %cst_51 = arith.constant dense<0.000000e+00> : vector<64xf32>
    %130 = vector.multi_reduction <add>, %127, %cst_51 [1] : vector<64x16xf32> to vector<64xf32>
    %131 = vector.shape_cast %130 : vector<64xf32> to vector<64x1xf32>
    %cst_52 = arith.constant 1.600000e+01 : f32
    %132 = vector.broadcast %cst_52 : f32 to vector<64x1xf32>
    %133 = arith.divf %131, %132 : vector<64x1xf32>
    %134 = vector.broadcast %133 : vector<64x1xf32> to vector<64x16xf32>
    %135 = arith.subf %127, %134 : vector<64x16xf32>
    %136 = arith.mulf %135, %135 : vector<64x16xf32>
    %cst_53 = arith.constant dense<0.000000e+00> : vector<64xf32>
    %137 = vector.multi_reduction <add>, %136, %cst_53 [1] : vector<64x16xf32> to vector<64xf32>
    %138 = vector.shape_cast %137 : vector<64xf32> to vector<64x1xf32>
    %cst_54 = arith.constant 1.600000e+01 : f32
    %139 = vector.broadcast %cst_54 : f32 to vector<64x1xf32>
    %140 = arith.divf %138, %139 : vector<64x1xf32>
    %cst_55 = arith.constant 9.99999974E-6 : f32
    %141 = vector.broadcast %cst_55 : f32 to vector<64x1xf32>
    %142 = arith.addf %140, %141 : vector<64x1xf32>
    %143 = math.rsqrt %142 : vector<64x1xf32>
    %144 = vector.broadcast %143 : vector<64x1xf32> to vector<64x16xf32>
    %145 = arith.mulf %135, %144 : vector<64x16xf32>
    %146 = vector.broadcast %128 : vector<1x16xf32> to vector<64x16xf32>
    %147 = arith.mulf %145, %146 : vector<64x16xf32>
    %148 = vector.broadcast %129 : vector<1x16xf32> to vector<64x16xf32>
    %149 = arith.addf %147, %148 : vector<64x16xf32>
    %c0_56 = arith.constant 0 : index
    %c8_57 = arith.constant 8 : index
    %150 = vector.load %arg7[%c0_56, %c8_57] : memref<16x40xf32, #tpu.memory_space<vmem>>, vector<16x32xf32>
    %cst_58 = arith.constant dense<0.000000e+00> : vector<64x32xf32>
    %151 = tpu.matmul %149, %150, %cst_58 {dimension_numbers = #tpu.dot_dimension_numbers<[1], [0], [0], [1], [0, 0, 1, 1], [], []>} : vector<64x16xf32>, vector<16x32xf32>, vector<64x32xf32> -> vector<64x32xf32>
    %c0_59 = arith.constant 0 : index
    %c496 = arith.constant 496 : index
    %152 = vector.load %arg14[%c0_59, %c496] : memref<1x2736xf32, #tpu.memory_space<vmem>>, vector<1x32xf32>
    %153 = vector.broadcast %152 : vector<1x32xf32> to vector<64x32xf32>
    %154 = arith.addf %151, %153 : vector<64x32xf32>
    %cst_60 = arith.constant 0.000000e+00 : f32
    %155 = vector.broadcast %cst_60 : f32 to vector<64x32xf32>
    %156 = arith.maximumf %154, %155 : vector<64x32xf32>
    %c0_61 = arith.constant 0 : index
    %c0_62 = arith.constant 0 : index
    %157 = vector.load %arg12[%c0_61, %c0_62] : memref<32x16xf32, #tpu.memory_space<vmem>>, vector<32x16xf32>
    %cst_63 = arith.constant dense<0.000000e+00> : vector<64x16xf32>
    %158 = tpu.matmul %156, %157, %cst_63 {dimension_numbers = #tpu.dot_dimension_numbers<[1], [0], [0], [1], [0, 0, 1, 1], [], []>} : vector<64x32xf32>, vector<32x16xf32>, vector<64x16xf32> -> vector<64x16xf32>
    %159 = arith.addf %149, %158 : vector<64x16xf32>
    %c0_64 = arith.constant 0 : index
    %c528 = arith.constant 528 : index
    %160 = vector.load %arg14[%c0_64, %c528] : memref<1x2736xf32, #tpu.memory_space<vmem>>, vector<1x16xf32>
    %161 = vector.broadcast %160 : vector<1x16xf32> to vector<64x16xf32>
    %162 = arith.addf %159, %161 : vector<64x16xf32>
    %c0_65 = arith.constant 0 : index
    %c2672 = arith.constant 2672 : index
    %163 = vector.load %arg14[%c0_65, %c2672] : memref<1x2736xf32, #tpu.memory_space<vmem>>, vector<1x16xf32>
    %c0_66 = arith.constant 0 : index
    %c2688 = arith.constant 2688 : index
    %164 = vector.load %arg14[%c0_66, %c2688] : memref<1x2736xf32, #tpu.memory_space<vmem>>, vector<1x16xf32>
    %cst_67 = arith.constant dense<0.000000e+00> : vector<64xf32>
    %165 = vector.multi_reduction <add>, %162, %cst_67 [1] : vector<64x16xf32> to vector<64xf32>
    %166 = vector.shape_cast %165 : vector<64xf32> to vector<64x1xf32>
    %cst_68 = arith.constant 1.600000e+01 : f32
    %167 = vector.broadcast %cst_68 : f32 to vector<64x1xf32>
    %168 = arith.divf %166, %167 : vector<64x1xf32>
    %169 = vector.broadcast %168 : vector<64x1xf32> to vector<64x16xf32>
    %170 = arith.subf %162, %169 : vector<64x16xf32>
    %171 = arith.mulf %170, %170 : vector<64x16xf32>
    %cst_69 = arith.constant dense<0.000000e+00> : vector<64xf32>
    %172 = vector.multi_reduction <add>, %171, %cst_69 [1] : vector<64x16xf32> to vector<64xf32>
    %173 = vector.shape_cast %172 : vector<64xf32> to vector<64x1xf32>
    %cst_70 = arith.constant 1.600000e+01 : f32
    %174 = vector.broadcast %cst_70 : f32 to vector<64x1xf32>
    %175 = arith.divf %173, %174 : vector<64x1xf32>
    %cst_71 = arith.constant 9.99999974E-6 : f32
    %176 = vector.broadcast %cst_71 : f32 to vector<64x1xf32>
    %177 = arith.addf %175, %176 : vector<64x1xf32>
    %178 = math.rsqrt %177 : vector<64x1xf32>
    %179 = vector.broadcast %178 : vector<64x1xf32> to vector<64x16xf32>
    %180 = arith.mulf %170, %179 : vector<64x16xf32>
    %181 = vector.broadcast %163 : vector<1x16xf32> to vector<64x16xf32>
    %182 = arith.mulf %180, %181 : vector<64x16xf32>
    %183 = vector.broadcast %164 : vector<1x16xf32> to vector<64x16xf32>
    %184 = arith.addf %182, %183 : vector<64x16xf32>
    %cst_72 = arith.constant 0.000000e+00 : f32
    %185 = vector.broadcast %cst_72 : f32 to vector<64x1xf32>
    %186 = arith.cmpf ogt, %66, %185 : vector<64x1xf32>
    %cst_73 = arith.constant -1.000000e+30 : f32
    %187 = vector.shape_cast %186 : vector<64x1xi1> to vector<64x1xi1>
    %188 = vector.broadcast %187 : vector<64x1xi1> to vector<64x4xi1>
    %189 = vector.broadcast %cst_73 : f32 to vector<64x4xf32>
    %190 = arith.select %188, %103, %189 : vector<64x4xi1>, vector<64x4xf32>
    %cst_74 = arith.constant dense<0xFF800000> : vector<4xf32>
    %191 = vector.multi_reduction <maximumf>, %190, %cst_74 [0] : vector<64x4xf32> to vector<4xf32>
    %192 = vector.shape_cast %191 : vector<4xf32> to vector<1x4xf32>
    %193 = vector.broadcast %192 : vector<1x4xf32> to vector<64x4xf32>
    %194 = arith.subf %190, %193 : vector<64x4xf32>
    %195 = math.exp %194 : vector<64x4xf32>
    %cst_75 = arith.constant dense<0.000000e+00> : vector<8x4xf32>
    %196 = tpu.matmul %35, %195, %cst_75 {dimension_numbers = #tpu.dot_dimension_numbers<[1], [0], [0], [1], [0, 0, 1, 1], [], []>} : vector<8x64xf32>, vector<64x4xf32>, vector<8x4xf32> -> vector<8x4xf32>
    %cst_76 = arith.constant 0.000000e+00 : f32
    %197 = vector.broadcast %cst_76 : f32 to vector<8x4xf32>
    %198 = arith.cmpf ogt, %196, %197 : vector<8x4xf32>
    %cst_77 = arith.constant 1.000000e+00 : f32
    %199 = vector.broadcast %cst_77 : f32 to vector<8x4xf32>
    %200 = arith.divf %199, %196 : vector<8x4xf32>
    %cst_78 = arith.constant 0.000000e+00 : f32
    %201 = vector.broadcast %cst_78 : f32 to vector<8x4xf32>
    %202 = arith.select %198, %200, %201 : vector<8x4xi1>, vector<8x4xf32>
    %cst_79 = arith.constant dense<0.000000e+00> : vector<64x4xf32>
    %203 = tpu.matmul %22, %202, %cst_79 {dimension_numbers = #tpu.dot_dimension_numbers<[1], [0], [0], [1], [0, 0, 1, 1], [], []>} : vector<64x8xf32>, vector<8x4xf32>, vector<64x4xf32> -> vector<64x4xf32>
    %204 = arith.mulf %195, %203 : vector<64x4xf32>
    %cst_80 = arith.constant dense<0.000000e+00> : vector<64x32xf32>
    %205 = tpu.matmul %204, %61, %cst_80 {dimension_numbers = #tpu.dot_dimension_numbers<[1], [0], [0], [1], [0, 0, 1, 1], [], []>} : vector<64x4xf32>, vector<4x32xf32>, vector<64x32xf32> -> vector<64x32xf32>
    %206 = arith.mulf %205, %84 : vector<64x32xf32>
    %cst_81 = arith.constant dense<0.000000e+00> : vector<8x32xf32>
    %207 = tpu.matmul %35, %206, %cst_81 {dimension_numbers = #tpu.dot_dimension_numbers<[1], [0], [0], [1], [0, 0, 1, 1], [], []>} : vector<8x64xf32>, vector<64x32xf32>, vector<8x32xf32> -> vector<8x32xf32>
    %208 = vector.extract_strided_slice %111 {offsets = [0, 0], sizes = [1, 32], strides = [1, 1]} : vector<1x64xf32> to vector<1x32xf32>
    %209 = vector.extract_strided_slice %111 {offsets = [0, 32], sizes = [1, 32], strides = [1, 1]} : vector<1x64xf32> to vector<1x32xf32>
    %cst_82 = arith.constant 1.000000e+00 : f32
    %210 = vector.broadcast %cst_82 : f32 to vector<1x32xf32>
    %211 = arith.addf %209, %210 : vector<1x32xf32>
    %212 = vector.broadcast %211 : vector<1x32xf32> to vector<8x32xf32>
    %213 = arith.mulf %212, %207 : vector<8x32xf32>
    %214 = vector.broadcast %208 : vector<1x32xf32> to vector<8x32xf32>
    %215 = arith.addf %214, %213 : vector<8x32xf32>
    %c0_83 = arith.constant 0 : index
    %c96_84 = arith.constant 96 : index
    %216 = vector.load %arg6[%c0_83, %c96_84] : memref<32x192xf32, #tpu.memory_space<vmem>>, vector<32x32xf32>
    %cst_85 = arith.constant dense<0.000000e+00> : vector<8x32xf32>
    %217 = tpu.matmul %215, %216, %cst_85 {dimension_numbers = #tpu.dot_dimension_numbers<[1], [0], [0], [1], [0, 0, 1, 1], [], []>} : vector<8x32xf32>, vector<32x32xf32>, vector<8x32xf32> -> vector<8x32xf32>
    %c0_86 = arith.constant 0 : index
    %c192 = arith.constant 192 : index
    %218 = vector.load %arg14[%c0_86, %c192] : memref<1x2736xf32, #tpu.memory_space<vmem>>, vector<1x32xf32>
    %219 = vector.broadcast %218 : vector<1x32xf32> to vector<8x32xf32>
    %220 = arith.addf %217, %219 : vector<8x32xf32>
    %221 = vector.broadcast %1 : vector<8x1xf32> to vector<8x32xf32>
    %222 = arith.mulf %220, %221 : vector<8x32xf32>
    %cst_87 = arith.constant dense<0.000000e+00> : vector<32xf32>
    %223 = vector.multi_reduction <add>, %5, %cst_87 [0] : vector<8x32xf32> to vector<32xf32>
    %224 = vector.shape_cast %223 : vector<32xf32> to vector<1x32xf32>
    %cst_88 = arith.constant 8.000000e+00 : f32
    %225 = vector.broadcast %cst_88 : f32 to vector<1x32xf32>
    %226 = arith.divf %224, %225 : vector<1x32xf32>
    %cst_89 = arith.constant dense<0x7F800000> : vector<32xf32>
    %227 = vector.multi_reduction <minimumf>, %5, %cst_89 [0] : vector<8x32xf32> to vector<32xf32>
    %228 = vector.shape_cast %227 : vector<32xf32> to vector<1x32xf32>
    %cst_90 = arith.constant dense<0xFF800000> : vector<32xf32>
    %229 = vector.multi_reduction <maximumf>, %5, %cst_90 [0] : vector<8x32xf32> to vector<32xf32>
    %230 = vector.shape_cast %229 : vector<32xf32> to vector<1x32xf32>
    %231 = vector.broadcast %226 : vector<1x32xf32> to vector<8x32xf32>
    %232 = arith.subf %5, %231 : vector<8x32xf32>
    %233 = arith.mulf %232, %232 : vector<8x32xf32>
    %cst_91 = arith.constant dense<0.000000e+00> : vector<32xf32>
    %234 = vector.multi_reduction <add>, %233, %cst_91 [0] : vector<8x32xf32> to vector<32xf32>
    %235 = vector.shape_cast %234 : vector<32xf32> to vector<1x32xf32>
    %cst_92 = arith.constant 7.000000e+00 : f32
    %236 = vector.broadcast %cst_92 : f32 to vector<1x32xf32>
    %237 = arith.divf %235, %236 : vector<1x32xf32>
    %238 = math.sqrt %237 : vector<1x32xf32>
    %cst_93 = arith.constant dense<0.000000e+00> : vector<16xf32>
    %239 = vector.multi_reduction <add>, %7, %cst_93 [0] : vector<64x16xf32> to vector<16xf32>
    %240 = vector.shape_cast %239 : vector<16xf32> to vector<1x16xf32>
    %cst_94 = arith.constant 6.400000e+01 : f32
    %241 = vector.broadcast %cst_94 : f32 to vector<1x16xf32>
    %242 = arith.divf %240, %241 : vector<1x16xf32>
    %cst_95 = arith.constant dense<0x7F800000> : vector<16xf32>
    %243 = vector.multi_reduction <minimumf>, %7, %cst_95 [0] : vector<64x16xf32> to vector<16xf32>
    %244 = vector.shape_cast %243 : vector<16xf32> to vector<1x16xf32>
    %cst_96 = arith.constant dense<0xFF800000> : vector<16xf32>
    %245 = vector.multi_reduction <maximumf>, %7, %cst_96 [0] : vector<64x16xf32> to vector<16xf32>
    %246 = vector.shape_cast %245 : vector<16xf32> to vector<1x16xf32>
    %247 = vector.broadcast %242 : vector<1x16xf32> to vector<64x16xf32>
    %248 = arith.subf %7, %247 : vector<64x16xf32>
    %249 = arith.mulf %248, %248 : vector<64x16xf32>
    %cst_97 = arith.constant dense<0.000000e+00> : vector<16xf32>
    %250 = vector.multi_reduction <add>, %249, %cst_97 [0] : vector<64x16xf32> to vector<16xf32>
    %251 = vector.shape_cast %250 : vector<16xf32> to vector<1x16xf32>
    %cst_98 = arith.constant 6.300000e+01 : f32
    %252 = vector.broadcast %cst_98 : f32 to vector<1x16xf32>
    %253 = arith.divf %251, %252 : vector<1x16xf32>
    %254 = math.sqrt %253 : vector<1x16xf32>
    %255 = tpu.concatenate %226, %228, %230, %238, %242, %244, %246, %254 in 1 : vector<1x32xf32>, vector<1x32xf32>, vector<1x32xf32>, vector<1x32xf32>, vector<1x16xf32>, vector<1x16xf32>, vector<1x16xf32>, vector<1x16xf32> -> vector<1x192xf32>
    %c0_99 = arith.constant 0 : index
    %c72 = arith.constant 72 : index
    %256 = vector.load %arg8[%c0_99, %c72] : memref<16x2168xf32, #tpu.memory_space<vmem>>, vector<16x16xf32>
    %cst_100 = arith.constant dense<0.000000e+00> : vector<1x16xf32>
    %257 = tpu.matmul %9, %256, %cst_100 {dimension_numbers = #tpu.dot_dimension_numbers<[1], [0], [0], [1], [0, 0, 1, 1], [], []>} : vector<1x16xf32>, vector<16x16xf32>, vector<1x16xf32> -> vector<1x16xf32>
    %c0_101 = arith.constant 0 : index
    %c0_102 = arith.constant 0 : index
    %258 = vector.load %arg9[%c0_101, %c0_102] : memref<192x16xf32, #tpu.memory_space<vmem>>, vector<192x16xf32>
    %cst_103 = arith.constant dense<0.000000e+00> : vector<1x16xf32>
    %259 = tpu.matmul %255, %258, %cst_103 {dimension_numbers = #tpu.dot_dimension_numbers<[1], [0], [0], [1], [0, 0, 1, 1], [], []>} : vector<1x192xf32>, vector<192x16xf32>, vector<1x16xf32> -> vector<1x16xf32>
    %260 = arith.addf %257, %259 : vector<1x16xf32>
    %c0_104 = arith.constant 0 : index
    %c176 = arith.constant 176 : index
    %261 = vector.load %arg14[%c0_104, %c176] : memref<1x2736xf32, #tpu.memory_space<vmem>>, vector<1x16xf32>
    %262 = arith.addf %260, %261 : vector<1x16xf32>
    %c0_105 = arith.constant 0 : index
    %c88 = arith.constant 88 : index
    %263 = vector.load %arg8[%c0_105, %c88] : memref<16x2168xf32, #tpu.memory_space<vmem>>, vector<16x16xf32>
    %cst_106 = arith.constant dense<0.000000e+00> : vector<1x16xf32>
    %264 = tpu.matmul %262, %263, %cst_106 {dimension_numbers = #tpu.dot_dimension_numbers<[1], [0], [0], [1], [0, 0, 1, 1], [], []>} : vector<1x16xf32>, vector<16x16xf32>, vector<1x16xf32> -> vector<1x16xf32>
    %c0_107 = arith.constant 0 : index
    %c240 = arith.constant 240 : index
    %265 = vector.load %arg14[%c0_107, %c240] : memref<1x2736xf32, #tpu.memory_space<vmem>>, vector<1x16xf32>
    %266 = arith.addf %264, %265 : vector<1x16xf32>
    %cst_108 = arith.constant 0.000000e+00 : f32
    %267 = vector.broadcast %cst_108 : f32 to vector<1x16xf32>
    %268 = arith.maximumf %266, %267 : vector<1x16xf32>
    %c0_109 = arith.constant 0 : index
    %c104_110 = arith.constant 104 : index
    %269 = vector.load %arg8[%c0_109, %c104_110] : memref<16x2168xf32, #tpu.memory_space<vmem>>, vector<16x16xf32>
    %cst_111 = arith.constant dense<0.000000e+00> : vector<1x16xf32>
    %270 = tpu.matmul %268, %269, %cst_111 {dimension_numbers = #tpu.dot_dimension_numbers<[1], [0], [0], [1], [0, 0, 1, 1], [], []>} : vector<1x16xf32>, vector<16x16xf32>, vector<1x16xf32> -> vector<1x16xf32>
    %c0_112 = arith.constant 0 : index
    %c256 = arith.constant 256 : index
    %271 = vector.load %arg14[%c0_112, %c256] : memref<1x2736xf32, #tpu.memory_space<vmem>>, vector<1x16xf32>
    %272 = arith.addf %270, %271 : vector<1x16xf32>
    %273 = arith.addf %5, %222 : vector<8x32xf32>
    %c0_113 = arith.constant 0 : index
    %c272 = arith.constant 272 : index
    %274 = vector.load %arg14[%c0_113, %c272] : memref<1x2736xf32, #tpu.memory_space<vmem>>, vector<1x32xf32>
    %c0_114 = arith.constant 0 : index
    %c304 = arith.constant 304 : index
    %275 = vector.load %arg14[%c0_114, %c304] : memref<1x2736xf32, #tpu.memory_space<vmem>>, vector<1x32xf32>
    %cst_115 = arith.constant dense<0.000000e+00> : vector<8xf32>
    %276 = vector.multi_reduction <add>, %273, %cst_115 [1] : vector<8x32xf32> to vector<8xf32>
    %277 = vector.shape_cast %276 : vector<8xf32> to vector<8x1xf32>
    %cst_116 = arith.constant 3.200000e+01 : f32
    %278 = vector.broadcast %cst_116 : f32 to vector<8x1xf32>
    %279 = arith.divf %277, %278 : vector<8x1xf32>
    %280 = vector.broadcast %279 : vector<8x1xf32> to vector<8x32xf32>
    %281 = arith.subf %273, %280 : vector<8x32xf32>
    %282 = arith.mulf %281, %281 : vector<8x32xf32>
    %cst_117 = arith.constant dense<0.000000e+00> : vector<8xf32>
    %283 = vector.multi_reduction <add>, %282, %cst_117 [1] : vector<8x32xf32> to vector<8xf32>
    %284 = vector.shape_cast %283 : vector<8xf32> to vector<8x1xf32>
    %cst_118 = arith.constant 3.200000e+01 : f32
    %285 = vector.broadcast %cst_118 : f32 to vector<8x1xf32>
    %286 = arith.divf %284, %285 : vector<8x1xf32>
    %cst_119 = arith.constant 9.99999974E-6 : f32
    %287 = vector.broadcast %cst_119 : f32 to vector<8x1xf32>
    %288 = arith.addf %286, %287 : vector<8x1xf32>
    %289 = math.rsqrt %288 : vector<8x1xf32>
    %290 = vector.broadcast %289 : vector<8x1xf32> to vector<8x32xf32>
    %291 = arith.mulf %281, %290 : vector<8x32xf32>
    %292 = vector.broadcast %274 : vector<1x32xf32> to vector<8x32xf32>
    %293 = arith.mulf %291, %292 : vector<8x32xf32>
    %294 = vector.broadcast %275 : vector<1x32xf32> to vector<8x32xf32>
    %295 = arith.addf %293, %294 : vector<8x32xf32>
    %296 = arith.addf %9, %272 : vector<1x16xf32>
    %c0_120 = arith.constant 0 : index
    %c368 = arith.constant 368 : index
    %297 = vector.load %arg14[%c0_120, %c368] : memref<1x2736xf32, #tpu.memory_space<vmem>>, vector<1x16xf32>
    %c0_121 = arith.constant 0 : index
    %c384 = arith.constant 384 : index
    %298 = vector.load %arg14[%c0_121, %c384] : memref<1x2736xf32, #tpu.memory_space<vmem>>, vector<1x16xf32>
    %cst_122 = arith.constant dense<0.000000e+00> : vector<1xf32>
    %299 = vector.multi_reduction <add>, %296, %cst_122 [1] : vector<1x16xf32> to vector<1xf32>
    %300 = vector.shape_cast %299 : vector<1xf32> to vector<1x1xf32>
    %cst_123 = arith.constant 1.600000e+01 : f32
    %301 = vector.broadcast %cst_123 : f32 to vector<1x1xf32>
    %302 = arith.divf %300, %301 : vector<1x1xf32>
    %303 = vector.broadcast %302 : vector<1x1xf32> to vector<1x16xf32>
    %304 = arith.subf %296, %303 : vector<1x16xf32>
    %305 = arith.mulf %304, %304 : vector<1x16xf32>
    %cst_124 = arith.constant dense<0.000000e+00> : vector<1xf32>
    %306 = vector.multi_reduction <add>, %305, %cst_124 [1] : vector<1x16xf32> to vector<1xf32>
    %307 = vector.shape_cast %306 : vector<1xf32> to vector<1x1xf32>
    %cst_125 = arith.constant 1.600000e+01 : f32
    %308 = vector.broadcast %cst_125 : f32 to vector<1x1xf32>
    %309 = arith.divf %307, %308 : vector<1x1xf32>
    %cst_126 = arith.constant 9.99999974E-6 : f32
    %310 = vector.broadcast %cst_126 : f32 to vector<1x1xf32>
    %311 = arith.addf %309, %310 : vector<1x1xf32>
    %312 = math.rsqrt %311 : vector<1x1xf32>
    %313 = vector.broadcast %312 : vector<1x1xf32> to vector<1x16xf32>
    %314 = arith.mulf %304, %313 : vector<1x16xf32>
    %315 = arith.mulf %314, %297 : vector<1x16xf32>
    %316 = arith.addf %315, %298 : vector<1x16xf32>
    %c0_127 = arith.constant 0 : index
    %c128 = arith.constant 128 : index
    %317 = vector.load %arg6[%c0_127, %c128] : memref<32x192xf32, #tpu.memory_space<vmem>>, vector<32x64xf32>
    %cst_128 = arith.constant dense<0.000000e+00> : vector<8x64xf32>
    %318 = tpu.matmul %295, %317, %cst_128 {dimension_numbers = #tpu.dot_dimension_numbers<[1], [0], [0], [1], [0, 0, 1, 1], [], []>} : vector<8x32xf32>, vector<32x64xf32>, vector<8x64xf32> -> vector<8x64xf32>
    %c0_129 = arith.constant 0 : index
    %c400 = arith.constant 400 : index
    %319 = vector.load %arg14[%c0_129, %c400] : memref<1x2736xf32, #tpu.memory_space<vmem>>, vector<1x64xf32>
    %320 = vector.broadcast %319 : vector<1x64xf32> to vector<8x64xf32>
    %321 = arith.addf %318, %320 : vector<8x64xf32>
    %cst_130 = arith.constant 0.000000e+00 : f32
    %322 = vector.broadcast %cst_130 : f32 to vector<8x64xf32>
    %323 = arith.maximumf %321, %322 : vector<8x64xf32>
    %c0_131 = arith.constant 0 : index
    %c0_132 = arith.constant 0 : index
    %324 = vector.load %arg11[%c0_131, %c0_132] : memref<64x32xf32, #tpu.memory_space<vmem>>, vector<64x32xf32>
    %cst_133 = arith.constant dense<0.000000e+00> : vector<8x32xf32>
    %325 = tpu.matmul %323, %324, %cst_133 {dimension_numbers = #tpu.dot_dimension_numbers<[1], [0], [0], [1], [0, 0, 1, 1], [], []>} : vector<8x64xf32>, vector<64x32xf32>, vector<8x32xf32> -> vector<8x32xf32>
    %326 = arith.addf %295, %325 : vector<8x32xf32>
    %c0_134 = arith.constant 0 : index
    %c464 = arith.constant 464 : index
    %327 = vector.load %arg14[%c0_134, %c464] : memref<1x2736xf32, #tpu.memory_space<vmem>>, vector<1x32xf32>
    %328 = vector.broadcast %327 : vector<1x32xf32> to vector<8x32xf32>
    %329 = arith.addf %326, %328 : vector<8x32xf32>
    %c0_135 = arith.constant 0 : index
    %c2608 = arith.constant 2608 : index
    %330 = vector.load %arg14[%c0_135, %c2608] : memref<1x2736xf32, #tpu.memory_space<vmem>>, vector<1x32xf32>
    %c0_136 = arith.constant 0 : index
    %c2640 = arith.constant 2640 : index
    %331 = vector.load %arg14[%c0_136, %c2640] : memref<1x2736xf32, #tpu.memory_space<vmem>>, vector<1x32xf32>
    %cst_137 = arith.constant dense<0.000000e+00> : vector<8xf32>
    %332 = vector.multi_reduction <add>, %329, %cst_137 [1] : vector<8x32xf32> to vector<8xf32>
    %333 = vector.shape_cast %332 : vector<8xf32> to vector<8x1xf32>
    %cst_138 = arith.constant 3.200000e+01 : f32
    %334 = vector.broadcast %cst_138 : f32 to vector<8x1xf32>
    %335 = arith.divf %333, %334 : vector<8x1xf32>
    %336 = vector.broadcast %335 : vector<8x1xf32> to vector<8x32xf32>
    %337 = arith.subf %329, %336 : vector<8x32xf32>
    %338 = arith.mulf %337, %337 : vector<8x32xf32>
    %cst_139 = arith.constant dense<0.000000e+00> : vector<8xf32>
    %339 = vector.multi_reduction <add>, %338, %cst_139 [1] : vector<8x32xf32> to vector<8xf32>
    %340 = vector.shape_cast %339 : vector<8xf32> to vector<8x1xf32>
    %cst_140 = arith.constant 3.200000e+01 : f32
    %341 = vector.broadcast %cst_140 : f32 to vector<8x1xf32>
    %342 = arith.divf %340, %341 : vector<8x1xf32>
    %cst_141 = arith.constant 9.99999974E-6 : f32
    %343 = vector.broadcast %cst_141 : f32 to vector<8x1xf32>
    %344 = arith.addf %342, %343 : vector<8x1xf32>
    %345 = math.rsqrt %344 : vector<8x1xf32>
    %346 = vector.broadcast %345 : vector<8x1xf32> to vector<8x32xf32>
    %347 = arith.mulf %337, %346 : vector<8x32xf32>
    %348 = vector.broadcast %330 : vector<1x32xf32> to vector<8x32xf32>
    %349 = arith.mulf %347, %348 : vector<8x32xf32>
    %350 = vector.broadcast %331 : vector<1x32xf32> to vector<8x32xf32>
    %351 = arith.addf %349, %350 : vector<8x32xf32>
    %c0_142 = arith.constant 0 : index
    %c120 = arith.constant 120 : index
    %352 = vector.load %arg8[%c0_142, %c120] : memref<16x2168xf32, #tpu.memory_space<vmem>>, vector<16x2048xf32>
    %cst_143 = arith.constant dense<0.000000e+00> : vector<1x2048xf32>
    %353 = tpu.matmul %316, %352, %cst_143 {dimension_numbers = #tpu.dot_dimension_numbers<[1], [0], [0], [1], [0, 0, 1, 1], [], []>} : vector<1x16xf32>, vector<16x2048xf32>, vector<1x2048xf32> -> vector<1x2048xf32>
    %c0_144 = arith.constant 0 : index
    %c544 = arith.constant 544 : index
    %354 = vector.load %arg14[%c0_144, %c544] : memref<1x2736xf32, #tpu.memory_space<vmem>>, vector<1x2048xf32>
    %355 = arith.addf %353, %354 : vector<1x2048xf32>
    %cst_145 = arith.constant 0.000000e+00 : f32
    %356 = vector.broadcast %cst_145 : f32 to vector<1x2048xf32>
    %357 = arith.maximumf %355, %356 : vector<1x2048xf32>
    %c0_146 = arith.constant 0 : index
    %c0_147 = arith.constant 0 : index
    %358 = vector.load %arg13[%c0_146, %c0_147] : memref<2048x16xf32, #tpu.memory_space<vmem>>, vector<2048x16xf32>
    %cst_148 = arith.constant dense<0.000000e+00> : vector<1x16xf32>
    %359 = tpu.matmul %357, %358, %cst_148 {dimension_numbers = #tpu.dot_dimension_numbers<[1], [0], [0], [1], [0, 0, 1, 1], [], []>} : vector<1x2048xf32>, vector<2048x16xf32>, vector<1x16xf32> -> vector<1x16xf32>
    %360 = arith.addf %316, %359 : vector<1x16xf32>
    %c0_149 = arith.constant 0 : index
    %c2592 = arith.constant 2592 : index
    %361 = vector.load %arg14[%c0_149, %c2592] : memref<1x2736xf32, #tpu.memory_space<vmem>>, vector<1x16xf32>
    %362 = arith.addf %360, %361 : vector<1x16xf32>
    %c0_150 = arith.constant 0 : index
    %c2704 = arith.constant 2704 : index
    %363 = vector.load %arg14[%c0_150, %c2704] : memref<1x2736xf32, #tpu.memory_space<vmem>>, vector<1x16xf32>
    %c0_151 = arith.constant 0 : index
    %c2720 = arith.constant 2720 : index
    %364 = vector.load %arg14[%c0_151, %c2720] : memref<1x2736xf32, #tpu.memory_space<vmem>>, vector<1x16xf32>
    %cst_152 = arith.constant dense<0.000000e+00> : vector<1xf32>
    %365 = vector.multi_reduction <add>, %362, %cst_152 [1] : vector<1x16xf32> to vector<1xf32>
    %366 = vector.shape_cast %365 : vector<1xf32> to vector<1x1xf32>
    %cst_153 = arith.constant 1.600000e+01 : f32
    %367 = vector.broadcast %cst_153 : f32 to vector<1x1xf32>
    %368 = arith.divf %366, %367 : vector<1x1xf32>
    %369 = vector.broadcast %368 : vector<1x1xf32> to vector<1x16xf32>
    %370 = arith.subf %362, %369 : vector<1x16xf32>
    %371 = arith.mulf %370, %370 : vector<1x16xf32>
    %cst_154 = arith.constant dense<0.000000e+00> : vector<1xf32>
    %372 = vector.multi_reduction <add>, %371, %cst_154 [1] : vector<1x16xf32> to vector<1xf32>
    %373 = vector.shape_cast %372 : vector<1xf32> to vector<1x1xf32>
    %cst_155 = arith.constant 1.600000e+01 : f32
    %374 = vector.broadcast %cst_155 : f32 to vector<1x1xf32>
    %375 = arith.divf %373, %374 : vector<1x1xf32>
    %cst_156 = arith.constant 9.99999974E-6 : f32
    %376 = vector.broadcast %cst_156 : f32 to vector<1x1xf32>
    %377 = arith.addf %375, %376 : vector<1x1xf32>
    %378 = math.rsqrt %377 : vector<1x1xf32>
    %379 = vector.broadcast %378 : vector<1x1xf32> to vector<1x16xf32>
    %380 = arith.mulf %370, %379 : vector<1x16xf32>
    %381 = arith.mulf %380, %363 : vector<1x16xf32>
    %382 = arith.addf %381, %364 : vector<1x16xf32>
    %c0_157 = arith.constant 0 : index
    %c0_158 = arith.constant 0 : index
    %c0_159 = arith.constant 0 : index
    %383 = vector.load %arg15[%c0_157, %c0_158, %c0_159] : memref<1x8x32xf32, #tpu.memory_space<vmem>>, vector<1x8x32xf32>
    %384 = vector.shape_cast %383 : vector<1x8x32xf32> to vector<8x32xf32>
    %385 = vector.shape_cast %351 : vector<8x32xf32> to vector<1x8x32xf32>
    tpu.vector_store %arg15[%c0_157, %c0_158, %c0_159], %385 {strides = array<i32>} : memref<1x8x32xf32, #tpu.memory_space<vmem>>, vector<1x8x32xf32>,
    %c0_160 = arith.constant 0 : index
    %c0_161 = arith.constant 0 : index
    %c0_162 = arith.constant 0 : index
    %386 = vector.load %arg16[%c0_160, %c0_161, %c0_162] : memref<1x64x16xf32, #tpu.memory_space<vmem>>, vector<1x64x16xf32>
    %387 = vector.shape_cast %386 : vector<1x64x16xf32> to vector<64x16xf32>
    %388 = vector.shape_cast %184 : vector<64x16xf32> to vector<1x64x16xf32>
    tpu.vector_store %arg16[%c0_160, %c0_161, %c0_162], %388 {strides = array<i32>} : memref<1x64x16xf32, #tpu.memory_space<vmem>>, vector<1x64x16xf32>,
    %c0_163 = arith.constant 0 : index
    %c0_164 = arith.constant 0 : index
    %c0_165 = arith.constant 0 : index
    %389 = vector.load %arg17[%c0_163, %c0_164, %c0_165] : memref<1x1x16xf32, #tpu.memory_space<vmem>>, vector<1x1x16xf32>
    %390 = vector.shape_cast %389 : vector<1x1x16xf32> to vector<1x16xf32>
    %391 = vector.shape_cast %382 : vector<1x16xf32> to vector<1x1x16xf32>
    tpu.vector_store %arg17[%c0_163, %c0_164, %c0_165], %391 {strides = array<i32>} : memref<1x1x16xf32, #tpu.memory_space<vmem>>, vector<1x1x16xf32>,
    return
  }
  func.func @transform_0(%arg0: i32) -> (i32, i32, i32) {
    %c0_i32 = arith.constant 0 : i32
    %c0_i32_0 = arith.constant 0 : i32
    %c0_i32_1 = arith.constant 0 : i32
    return %arg0, %c0_i32, %c0_i32_0 : i32, i32, i32
  }
  func.func @transform_1(%arg0: i32) -> (i32, i32, i32) {
    %c0_i32 = arith.constant 0 : i32
    %c0_i32_0 = arith.constant 0 : i32
    %c0_i32_1 = arith.constant 0 : i32
    return %arg0, %c0_i32, %c0_i32_0 : i32, i32, i32
  }
  func.func @transform_2(%arg0: i32) -> (i32, i32, i32) {
    %c0_i32 = arith.constant 0 : i32
    %c0_i32_0 = arith.constant 0 : i32
    %c0_i32_1 = arith.constant 0 : i32
    return %arg0, %c0_i32, %c0_i32_0 : i32, i32, i32
  }
  func.func @transform_3(%arg0: i32) -> (i32, i32, i32) {
    %c0_i32 = arith.constant 0 : i32
    %c0_i32_0 = arith.constant 0 : i32
    %c0_i32_1 = arith.constant 0 : i32
    return %arg0, %c0_i32, %c0_i32_0 : i32, i32, i32
  }
  func.func @transform_4(%arg0: i32) -> (i32, i32, i32) {
    %c0_i32 = arith.constant 0 : i32
    %c0_i32_0 = arith.constant 0 : i32
    %c0_i32_1 = arith.constant 0 : i32
    return %arg0, %c0_i32, %c0_i32_0 : i32, i32, i32
  }
  func.func @transform_5(%arg0: i32) -> (i32, i32) {
    %c0_i32 = arith.constant 0 : i32
    %c0_i32_0 = arith.constant 0 : i32
    %c0_i32_1 = arith.constant 0 : i32
    return %c0_i32, %c0_i32_0 : i32, i32
  }
  func.func @transform_6(%arg0: i32) -> (i32, i32) {
    %c0_i32 = arith.constant 0 : i32
    %c0_i32_0 = arith.constant 0 : i32
    %c0_i32_1 = arith.constant 0 : i32
    return %c0_i32, %c0_i32_0 : i32, i32
  }
  func.func @transform_7(%arg0: i32) -> (i32, i32) {
    %c0_i32 = arith.constant 0 : i32
    %c0_i32_0 = arith.constant 0 : i32
    %c0_i32_1 = arith.constant 0 : i32
    return %c0_i32, %c0_i32_0 : i32, i32
  }
  func.func @transform_8(%arg0: i32) -> (i32, i32) {
    %c0_i32 = arith.constant 0 : i32
    %c0_i32_0 = arith.constant 0 : i32
    %c0_i32_1 = arith.constant 0 : i32
    return %c0_i32, %c0_i32_0 : i32, i32
  }
  func.func @transform_9(%arg0: i32) -> (i32, i32) {
    %c0_i32 = arith.constant 0 : i32
    %c0_i32_0 = arith.constant 0 : i32
    %c0_i32_1 = arith.constant 0 : i32
    return %c0_i32, %c0_i32_0 : i32, i32
  }
  func.func @transform_10(%arg0: i32) -> (i32, i32) {
    %c0_i32 = arith.constant 0 : i32
    %c0_i32_0 = arith.constant 0 : i32
    %c0_i32_1 = arith.constant 0 : i32
    return %c0_i32, %c0_i32_0 : i32, i32
  }
  func.func @transform_11(%arg0: i32) -> (i32, i32) {
    %c0_i32 = arith.constant 0 : i32
    %c0_i32_0 = arith.constant 0 : i32
    %c0_i32_1 = arith.constant 0 : i32
    return %c0_i32, %c0_i32_0 : i32, i32
  }
  func.func @transform_12(%arg0: i32) -> (i32, i32) {
    %c0_i32 = arith.constant 0 : i32
    %c0_i32_0 = arith.constant 0 : i32
    %c0_i32_1 = arith.constant 0 : i32
    return %c0_i32, %c0_i32_0 : i32, i32
  }
  func.func @transform_13(%arg0: i32) -> (i32, i32) {
    %c0_i32 = arith.constant 0 : i32
    %c0_i32_0 = arith.constant 0 : i32
    %c0_i32_1 = arith.constant 0 : i32
    return %c0_i32, %c0_i32_0 : i32, i32
  }
  func.func @transform_14(%arg0: i32) -> (i32, i32, i32) {
    %c0_i32 = arith.constant 0 : i32
    %c0_i32_0 = arith.constant 0 : i32
    %c0_i32_1 = arith.constant 0 : i32
    return %arg0, %c0_i32, %c0_i32_0 : i32, i32, i32
  }
  func.func @transform_15(%arg0: i32) -> (i32, i32, i32) {
    %c0_i32 = arith.constant 0 : i32
    %c0_i32_0 = arith.constant 0 : i32
    %c0_i32_1 = arith.constant 0 : i32
    return %arg0, %c0_i32, %c0_i32_0 : i32, i32, i32
  }
  func.func @transform_16(%arg0: i32) -> (i32, i32, i32) {
    %c0_i32 = arith.constant 0 : i32
    %c0_i32_0 = arith.constant 0 : i32
    %c0_i32_1 = arith.constant 0 : i32
    return %arg0, %c0_i32, %c0_i32_0 : i32, i32, i32
  }
}

module attributes {stable_mosaic.version = 11 : i64} {
  func.func @_out_mlp_kernel(%arg0: memref<16x32xf32, #tpu.memory_space<vmem>>, %arg1: memref<128x16xf32, #tpu.memory_space<vmem>>, %arg2: memref<2x16xf32, #tpu.memory_space<vmem>>, %arg3: memref<16x1xf32, #tpu.memory_space<vmem>>, %arg4: memref<128x1xf32, #tpu.memory_space<vmem>>, %arg5: memref<128x1xf32, #tpu.memory_space<vmem>>, %arg6: memref<32x16xf32, #tpu.memory_space<vmem>>, %arg7: memref<1x16xf32, #tpu.memory_space<vmem>>, %arg8: memref<16x4xf32, #tpu.memory_space<vmem>>, %arg9: memref<1x4xf32, #tpu.memory_space<vmem>>, %arg10: memref<16x8xf32, #tpu.memory_space<vmem>>, %arg11: memref<1x8xf32, #tpu.memory_space<vmem>>, %arg12: memref<8x2xf32, #tpu.memory_space<vmem>>, %arg13: memref<1x2xf32, #tpu.memory_space<vmem>>, %arg14: memref<16x16xf32, #tpu.memory_space<vmem>>, %arg15: memref<1x16xf32, #tpu.memory_space<vmem>>, %arg16: memref<16x5xf32, #tpu.memory_space<vmem>>, %arg17: memref<1x5xf32, #tpu.memory_space<vmem>>, %arg18: memref<16x4xf32, #tpu.memory_space<vmem>>, %arg19: memref<128x2xf32, #tpu.memory_space<vmem>>, %arg20: memref<2x5xf32, #tpu.memory_space<vmem>>) attributes {dimension_semantics = [], scalar_prefetch = 0 : i64, scratch_operands = 0 : i64, tpu.core_type = #tpu.core_type<tc>} {
    %c0 = arith.constant 0 : index
    %c0_0 = arith.constant 0 : index
    %0 = vector.load %arg0[%c0, %c0_0] : memref<16x32xf32, #tpu.memory_space<vmem>>, vector<16x32xf32>
    %c0_1 = arith.constant 0 : index
    %c0_2 = arith.constant 0 : index
    %1 = vector.load %arg6[%c0_1, %c0_2] : memref<32x16xf32, #tpu.memory_space<vmem>>, vector<32x16xf32>
    %cst = arith.constant dense<0.000000e+00> : vector<16x16xf32>
    %2 = tpu.matmul %0, %1, %cst {dimension_numbers = #tpu.dot_dimension_numbers<[1], [0], [0], [1], [0, 0, 1, 1], [], []>} : vector<16x32xf32>, vector<32x16xf32>, vector<16x16xf32> -> vector<16x16xf32>
    %c0_3 = arith.constant 0 : index
    %c0_4 = arith.constant 0 : index
    %3 = vector.load %arg7[%c0_3, %c0_4] : memref<1x16xf32, #tpu.memory_space<vmem>>, vector<1x16xf32>
    %4 = vector.broadcast %3 : vector<1x16xf32> to vector<16x16xf32>
    %5 = arith.addf %2, %4 : vector<16x16xf32>
    %cst_5 = arith.constant 0.000000e+00 : f32
    %6 = vector.broadcast %cst_5 : f32 to vector<16x16xf32>
    %7 = arith.maximumf %5, %6 : vector<16x16xf32>
    %c0_6 = arith.constant 0 : index
    %c0_7 = arith.constant 0 : index
    %8 = vector.load %arg8[%c0_6, %c0_7] : memref<16x4xf32, #tpu.memory_space<vmem>>, vector<16x4xf32>
    %cst_8 = arith.constant dense<0.000000e+00> : vector<16x4xf32>
    %9 = tpu.matmul %7, %8, %cst_8 {dimension_numbers = #tpu.dot_dimension_numbers<[1], [0], [0], [1], [0, 0, 1, 1], [], []>} : vector<16x16xf32>, vector<16x4xf32>, vector<16x4xf32> -> vector<16x4xf32>
    %c0_9 = arith.constant 0 : index
    %c0_10 = arith.constant 0 : index
    %10 = vector.load %arg9[%c0_9, %c0_10] : memref<1x4xf32, #tpu.memory_space<vmem>>, vector<1x4xf32>
    %11 = vector.broadcast %10 : vector<1x4xf32> to vector<16x4xf32>
    %12 = arith.addf %9, %11 : vector<16x4xf32>
    %c0_11 = arith.constant 0 : index
    %c0_12 = arith.constant 0 : index
    %13 = vector.load %arg3[%c0_11, %c0_12] : memref<16x1xf32, #tpu.memory_space<vmem>>, vector<16x1xf32>
    %14 = vector.broadcast %13 : vector<16x1xf32> to vector<16x4xf32>
    %15 = arith.mulf %12, %14 : vector<16x4xf32>
    %c0_13 = arith.constant 0 : index
    %c0_14 = arith.constant 0 : index
    %16 = vector.load %arg18[%c0_13, %c0_14] : memref<16x4xf32, #tpu.memory_space<vmem>>, vector<16x4xf32>
    tpu.vector_store %arg18[%c0_13, %c0_14], %15 {strides = array<i32>} : memref<16x4xf32, #tpu.memory_space<vmem>>, vector<16x4xf32>,
    %c0_15 = arith.constant 0 : index
    %c0_16 = arith.constant 0 : index
    %17 = vector.load %arg1[%c0_15, %c0_16] : memref<128x16xf32, #tpu.memory_space<vmem>>, vector<128x16xf32>
    %c0_17 = arith.constant 0 : index
    %c0_18 = arith.constant 0 : index
    %18 = vector.load %arg10[%c0_17, %c0_18] : memref<16x8xf32, #tpu.memory_space<vmem>>, vector<16x8xf32>
    %cst_19 = arith.constant dense<0.000000e+00> : vector<128x8xf32>
    %19 = tpu.matmul %17, %18, %cst_19 {dimension_numbers = #tpu.dot_dimension_numbers<[1], [0], [0], [1], [0, 0, 1, 1], [], []>} : vector<128x16xf32>, vector<16x8xf32>, vector<128x8xf32> -> vector<128x8xf32>
    %c0_20 = arith.constant 0 : index
    %c0_21 = arith.constant 0 : index
    %20 = vector.load %arg11[%c0_20, %c0_21] : memref<1x8xf32, #tpu.memory_space<vmem>>, vector<1x8xf32>
    %21 = vector.broadcast %20 : vector<1x8xf32> to vector<128x8xf32>
    %22 = arith.addf %19, %21 : vector<128x8xf32>
    %cst_22 = arith.constant 0.000000e+00 : f32
    %23 = vector.broadcast %cst_22 : f32 to vector<128x8xf32>
    %24 = arith.maximumf %22, %23 : vector<128x8xf32>
    %c0_23 = arith.constant 0 : index
    %c0_24 = arith.constant 0 : index
    %25 = vector.load %arg12[%c0_23, %c0_24] : memref<8x2xf32, #tpu.memory_space<vmem>>, vector<8x2xf32>
    %cst_25 = arith.constant dense<0.000000e+00> : vector<128x2xf32>
    %26 = tpu.matmul %24, %25, %cst_25 {dimension_numbers = #tpu.dot_dimension_numbers<[1], [0], [0], [1], [0, 0, 1, 1], [], []>} : vector<128x8xf32>, vector<8x2xf32>, vector<128x2xf32> -> vector<128x2xf32>
    %c0_26 = arith.constant 0 : index
    %c0_27 = arith.constant 0 : index
    %27 = vector.load %arg13[%c0_26, %c0_27] : memref<1x2xf32, #tpu.memory_space<vmem>>, vector<1x2xf32>
    %28 = vector.broadcast %27 : vector<1x2xf32> to vector<128x2xf32>
    %29 = arith.addf %26, %28 : vector<128x2xf32>
    %c0_28 = arith.constant 0 : index
    %c0_29 = arith.constant 0 : index
    %30 = vector.load %arg5[%c0_28, %c0_29] : memref<128x1xf32, #tpu.memory_space<vmem>>, vector<128x1xf32>
    %cst_30 = arith.constant 1.000000e+00 : f32
    %31 = vector.broadcast %cst_30 : f32 to vector<128x1xf32>
    %32 = arith.subf %31, %30 : vector<128x1xf32>
    %33 = vector.broadcast %32 : vector<128x1xf32> to vector<128x2xf32>
    %34 = arith.mulf %29, %33 : vector<128x2xf32>
    %cst_31 = arith.constant dense<0xFF800000> : vector<128xf32>
    %35 = vector.multi_reduction <maximumf>, %34, %cst_31 [1] : vector<128x2xf32> to vector<128xf32>
    %36 = vector.shape_cast %35 : vector<128xf32> to vector<128x1xf32>
    %37 = vector.broadcast %36 : vector<128x1xf32> to vector<128x2xf32>
    %38 = arith.subf %34, %37 : vector<128x2xf32>
    %39 = math.exp %38 : vector<128x2xf32>
    %cst_32 = arith.constant dense<0.000000e+00> : vector<128xf32>
    %40 = vector.multi_reduction <add>, %39, %cst_32 [1] : vector<128x2xf32> to vector<128xf32>
    %41 = vector.shape_cast %40 : vector<128xf32> to vector<128x1xf32>
    %42 = vector.broadcast %41 : vector<128x1xf32> to vector<128x2xf32>
    %43 = arith.divf %39, %42 : vector<128x2xf32>
    %c0_33 = arith.constant 0 : index
    %c0_34 = arith.constant 0 : index
    %44 = vector.load %arg4[%c0_33, %c0_34] : memref<128x1xf32, #tpu.memory_space<vmem>>, vector<128x1xf32>
    %45 = vector.broadcast %44 : vector<128x1xf32> to vector<128x2xf32>
    %46 = arith.mulf %43, %45 : vector<128x2xf32>
    %c0_35 = arith.constant 0 : index
    %c0_36 = arith.constant 0 : index
    %47 = vector.load %arg19[%c0_35, %c0_36] : memref<128x2xf32, #tpu.memory_space<vmem>>, vector<128x2xf32>
    tpu.vector_store %arg19[%c0_35, %c0_36], %46 {strides = array<i32>} : memref<128x2xf32, #tpu.memory_space<vmem>>, vector<128x2xf32>,
    %c0_37 = arith.constant 0 : index
    %c0_38 = arith.constant 0 : index
    %48 = vector.load %arg2[%c0_37, %c0_38] : memref<2x16xf32, #tpu.memory_space<vmem>>, vector<2x16xf32>
    %c0_39 = arith.constant 0 : index
    %c0_40 = arith.constant 0 : index
    %49 = vector.load %arg14[%c0_39, %c0_40] : memref<16x16xf32, #tpu.memory_space<vmem>>, vector<16x16xf32>
    %cst_41 = arith.constant dense<0.000000e+00> : vector<2x16xf32>
    %50 = tpu.matmul %48, %49, %cst_41 {dimension_numbers = #tpu.dot_dimension_numbers<[1], [0], [0], [1], [0, 0, 1, 1], [], []>} : vector<2x16xf32>, vector<16x16xf32>, vector<2x16xf32> -> vector<2x16xf32>
    %c0_42 = arith.constant 0 : index
    %c0_43 = arith.constant 0 : index
    %51 = vector.load %arg15[%c0_42, %c0_43] : memref<1x16xf32, #tpu.memory_space<vmem>>, vector<1x16xf32>
    %52 = vector.broadcast %51 : vector<1x16xf32> to vector<2x16xf32>
    %53 = arith.addf %50, %52 : vector<2x16xf32>
    %cst_44 = arith.constant 0.000000e+00 : f32
    %54 = vector.broadcast %cst_44 : f32 to vector<2x16xf32>
    %55 = arith.maximumf %53, %54 : vector<2x16xf32>
    %c0_45 = arith.constant 0 : index
    %c0_46 = arith.constant 0 : index
    %56 = vector.load %arg16[%c0_45, %c0_46] : memref<16x5xf32, #tpu.memory_space<vmem>>, vector<16x5xf32>
    %cst_47 = arith.constant dense<0.000000e+00> : vector<2x5xf32>
    %57 = tpu.matmul %55, %56, %cst_47 {dimension_numbers = #tpu.dot_dimension_numbers<[1], [0], [0], [1], [0, 0, 1, 1], [], []>} : vector<2x16xf32>, vector<16x5xf32>, vector<2x5xf32> -> vector<2x5xf32>
    %c0_48 = arith.constant 0 : index
    %c0_49 = arith.constant 0 : index
    %58 = vector.load %arg17[%c0_48, %c0_49] : memref<1x5xf32, #tpu.memory_space<vmem>>, vector<1x5xf32>
    %59 = vector.broadcast %58 : vector<1x5xf32> to vector<2x5xf32>
    %60 = arith.addf %57, %59 : vector<2x5xf32>
    %c0_50 = arith.constant 0 : index
    %c0_51 = arith.constant 0 : index
    %61 = vector.load %arg20[%c0_50, %c0_51] : memref<2x5xf32, #tpu.memory_space<vmem>>, vector<2x5xf32>
    tpu.vector_store %arg20[%c0_50, %c0_51], %60 {strides = array<i32>} : memref<2x5xf32, #tpu.memory_space<vmem>>, vector<2x5xf32>,
    return
  }
}

</mosaic_0001>

<llo_original>
// kernel: mul.23
$region0: #{mul.23}
  #allocation0 [shape = 's32[1]{0}', space=sflag, size = 0x4, scoped, tag = 'scoped memory for mul.23']
  %s0 = inlined_call_operand.vmem [shape: f32[128,1], index: 0, kind: input, shape index: {}]
  %s1 = inlined_call_operand.vmem [shape: f32[128,1], index: 1, kind: input, shape index: {}]
  %s2 = inlined_call_operand.vmem [shape: f32[128,1], index: 2, kind: output, shape index: {}]
  %v3 = vld [vmem:[%s0] sm:$0x1]
  %v4 = vld [vmem:[%s1] sm:$0x1]
  %5 = xla_tuple %v3, %v4
  %6 = xla_tuple %5
  %v7 = vmul.f32 %v3, %v4
  %8 = xla_tuple %v7
  %9 = vst [vmem:[%s2] sm:$0x1] %v7

// kernel: _forward.4
$region0: #{_forward.4}
  #allocation0 [shape = 'u32[]', space=smem, size = 0x4, offset = 0x4, fixed_abs, tag = 'smem constant byte address 0x4 - core index']
  #allocation1 [shape = 'u32[144,128]{1,0:T(1,128)}', space=vmem, size = 0x12000, scoped, tag = 'internal scratch']
  %s0 = inlined_call_operand.vmem [shape: f32[16,4], index: 0, kind: input, shape index: {}]
  %s1 = inlined_call_operand.vmem [shape: f32[128,1], index: 1, kind: input, shape index: {}]
  %s2 = inlined_call_operand.vmem [shape: f32[2,5], index: 2, kind: input, shape index: {}]
  %s3 = inlined_call_operand.vmem [shape: f32[16,1], index: 3, kind: input, shape index: {}]
  %s4 = inlined_call_operand.vmem [shape: f32[128,1], index: 4, kind: input, shape index: {}]
  %s5 = inlined_call_operand.vmem [shape: f32[4,16], index: 5, kind: input, shape index: {}]
  %s6 = inlined_call_operand.vmem [shape: f32[1,16], index: 6, kind: input, shape index: {}]
  %s7 = inlined_call_operand.vmem [shape: f32[16,32], index: 7, kind: input, shape index: {}]
  %s8 = inlined_call_operand.vmem [shape: f32[1,32], index: 8, kind: input, shape index: {}]
  %s9 = inlined_call_operand.vmem [shape: f32[1,8], index: 9, kind: input, shape index: {}]
  %s10 = inlined_call_operand.vmem [shape: f32[1,8], index: 10, kind: input, shape index: {}]
  %s11 = inlined_call_operand.vmem [shape: f32[8,16], index: 11, kind: input, shape index: {}]
  %s12 = inlined_call_operand.vmem [shape: f32[1,16], index: 12, kind: input, shape index: {}]
  %s13 = inlined_call_operand.vmem [shape: f32[5,16], index: 13, kind: input, shape index: {}]
  %s14 = inlined_call_operand.vmem [shape: f32[1,16], index: 14, kind: input, shape index: {}]
  %s15 = inlined_call_operand.vmem [shape: f32[16,16], index: 15, kind: input, shape index: {}]
  %s16 = inlined_call_operand.vmem [shape: f32[1,16], index: 16, kind: input, shape index: {}]
  %s17 = inlined_call_operand.vmem [shape: f32[16,32], index: 17, kind: output, shape index: {0}]
  %s18 = inlined_call_operand.vmem [shape: f32[128,16], index: 18, kind: output, shape index: {1}]
  %s19 = inlined_call_operand.vmem [shape: f32[2,16], index: 19, kind: output, shape index: {2}]
  %20 = xla_tuple %s17, %s18, %s19
  %s21 = sld [smem:[#allocation0]]
  $region94: #{_forward.4} parent=0
    _
  %s23 = ssub.s32 1, %s21
  %s24 = scalar_select 0, %s23, %s21
  // Predicated region
  $region2: #{_forward.4} parent=0 // pred_check
    _
  $region3: #{_forward.4} parent=0 // pred_check_branch
    %26 = sbr.rel (0) target = $region5
  $region4: #{_forward.4} parent=0 // pred_region
    _
  $region5: #{_forward.4} parent=0 // pred_fallthru
    _
  // Predicated region
  $region6: #{_forward.4} parent=0 // pred_check
    _
  $region7: #{_forward.4} parent=0 // pred_check_branch
    %28 = sbr.rel (0) target = $region9
  $region8: #{_forward.4} parent=0 // pred_region
    _
  $region9: #{_forward.4} parent=0 // pred_fallthru
    _
  // Predicated region
  $region10: #{_forward.4} parent=0 // pred_check
    _
  $region11: #{_forward.4} parent=0 // pred_check_branch
    %30 = sbr.rel (0) target = $region13
  $region12: #{_forward.4} parent=0 // pred_region
    _
  $region13: #{_forward.4} parent=0 // pred_fallthru
    _
  // Predicated region
  $region14: #{_forward.4} parent=0 // pred_check
    _
  $region15: #{_forward.4} parent=0 // pred_check_branch
    %32 = sbr.rel (0) target = $region17
  $region16: #{_forward.4} parent=0 // pred_region
    _
  $region17: #{_forward.4} parent=0 // pred_fallthru
    _
  // Predicated region
  $region18: #{_forward.4} parent=0 // pred_check
    _
  $region19: #{_forward.4} parent=0 // pred_check_branch
    %34 = sbr.rel (0) target = $region21
  $region20: #{_forward.4} parent=0 // pred_region
    _
  $region21: #{_forward.4} parent=0 // pred_fallthru
    _
  // Predicated region
  $region22: #{_forward.4} parent=0 // pred_check
    _
  $region23: #{_forward.4} parent=0 // pred_check_branch
    %36 = sbr.rel (0) target = $region25
  $region24: #{_forward.4} parent=0 // pred_region
    _
  $region25: #{_forward.4} parent=0 // pred_fallthru
    _
  // Predicated region
  $region26: #{_forward.4} parent=0 // pred_check
    _
  $region27: #{_forward.4} parent=0 // pred_check_branch
    %38 = sbr.rel (0) target = $region29
  $region28: #{_forward.4} parent=0 // pred_region
    _
  $region29: #{_forward.4} parent=0 // pred_fallthru
    _
  // Predicated region
  $region30: #{_forward.4} parent=0 // pred_check
    _
  $region31: #{_forward.4} parent=0 // pred_check_branch
    %40 = sbr.rel (0) target = $region33
  $region32: #{_forward.4} parent=0 // pred_region
    _
  $region33: #{_forward.4} parent=0 // pred_fallthru
    _
  // Predicated region
  $region34: #{_forward.4} parent=0 // pred_check
    _
  $region35: #{_forward.4} parent=0 // pred_check_branch
    %42 = sbr.rel (0) target = $region37
  $region36: #{_forward.4} parent=0 // pred_region
    _
  $region37: #{_forward.4} parent=0 // pred_fallthru
    _
  // Predicated region
  $region38: #{_forward.4} parent=0 // pred_check
    _
  $region39: #{_forward.4} parent=0 // pred_check_branch
    %44 = sbr.rel (0) target = $region41
  $region40: #{_forward.4} parent=0 // pred_region
    _
  $region41: #{_forward.4} parent=0 // pred_fallthru
    _
  // Predicated region
  $region42: #{_forward.4} parent=0 // pred_check
    _
  $region43: #{_forward.4} parent=0 // pred_check_branch
    %46 = sbr.rel (0) target = $region45
  $region44: #{_forward.4} parent=0 // pred_region
    _
  $region45: #{_forward.4} parent=0 // pred_fallthru
    _
  // Predicated region
  $region46: #{_forward.4} parent=0 // pred_check
    _
  $region47: #{_forward.4} parent=0 // pred_check_branch
    %48 = sbr.rel (0) target = $region49
  $region48: #{_forward.4} parent=0 // pred_region
    _
  $region49: #{_forward.4} parent=0 // pred_fallthru
    _
  // Predicated region
  $region50: #{_forward.4} parent=0 // pred_check
    _
  $region51: #{_forward.4} parent=0 // pred_check_branch
    %50 = sbr.rel (0) target = $region53
  $region52: #{_forward.4} parent=0 // pred_region
    _
  $region53: #{_forward.4} parent=0 // pred_fallthru
    _
  // Predicated region
  $region54: #{_forward.4} parent=0 // pred_check
    _
  $region55: #{_forward.4} parent=0 // pred_check_branch
    %52 = sbr.rel (0) target = $region57
  $region56: #{_forward.4} parent=0 // pred_region
    _
  $region57: #{_forward.4} parent=0 // pred_fallthru
    _
  // Predicated region
  $region58: #{_forward.4} parent=0 // pred_check
    _
  $region59: #{_forward.4} parent=0 // pred_check_branch
    %54 = sbr.rel (0) target = $region61
  $region60: #{_forward.4} parent=0 // pred_region
    _
  $region61: #{_forward.4} parent=0 // pred_fallthru
    _
  // Predicated region
  $region62: #{_forward.4} parent=0 // pred_check
    _
  $region63: #{_forward.4} parent=0 // pred_check_branch
    %56 = sbr.rel (0) target = $region65
  $region64: #{_forward.4} parent=0 // pred_region
    _
  $region65: #{_forward.4} parent=0 // pred_fallthru
    _
  // Predicated region
  $region66: #{_forward.4} parent=0 // pred_check
    _
  $region67: #{_forward.4} parent=0 // pred_check_branch
    %58 = sbr.rel (0) target = $region69
  $region68: #{_forward.4} parent=0 // pred_region
    _
  $region69: #{_forward.4} parent=0 // pred_fallthru
    _
  %v59 = vld [vmem:[%s0] sm:$0xff]
  %v60 = vld [vmem:[%s0 + $0x8] sm:$0xff]
  %v61 = vld [vmem:[%s5] sm:$0xf]
  %v62 = vld [vmem:[%s6] sm:$0x1]
  %v64 = vlaneseq
  %v65 = vshrl.u32 %v64, 7
  %v66 = vsub.s32 0, %v65
  %v67 = vrot.slane %v62, %v66
  %vm69 = vcmask 31744
  %v71 = vsel %vm69, %v59, 0
  %v74 = vsel %vm69, %v60, 0
  %vm76 = vcmask 1043456
  %v78 = vsel %vm76, %v61, 0
  %80 = vmatprep.subr.mxu0 0.0
  %81 = vmatpush1.msra.mxu0 %v78
  %82 = vmatprep.subr.mxu0 0.0
  %83 = vmatpush1.msra.mxu0 0.0
  %84 = vmatprep.subr.mxu0 0.0
  %85 = vmatpush1.msra.mxu0 0.0
  %86 = vmatprep.subr.mxu0 0.0
  %87 = vmatpush1.msra.mxu0 0.0
  %88 = vmatprep.subr.mxu0 0.0
  %89 = vmatpush1.msra.mxu0 0.0
  %90 = vmatprep.subr.mxu0 0.0
  %91 = vmatpush1.msra.mxu0 0.0
  %92 = vmatprep.subr.mxu0 0.0
  %93 = vmatpush1.msra.mxu0 0.0
  %94 = vmatprep.subr.mxu0 0.0
  %95 = vmatpush1.msra.mxu0 0.0
  %96 = vmatprep.subr.mxu0 0.0
  %97 = vmatpush1.msra.mxu0 0.0
  %98 = vmatprep.subr.mxu0 0.0
  %99 = vmatpush1.msra.mxu0 0.0
  %100 = vmatprep.subr.mxu0 0.0
  %101 = vmatpush1.msra.mxu0 0.0
  %102 = vmatprep.subr.mxu0 0.0
  %103 = vmatpush1.msra.mxu0 0.0
  %104 = vmatprep.subr.mxu0 0.0
  %105 = vmatpush1.msra.mxu0 0.0
  %106 = vmatprep.subr.mxu0 0.0
  %107 = vmatpush1.msra.mxu0 0.0
  %108 = vmatprep.subr.mxu0 0.0
  %109 = vmatpush1.msra.mxu0 0.0
  %110 = vmatprep.subr.mxu0 0.0
  %111 = vmatpush1.msra.mxu0 0.0
  %112 = vmatprep.subr.mxu0 0.0
  %113 = vmatpush1.msra.mxu0 0.0
  %114 = vmatprep.subr.mxu0 0.0
  %115 = vmatpush1.msra.mxu0 0.0
  %116 = vmatprep.subr.mxu0 0.0
  %117 = vmatpush1.msra.mxu0 0.0
  %118 = vmatprep.subr.mxu0 0.0
  %119 = vmatpush1.msra.mxu0 0.0
  %120 = vmatprep.subr.mxu0 0.0
  %121 = vmatpush1.msra.mxu0 0.0
  %122 = vmatprep.subr.mxu0 0.0
  %123 = vmatpush1.msra.mxu0 0.0
  %124 = vmatprep.subr.mxu0 0.0
  %125 = vmatpush1.msra.mxu0 0.0
  %126 = vmatprep.subr.mxu0 0.0
  %127 = vmatpush1.msra.mxu0 0.0
  %128 = vmatprep.subr.mxu0 0.0
  %129 = vmatpush1.msra.mxu0 0.0
  %130 = vmatprep.subr.mxu0 0.0
  %131 = vmatpush1.msra.mxu0 0.0
  %132 = vmatprep.subr.mxu0 0.0
  %133 = vmatpush1.msra.mxu0 0.0
  %134 = vmatprep.subr.mxu0 0.0
  %135 = vmatpush1.msra.mxu0 0.0
  %136 = vmatprep.subr.mxu0 0.0
  %137 = vmatpush1.msra.mxu0 0.0
  %138 = vmatprep.subr.mxu0 0.0
  %139 = vmatpush1.msra.mxu0 0.0
  %140 = vmatprep.subr.mxu0 0.0
  %141 = vmatpush1.msra.mxu0 0.0
  %142 = vmatprep.subr.mxu0 0.0
  %143 = vmatpush1.msra.mxu0 0.0
  %144 = vmatprep.mubr.f32.mxu0 0.0
  %145 = vmatmul.mubr.f32.gmra.mrb[0].mxu0 %v71
  %v146 = vpop.f32.mrb[0].mxu0
  %v147 = vadd.f32 %v67, %v146
  %v148 = vpop.f32.mrb[0].mxu0
  %149 = vmatprep.mubr.f32.mxu0 0.0
  %150 = vmatmul.mubr.f32.gmra.mrb[0].mxu0 %v74
  %v151 = vpop.f32.mrb[0].mxu0
  %v152 = vadd.f32 %v67, %v151
  %v153 = vpop.f32.mrb[0].mxu0
  %154 = vdwg.mxu0
  %v155 = vmax.f32 %v147, 0.0
  %v156 = vmax.f32 %v152, 0.0
  %v157 = vld [vmem:[%s7] sm:$0xff]
  %v158 = vld [vmem:[%s7 + $0x8] sm:$0xff]
  %v159 = vld [vmem:[%s8] sm:$0x1]
  %v161 = vlaneseq
  %v162 = vshrl.u32 %v161, 7
  %v163 = vsub.s32 0, %v162
  %v164 = vrot.slane %v159, %v163
  %vm166 = vcmask 130048
  %v168 = vsel %vm166, %v155, 0
  %v171 = vsel %vm166, %v156, 0
  %173 = vmatprep.subr.mxu0 0.0
  %174 = vmatpush1.msra.mxu0 %v157
  %175 = vmatprep.subr.mxu0 0.0
  %176 = vmatpush1.msra.mxu0 %v158
  %177 = vmatprep.subr.mxu0 0.0
  %178 = vmatpush1.msra.mxu0 0.0
  %179 = vmatprep.subr.mxu0 0.0
  %180 = vmatpush1.msra.mxu0 0.0
  %181 = vmatprep.subr.mxu0 0.0
  %182 = vmatpush1.msra.mxu0 0.0
  %183 = vmatprep.subr.mxu0 0.0
  %184 = vmatpush1.msra.mxu0 0.0
  %185 = vmatprep.subr.mxu0 0.0
  %186 = vmatpush1.msra.mxu0 0.0
  %187 = vmatprep.subr.mxu0 0.0
  %188 = vmatpush1.msra.mxu0 0.0
  %189 = vmatprep.subr.mxu0 0.0
  %190 = vmatpush1.msra.mxu0 0.0
  %191 = vmatprep.subr.mxu0 0.0
  %192 = vmatpush1.msra.mxu0 0.0
  %193 = vmatprep.subr.mxu0 0.0
  %194 = vmatpush1.msra.mxu0 0.0
  %195 = vmatprep.subr.mxu0 0.0
  %196 = vmatpush1.msra.mxu0 0.0
  %197 = vmatprep.subr.mxu0 0.0
  %198 = vmatpush1.msra.mxu0 0.0
  %199 = vmatprep.subr.mxu0 0.0
  %200 = vmatpush1.msra.mxu0 0.0
  %201 = vmatprep.subr.mxu0 0.0
  %202 = vmatpush1.msra.mxu0 0.0
  %203 = vmatprep.subr.mxu0 0.0
  %204 = vmatpush1.msra.mxu0 0.0
  %205 = vmatprep.subr.mxu0 0.0
  %206 = vmatpush1.msra.mxu0 0.0
  %207 = vmatprep.subr.mxu0 0.0
  %208 = vmatpush1.msra.mxu0 0.0
  %209 = vmatprep.subr.mxu0 0.0
  %210 = vmatpush1.msra.mxu0 0.0
  %211 = vmatprep.subr.mxu0 0.0
  %212 = vmatpush1.msra.mxu0 0.0
  %213 = vmatprep.subr.mxu0 0.0
  %214 = vmatpush1.msra.mxu0 0.0
  %215 = vmatprep.subr.mxu0 0.0
  %216 = vmatpush1.msra.mxu0 0.0
  %217 = vmatprep.subr.mxu0 0.0
  %218 = vmatpush1.msra.mxu0 0.0
  %219 = vmatprep.subr.mxu0 0.0
  %220 = vmatpush1.msra.mxu0 0.0
  %221 = vmatprep.subr.mxu0 0.0
  %222 = vmatpush1.msra.mxu0 0.0
  %223 = vmatprep.subr.mxu0 0.0
  %224 = vmatpush1.msra.mxu0 0.0
  %225 = vmatprep.subr.mxu0 0.0
  %226 = vmatpush1.msra.mxu0 0.0
  %227 = vmatprep.subr.mxu0 0.0
  %228 = vmatpush1.msra.mxu0 0.0
  %229 = vmatprep.subr.mxu0 0.0
  %230 = vmatpush1.msra.mxu0 0.0
  %231 = vmatprep.subr.mxu0 0.0
  %232 = vmatpush1.msra.mxu0 0.0
  %233 = vmatprep.subr.mxu0 0.0
  %234 = vmatpush1.msra.mxu0 0.0
  %235 = vmatprep.subr.mxu0 0.0
  %236 = vmatpush1.msra.mxu0 0.0
  %237 = vmatprep.mubr.f32.mxu0 0.0
  %238 = vmatmul.mubr.f32.gmra.mrb[0].mxu0 %v168
  %v239 = vpop.f32.mrb[0].mxu0
  %v240 = vadd.f32 %v164, %v239
  %v241 = vpop.f32.mrb[0].mxu0
  %242 = vmatprep.mubr.f32.mxu0 0.0
  %243 = vmatmul.mubr.f32.gmra.mrb[0].mxu0 %v171
  %v244 = vpop.f32.mrb[0].mxu0
  %v245 = vadd.f32 %v164, %v244
  %v246 = vpop.f32.mrb[0].mxu0
  %247 = vdwg.mxu0
  %v248 = vmax.f32 %v240, 0.0
  %v249 = vmax.f32 %v245, 0.0
  %v250 = vld [vmem:[%s3] sm:$0xff]
  %v251 = vld [vmem:[%s3 + $0x8] sm:$0xff]
  %253 = vset.pattern.permute.xlu0 0
  %254 = vperm.xlu0 %253, %v250
  %v255 = vpop.permute.xlu0 %254
  %258 = vset.pattern.permute.xlu0 0
  %259 = vperm.xlu0 %258, %v251
  %v260 = vpop.permute.xlu0 %259
  %v262 = vmul.f32 %v248, %v255
  %v263 = vmul.f32 %v249, %v260
  %vm264 = vcmask 261120
  %265 = vst.msk [vmem:[%s17] sm:$0xff] %vm264, %v262
  %266 = vst.msk [vmem:[%s17 + $0x8] sm:$0xff] %vm264, %v263
  %v267 = vld [vmem:[%s1] sm:$0xff]
  %v268 = vld [vmem:[%s1 + $0x8] sm:$0xff]
  %v269 = vld [vmem:[%s1 + $0x10] sm:$0xff]
  %v270 = vld [vmem:[%s1 + $0x18] sm:$0xff]
  %v271 = vld [vmem:[%s1 + $0x20] sm:$0xff]
  %v272 = vld [vmem:[%s1 + $0x28] sm:$0xff]
  %v273 = vld [vmem:[%s1 + $0x30] sm:$0xff]
  %v274 = vld [vmem:[%s1 + $0x38] sm:$0xff]
  %v275 = vld [vmem:[%s1 + $0x40] sm:$0xff]
  %v276 = vld [vmem:[%s1 + $0x48] sm:$0xff]
  %v277 = vld [vmem:[%s1 + $0x50] sm:$0xff]
  %v278 = vld [vmem:[%s1 + $0x58] sm:$0xff]
  %v279 = vld [vmem:[%s1 + $0x60] sm:$0xff]
  %v280 = vld [vmem:[%s1 + $0x68] sm:$0xff]
  %v281 = vld [vmem:[%s1 + $0x70] sm:$0xff]
  %v282 = vld [vmem:[%s1 + $0x78] sm:$0xff]
  %v283 = vld [vmem:[%s9] sm:$0x1]
  %285 = vset.pattern.permute.xlu0 0
  %286 = vperm.xlu0 %285, %v267
  %v287 = vpop.permute.xlu0 %286
  %290 = vset.pattern.permute.xlu0 0
  %291 = vperm.xlu0 %290, %v268
  %v292 = vpop.permute.xlu0 %291
  %295 = vset.pattern.permute.xlu0 0
  %296 = vperm.xlu0 %295, %v269
  %v297 = vpop.permute.xlu0 %296
  %300 = vset.pattern.permute.xlu0 0
  %301 = vperm.xlu0 %300, %v270
  %v302 = vpop.permute.xlu0 %301
  %305 = vset.pattern.permute.xlu0 0
  %306 = vperm.xlu0 %305, %v271
  %v307 = vpop.permute.xlu0 %306
  %310 = vset.pattern.permute.xlu0 0
  %311 = vperm.xlu0 %310, %v272
  %v312 = vpop.permute.xlu0 %311
  %315 = vset.pattern.permute.xlu0 0
  %316 = vperm.xlu0 %315, %v273
  %v317 = vpop.permute.xlu0 %316
  %320 = vset.pattern.permute.xlu0 0
  %321 = vperm.xlu0 %320, %v274
  %v322 = vpop.permute.xlu0 %321
  %325 = vset.pattern.permute.xlu0 0
  %326 = vperm.xlu0 %325, %v275
  %v327 = vpop.permute.xlu0 %326
  %330 = vset.pattern.permute.xlu0 0
  %331 = vperm.xlu0 %330, %v276
  %v332 = vpop.permute.xlu0 %331
  %335 = vset.pattern.permute.xlu0 0
  %336 = vperm.xlu0 %335, %v277
  %v337 = vpop.permute.xlu0 %336
  %340 = vset.pattern.permute.xlu0 0
  %341 = vperm.xlu0 %340, %v278
  %v342 = vpop.permute.xlu0 %341
  %345 = vset.pattern.permute.xlu0 0
  %346 = vperm.xlu0 %345, %v279
  %v347 = vpop.permute.xlu0 %346
  %350 = vset.pattern.permute.xlu0 0
  %351 = vperm.xlu0 %350, %v280
  %v352 = vpop.permute.xlu0 %351
  %355 = vset.pattern.permute.xlu0 0
  %356 = vperm.xlu0 %355, %v281
  %v357 = vpop.permute.xlu0 %356
  %360 = vset.pattern.permute.xlu0 0
  %361 = vperm.xlu0 %360, %v282
  %v362 = vpop.permute.xlu0 %361
  %v365 = vlaneseq
  %v366 = vshrl.u32 %v365, 7
  %v367 = vsub.s32 0, %v366
  %v368 = vrot.slane %v283, %v367
  %v370 = vmul.f32 %v287, %v368
  %v371 = vmul.f32 %v292, %v368
  %v372 = vmul.f32 %v297, %v368
  %v373 = vmul.f32 %v302, %v368
  %v374 = vmul.f32 %v307, %v368
  %v375 = vmul.f32 %v312, %v368
  %v376 = vmul.f32 %v317, %v368
  %v377 = vmul.f32 %v322, %v368
  %v378 = vmul.f32 %v327, %v368
  %v379 = vmul.f32 %v332, %v368
  %v380 = vmul.f32 %v337, %v368
  %v381 = vmul.f32 %v342, %v368
  %v382 = vmul.f32 %v347, %v368
  %v383 = vmul.f32 %v352, %v368
  %v384 = vmul.f32 %v357, %v368
  %v385 = vmul.f32 %v362, %v368
  %v386 = vld [vmem:[%s10] sm:$0x1]
  %v388 = vlaneseq
  %v389 = vshrl.u32 %v388, 7
  %v390 = vsub.s32 0, %v389
  %v391 = vrot.slane %v386, %v390
  %v393 = vadd.f32 %v370, %v391
  %v394 = vadd.f32 %v371, %v391
  %v395 = vadd.f32 %v372, %v391
  %v396 = vadd.f32 %v373, %v391
  %v397 = vadd.f32 %v374, %v391
  %v398 = vadd.f32 %v375, %v391
  %v399 = vadd.f32 %v376, %v391
  %v400 = vadd.f32 %v377, %v391
  %v401 = vadd.f32 %v378, %v391
  %v402 = vadd.f32 %v379, %v391
  %v403 = vadd.f32 %v380, %v391
  %v404 = vadd.f32 %v381, %v391
  %v405 = vadd.f32 %v382, %v391
  %v406 = vadd.f32 %v383, %v391
  %v407 = vadd.f32 %v384, %v391
  %v408 = vadd.f32 %v385, %v391
  %v409 = vmax.f32 %v393, 0.0
  %v410 = vmax.f32 %v394, 0.0
  %v411 = vmax.f32 %v395, 0.0
  %v412 = vmax.f32 %v396, 0.0
  %v413 = vmax.f32 %v397, 0.0
  %v414 = vmax.f32 %v398, 0.0
  %v415 = vmax.f32 %v399, 0.0
  %v416 = vmax.f32 %v400, 0.0
  %v417 = vmax.f32 %v401, 0.0
  %v418 = vmax.f32 %v402, 0.0
  %v419 = vmax.f32 %v403, 0.0
  %v420 = vmax.f32 %v404, 0.0
  %v421 = vmax.f32 %v405, 0.0
  %v422 = vmax.f32 %v406, 0.0
  %v423 = vmax.f32 %v407, 0.0
  %v424 = vmax.f32 %v408, 0.0
  %v425 = vld [vmem:[%s11] sm:$0xff]
  %v426 = vld [vmem:[%s12] sm:$0x1]
  %v428 = vlaneseq
  %v429 = vshrl.u32 %v428, 7
  %v430 = vsub.s32 0, %v429
  %v431 = vrot.slane %v426, %v430
  %vm433 = vcmask 64512
  %v435 = vsel %vm433, %v409, 0
  %v438 = vsel %vm433, %v410, 0
  %v441 = vsel %vm433, %v411, 0
  %v444 = vsel %vm433, %v412, 0
  %v447 = vsel %vm433, %v413, 0
  %v450 = vsel %vm433, %v414, 0
  %v453 = vsel %vm433, %v415, 0
  %v456 = vsel %vm433, %v416, 0
  %v459 = vsel %vm433, %v417, 0
  %v462 = vsel %vm433, %v418, 0
  %v465 = vsel %vm433, %v419, 0
  %v468 = vsel %vm433, %v420, 0
  %v471 = vsel %vm433, %v421, 0
  %v474 = vsel %vm433, %v422, 0
  %v477 = vsel %vm433, %v423, 0
  %v480 = vsel %vm433, %v424, 0
  %482 = vmatprep.subr.mxu0 0.0
  %483 = vmatpush1.msra.mxu0 %v425
  %484 = vmatprep.subr.mxu0 0.0
  %485 = vmatpush1.msra.mxu0 0.0
  %486 = vmatprep.subr.mxu0 0.0
  %487 = vmatpush1.msra.mxu0 0.0
  %488 = vmatprep.subr.mxu0 0.0
  %489 = vmatpush1.msra.mxu0 0.0
  %490 = vmatprep.subr.mxu0 0.0
  %491 = vmatpush1.msra.mxu0 0.0
  %492 = vmatprep.subr.mxu0 0.0
  %493 = vmatpush1.msra.mxu0 0.0
  %494 = vmatprep.subr.mxu0 0.0
  %495 = vmatpush1.msra.mxu0 0.0
  %496 = vmatprep.subr.mxu0 0.0
  %497 = vmatpush1.msra.mxu0 0.0
  %498 = vmatprep.subr.mxu0 0.0
  %499 = vmatpush1.msra.mxu0 0.0
  %500 = vmatprep.subr.mxu0 0.0
  %501 = vmatpush1.msra.mxu0 0.0
  %502 = vmatprep.subr.mxu0 0.0
  %503 = vmatpush1.msra.mxu0 0.0
  %504 = vmatprep.subr.mxu0 0.0
  %505 = vmatpush1.msra.mxu0 0.0
  %506 = vmatprep.subr.mxu0 0.0
  %507 = vmatpush1.msra.mxu0 0.0
  %508 = vmatprep.subr.mxu0 0.0
  %509 = vmatpush1.msra.mxu0 0.0
  %510 = vmatprep.subr.mxu0 0.0
  %511 = vmatpush1.msra.mxu0 0.0
  %512 = vmatprep.subr.mxu0 0.0
  %513 = vmatpush1.msra.mxu0 0.0
  %514 = vmatprep.subr.mxu0 0.0
  %515 = vmatpush1.msra.mxu0 0.0
  %516 = vmatprep.subr.mxu0 0.0
  %517 = vmatpush1.msra.mxu0 0.0
  %518 = vmatprep.subr.mxu0 0.0
  %519 = vmatpush1.msra.mxu0 0.0
  %520 = vmatprep.subr.mxu0 0.0
  %521 = vmatpush1.msra.mxu0 0.0
  %522 = vmatprep.subr.mxu0 0.0
  %523 = vmatpush1.msra.mxu0 0.0
  %524 = vmatprep.subr.mxu0 0.0
  %525 = vmatpush1.msra.mxu0 0.0
  %526 = vmatprep.subr.mxu0 0.0
  %527 = vmatpush1.msra.mxu0 0.0
  %528 = vmatprep.subr.mxu0 0.0
  %529 = vmatpush1.msra.mxu0 0.0
  %530 = vmatprep.subr.mxu0 0.0
  %531 = vmatpush1.msra.mxu0 0.0
  %532 = vmatprep.subr.mxu0 0.0
  %533 = vmatpush1.msra.mxu0 0.0
  %534 = vmatprep.subr.mxu0 0.0
  %535 = vmatpush1.msra.mxu0 0.0
  %536 = vmatprep.subr.mxu0 0.0
  %537 = vmatpush1.msra.mxu0 0.0
  %538 = vmatprep.subr.mxu0 0.0
  %539 = vmatpush1.msra.mxu0 0.0
  %540 = vmatprep.subr.mxu0 0.0
  %541 = vmatpush1.msra.mxu0 0.0
  %542 = vmatprep.subr.mxu0 0.0
  %543 = vmatpush1.msra.mxu0 0.0
  %544 = vmatprep.subr.mxu0 0.0
  %545 = vmatpush1.msra.mxu0 0.0
  %546 = vmatprep.mubr.f32.mxu0 0.0
  %547 = vmatmul.mubr.f32.gmra.mrb[0].mxu0 %v435
  %v548 = vpop.f32.mrb[0].mxu0
  %v549 = vadd.f32 %v431, %v548
  %v550 = vpop.f32.mrb[0].mxu0
  %551 = vmatprep.mubr.f32.mxu0 0.0
  %552 = vmatmul.mubr.f32.gmra.mrb[0].mxu0 %v438
  %v553 = vpop.f32.mrb[0].mxu0
  %v554 = vadd.f32 %v431, %v553
  %v555 = vpop.f32.mrb[0].mxu0
  %556 = vmatprep.mubr.f32.mxu0 0.0
  %557 = vmatmul.mubr.f32.gmra.mrb[0].mxu0 %v441
  %v558 = vpop.f32.mrb[0].mxu0
  %v559 = vadd.f32 %v431, %v558
  %v560 = vpop.f32.mrb[0].mxu0
  %561 = vmatprep.mubr.f32.mxu0 0.0
  %562 = vmatmul.mubr.f32.gmra.mrb[0].mxu0 %v444
  %v563 = vpop.f32.mrb[0].mxu0
  %v564 = vadd.f32 %v431, %v563
  %v565 = vpop.f32.mrb[0].mxu0
  %566 = vmatprep.mubr.f32.mxu0 0.0
  %567 = vmatmul.mubr.f32.gmra.mrb[0].mxu0 %v447
  %v568 = vpop.f32.mrb[0].mxu0
  %v569 = vadd.f32 %v431, %v568
  %v570 = vpop.f32.mrb[0].mxu0
  %571 = vmatprep.mubr.f32.mxu0 0.0
  %572 = vmatmul.mubr.f32.gmra.mrb[0].mxu0 %v450
  %v573 = vpop.f32.mrb[0].mxu0
  %v574 = vadd.f32 %v431, %v573
  %v575 = vpop.f32.mrb[0].mxu0
  %576 = vmatprep.mubr.f32.mxu0 0.0
  %577 = vmatmul.mubr.f32.gmra.mrb[0].mxu0 %v453
  %v578 = vpop.f32.mrb[0].mxu0
  %v579 = vadd.f32 %v431, %v578
  %v580 = vpop.f32.mrb[0].mxu0
  %581 = vmatprep.mubr.f32.mxu0 0.0
  %582 = vmatmul.mubr.f32.gmra.mrb[0].mxu0 %v456
  %v583 = vpop.f32.mrb[0].mxu0
  %v584 = vadd.f32 %v431, %v583
  %v585 = vpop.f32.mrb[0].mxu0
  %586 = vmatprep.mubr.f32.mxu0 0.0
  %587 = vmatmul.mubr.f32.gmra.mrb[0].mxu0 %v459
  %v588 = vpop.f32.mrb[0].mxu0
  %v589 = vadd.f32 %v431, %v588
  %v590 = vpop.f32.mrb[0].mxu0
  %591 = vmatprep.mubr.f32.mxu0 0.0
  %592 = vmatmul.mubr.f32.gmra.mrb[0].mxu0 %v462
  %v593 = vpop.f32.mrb[0].mxu0
  %v594 = vadd.f32 %v431, %v593
  %v595 = vpop.f32.mrb[0].mxu0
  %596 = vmatprep.mubr.f32.mxu0 0.0
  %597 = vmatmul.mubr.f32.gmra.mrb[0].mxu0 %v465
  %v598 = vpop.f32.mrb[0].mxu0
  %v599 = vadd.f32 %v431, %v598
  %v600 = vpop.f32.mrb[0].mxu0
  %601 = vmatprep.mubr.f32.mxu0 0.0
  %602 = vmatmul.mubr.f32.gmra.mrb[0].mxu0 %v468
  %v603 = vpop.f32.mrb[0].mxu0
  %v604 = vadd.f32 %v431, %v603
  %v605 = vpop.f32.mrb[0].mxu0
  %606 = vmatprep.mubr.f32.mxu0 0.0
  %607 = vmatmul.mubr.f32.gmra.mrb[0].mxu0 %v471
  %v608 = vpop.f32.mrb[0].mxu0
  %v609 = vadd.f32 %v431, %v608
  %v610 = vpop.f32.mrb[0].mxu0
  %611 = vmatprep.mubr.f32.mxu0 0.0
  %612 = vmatmul.mubr.f32.gmra.mrb[0].mxu0 %v474
  %v613 = vpop.f32.mrb[0].mxu0
  %v614 = vadd.f32 %v431, %v613
  %v615 = vpop.f32.mrb[0].mxu0
  %616 = vmatprep.mubr.f32.mxu0 0.0
  %617 = vmatmul.mubr.f32.gmra.mrb[0].mxu0 %v477
  %v618 = vpop.f32.mrb[0].mxu0
  %v619 = vadd.f32 %v431, %v618
  %v620 = vpop.f32.mrb[0].mxu0
  %621 = vmatprep.mubr.f32.mxu0 0.0
  %622 = vmatmul.mubr.f32.gmra.mrb[0].mxu0 %v480
  %v623 = vpop.f32.mrb[0].mxu0
  %v624 = vadd.f32 %v431, %v623
  %v625 = vpop.f32.mrb[0].mxu0
  %626 = vdwg.mxu0
  %v627 = vmax.f32 %v549, 0.0
  %v628 = vmax.f32 %v554, 0.0
  %v629 = vmax.f32 %v559, 0.0
  %v630 = vmax.f32 %v564, 0.0
  %v631 = vmax.f32 %v569, 0.0
  %v632 = vmax.f32 %v574, 0.0
  %v633 = vmax.f32 %v579, 0.0
  %v634 = vmax.f32 %v584, 0.0
  %v635 = vmax.f32 %v589, 0.0
  %v636 = vmax.f32 %v594, 0.0
  %v637 = vmax.f32 %v599, 0.0
  %v638 = vmax.f32 %v604, 0.0
  %v639 = vmax.f32 %v609, 0.0
  %v640 = vmax.f32 %v614, 0.0
  %v641 = vmax.f32 %v619, 0.0
  %v642 = vmax.f32 %v624, 0.0
  %v643 = vld [vmem:[%s4] sm:$0xff]
  %v644 = vld [vmem:[%s4 + $0x8] sm:$0xff]
  %v645 = vld [vmem:[%s4 + $0x10] sm:$0xff]
  %v646 = vld [vmem:[%s4 + $0x18] sm:$0xff]
  %v647 = vld [vmem:[%s4 + $0x20] sm:$0xff]
  %v648 = vld [vmem:[%s4 + $0x28] sm:$0xff]
  %v649 = vld [vmem:[%s4 + $0x30] sm:$0xff]
  %v650 = vld [vmem:[%s4 + $0x38] sm:$0xff]
  %v651 = vld [vmem:[%s4 + $0x40] sm:$0xff]
  %v652 = vld [vmem:[%s4 + $0x48] sm:$0xff]
  %v653 = vld [vmem:[%s4 + $0x50] sm:$0xff]
  %v654 = vld [vmem:[%s4 + $0x58] sm:$0xff]
  %v655 = vld [vmem:[%s4 + $0x60] sm:$0xff]
  %v656 = vld [vmem:[%s4 + $0x68] sm:$0xff]
  %v657 = vld [vmem:[%s4 + $0x70] sm:$0xff]
  %v658 = vld [vmem:[%s4 + $0x78] sm:$0xff]
  %660 = vset.pattern.permute.xlu0 0
  %661 = vperm.xlu0 %660, %v643
  %v662 = vpop.permute.xlu0 %661
  %665 = vset.pattern.permute.xlu0 0
  %666 = vperm.xlu0 %665, %v644
  %v667 = vpop.permute.xlu0 %666
  %670 = vset.pattern.permute.xlu0 0
  %671 = vperm.xlu0 %670, %v645
  %v672 = vpop.permute.xlu0 %671
  %675 = vset.pattern.permute.xlu0 0
  %676 = vperm.xlu0 %675, %v646
  %v677 = vpop.permute.xlu0 %676
  %680 = vset.pattern.permute.xlu0 0
  %681 = vperm.xlu0 %680, %v647
  %v682 = vpop.permute.xlu0 %681
  %685 = vset.pattern.permute.xlu0 0
  %686 = vperm.xlu0 %685, %v648
  %v687 = vpop.permute.xlu0 %686
  %690 = vset.pattern.permute.xlu0 0
  %691 = vperm.xlu0 %690, %v649
  %v692 = vpop.permute.xlu0 %691
  %695 = vset.pattern.permute.xlu0 0
  %696 = vperm.xlu0 %695, %v650
  %v697 = vpop.permute.xlu0 %696
  %700 = vset.pattern.permute.xlu0 0
  %701 = vperm.xlu0 %700, %v651
  %v702 = vpop.permute.xlu0 %701
  %705 = vset.pattern.permute.xlu0 0
  %706 = vperm.xlu0 %705, %v652
  %v707 = vpop.permute.xlu0 %706
  %710 = vset.pattern.permute.xlu0 0
  %711 = vperm.xlu0 %710, %v653
  %v712 = vpop.permute.xlu0 %711
  %715 = vset.pattern.permute.xlu0 0
  %716 = vperm.xlu0 %715, %v654
  %v717 = vpop.permute.xlu0 %716
  %720 = vset.pattern.permute.xlu0 0
  %721 = vperm.xlu0 %720, %v655
  %v722 = vpop.permute.xlu0 %721
  %725 = vset.pattern.permute.xlu0 0
  %726 = vperm.xlu0 %725, %v656
  %v727 = vpop.permute.xlu0 %726
  %730 = vset.pattern.permute.xlu0 0
  %731 = vperm.xlu0 %730, %v657
  %v732 = vpop.permute.xlu0 %731
  %735 = vset.pattern.permute.xlu0 0
  %736 = vperm.xlu0 %735, %v658
  %v737 = vpop.permute.xlu0 %736
  %v739 = vmul.f32 %v627, %v662
  %v740 = vmul.f32 %v628, %v667
  %v741 = vmul.f32 %v629, %v672
  %v742 = vmul.f32 %v630, %v677
  %v743 = vmul.f32 %v631, %v682
  %v744 = vmul.f32 %v632, %v687
  %v745 = vmul.f32 %v633, %v692
  %v746 = vmul.f32 %v634, %v697
  %v747 = vmul.f32 %v635, %v702
  %v748 = vmul.f32 %v636, %v707
  %v749 = vmul.f32 %v637, %v712
  %v750 = vmul.f32 %v638, %v717
  %v751 = vmul.f32 %v639, %v722
  %v752 = vmul.f32 %v640, %v727
  %v753 = vmul.f32 %v641, %v732
  %v754 = vmul.f32 %v642, %v737
  %755 = vst.msk [vmem:[%s18] sm:$0xff] %vm166, %v739
  %756 = vst.msk [vmem:[%s18 + $0x8] sm:$0xff] %vm166, %v740
  %757 = vst.msk [vmem:[%s18 + $0x10] sm:$0xff] %vm166, %v741
  %758 = vst.msk [vmem:[%s18 + $0x18] sm:$0xff] %vm166, %v742
  %759 = vst.msk [vmem:[%s18 + $0x20] sm:$0xff] %vm166, %v743
  %760 = vst.msk [vmem:[%s18 + $0x28] sm:$0xff] %vm166, %v744
  %761 = vst.msk [vmem:[%s18 + $0x30] sm:$0xff] %vm166, %v745
  %762 = vst.msk [vmem:[%s18 + $0x38] sm:$0xff] %vm166, %v746
  %763 = vst.msk [vmem:[%s18 + $0x40] sm:$0xff] %vm166, %v747
  %764 = vst.msk [vmem:[%s18 + $0x48] sm:$0xff] %vm166, %v748
  %765 = vst.msk [vmem:[%s18 + $0x50] sm:$0xff] %vm166, %v749
  %766 = vst.msk [vmem:[%s18 + $0x58] sm:$0xff] %vm166, %v750
  %767 = vst.msk [vmem:[%s18 + $0x60] sm:$0xff] %vm166, %v751
  %768 = vst.msk [vmem:[%s18 + $0x68] sm:$0xff] %vm166, %v752
  %769 = vst.msk [vmem:[%s18 + $0x70] sm:$0xff] %vm166, %v753
  %770 = vst.msk [vmem:[%s18 + $0x78] sm:$0xff] %vm166, %v754
  %v771 = vld [vmem:[%s2] sm:$0x3]
  %v772 = vld [vmem:[%s13] sm:$0x1f]
  %v773 = vld [vmem:[%s14] sm:$0x1]
  %v775 = vlaneseq
  %v776 = vshrl.u32 %v775, 7
  %v777 = vsub.s32 0, %v776
  %v778 = vrot.slane %v773, %v777
  %vm780 = vcmask 39936
  %v782 = vsel %vm780, %v771, 0
  %vm784 = vcmask 1044480
  %v786 = vsel %vm784, %v772, 0
  %788 = vmatprep.subr.mxu0 0.0
  %789 = vmatpush1.msra.mxu0 %v786
  %790 = vmatprep.subr.mxu0 0.0
  %791 = vmatpush1.msra.mxu0 0.0
  %792 = vmatprep.subr.mxu0 0.0
  %793 = vmatpush1.msra.mxu0 0.0
  %794 = vmatprep.subr.mxu0 0.0
  %795 = vmatpush1.msra.mxu0 0.0
  %796 = vmatprep.subr.mxu0 0.0
  %797 = vmatpush1.msra.mxu0 0.0
  %798 = vmatprep.subr.mxu0 0.0
  %799 = vmatpush1.msra.mxu0 0.0
  %800 = vmatprep.subr.mxu0 0.0
  %801 = vmatpush1.msra.mxu0 0.0
  %802 = vmatprep.subr.mxu0 0.0
  %803 = vmatpush1.msra.mxu0 0.0
  %804 = vmatprep.subr.mxu0 0.0
  %805 = vmatpush1.msra.mxu0 0.0
  %806 = vmatprep.subr.mxu0 0.0
  %807 = vmatpush1.msra.mxu0 0.0
  %808 = vmatprep.subr.mxu0 0.0
  %809 = vmatpush1.msra.mxu0 0.0
  %810 = vmatprep.subr.mxu0 0.0
  %811 = vmatpush1.msra.mxu0 0.0
  %812 = vmatprep.subr.mxu0 0.0
  %813 = vmatpush1.msra.mxu0 0.0
  %814 = vmatprep.subr.mxu0 0.0
  %815 = vmatpush1.msra.mxu0 0.0
  %816 = vmatprep.subr.mxu0 0.0
  %817 = vmatpush1.msra.mxu0 0.0
  %818 = vmatprep.subr.mxu0 0.0
  %819 = vmatpush1.msra.mxu0 0.0
  %820 = vmatprep.subr.mxu0 0.0
  %821 = vmatpush1.msra.mxu0 0.0
  %822 = vmatprep.subr.mxu0 0.0
  %823 = vmatpush1.msra.mxu0 0.0
  %824 = vmatprep.subr.mxu0 0.0
  %825 = vmatpush1.msra.mxu0 0.0
  %826 = vmatprep.subr.mxu0 0.0
  %827 = vmatpush1.msra.mxu0 0.0
  %828 = vmatprep.subr.mxu0 0.0
  %829 = vmatpush1.msra.mxu0 0.0
  %830 = vmatprep.subr.mxu0 0.0
  %831 = vmatpush1.msra.mxu0 0.0
  %832 = vmatprep.subr.mxu0 0.0
  %833 = vmatpush1.msra.mxu0 0.0
  %834 = vmatprep.subr.mxu0 0.0
  %835 = vmatpush1.msra.mxu0 0.0
  %836 = vmatprep.subr.mxu0 0.0
  %837 = vmatpush1.msra.mxu0 0.0
  %838 = vmatprep.subr.mxu0 0.0
  %839 = vmatpush1.msra.mxu0 0.0
  %840 = vmatprep.subr.mxu0 0.0
  %841 = vmatpush1.msra.mxu0 0.0
  %842 = vmatprep.subr.mxu0 0.0
  %843 = vmatpush1.msra.mxu0 0.0
  %844 = vmatprep.subr.mxu0 0.0
  %845 = vmatpush1.msra.mxu0 0.0
  %846 = vmatprep.subr.mxu0 0.0
  %847 = vmatpush1.msra.mxu0 0.0
  %848 = vmatprep.subr.mxu0 0.0
  %849 = vmatpush1.msra.mxu0 0.0
  %850 = vmatprep.subr.mxu0 0.0
  %851 = vmatpush1.msra.mxu0 0.0
  %852 = vmatprep.mubr.f32.mxu0 0.0
  %853 = vmatmul.mubr.f32.gmra.mrb[0].mxu0 %v782
  %v854 = vpop.f32.mrb[0].mxu0
  %v855 = vadd.f32 %v778, %v854
  %v856 = vpop.f32.mrb[0].mxu0
  %857 = vdwg.mxu0
  %v858 = vmax.f32 %v855, 0.0
  %v859 = vld [vmem:[%s15] sm:$0xff]
  %v860 = vld [vmem:[%s15 + $0x8] sm:$0xff]
  %v861 = vld [vmem:[%s16] sm:$0x1]
  %v863 = vlaneseq
  %v864 = vshrl.u32 %v863, 7
  %v865 = vsub.s32 0, %v864
  %v866 = vrot.slane %v861, %v865
  %v869 = vsel %vm166, %v858, 0
  %871 = vmatprep.subr.mxu0 0.0
  %872 = vmatpush1.msra.mxu0 %v859
  %873 = vmatprep.subr.mxu0 0.0
  %874 = vmatpush1.msra.mxu0 %v860
  %875 = vmatprep.subr.mxu0 0.0
  %876 = vmatpush1.msra.mxu0 0.0
  %877 = vmatprep.subr.mxu0 0.0
  %878 = vmatpush1.msra.mxu0 0.0
  %879 = vmatprep.subr.mxu0 0.0
  %880 = vmatpush1.msra.mxu0 0.0
  %881 = vmatprep.subr.mxu0 0.0
  %882 = vmatpush1.msra.mxu0 0.0
  %883 = vmatprep.subr.mxu0 0.0
  %884 = vmatpush1.msra.mxu0 0.0
  %885 = vmatprep.subr.mxu0 0.0
  %886 = vmatpush1.msra.mxu0 0.0
  %887 = vmatprep.subr.mxu0 0.0
  %888 = vmatpush1.msra.mxu0 0.0
  %889 = vmatprep.subr.mxu0 0.0
  %890 = vmatpush1.msra.mxu0 0.0
  %891 = vmatprep.subr.mxu0 0.0
  %892 = vmatpush1.msra.mxu0 0.0
  %893 = vmatprep.subr.mxu0 0.0
  %894 = vmatpush1.msra.mxu0 0.0
  %895 = vmatprep.subr.mxu0 0.0
  %896 = vmatpush1.msra.mxu0 0.0
  %897 = vmatprep.subr.mxu0 0.0
  %898 = vmatpush1.msra.mxu0 0.0
  %899 = vmatprep.subr.mxu0 0.0
  %900 = vmatpush1.msra.mxu0 0.0
  %901 = vmatprep.subr.mxu0 0.0
  %902 = vmatpush1.msra.mxu0 0.0
  %903 = vmatprep.subr.mxu0 0.0
  %904 = vmatpush1.msra.mxu0 0.0
  %905 = vmatprep.subr.mxu0 0.0
  %906 = vmatpush1.msra.mxu0 0.0
  %907 = vmatprep.subr.mxu0 0.0
  %908 = vmatpush1.msra.mxu0 0.0
  %909 = vmatprep.subr.mxu0 0.0
  %910 = vmatpush1.msra.mxu0 0.0
  %911 = vmatprep.subr.mxu0 0.0
  %912 = vmatpush1.msra.mxu0 0.0
  %913 = vmatprep.subr.mxu0 0.0
  %914 = vmatpush1.msra.mxu0 0.0
  %915 = vmatprep.subr.mxu0 0.0
  %916 = vmatpush1.msra.mxu0 0.0
  %917 = vmatprep.subr.mxu0 0.0
  %918 = vmatpush1.msra.mxu0 0.0
  %919 = vmatprep.subr.mxu0 0.0
  %920 = vmatpush1.msra.mxu0 0.0
  %921 = vmatprep.subr.mxu0 0.0
  %922 = vmatpush1.msra.mxu0 0.0
  %923 = vmatprep.subr.mxu0 0.0
  %924 = vmatpush1.msra.mxu0 0.0
  %925 = vmatprep.subr.mxu0 0.0
  %926 = vmatpush1.msra.mxu0 0.0
  %927 = vmatprep.subr.mxu0 0.0
  %928 = vmatpush1.msra.mxu0 0.0
  %929 = vmatprep.subr.mxu0 0.0
  %930 = vmatpush1.msra.mxu0 0.0
  %931 = vmatprep.subr.mxu0 0.0
  %932 = vmatpush1.msra.mxu0 0.0
  %933 = vmatprep.subr.mxu0 0.0
  %934 = vmatpush1.msra.mxu0 0.0
  %935 = vmatprep.mubr.f32.mxu0 0.0
  %936 = vmatmul.mubr.f32.gmra.mrb[0].mxu0 %v869
  %v937 = vpop.f32.mrb[0].mxu0
  %v938 = vadd.f32 %v866, %v937
  %v939 = vpop.f32.mrb[0].mxu0
  %940 = vdwg.mxu0
  %v941 = vmax.f32 %v938, 0.0
  %vm942 = vcmask 123904
  %943 = vst.msk [vmem:[%s19] sm:$0x3] %vm942, %v941
  // Predicated region
  $region70: #{_forward.4} parent=0 // pred_check
    _
  $region71: #{_forward.4} parent=0 // pred_check_branch
    %945 = sbr.rel (0) target = $region73
  $region72: #{_forward.4} parent=0 // pred_region
    _
  $region73: #{_forward.4} parent=0 // pred_fallthru
    _
  // Predicated region
  $region74: #{_forward.4} parent=0 // pred_check
    _
  $region75: #{_forward.4} parent=0 // pred_check_branch
    %947 = sbr.rel (0) target = $region77
  $region76: #{_forward.4} parent=0 // pred_region
    _
  $region77: #{_forward.4} parent=0 // pred_fallthru
    _
  // Predicated region
  $region78: #{_forward.4} parent=0 // pred_check
    _
  $region79: #{_forward.4} parent=0 // pred_check_branch
    %949 = sbr.rel (0) target = $region81
  $region80: #{_forward.4} parent=0 // pred_region
    _
  $region81: #{_forward.4} parent=0 // pred_fallthru
    _
  // Predicated region
  $region82: #{_forward.4} parent=0 // pred_check
    _
  $region83: #{_forward.4} parent=0 // pred_check_branch
    %951 = sbr.rel (0) target = $region85
  $region84: #{_forward.4} parent=0 // pred_region
    _
  $region85: #{_forward.4} parent=0 // pred_fallthru
    _
  // Predicated region
  $region86: #{_forward.4} parent=0 // pred_check
    _
  $region87: #{_forward.4} parent=0 // pred_check_branch
    %953 = sbr.rel (0) target = $region89
  $region88: #{_forward.4} parent=0 // pred_region
    _
  $region89: #{_forward.4} parent=0 // pred_fallthru
    _
  // Predicated region
  $region90: #{_forward.4} parent=0 // pred_check
    _
  $region91: #{_forward.4} parent=0 // pred_check_branch
    %955 = sbr.rel (0) target = $region93
  $region92: #{_forward.4} parent=0 // pred_region
    _
  $region93: #{_forward.4} parent=0 // pred_fallthru
    _

// kernel: _forward.7
$region0: #{_forward.7}
  #allocation0 [shape = 'u32[]', space=smem, size = 0x4, offset = 0x4, fixed_abs, tag = 'smem constant byte address 0x4 - core index']
  #allocation1 [shape = 'u32[144,128]{1,0:T(1,128)}', space=vmem, size = 0x12000, scoped, tag = 'internal scratch']
  %s0 = inlined_call_operand.vmem [shape: f32[16,32], index: 0, kind: input, shape index: {}]
  %s1 = inlined_call_operand.vmem [shape: f32[128,16], index: 1, kind: input, shape index: {}]
  %s2 = inlined_call_operand.vmem [shape: f32[2,16], index: 2, kind: input, shape index: {}]
  %s3 = inlined_call_operand.vmem [shape: f32[16,1], index: 3, kind: input, shape index: {}]
  %s4 = inlined_call_operand.vmem [shape: f32[128,1], index: 4, kind: input, shape index: {}]
  %s5 = inlined_call_operand.vmem [shape: f32[128,1], index: 5, kind: input, shape index: {}]
  %s6 = inlined_call_operand.vmem [shape: f32[32,16], index: 6, kind: input, shape index: {}]
  %s7 = inlined_call_operand.vmem [shape: f32[1,16], index: 7, kind: input, shape index: {}]
  %s8 = inlined_call_operand.vmem [shape: f32[16,4], index: 8, kind: input, shape index: {}]
  %s9 = inlined_call_operand.vmem [shape: f32[1,4], index: 9, kind: input, shape index: {}]
  %s10 = inlined_call_operand.vmem [shape: f32[16,8], index: 10, kind: input, shape index: {}]
  %s11 = inlined_call_operand.vmem [shape: f32[1,8], index: 11, kind: input, shape index: {}]
  %s12 = inlined_call_operand.vmem [shape: f32[8,2], index: 12, kind: input, shape index: {}]
  %s13 = inlined_call_operand.vmem [shape: f32[1,2], index: 13, kind: input, shape index: {}]
  %s14 = inlined_call_operand.vmem [shape: f32[16,16], index: 14, kind: input, shape index: {}]
  %s15 = inlined_call_operand.vmem [shape: f32[1,16], index: 15, kind: input, shape index: {}]
  %s16 = inlined_call_operand.vmem [shape: f32[16,5], index: 16, kind: input, shape index: {}]
  %s17 = inlined_call_operand.vmem [shape: f32[1,5], index: 17, kind: input, shape index: {}]
  %s18 = inlined_call_operand.vmem [shape: f32[16,4], index: 18, kind: output, shape index: {0}]
  %s19 = inlined_call_operand.vmem [shape: f32[128,2], index: 19, kind: output, shape index: {1}]
  %s20 = inlined_call_operand.hbm [shape: f32[2,5], index: 20, kind: output, shape index: {2}]
  %21 = xla_tuple %s18, %s19, %s20
  %s22 = sld [smem:[#allocation0]]
  $region98: #{_forward.7} parent=0
    _
  %s24 = ssub.s32 1, %s22
  %s25 = scalar_select 0, %s24, %s22
  $region1: #{_forward.7} parent=0
    #allocation2 [shape = 'u8[1024]{0}', space=vmem, size = 0x400, scoped, tag = 'output window, operand 2, single buffered']
    #allocation3 [shape = 's32[1]{0}', space=sflag, size = 0x4, scoped, tag = 'scoped memory for _forward.7']
    %26 = vsyncpa [#allocation3], 0
    // Predicated region
    $region2: #{_forward.7} parent=1 // pred_check
      _
    $region3: #{_forward.7} parent=1 // pred_check_branch
      %28 = sbr.rel (0) target = $region5
    $region4: #{_forward.7} parent=1 // pred_region
      _
    $region5: #{_forward.7} parent=1 // pred_fallthru
      _
    // Predicated region
    $region6: #{_forward.7} parent=1 // pred_check
      _
    $region7: #{_forward.7} parent=1 // pred_check_branch
      %30 = sbr.rel (0) target = $region9
    $region8: #{_forward.7} parent=1 // pred_region
      _
    $region9: #{_forward.7} parent=1 // pred_fallthru
      _
    // Predicated region
    $region10: #{_forward.7} parent=1 // pred_check
      _
    $region11: #{_forward.7} parent=1 // pred_check_branch
      %32 = sbr.rel (0) target = $region13
    $region12: #{_forward.7} parent=1 // pred_region
      _
    $region13: #{_forward.7} parent=1 // pred_fallthru
      _
    // Predicated region
    $region14: #{_forward.7} parent=1 // pred_check
      _
    $region15: #{_forward.7} parent=1 // pred_check_branch
      %34 = sbr.rel (0) target = $region17
    $region16: #{_forward.7} parent=1 // pred_region
      _
    $region17: #{_forward.7} parent=1 // pred_fallthru
      _
    // Predicated region
    $region18: #{_forward.7} parent=1 // pred_check
      _
    $region19: #{_forward.7} parent=1 // pred_check_branch
      %36 = sbr.rel (0) target = $region21
    $region20: #{_forward.7} parent=1 // pred_region
      _
    $region21: #{_forward.7} parent=1 // pred_fallthru
      _
    // Predicated region
    $region22: #{_forward.7} parent=1 // pred_check
      _
    $region23: #{_forward.7} parent=1 // pred_check_branch
      %38 = sbr.rel (0) target = $region25
    $region24: #{_forward.7} parent=1 // pred_region
      _
    $region25: #{_forward.7} parent=1 // pred_fallthru
      _
    // Predicated region
    $region26: #{_forward.7} parent=1 // pred_check
      _
    $region27: #{_forward.7} parent=1 // pred_check_branch
      %40 = sbr.rel (0) target = $region29
    $region28: #{_forward.7} parent=1 // pred_region
      _
    $region29: #{_forward.7} parent=1 // pred_fallthru
      _
    // Predicated region
    $region30: #{_forward.7} parent=1 // pred_check
      _
    $region31: #{_forward.7} parent=1 // pred_check_branch
      %42 = sbr.rel (0) target = $region33
    $region32: #{_forward.7} parent=1 // pred_region
      _
    $region33: #{_forward.7} parent=1 // pred_fallthru
      _
    // Predicated region
    $region34: #{_forward.7} parent=1 // pred_check
      _
    $region35: #{_forward.7} parent=1 // pred_check_branch
      %44 = sbr.rel (0) target = $region37
    $region36: #{_forward.7} parent=1 // pred_region
      _
    $region37: #{_forward.7} parent=1 // pred_fallthru
      _
    // Predicated region
    $region38: #{_forward.7} parent=1 // pred_check
      _
    $region39: #{_forward.7} parent=1 // pred_check_branch
      %46 = sbr.rel (0) target = $region41
    $region40: #{_forward.7} parent=1 // pred_region
      _
    $region41: #{_forward.7} parent=1 // pred_fallthru
      _
    // Predicated region
    $region42: #{_forward.7} parent=1 // pred_check
      _
    $region43: #{_forward.7} parent=1 // pred_check_branch
      %48 = sbr.rel (0) target = $region45
    $region44: #{_forward.7} parent=1 // pred_region
      _
    $region45: #{_forward.7} parent=1 // pred_fallthru
      _
    // Predicated region
    $region46: #{_forward.7} parent=1 // pred_check
      _
    $region47: #{_forward.7} parent=1 // pred_check_branch
      %50 = sbr.rel (0) target = $region49
    $region48: #{_forward.7} parent=1 // pred_region
      _
    $region49: #{_forward.7} parent=1 // pred_fallthru
      _
    // Predicated region
    $region50: #{_forward.7} parent=1 // pred_check
      _
    $region51: #{_forward.7} parent=1 // pred_check_branch
      %52 = sbr.rel (0) target = $region53
    $region52: #{_forward.7} parent=1 // pred_region
      _
    $region53: #{_forward.7} parent=1 // pred_fallthru
      _
    // Predicated region
    $region54: #{_forward.7} parent=1 // pred_check
      _
    $region55: #{_forward.7} parent=1 // pred_check_branch
      %54 = sbr.rel (0) target = $region57
    $region56: #{_forward.7} parent=1 // pred_region
      _
    $region57: #{_forward.7} parent=1 // pred_fallthru
      _
    // Predicated region
    $region58: #{_forward.7} parent=1 // pred_check
      _
    $region59: #{_forward.7} parent=1 // pred_check_branch
      %56 = sbr.rel (0) target = $region61
    $region60: #{_forward.7} parent=1 // pred_region
      _
    $region61: #{_forward.7} parent=1 // pred_fallthru
      _
    // Predicated region
    $region62: #{_forward.7} parent=1 // pred_check
      _
    $region63: #{_forward.7} parent=1 // pred_check_branch
      %58 = sbr.rel (0) target = $region65
    $region64: #{_forward.7} parent=1 // pred_region
      _
    $region65: #{_forward.7} parent=1 // pred_fallthru
      _
    // Predicated region
    $region66: #{_forward.7} parent=1 // pred_check
      _
    $region67: #{_forward.7} parent=1 // pred_check_branch
      %60 = sbr.rel (0) target = $region69
    $region68: #{_forward.7} parent=1 // pred_region
      _
    $region69: #{_forward.7} parent=1 // pred_fallthru
      _
    // Predicated region
    $region70: #{_forward.7} parent=1 // pred_check
      _
    $region71: #{_forward.7} parent=1 // pred_check_branch
      %62 = sbr.rel (0) target = $region73
    $region72: #{_forward.7} parent=1 // pred_region
      _
    $region73: #{_forward.7} parent=1 // pred_fallthru
      _
    %v63 = vld [vmem:[%s0] sm:$0xff]
    %v64 = vld [vmem:[%s0 + $0x8] sm:$0xff]
    %v65 = vld [vmem:[%s6] sm:$0xff]
    %v66 = vld [vmem:[%s6 + $0x8] sm:$0xff]
    %v67 = vld [vmem:[%s6 + $0x10] sm:$0xff]
    %v68 = vld [vmem:[%s6 + $0x18] sm:$0xff]
    %v69 = vld [vmem:[%s7] sm:$0x1]
    %v71 = vlaneseq
    %v72 = vshrl.u32 %v71, 7
    %v73 = vsub.s32 0, %v72
    %v74 = vrot.slane %v69, %v73
    %vm76 = vcmask 261120
    %v78 = vsel %vm76, %v63, 0
    %v81 = vsel %vm76, %v64, 0
    %83 = vmatprep.subr.mxu0 0.0
    %84 = vmatpush1.msra.mxu0 %v65
    %85 = vmatprep.subr.mxu0 0.0
    %86 = vmatpush1.msra.mxu0 %v66
    %87 = vmatprep.subr.mxu0 0.0
    %88 = vmatpush1.msra.mxu0 %v67
    %89 = vmatprep.subr.mxu0 0.0
    %90 = vmatpush1.msra.mxu0 %v68
    %91 = vmatprep.subr.mxu0 0.0
    %92 = vmatpush1.msra.mxu0 0.0
    %93 = vmatprep.subr.mxu0 0.0
    %94 = vmatpush1.msra.mxu0 0.0
    %95 = vmatprep.subr.mxu0 0.0
    %96 = vmatpush1.msra.mxu0 0.0
    %97 = vmatprep.subr.mxu0 0.0
    %98 = vmatpush1.msra.mxu0 0.0
    %99 = vmatprep.subr.mxu0 0.0
    %100 = vmatpush1.msra.mxu0 0.0
    %101 = vmatprep.subr.mxu0 0.0
    %102 = vmatpush1.msra.mxu0 0.0
    %103 = vmatprep.subr.mxu0 0.0
    %104 = vmatpush1.msra.mxu0 0.0
    %105 = vmatprep.subr.mxu0 0.0
    %106 = vmatpush1.msra.mxu0 0.0
    %107 = vmatprep.subr.mxu0 0.0
    %108 = vmatpush1.msra.mxu0 0.0
    %109 = vmatprep.subr.mxu0 0.0
    %110 = vmatpush1.msra.mxu0 0.0
    %111 = vmatprep.subr.mxu0 0.0
    %112 = vmatpush1.msra.mxu0 0.0
    %113 = vmatprep.subr.mxu0 0.0
    %114 = vmatpush1.msra.mxu0 0.0
    %115 = vmatprep.subr.mxu0 0.0
    %116 = vmatpush1.msra.mxu0 0.0
    %117 = vmatprep.subr.mxu0 0.0
    %118 = vmatpush1.msra.mxu0 0.0
    %119 = vmatprep.subr.mxu0 0.0
    %120 = vmatpush1.msra.mxu0 0.0
    %121 = vmatprep.subr.mxu0 0.0
    %122 = vmatpush1.msra.mxu0 0.0
    %123 = vmatprep.subr.mxu0 0.0
    %124 = vmatpush1.msra.mxu0 0.0
    %125 = vmatprep.subr.mxu0 0.0
    %126 = vmatpush1.msra.mxu0 0.0
    %127 = vmatprep.subr.mxu0 0.0
    %128 = vmatpush1.msra.mxu0 0.0
    %129 = vmatprep.subr.mxu0 0.0
    %130 = vmatpush1.msra.mxu0 0.0
    %131 = vmatprep.subr.mxu0 0.0
    %132 = vmatpush1.msra.mxu0 0.0
    %133 = vmatprep.subr.mxu0 0.0
    %134 = vmatpush1.msra.mxu0 0.0
    %135 = vmatprep.subr.mxu0 0.0
    %136 = vmatpush1.msra.mxu0 0.0
    %137 = vmatprep.subr.mxu0 0.0
    %138 = vmatpush1.msra.mxu0 0.0
    %139 = vmatprep.subr.mxu0 0.0
    %140 = vmatpush1.msra.mxu0 0.0
    %141 = vmatprep.subr.mxu0 0.0
    %142 = vmatpush1.msra.mxu0 0.0
    %143 = vmatprep.subr.mxu0 0.0
    %144 = vmatpush1.msra.mxu0 0.0
    %145 = vmatprep.subr.mxu0 0.0
    %146 = vmatpush1.msra.mxu0 0.0
    %147 = vmatprep.mubr.f32.mxu0 0.0
    %148 = vmatmul.mubr.f32.gmra.mrb[0].mxu0 %v78
    %v149 = vpop.f32.mrb[0].mxu0
    %v150 = vadd.f32 %v74, %v149
    %v151 = vpop.f32.mrb[0].mxu0
    %152 = vmatprep.mubr.f32.mxu0 0.0
    %153 = vmatmul.mubr.f32.gmra.mrb[0].mxu0 %v81
    %v154 = vpop.f32.mrb[0].mxu0
    %v155 = vadd.f32 %v74, %v154
    %v156 = vpop.f32.mrb[0].mxu0
    %157 = vdwg.mxu0
    %v158 = vmax.f32 %v150, 0.0
    %v159 = vmax.f32 %v155, 0.0
    %v160 = vld [vmem:[%s8] sm:$0xff]
    %v161 = vld [vmem:[%s8 + $0x8] sm:$0xff]
    %v162 = vld [vmem:[%s9] sm:$0x1]
    %v164 = vlaneseq
    %v165 = vshrl.u32 %v164, 7
    %v166 = vsub.s32 0, %v165
    %v167 = vrot.slane %v162, %v166
    %vm169 = vcmask 130048
    %v171 = vsel %vm169, %v158, 0
    %v174 = vsel %vm169, %v159, 0
    %176 = vmatprep.subr.mxu0 0.0
    %177 = vmatpush1.msra.mxu0 %v160
    %178 = vmatprep.subr.mxu0 0.0
    %179 = vmatpush1.msra.mxu0 %v161
    %180 = vmatprep.subr.mxu0 0.0
    %181 = vmatpush1.msra.mxu0 0.0
    %182 = vmatprep.subr.mxu0 0.0
    %183 = vmatpush1.msra.mxu0 0.0
    %184 = vmatprep.subr.mxu0 0.0
    %185 = vmatpush1.msra.mxu0 0.0
    %186 = vmatprep.subr.mxu0 0.0
    %187 = vmatpush1.msra.mxu0 0.0
    %188 = vmatprep.subr.mxu0 0.0
    %189 = vmatpush1.msra.mxu0 0.0
    %190 = vmatprep.subr.mxu0 0.0
    %191 = vmatpush1.msra.mxu0 0.0
    %192 = vmatprep.subr.mxu0 0.0
    %193 = vmatpush1.msra.mxu0 0.0
    %194 = vmatprep.subr.mxu0 0.0
    %195 = vmatpush1.msra.mxu0 0.0
    %196 = vmatprep.subr.mxu0 0.0
    %197 = vmatpush1.msra.mxu0 0.0
    %198 = vmatprep.subr.mxu0 0.0
    %199 = vmatpush1.msra.mxu0 0.0
    %200 = vmatprep.subr.mxu0 0.0
    %201 = vmatpush1.msra.mxu0 0.0
    %202 = vmatprep.subr.mxu0 0.0
    %203 = vmatpush1.msra.mxu0 0.0
    %204 = vmatprep.subr.mxu0 0.0
    %205 = vmatpush1.msra.mxu0 0.0
    %206 = vmatprep.subr.mxu0 0.0
    %207 = vmatpush1.msra.mxu0 0.0
    %208 = vmatprep.subr.mxu0 0.0
    %209 = vmatpush1.msra.mxu0 0.0
    %210 = vmatprep.subr.mxu0 0.0
    %211 = vmatpush1.msra.mxu0 0.0
    %212 = vmatprep.subr.mxu0 0.0
    %213 = vmatpush1.msra.mxu0 0.0
    %214 = vmatprep.subr.mxu0 0.0
    %215 = vmatpush1.msra.mxu0 0.0
    %216 = vmatprep.subr.mxu0 0.0
    %217 = vmatpush1.msra.mxu0 0.0
    %218 = vmatprep.subr.mxu0 0.0
    %219 = vmatpush1.msra.mxu0 0.0
    %220 = vmatprep.subr.mxu0 0.0
    %221 = vmatpush1.msra.mxu0 0.0
    %222 = vmatprep.subr.mxu0 0.0
    %223 = vmatpush1.msra.mxu0 0.0
    %224 = vmatprep.subr.mxu0 0.0
    %225 = vmatpush1.msra.mxu0 0.0
    %226 = vmatprep.subr.mxu0 0.0
    %227 = vmatpush1.msra.mxu0 0.0
    %228 = vmatprep.subr.mxu0 0.0
    %229 = vmatpush1.msra.mxu0 0.0
    %230 = vmatprep.subr.mxu0 0.0
    %231 = vmatpush1.msra.mxu0 0.0
    %232 = vmatprep.subr.mxu0 0.0
    %233 = vmatpush1.msra.mxu0 0.0
    %234 = vmatprep.subr.mxu0 0.0
    %235 = vmatpush1.msra.mxu0 0.0
    %236 = vmatprep.subr.mxu0 0.0
    %237 = vmatpush1.msra.mxu0 0.0
    %238 = vmatprep.subr.mxu0 0.0
    %239 = vmatpush1.msra.mxu0 0.0
    %240 = vmatprep.mubr.f32.mxu0 0.0
    %241 = vmatmul.mubr.f32.gmra.mrb[0].mxu0 %v171
    %v242 = vpop.f32.mrb[0].mxu0
    %v243 = vadd.f32 %v167, %v242
    %v244 = vpop.f32.mrb[0].mxu0
    %245 = vmatprep.mubr.f32.mxu0 0.0
    %246 = vmatmul.mubr.f32.gmra.mrb[0].mxu0 %v174
    %v247 = vpop.f32.mrb[0].mxu0
    %v248 = vadd.f32 %v167, %v247
    %v249 = vpop.f32.mrb[0].mxu0
    %250 = vdwg.mxu0
    %v251 = vld [vmem:[%s3] sm:$0xff]
    %v252 = vld [vmem:[%s3 + $0x8] sm:$0xff]
    %254 = vset.pattern.permute.xlu0 0
    %255 = vperm.xlu0 %254, %v251
    %v256 = vpop.permute.xlu0 %255
    %259 = vset.pattern.permute.xlu0 0
    %260 = vperm.xlu0 %259, %v252
    %v261 = vpop.permute.xlu0 %260
    %v263 = vmul.f32 %v243, %v256
    %v264 = vmul.f32 %v248, %v261
    %vm265 = vcmask 31744
    %266 = vst.msk [vmem:[%s18] sm:$0xff] %vm265, %v263
    %267 = vst.msk [vmem:[%s18 + $0x8] sm:$0xff] %vm265, %v264
    %v268 = vld [vmem:[%s1] sm:$0xff]
    %v269 = vld [vmem:[%s1 + $0x8] sm:$0xff]
    %v270 = vld [vmem:[%s1 + $0x10] sm:$0xff]
    %v271 = vld [vmem:[%s1 + $0x18] sm:$0xff]
    %v272 = vld [vmem:[%s1 + $0x20] sm:$0xff]
    %v273 = vld [vmem:[%s1 + $0x28] sm:$0xff]
    %v274 = vld [vmem:[%s1 + $0x30] sm:$0xff]
    %v275 = vld [vmem:[%s1 + $0x38] sm:$0xff]
    %v276 = vld [vmem:[%s1 + $0x40] sm:$0xff]
    %v277 = vld [vmem:[%s1 + $0x48] sm:$0xff]
    %v278 = vld [vmem:[%s1 + $0x50] sm:$0xff]
    %v279 = vld [vmem:[%s1 + $0x58] sm:$0xff]
    %v280 = vld [vmem:[%s1 + $0x60] sm:$0xff]
    %v281 = vld [vmem:[%s1 + $0x68] sm:$0xff]
    %v282 = vld [vmem:[%s1 + $0x70] sm:$0xff]
    %v283 = vld [vmem:[%s1 + $0x78] sm:$0xff]
    %v284 = vld [vmem:[%s10] sm:$0xff]
    %v285 = vld [vmem:[%s10 + $0x8] sm:$0xff]
    %v286 = vld [vmem:[%s11] sm:$0x1]
    %v288 = vlaneseq
    %v289 = vshrl.u32 %v288, 7
    %v290 = vsub.s32 0, %v289
    %v291 = vrot.slane %v286, %v290
    %v294 = vsel %vm169, %v268, 0
    %v297 = vsel %vm169, %v269, 0
    %v300 = vsel %vm169, %v270, 0
    %v303 = vsel %vm169, %v271, 0
    %v306 = vsel %vm169, %v272, 0
    %v309 = vsel %vm169, %v273, 0
    %v312 = vsel %vm169, %v274, 0
    %v315 = vsel %vm169, %v275, 0
    %v318 = vsel %vm169, %v276, 0
    %v321 = vsel %vm169, %v277, 0
    %v324 = vsel %vm169, %v278, 0
    %v327 = vsel %vm169, %v279, 0
    %v330 = vsel %vm169, %v280, 0
    %v333 = vsel %vm169, %v281, 0
    %v336 = vsel %vm169, %v282, 0
    %v339 = vsel %vm169, %v283, 0
    %341 = vmatprep.subr.mxu0 0.0
    %342 = vmatpush1.msra.mxu0 %v284
    %343 = vmatprep.subr.mxu0 0.0
    %344 = vmatpush1.msra.mxu0 %v285
    %345 = vmatprep.subr.mxu0 0.0
    %346 = vmatpush1.msra.mxu0 0.0
    %347 = vmatprep.subr.mxu0 0.0
    %348 = vmatpush1.msra.mxu0 0.0
    %349 = vmatprep.subr.mxu0 0.0
    %350 = vmatpush1.msra.mxu0 0.0
    %351 = vmatprep.subr.mxu0 0.0
    %352 = vmatpush1.msra.mxu0 0.0
    %353 = vmatprep.subr.mxu0 0.0
    %354 = vmatpush1.msra.mxu0 0.0
    %355 = vmatprep.subr.mxu0 0.0
    %356 = vmatpush1.msra.mxu0 0.0
    %357 = vmatprep.subr.mxu0 0.0
    %358 = vmatpush1.msra.mxu0 0.0
    %359 = vmatprep.subr.mxu0 0.0
    %360 = vmatpush1.msra.mxu0 0.0
    %361 = vmatprep.subr.mxu0 0.0
    %362 = vmatpush1.msra.mxu0 0.0
    %363 = vmatprep.subr.mxu0 0.0
    %364 = vmatpush1.msra.mxu0 0.0
    %365 = vmatprep.subr.mxu0 0.0
    %366 = vmatpush1.msra.mxu0 0.0
    %367 = vmatprep.subr.mxu0 0.0
    %368 = vmatpush1.msra.mxu0 0.0
    %369 = vmatprep.subr.mxu0 0.0
    %370 = vmatpush1.msra.mxu0 0.0
    %371 = vmatprep.subr.mxu0 0.0
    %372 = vmatpush1.msra.mxu0 0.0
    %373 = vmatprep.subr.mxu0 0.0
    %374 = vmatpush1.msra.mxu0 0.0
    %375 = vmatprep.subr.mxu0 0.0
    %376 = vmatpush1.msra.mxu0 0.0
    %377 = vmatprep.subr.mxu0 0.0
    %378 = vmatpush1.msra.mxu0 0.0
    %379 = vmatprep.subr.mxu0 0.0
    %380 = vmatpush1.msra.mxu0 0.0
    %381 = vmatprep.subr.mxu0 0.0
    %382 = vmatpush1.msra.mxu0 0.0
    %383 = vmatprep.subr.mxu0 0.0
    %384 = vmatpush1.msra.mxu0 0.0
    %385 = vmatprep.subr.mxu0 0.0
    %386 = vmatpush1.msra.mxu0 0.0
    %387 = vmatprep.subr.mxu0 0.0
    %388 = vmatpush1.msra.mxu0 0.0
    %389 = vmatprep.subr.mxu0 0.0
    %390 = vmatpush1.msra.mxu0 0.0
    %391 = vmatprep.subr.mxu0 0.0
    %392 = vmatpush1.msra.mxu0 0.0
    %393 = vmatprep.subr.mxu0 0.0
    %394 = vmatpush1.msra.mxu0 0.0
    %395 = vmatprep.subr.mxu0 0.0
    %396 = vmatpush1.msra.mxu0 0.0
    %397 = vmatprep.subr.mxu0 0.0
    %398 = vmatpush1.msra.mxu0 0.0
    %399 = vmatprep.subr.mxu0 0.0
    %400 = vmatpush1.msra.mxu0 0.0
    %401 = vmatprep.subr.mxu0 0.0
    %402 = vmatpush1.msra.mxu0 0.0
    %403 = vmatprep.subr.mxu0 0.0
    %404 = vmatpush1.msra.mxu0 0.0
    %405 = vmatprep.mubr.f32.mxu0 0.0
    %406 = vmatmul.mubr.f32.gmra.mrb[0].mxu0 %v294
    %v407 = vpop.f32.mrb[0].mxu0
    %v408 = vadd.f32 %v291, %v407
    %v409 = vpop.f32.mrb[0].mxu0
    %410 = vmatprep.mubr.f32.mxu0 0.0
    %411 = vmatmul.mubr.f32.gmra.mrb[0].mxu0 %v297
    %v412 = vpop.f32.mrb[0].mxu0
    %v413 = vadd.f32 %v291, %v412
    %v414 = vpop.f32.mrb[0].mxu0
    %415 = vmatprep.mubr.f32.mxu0 0.0
    %416 = vmatmul.mubr.f32.gmra.mrb[0].mxu0 %v300
    %v417 = vpop.f32.mrb[0].mxu0
    %v418 = vadd.f32 %v291, %v417
    %v419 = vpop.f32.mrb[0].mxu0
    %420 = vmatprep.mubr.f32.mxu0 0.0
    %421 = vmatmul.mubr.f32.gmra.mrb[0].mxu0 %v303
    %v422 = vpop.f32.mrb[0].mxu0
    %v423 = vadd.f32 %v291, %v422
    %v424 = vpop.f32.mrb[0].mxu0
    %425 = vmatprep.mubr.f32.mxu0 0.0
    %426 = vmatmul.mubr.f32.gmra.mrb[0].mxu0 %v306
    %v427 = vpop.f32.mrb[0].mxu0
    %v428 = vadd.f32 %v291, %v427
    %v429 = vpop.f32.mrb[0].mxu0
    %430 = vmatprep.mubr.f32.mxu0 0.0
    %431 = vmatmul.mubr.f32.gmra.mrb[0].mxu0 %v309
    %v432 = vpop.f32.mrb[0].mxu0
    %v433 = vadd.f32 %v291, %v432
    %v434 = vpop.f32.mrb[0].mxu0
    %435 = vmatprep.mubr.f32.mxu0 0.0
    %436 = vmatmul.mubr.f32.gmra.mrb[0].mxu0 %v312
    %v437 = vpop.f32.mrb[0].mxu0
    %v438 = vadd.f32 %v291, %v437
    %v439 = vpop.f32.mrb[0].mxu0
    %440 = vmatprep.mubr.f32.mxu0 0.0
    %441 = vmatmul.mubr.f32.gmra.mrb[0].mxu0 %v315
    %v442 = vpop.f32.mrb[0].mxu0
    %v443 = vadd.f32 %v291, %v442
    %v444 = vpop.f32.mrb[0].mxu0
    %445 = vmatprep.mubr.f32.mxu0 0.0
    %446 = vmatmul.mubr.f32.gmra.mrb[0].mxu0 %v318
    %v447 = vpop.f32.mrb[0].mxu0
    %v448 = vadd.f32 %v291, %v447
    %v449 = vpop.f32.mrb[0].mxu0
    %450 = vmatprep.mubr.f32.mxu0 0.0
    %451 = vmatmul.mubr.f32.gmra.mrb[0].mxu0 %v321
    %v452 = vpop.f32.mrb[0].mxu0
    %v453 = vadd.f32 %v291, %v452
    %v454 = vpop.f32.mrb[0].mxu0
    %455 = vmatprep.mubr.f32.mxu0 0.0
    %456 = vmatmul.mubr.f32.gmra.mrb[0].mxu0 %v324
    %v457 = vpop.f32.mrb[0].mxu0
    %v458 = vadd.f32 %v291, %v457
    %v459 = vpop.f32.mrb[0].mxu0
    %460 = vmatprep.mubr.f32.mxu0 0.0
    %461 = vmatmul.mubr.f32.gmra.mrb[0].mxu0 %v327
    %v462 = vpop.f32.mrb[0].mxu0
    %v463 = vadd.f32 %v291, %v462
    %v464 = vpop.f32.mrb[0].mxu0
    %465 = vmatprep.mubr.f32.mxu0 0.0
    %466 = vmatmul.mubr.f32.gmra.mrb[0].mxu0 %v330
    %v467 = vpop.f32.mrb[0].mxu0
    %v468 = vadd.f32 %v291, %v467
    %v469 = vpop.f32.mrb[0].mxu0
    %470 = vmatprep.mubr.f32.mxu0 0.0
    %471 = vmatmul.mubr.f32.gmra.mrb[0].mxu0 %v333
    %v472 = vpop.f32.mrb[0].mxu0
    %v473 = vadd.f32 %v291, %v472
    %v474 = vpop.f32.mrb[0].mxu0
    %475 = vmatprep.mubr.f32.mxu0 0.0
    %476 = vmatmul.mubr.f32.gmra.mrb[0].mxu0 %v336
    %v477 = vpop.f32.mrb[0].mxu0
    %v478 = vadd.f32 %v291, %v477
    %v479 = vpop.f32.mrb[0].mxu0
    %480 = vmatprep.mubr.f32.mxu0 0.0
    %481 = vmatmul.mubr.f32.gmra.mrb[0].mxu0 %v339
    %v482 = vpop.f32.mrb[0].mxu0
    %v483 = vadd.f32 %v291, %v482
    %v484 = vpop.f32.mrb[0].mxu0
    %485 = vdwg.mxu0
    %v486 = vmax.f32 %v408, 0.0
    %v487 = vmax.f32 %v413, 0.0
    %v488 = vmax.f32 %v418, 0.0
    %v489 = vmax.f32 %v423, 0.0
    %v490 = vmax.f32 %v428, 0.0
    %v491 = vmax.f32 %v433, 0.0
    %v492 = vmax.f32 %v438, 0.0
    %v493 = vmax.f32 %v443, 0.0
    %v494 = vmax.f32 %v448, 0.0
    %v495 = vmax.f32 %v453, 0.0
    %v496 = vmax.f32 %v458, 0.0
    %v497 = vmax.f32 %v463, 0.0
    %v498 = vmax.f32 %v468, 0.0
    %v499 = vmax.f32 %v473, 0.0
    %v500 = vmax.f32 %v478, 0.0
    %v501 = vmax.f32 %v483, 0.0
    %v502 = vld [vmem:[%s12] sm:$0xff]
    %v503 = vld [vmem:[%s13] sm:$0x1]
    %v505 = vlaneseq
    %v506 = vshrl.u32 %v505, 7
    %v507 = vsub.s32 0, %v506
    %v508 = vrot.slane %v503, %v507
    %vm510 = vcmask 64512
    %v512 = vsel %vm510, %v486, 0
    %v515 = vsel %vm510, %v487, 0
    %v518 = vsel %vm510, %v488, 0
    %v521 = vsel %vm510, %v489, 0
    %v524 = vsel %vm510, %v490, 0
    %v527 = vsel %vm510, %v491, 0
    %v530 = vsel %vm510, %v492, 0
    %v533 = vsel %vm510, %v493, 0
    %v536 = vsel %vm510, %v494, 0
    %v539 = vsel %vm510, %v495, 0
    %v542 = vsel %vm510, %v496, 0
    %v545 = vsel %vm510, %v497, 0
    %v548 = vsel %vm510, %v498, 0
    %v551 = vsel %vm510, %v499, 0
    %v554 = vsel %vm510, %v500, 0
    %v557 = vsel %vm510, %v501, 0
    %559 = vmatprep.subr.mxu0 0.0
    %560 = vmatpush1.msra.mxu0 %v502
    %561 = vmatprep.subr.mxu0 0.0
    %562 = vmatpush1.msra.mxu0 0.0
    %563 = vmatprep.subr.mxu0 0.0
    %564 = vmatpush1.msra.mxu0 0.0
    %565 = vmatprep.subr.mxu0 0.0
    %566 = vmatpush1.msra.mxu0 0.0
    %567 = vmatprep.subr.mxu0 0.0
    %568 = vmatpush1.msra.mxu0 0.0
    %569 = vmatprep.subr.mxu0 0.0
    %570 = vmatpush1.msra.mxu0 0.0
    %571 = vmatprep.subr.mxu0 0.0
    %572 = vmatpush1.msra.mxu0 0.0
    %573 = vmatprep.subr.mxu0 0.0
    %574 = vmatpush1.msra.mxu0 0.0
    %575 = vmatprep.subr.mxu0 0.0
    %576 = vmatpush1.msra.mxu0 0.0
    %577 = vmatprep.subr.mxu0 0.0
    %578 = vmatpush1.msra.mxu0 0.0
    %579 = vmatprep.subr.mxu0 0.0
    %580 = vmatpush1.msra.mxu0 0.0
    %581 = vmatprep.subr.mxu0 0.0
    %582 = vmatpush1.msra.mxu0 0.0
    %583 = vmatprep.subr.mxu0 0.0
    %584 = vmatpush1.msra.mxu0 0.0
    %585 = vmatprep.subr.mxu0 0.0
    %586 = vmatpush1.msra.mxu0 0.0
    %587 = vmatprep.subr.mxu0 0.0
    %588 = vmatpush1.msra.mxu0 0.0
    %589 = vmatprep.subr.mxu0 0.0
    %590 = vmatpush1.msra.mxu0 0.0
    %591 = vmatprep.subr.mxu0 0.0
    %592 = vmatpush1.msra.mxu0 0.0
    %593 = vmatprep.subr.mxu0 0.0
    %594 = vmatpush1.msra.mxu0 0.0
    %595 = vmatprep.subr.mxu0 0.0
    %596 = vmatpush1.msra.mxu0 0.0
    %597 = vmatprep.subr.mxu0 0.0
    %598 = vmatpush1.msra.mxu0 0.0
    %599 = vmatprep.subr.mxu0 0.0
    %600 = vmatpush1.msra.mxu0 0.0
    %601 = vmatprep.subr.mxu0 0.0
    %602 = vmatpush1.msra.mxu0 0.0
    %603 = vmatprep.subr.mxu0 0.0
    %604 = vmatpush1.msra.mxu0 0.0
    %605 = vmatprep.subr.mxu0 0.0
    %606 = vmatpush1.msra.mxu0 0.0
    %607 = vmatprep.subr.mxu0 0.0
    %608 = vmatpush1.msra.mxu0 0.0
    %609 = vmatprep.subr.mxu0 0.0
    %610 = vmatpush1.msra.mxu0 0.0
    %611 = vmatprep.subr.mxu0 0.0
    %612 = vmatpush1.msra.mxu0 0.0
    %613 = vmatprep.subr.mxu0 0.0
    %614 = vmatpush1.msra.mxu0 0.0
    %615 = vmatprep.subr.mxu0 0.0
    %616 = vmatpush1.msra.mxu0 0.0
    %617 = vmatprep.subr.mxu0 0.0
    %618 = vmatpush1.msra.mxu0 0.0
    %619 = vmatprep.subr.mxu0 0.0
    %620 = vmatpush1.msra.mxu0 0.0
    %621 = vmatprep.subr.mxu0 0.0
    %622 = vmatpush1.msra.mxu0 0.0
    %623 = vmatprep.mubr.f32.mxu0 0.0
    %624 = vmatmul.mubr.f32.gmra.mrb[0].mxu0 %v512
    %v625 = vpop.f32.mrb[0].mxu0
    %v626 = vadd.f32 %v508, %v625
    %v627 = vpop.f32.mrb[0].mxu0
    %628 = vmatprep.mubr.f32.mxu0 0.0
    %629 = vmatmul.mubr.f32.gmra.mrb[0].mxu0 %v515
    %v630 = vpop.f32.mrb[0].mxu0
    %v631 = vadd.f32 %v508, %v630
    %v632 = vpop.f32.mrb[0].mxu0
    %633 = vmatprep.mubr.f32.mxu0 0.0
    %634 = vmatmul.mubr.f32.gmra.mrb[0].mxu0 %v518
    %v635 = vpop.f32.mrb[0].mxu0
    %v636 = vadd.f32 %v508, %v635
    %v637 = vpop.f32.mrb[0].mxu0
    %638 = vmatprep.mubr.f32.mxu0 0.0
    %639 = vmatmul.mubr.f32.gmra.mrb[0].mxu0 %v521
    %v640 = vpop.f32.mrb[0].mxu0
    %v641 = vadd.f32 %v508, %v640
    %v642 = vpop.f32.mrb[0].mxu0
    %643 = vmatprep.mubr.f32.mxu0 0.0
    %644 = vmatmul.mubr.f32.gmra.mrb[0].mxu0 %v524
    %v645 = vpop.f32.mrb[0].mxu0
    %v646 = vadd.f32 %v508, %v645
    %v647 = vpop.f32.mrb[0].mxu0
    %648 = vmatprep.mubr.f32.mxu0 0.0
    %649 = vmatmul.mubr.f32.gmra.mrb[0].mxu0 %v527
    %v650 = vpop.f32.mrb[0].mxu0
    %v651 = vadd.f32 %v508, %v650
    %v652 = vpop.f32.mrb[0].mxu0
    %653 = vmatprep.mubr.f32.mxu0 0.0
    %654 = vmatmul.mubr.f32.gmra.mrb[0].mxu0 %v530
    %v655 = vpop.f32.mrb[0].mxu0
    %v656 = vadd.f32 %v508, %v655
    %v657 = vpop.f32.mrb[0].mxu0
    %658 = vmatprep.mubr.f32.mxu0 0.0
    %659 = vmatmul.mubr.f32.gmra.mrb[0].mxu0 %v533
    %v660 = vpop.f32.mrb[0].mxu0
    %v661 = vadd.f32 %v508, %v660
    %v662 = vpop.f32.mrb[0].mxu0
    %663 = vmatprep.mubr.f32.mxu0 0.0
    %664 = vmatmul.mubr.f32.gmra.mrb[0].mxu0 %v536
    %v665 = vpop.f32.mrb[0].mxu0
    %v666 = vadd.f32 %v508, %v665
    %v667 = vpop.f32.mrb[0].mxu0
    %668 = vmatprep.mubr.f32.mxu0 0.0
    %669 = vmatmul.mubr.f32.gmra.mrb[0].mxu0 %v539
    %v670 = vpop.f32.mrb[0].mxu0
    %v671 = vadd.f32 %v508, %v670
    %v672 = vpop.f32.mrb[0].mxu0
    %673 = vmatprep.mubr.f32.mxu0 0.0
    %674 = vmatmul.mubr.f32.gmra.mrb[0].mxu0 %v542
    %v675 = vpop.f32.mrb[0].mxu0
    %v676 = vadd.f32 %v508, %v675
    %v677 = vpop.f32.mrb[0].mxu0
    %678 = vmatprep.mubr.f32.mxu0 0.0
    %679 = vmatmul.mubr.f32.gmra.mrb[0].mxu0 %v545
    %v680 = vpop.f32.mrb[0].mxu0
    %v681 = vadd.f32 %v508, %v680
    %v682 = vpop.f32.mrb[0].mxu0
    %683 = vmatprep.mubr.f32.mxu0 0.0
    %684 = vmatmul.mubr.f32.gmra.mrb[0].mxu0 %v548
    %v685 = vpop.f32.mrb[0].mxu0
    %v686 = vadd.f32 %v508, %v685
    %v687 = vpop.f32.mrb[0].mxu0
    %688 = vmatprep.mubr.f32.mxu0 0.0
    %689 = vmatmul.mubr.f32.gmra.mrb[0].mxu0 %v551
    %v690 = vpop.f32.mrb[0].mxu0
    %v691 = vadd.f32 %v508, %v690
    %v692 = vpop.f32.mrb[0].mxu0
    %693 = vmatprep.mubr.f32.mxu0 0.0
    %694 = vmatmul.mubr.f32.gmra.mrb[0].mxu0 %v554
    %v695 = vpop.f32.mrb[0].mxu0
    %v696 = vadd.f32 %v508, %v695
    %v697 = vpop.f32.mrb[0].mxu0
    %698 = vmatprep.mubr.f32.mxu0 0.0
    %699 = vmatmul.mubr.f32.gmra.mrb[0].mxu0 %v557
    %v700 = vpop.f32.mrb[0].mxu0
    %v701 = vadd.f32 %v508, %v700
    %v702 = vpop.f32.mrb[0].mxu0
    %703 = vdwg.mxu0
    %v704 = vld [vmem:[%s5] sm:$0xff]
    %v705 = vld [vmem:[%s5 + $0x8] sm:$0xff]
    %v706 = vld [vmem:[%s5 + $0x10] sm:$0xff]
    %v707 = vld [vmem:[%s5 + $0x18] sm:$0xff]
    %v708 = vld [vmem:[%s5 + $0x20] sm:$0xff]
    %v709 = vld [vmem:[%s5 + $0x28] sm:$0xff]
    %v710 = vld [vmem:[%s5 + $0x30] sm:$0xff]
    %v711 = vld [vmem:[%s5 + $0x38] sm:$0xff]
    %v712 = vld [vmem:[%s5 + $0x40] sm:$0xff]
    %v713 = vld [vmem:[%s5 + $0x48] sm:$0xff]
    %v714 = vld [vmem:[%s5 + $0x50] sm:$0xff]
    %v715 = vld [vmem:[%s5 + $0x58] sm:$0xff]
    %v716 = vld [vmem:[%s5 + $0x60] sm:$0xff]
    %v717 = vld [vmem:[%s5 + $0x68] sm:$0xff]
    %v718 = vld [vmem:[%s5 + $0x70] sm:$0xff]
    %v719 = vld [vmem:[%s5 + $0x78] sm:$0xff]
    %v720 = vsub.f32 1.0, %v704
    %v721 = vsub.f32 1.0, %v705
    %v722 = vsub.f32 1.0, %v706
    %v723 = vsub.f32 1.0, %v707
    %v724 = vsub.f32 1.0, %v708
    %v725 = vsub.f32 1.0, %v709
    %v726 = vsub.f32 1.0, %v710
    %v727 = vsub.f32 1.0, %v711
    %v728 = vsub.f32 1.0, %v712
    %v729 = vsub.f32 1.0, %v713
    %v730 = vsub.f32 1.0, %v714
    %v731 = vsub.f32 1.0, %v715
    %v732 = vsub.f32 1.0, %v716
    %v733 = vsub.f32 1.0, %v717
    %v734 = vsub.f32 1.0, %v718
    %v735 = vsub.f32 1.0, %v719
    %737 = vset.pattern.permute.xlu0 0
    %738 = vperm.xlu0 %737, %v720
    %v739 = vpop.permute.xlu0 %738
    %742 = vset.pattern.permute.xlu0 0
    %743 = vperm.xlu0 %742, %v721
    %v744 = vpop.permute.xlu0 %743
    %747 = vset.pattern.permute.xlu0 0
    %748 = vperm.xlu0 %747, %v722
    %v749 = vpop.permute.xlu0 %748
    %752 = vset.pattern.permute.xlu0 0
    %753 = vperm.xlu0 %752, %v723
    %v754 = vpop.permute.xlu0 %753
    %757 = vset.pattern.permute.xlu0 0
    %758 = vperm.xlu0 %757, %v724
    %v759 = vpop.permute.xlu0 %758
    %762 = vset.pattern.permute.xlu0 0
    %763 = vperm.xlu0 %762, %v725
    %v764 = vpop.permute.xlu0 %763
    %767 = vset.pattern.permute.xlu0 0
    %768 = vperm.xlu0 %767, %v726
    %v769 = vpop.permute.xlu0 %768
    %772 = vset.pattern.permute.xlu0 0
    %773 = vperm.xlu0 %772, %v727
    %v774 = vpop.permute.xlu0 %773
    %777 = vset.pattern.permute.xlu0 0
    %778 = vperm.xlu0 %777, %v728
    %v779 = vpop.permute.xlu0 %778
    %782 = vset.pattern.permute.xlu0 0
    %783 = vperm.xlu0 %782, %v729
    %v784 = vpop.permute.xlu0 %783
    %787 = vset.pattern.permute.xlu0 0
    %788 = vperm.xlu0 %787, %v730
    %v789 = vpop.permute.xlu0 %788
    %792 = vset.pattern.permute.xlu0 0
    %793 = vperm.xlu0 %792, %v731
    %v794 = vpop.permute.xlu0 %793
    %797 = vset.pattern.permute.xlu0 0
    %798 = vperm.xlu0 %797, %v732
    %v799 = vpop.permute.xlu0 %798
    %802 = vset.pattern.permute.xlu0 0
    %803 = vperm.xlu0 %802, %v733
    %v804 = vpop.permute.xlu0 %803
    %807 = vset.pattern.permute.xlu0 0
    %808 = vperm.xlu0 %807, %v734
    %v809 = vpop.permute.xlu0 %808
    %812 = vset.pattern.permute.xlu0 0
    %813 = vperm.xlu0 %812, %v735
    %v814 = vpop.permute.xlu0 %813
    %v816 = vmul.f32 %v626, %v739
    %v817 = vmul.f32 %v631, %v744
    %v818 = vmul.f32 %v636, %v749
    %v819 = vmul.f32 %v641, %v754
    %v820 = vmul.f32 %v646, %v759
    %v821 = vmul.f32 %v651, %v764
    %v822 = vmul.f32 %v656, %v769
    %v823 = vmul.f32 %v661, %v774
    %v824 = vmul.f32 %v666, %v779
    %v825 = vmul.f32 %v671, %v784
    %v826 = vmul.f32 %v676, %v789
    %v827 = vmul.f32 %v681, %v794
    %v828 = vmul.f32 %v686, %v799
    %v829 = vmul.f32 %v691, %v804
    %v830 = vmul.f32 %v696, %v809
    %v831 = vmul.f32 %v701, %v814
    %vm832 = vcmask 15360
    %v833 = vsel %vm832, %v816, -inf
    %834 = vmax.xlane.f32.xlu0 %v833
    %v835 = vpop.xlane.xlu0 %834
    %v836 = vsel %vm832, %v817, -inf
    %837 = vmax.xlane.f32.xlu0 %v836
    %v838 = vpop.xlane.xlu0 %837
    %v839 = vsel %vm832, %v818, -inf
    %840 = vmax.xlane.f32.xlu0 %v839
    %v841 = vpop.xlane.xlu0 %840
    %v842 = vsel %vm832, %v819, -inf
    %843 = vmax.xlane.f32.xlu0 %v842
    %v844 = vpop.xlane.xlu0 %843
    %v845 = vsel %vm832, %v820, -inf
    %846 = vmax.xlane.f32.xlu0 %v845
    %v847 = vpop.xlane.xlu0 %846
    %v848 = vsel %vm832, %v821, -inf
    %849 = vmax.xlane.f32.xlu0 %v848
    %v850 = vpop.xlane.xlu0 %849
    %v851 = vsel %vm832, %v822, -inf
    %852 = vmax.xlane.f32.xlu0 %v851
    %v853 = vpop.xlane.xlu0 %852
    %v854 = vsel %vm832, %v823, -inf
    %855 = vmax.xlane.f32.xlu0 %v854
    %v856 = vpop.xlane.xlu0 %855
    %v857 = vsel %vm832, %v824, -inf
    %858 = vmax.xlane.f32.xlu0 %v857
    %v859 = vpop.xlane.xlu0 %858
    %v860 = vsel %vm832, %v825, -inf
    %861 = vmax.xlane.f32.xlu0 %v860
    %v862 = vpop.xlane.xlu0 %861
    %v863 = vsel %vm832, %v826, -inf
    %864 = vmax.xlane.f32.xlu0 %v863
    %v865 = vpop.xlane.xlu0 %864
    %v866 = vsel %vm832, %v827, -inf
    %867 = vmax.xlane.f32.xlu0 %v866
    %v868 = vpop.xlane.xlu0 %867
    %v869 = vsel %vm832, %v828, -inf
    %870 = vmax.xlane.f32.xlu0 %v869
    %v871 = vpop.xlane.xlu0 %870
    %v872 = vsel %vm832, %v829, -inf
    %873 = vmax.xlane.f32.xlu0 %v872
    %v874 = vpop.xlane.xlu0 %873
    %v875 = vsel %vm832, %v830, -inf
    %876 = vmax.xlane.f32.xlu0 %v875
    %v877 = vpop.xlane.xlu0 %876
    %v878 = vsel %vm832, %v831, -inf
    %879 = vmax.xlane.f32.xlu0 %v878
    %v880 = vpop.xlane.xlu0 %879
    %v881 = vsub.f32 %v816, %v835
    %v882 = vsub.f32 %v817, %v838
    %v883 = vsub.f32 %v818, %v841
    %v884 = vsub.f32 %v819, %v844
    %v885 = vsub.f32 %v820, %v847
    %v886 = vsub.f32 %v821, %v850
    %v887 = vsub.f32 %v822, %v853
    %v888 = vsub.f32 %v823, %v856
    %v889 = vsub.f32 %v824, %v859
    %v890 = vsub.f32 %v825, %v862
    %v891 = vsub.f32 %v826, %v865
    %v892 = vsub.f32 %v827, %v868
    %v893 = vsub.f32 %v828, %v871
    %v894 = vsub.f32 %v829, %v874
    %v895 = vsub.f32 %v830, %v877
    %v896 = vsub.f32 %v831, %v880
    %v897 = vmul.f32 %v881, 1.442695
    %v898 = vpow.pop %v897
    %v899 = vmul.f32 %v882, 1.442695
    %v900 = vpow.pop %v899
    %v901 = vmul.f32 %v883, 1.442695
    %v902 = vpow.pop %v901
    %v903 = vmul.f32 %v884, 1.442695
    %v904 = vpow.pop %v903
    %v905 = vmul.f32 %v885, 1.442695
    %v906 = vpow.pop %v905
    %v907 = vmul.f32 %v886, 1.442695
    %v908 = vpow.pop %v907
    %v909 = vmul.f32 %v887, 1.442695
    %v910 = vpow.pop %v909
    %v911 = vmul.f32 %v888, 1.442695
    %v912 = vpow.pop %v911
    %v913 = vmul.f32 %v889, 1.442695
    %v914 = vpow.pop %v913
    %v915 = vmul.f32 %v890, 1.442695
    %v916 = vpow.pop %v915
    %v917 = vmul.f32 %v891, 1.442695
    %v918 = vpow.pop %v917
    %v919 = vmul.f32 %v892, 1.442695
    %v920 = vpow.pop %v919
    %v921 = vmul.f32 %v893, 1.442695
    %v922 = vpow.pop %v921
    %v923 = vmul.f32 %v894, 1.442695
    %v924 = vpow.pop %v923
    %v925 = vmul.f32 %v895, 1.442695
    %v926 = vpow.pop %v925
    %v927 = vmul.f32 %v896, 1.442695
    %v928 = vpow.pop %v927
    %v929 = vsel %vm832, %v898, 0.0
    %930 = vadd.xlane.f32.xlu0 %v929
    %v931 = vpop.xlane.xlu0 %930
    %v932 = vsel %vm832, %v900, 0.0
    %933 = vadd.xlane.f32.xlu0 %v932
    %v934 = vpop.xlane.xlu0 %933
    %v935 = vsel %vm832, %v902, 0.0
    %936 = vadd.xlane.f32.xlu0 %v935
    %v937 = vpop.xlane.xlu0 %936
    %v938 = vsel %vm832, %v904, 0.0
    %939 = vadd.xlane.f32.xlu0 %v938
    %v940 = vpop.xlane.xlu0 %939
    %v941 = vsel %vm832, %v906, 0.0
    %942 = vadd.xlane.f32.xlu0 %v941
    %v943 = vpop.xlane.xlu0 %942
    %v944 = vsel %vm832, %v908, 0.0
    %945 = vadd.xlane.f32.xlu0 %v944
    %v946 = vpop.xlane.xlu0 %945
    %v947 = vsel %vm832, %v910, 0.0
    %948 = vadd.xlane.f32.xlu0 %v947
    %v949 = vpop.xlane.xlu0 %948
    %v950 = vsel %vm832, %v912, 0.0
    %951 = vadd.xlane.f32.xlu0 %v950
    %v952 = vpop.xlane.xlu0 %951
    %v953 = vsel %vm832, %v914, 0.0
    %954 = vadd.xlane.f32.xlu0 %v953
    %v955 = vpop.xlane.xlu0 %954
    %v956 = vsel %vm832, %v916, 0.0
    %957 = vadd.xlane.f32.xlu0 %v956
    %v958 = vpop.xlane.xlu0 %957
    %v959 = vsel %vm832, %v918, 0.0
    %960 = vadd.xlane.f32.xlu0 %v959
    %v961 = vpop.xlane.xlu0 %960
    %v962 = vsel %vm832, %v920, 0.0
    %963 = vadd.xlane.f32.xlu0 %v962
    %v964 = vpop.xlane.xlu0 %963
    %v965 = vsel %vm832, %v922, 0.0
    %966 = vadd.xlane.f32.xlu0 %v965
    %v967 = vpop.xlane.xlu0 %966
    %v968 = vsel %vm832, %v924, 0.0
    %969 = vadd.xlane.f32.xlu0 %v968
    %v970 = vpop.xlane.xlu0 %969
    %v971 = vsel %vm832, %v926, 0.0
    %972 = vadd.xlane.f32.xlu0 %v971
    %v973 = vpop.xlane.xlu0 %972
    %v974 = vsel %vm832, %v928, 0.0
    %975 = vadd.xlane.f32.xlu0 %v974
    %v976 = vpop.xlane.xlu0 %975
    %v977 = vrcp.pop %v931
    %v978 = vmul.f32 %v898, %v977
    %v979 = vrcp.pop %v934
    %v980 = vmul.f32 %v900, %v979
    %v981 = vrcp.pop %v937
    %v982 = vmul.f32 %v902, %v981
    %v983 = vrcp.pop %v940
    %v984 = vmul.f32 %v904, %v983
    %v985 = vrcp.pop %v943
    %v986 = vmul.f32 %v906, %v985
    %v987 = vrcp.pop %v946
    %v988 = vmul.f32 %v908, %v987
    %v989 = vrcp.pop %v949
    %v990 = vmul.f32 %v910, %v989
    %v991 = vrcp.pop %v952
    %v992 = vmul.f32 %v912, %v991
    %v993 = vrcp.pop %v955
    %v994 = vmul.f32 %v914, %v993
    %v995 = vrcp.pop %v958
    %v996 = vmul.f32 %v916, %v995
    %v997 = vrcp.pop %v961
    %v998 = vmul.f32 %v918, %v997
    %v999 = vrcp.pop %v964
    %v1000 = vmul.f32 %v920, %v999
    %v1001 = vrcp.pop %v967
    %v1002 = vmul.f32 %v922, %v1001
    %v1003 = vrcp.pop %v970
    %v1004 = vmul.f32 %v924, %v1003
    %v1005 = vrcp.pop %v973
    %v1006 = vmul.f32 %v926, %v1005
    %v1007 = vrcp.pop %v976
    %v1008 = vmul.f32 %v928, %v1007
    %v1009 = vld [vmem:[%s4] sm:$0xff]
    %v1010 = vld [vmem:[%s4 + $0x8] sm:$0xff]
    %v1011 = vld [vmem:[%s4 + $0x10] sm:$0xff]
    %v1012 = vld [vmem:[%s4 + $0x18] sm:$0xff]
    %v1013 = vld [vmem:[%s4 + $0x20] sm:$0xff]
    %v1014 = vld [vmem:[%s4 + $0x28] sm:$0xff]
    %v1015 = vld [vmem:[%s4 + $0x30] sm:$0xff]
    %v1016 = vld [vmem:[%s4 + $0x38] sm:$0xff]
    %v1017 = vld [vmem:[%s4 + $0x40] sm:$0xff]
    %v1018 = vld [vmem:[%s4 + $0x48] sm:$0xff]
    %v1019 = vld [vmem:[%s4 + $0x50] sm:$0xff]
    %v1020 = vld [vmem:[%s4 + $0x58] sm:$0xff]
    %v1021 = vld [vmem:[%s4 + $0x60] sm:$0xff]
    %v1022 = vld [vmem:[%s4 + $0x68] sm:$0xff]
    %v1023 = vld [vmem:[%s4 + $0x70] sm:$0xff]
    %v1024 = vld [vmem:[%s4 + $0x78] sm:$0xff]
    %1026 = vset.pattern.permute.xlu0 0
    %1027 = vperm.xlu0 %1026, %v1009
    %v1028 = vpop.permute.xlu0 %1027
    %1031 = vset.pattern.permute.xlu0 0
    %1032 = vperm.xlu0 %1031, %v1010
    %v1033 = vpop.permute.xlu0 %1032
    %1036 = vset.pattern.permute.xlu0 0
    %1037 = vperm.xlu0 %1036, %v1011
    %v1038 = vpop.permute.xlu0 %1037
    %1041 = vset.pattern.permute.xlu0 0
    %1042 = vperm.xlu0 %1041, %v1012
    %v1043 = vpop.permute.xlu0 %1042
    %1046 = vset.pattern.permute.xlu0 0
    %1047 = vperm.xlu0 %1046, %v1013
    %v1048 = vpop.permute.xlu0 %1047
    %1051 = vset.pattern.permute.xlu0 0
    %1052 = vperm.xlu0 %1051, %v1014
    %v1053 = vpop.permute.xlu0 %1052
    %1056 = vset.pattern.permute.xlu0 0
    %1057 = vperm.xlu0 %1056, %v1015
    %v1058 = vpop.permute.xlu0 %1057
    %1061 = vset.pattern.permute.xlu0 0
    %1062 = vperm.xlu0 %1061, %v1016
    %v1063 = vpop.permute.xlu0 %1062
    %1066 = vset.pattern.permute.xlu0 0
    %1067 = vperm.xlu0 %1066, %v1017
    %v1068 = vpop.permute.xlu0 %1067
    %1071 = vset.pattern.permute.xlu0 0
    %1072 = vperm.xlu0 %1071, %v1018
    %v1073 = vpop.permute.xlu0 %1072
    %1076 = vset.pattern.permute.xlu0 0
    %1077 = vperm.xlu0 %1076, %v1019
    %v1078 = vpop.permute.xlu0 %1077
    %1081 = vset.pattern.permute.xlu0 0
    %1082 = vperm.xlu0 %1081, %v1020
    %v1083 = vpop.permute.xlu0 %1082
    %1086 = vset.pattern.permute.xlu0 0
    %1087 = vperm.xlu0 %1086, %v1021
    %v1088 = vpop.permute.xlu0 %1087
    %1091 = vset.pattern.permute.xlu0 0
    %1092 = vperm.xlu0 %1091, %v1022
    %v1093 = vpop.permute.xlu0 %1092
    %1096 = vset.pattern.permute.xlu0 0
    %1097 = vperm.xlu0 %1096, %v1023
    %v1098 = vpop.permute.xlu0 %1097
    %1101 = vset.pattern.permute.xlu0 0
    %1102 = vperm.xlu0 %1101, %v1024
    %v1103 = vpop.permute.xlu0 %1102
    %v1105 = vmul.f32 %v978, %v1028
    %v1106 = vmul.f32 %v980, %v1033
    %v1107 = vmul.f32 %v982, %v1038
    %v1108 = vmul.f32 %v984, %v1043
    %v1109 = vmul.f32 %v986, %v1048
    %v1110 = vmul.f32 %v988, %v1053
    %v1111 = vmul.f32 %v990, %v1058
    %v1112 = vmul.f32 %v992, %v1063
    %v1113 = vmul.f32 %v994, %v1068
    %v1114 = vmul.f32 %v996, %v1073
    %v1115 = vmul.f32 %v998, %v1078
    %v1116 = vmul.f32 %v1000, %v1083
    %v1117 = vmul.f32 %v1002, %v1088
    %v1118 = vmul.f32 %v1004, %v1093
    %v1119 = vmul.f32 %v1006, %v1098
    %v1120 = vmul.f32 %v1008, %v1103
    %1121 = vst.msk [vmem:[%s19] sm:$0xff] %vm832, %v1105
    %1122 = vst.msk [vmem:[%s19 + $0x8] sm:$0xff] %vm832, %v1106
    %1123 = vst.msk [vmem:[%s19 + $0x10] sm:$0xff] %vm832, %v1107
    %1124 = vst.msk [vmem:[%s19 + $0x18] sm:$0xff] %vm832, %v1108
    %1125 = vst.msk [vmem:[%s19 + $0x20] sm:$0xff] %vm832, %v1109
    %1126 = vst.msk [vmem:[%s19 + $0x28] sm:$0xff] %vm832, %v1110
    %1127 = vst.msk [vmem:[%s19 + $0x30] sm:$0xff] %vm832, %v1111
    %1128 = vst.msk [vmem:[%s19 + $0x38] sm:$0xff] %vm832, %v1112
    %1129 = vst.msk [vmem:[%s19 + $0x40] sm:$0xff] %vm832, %v1113
    %1130 = vst.msk [vmem:[%s19 + $0x48] sm:$0xff] %vm832, %v1114
    %1131 = vst.msk [vmem:[%s19 + $0x50] sm:$0xff] %vm832, %v1115
    %1132 = vst.msk [vmem:[%s19 + $0x58] sm:$0xff] %vm832, %v1116
    %1133 = vst.msk [vmem:[%s19 + $0x60] sm:$0xff] %vm832, %v1117
    %1134 = vst.msk [vmem:[%s19 + $0x68] sm:$0xff] %vm832, %v1118
    %1135 = vst.msk [vmem:[%s19 + $0x70] sm:$0xff] %vm832, %v1119
    %1136 = vst.msk [vmem:[%s19 + $0x78] sm:$0xff] %vm832, %v1120
    %v1137 = vld [vmem:[%s2] sm:$0x3]
    %v1138 = vld [vmem:[%s14] sm:$0xff]
    %v1139 = vld [vmem:[%s14 + $0x8] sm:$0xff]
    %v1140 = vld [vmem:[%s15] sm:$0x1]
    %v1142 = vlaneseq
    %v1143 = vshrl.u32 %v1142, 7
    %v1144 = vsub.s32 0, %v1143
    %v1145 = vrot.slane %v1140, %v1144
    %v1148 = vsel %vm169, %v1137, 0
    %1150 = vmatprep.subr.mxu0 0.0
    %1151 = vmatpush1.msra.mxu0 %v1138
    %1152 = vmatprep.subr.mxu0 0.0
    %1153 = vmatpush1.msra.mxu0 %v1139
    %1154 = vmatprep.subr.mxu0 0.0
    %1155 = vmatpush1.msra.mxu0 0.0
    %1156 = vmatprep.subr.mxu0 0.0
    %1157 = vmatpush1.msra.mxu0 0.0
    %1158 = vmatprep.subr.mxu0 0.0
    %1159 = vmatpush1.msra.mxu0 0.0
    %1160 = vmatprep.subr.mxu0 0.0
    %1161 = vmatpush1.msra.mxu0 0.0
    %1162 = vmatprep.subr.mxu0 0.0
    %1163 = vmatpush1.msra.mxu0 0.0
    %1164 = vmatprep.subr.mxu0 0.0
    %1165 = vmatpush1.msra.mxu0 0.0
    %1166 = vmatprep.subr.mxu0 0.0
    %1167 = vmatpush1.msra.mxu0 0.0
    %1168 = vmatprep.subr.mxu0 0.0
    %1169 = vmatpush1.msra.mxu0 0.0
    %1170 = vmatprep.subr.mxu0 0.0
    %1171 = vmatpush1.msra.mxu0 0.0
    %1172 = vmatprep.subr.mxu0 0.0
    %1173 = vmatpush1.msra.mxu0 0.0
    %1174 = vmatprep.subr.mxu0 0.0
    %1175 = vmatpush1.msra.mxu0 0.0
    %1176 = vmatprep.subr.mxu0 0.0
    %1177 = vmatpush1.msra.mxu0 0.0
    %1178 = vmatprep.subr.mxu0 0.0
    %1179 = vmatpush1.msra.mxu0 0.0
    %1180 = vmatprep.subr.mxu0 0.0
    %1181 = vmatpush1.msra.mxu0 0.0
    %1182 = vmatprep.subr.mxu0 0.0
    %1183 = vmatpush1.msra.mxu0 0.0
    %1184 = vmatprep.subr.mxu0 0.0
    %1185 = vmatpush1.msra.mxu0 0.0
    %1186 = vmatprep.subr.mxu0 0.0
    %1187 = vmatpush1.msra.mxu0 0.0
    %1188 = vmatprep.subr.mxu0 0.0
    %1189 = vmatpush1.msra.mxu0 0.0
    %1190 = vmatprep.subr.mxu0 0.0
    %1191 = vmatpush1.msra.mxu0 0.0
    %1192 = vmatprep.subr.mxu0 0.0
    %1193 = vmatpush1.msra.mxu0 0.0
    %1194 = vmatprep.subr.mxu0 0.0
    %1195 = vmatpush1.msra.mxu0 0.0
    %1196 = vmatprep.subr.mxu0 0.0
    %1197 = vmatpush1.msra.mxu0 0.0
    %1198 = vmatprep.subr.mxu0 0.0
    %1199 = vmatpush1.msra.mxu0 0.0
    %1200 = vmatprep.subr.mxu0 0.0
    %1201 = vmatpush1.msra.mxu0 0.0
    %1202 = vmatprep.subr.mxu0 0.0
    %1203 = vmatpush1.msra.mxu0 0.0
    %1204 = vmatprep.subr.mxu0 0.0
    %1205 = vmatpush1.msra.mxu0 0.0
    %1206 = vmatprep.subr.mxu0 0.0
    %1207 = vmatpush1.msra.mxu0 0.0
    %1208 = vmatprep.subr.mxu0 0.0
    %1209 = vmatpush1.msra.mxu0 0.0
    %1210 = vmatprep.subr.mxu0 0.0
    %1211 = vmatpush1.msra.mxu0 0.0
    %1212 = vmatprep.subr.mxu0 0.0
    %1213 = vmatpush1.msra.mxu0 0.0
    %1214 = vmatprep.mubr.f32.mxu0 0.0
    %1215 = vmatmul.mubr.f32.gmra.mrb[0].mxu0 %v1148
    %v1216 = vpop.f32.mrb[0].mxu0
    %v1217 = vadd.f32 %v1145, %v1216
    %v1218 = vpop.f32.mrb[0].mxu0
    %1219 = vdwg.mxu0
    %v1220 = vmax.f32 %v1217, 0.0
    %v1221 = vld [vmem:[%s16] sm:$0xff]
    %v1222 = vld [vmem:[%s16 + $0x8] sm:$0xff]
    %v1223 = vld [vmem:[%s17] sm:$0x1]
    %v1225 = vlaneseq
    %v1226 = vshrl.u32 %v1225, 7
    %v1227 = vsub.s32 0, %v1226
    %v1228 = vrot.slane %v1223, %v1227
    %v1231 = vsel %vm169, %v1220, 0
    %1233 = vmatprep.subr.mxu0 0.0
    %1234 = vmatpush1.msra.mxu0 %v1221
    %1235 = vmatprep.subr.mxu0 0.0
    %1236 = vmatpush1.msra.mxu0 %v1222
    %1237 = vmatprep.subr.mxu0 0.0
    %1238 = vmatpush1.msra.mxu0 0.0
    %1239 = vmatprep.subr.mxu0 0.0
    %1240 = vmatpush1.msra.mxu0 0.0
    %1241 = vmatprep.subr.mxu0 0.0
    %1242 = vmatpush1.msra.mxu0 0.0
    %1243 = vmatprep.subr.mxu0 0.0
    %1244 = vmatpush1.msra.mxu0 0.0
    %1245 = vmatprep.subr.mxu0 0.0
    %1246 = vmatpush1.msra.mxu0 0.0
    %1247 = vmatprep.subr.mxu0 0.0
    %1248 = vmatpush1.msra.mxu0 0.0
    %1249 = vmatprep.subr.mxu0 0.0
    %1250 = vmatpush1.msra.mxu0 0.0
    %1251 = vmatprep.subr.mxu0 0.0
    %1252 = vmatpush1.msra.mxu0 0.0
    %1253 = vmatprep.subr.mxu0 0.0
    %1254 = vmatpush1.msra.mxu0 0.0
    %1255 = vmatprep.subr.mxu0 0.0
    %1256 = vmatpush1.msra.mxu0 0.0
    %1257 = vmatprep.subr.mxu0 0.0
    %1258 = vmatpush1.msra.mxu0 0.0
    %1259 = vmatprep.subr.mxu0 0.0
    %1260 = vmatpush1.msra.mxu0 0.0
    %1261 = vmatprep.subr.mxu0 0.0
    %1262 = vmatpush1.msra.mxu0 0.0
    %1263 = vmatprep.subr.mxu0 0.0
    %1264 = vmatpush1.msra.mxu0 0.0
    %1265 = vmatprep.subr.mxu0 0.0
    %1266 = vmatpush1.msra.mxu0 0.0
    %1267 = vmatprep.subr.mxu0 0.0
    %1268 = vmatpush1.msra.mxu0 0.0
    %1269 = vmatprep.subr.mxu0 0.0
    %1270 = vmatpush1.msra.mxu0 0.0
    %1271 = vmatprep.subr.mxu0 0.0
    %1272 = vmatpush1.msra.mxu0 0.0
    %1273 = vmatprep.subr.mxu0 0.0
    %1274 = vmatpush1.msra.mxu0 0.0
    %1275 = vmatprep.subr.mxu0 0.0
    %1276 = vmatpush1.msra.mxu0 0.0
    %1277 = vmatprep.subr.mxu0 0.0
    %1278 = vmatpush1.msra.mxu0 0.0
    %1279 = vmatprep.subr.mxu0 0.0
    %1280 = vmatpush1.msra.mxu0 0.0
    %1281 = vmatprep.subr.mxu0 0.0
    %1282 = vmatpush1.msra.mxu0 0.0
    %1283 = vmatprep.subr.mxu0 0.0
    %1284 = vmatpush1.msra.mxu0 0.0
    %1285 = vmatprep.subr.mxu0 0.0
    %1286 = vmatpush1.msra.mxu0 0.0
    %1287 = vmatprep.subr.mxu0 0.0
    %1288 = vmatpush1.msra.mxu0 0.0
    %1289 = vmatprep.subr.mxu0 0.0
    %1290 = vmatpush1.msra.mxu0 0.0
    %1291 = vmatprep.subr.mxu0 0.0
    %1292 = vmatpush1.msra.mxu0 0.0
    %1293 = vmatprep.subr.mxu0 0.0
    %1294 = vmatpush1.msra.mxu0 0.0
    %1295 = vmatprep.subr.mxu0 0.0
    %1296 = vmatpush1.msra.mxu0 0.0
    %1297 = vmatprep.mubr.f32.mxu0 0.0
    %1298 = vmatmul.mubr.f32.gmra.mrb[0].mxu0 %v1231
    %v1299 = vpop.f32.mrb[0].mxu0
    %v1300 = vadd.f32 %v1228, %v1299
    %v1301 = vpop.f32.mrb[0].mxu0
    %1302 = vdwg.mxu0
    %vm1303 = vcmask 33792
    %1304 = vst.msk [vmem:[#allocation2] sm:$0x3] %vm1303, %v1300
    // Predicated region
    $region74: #{_forward.7} parent=1 // pred_check
      _
    $region75: #{_forward.7} parent=1 // pred_check_branch
      %1306 = sbr.rel (0) target = $region77
    $region76: #{_forward.7} parent=1 // pred_region
      _
    $region77: #{_forward.7} parent=1 // pred_fallthru
      _
    // Predicated region
    $region78: #{_forward.7} parent=1 // pred_check
      _
    $region79: #{_forward.7} parent=1 // pred_check_branch
      %1308 = sbr.rel (0) target = $region81
    $region80: #{_forward.7} parent=1 // pred_region
      _
    $region81: #{_forward.7} parent=1 // pred_fallthru
      _
    // Predicated region
    $region82: #{_forward.7} parent=1 // pred_check
      _
    $region83: #{_forward.7} parent=1 // pred_check_branch
      %1310 = sbr.rel (0) target = $region85
    $region84: #{_forward.7} parent=1 // pred_region
      %s1312 = ssub.s32 32, 32
      %1313 = vsyncadd [#allocation3], %s1312
      %s1315 = sshll.u32 [#allocation2], 4
      %s1316 = int_to_ptr.vmem [resolvable:$true] %s1315
      %1318 = dma.vmem_to_hbm [thread:$0]  %s1316, 32, %s20, [#allocation3]
    $region85: #{_forward.7} parent=1 // pred_fallthru
      _
    // Predicated region
    $region86: #{_forward.7} parent=1 // pred_check
      _
    $region87: #{_forward.7} parent=1 // pred_check_branch
      %1320 = sbr.rel (0) target = $region89
    $region88: #{_forward.7} parent=1 // pred_region
      _
    $region89: #{_forward.7} parent=1 // pred_fallthru
      _
    // Predicated region
    $region90: #{_forward.7} parent=1 // pred_check
      _
    $region91: #{_forward.7} parent=1 // pred_check_branch
      %1322 = sbr.rel (0) target = $region93
    $region92: #{_forward.7} parent=1 // pred_region
      _
    $region93: #{_forward.7} parent=1 // pred_fallthru
      _
    // Predicated region
    $region94: #{_forward.7} parent=1 // pred_check
      _
    $region95: #{_forward.7} parent=1 // pred_check_branch
      %1324 = sbr.rel (0) target = $region97
    $region96: #{_forward.7} parent=1 // pred_region
      %1325 = dma.done [#allocation3], 32
    $region97: #{_forward.7} parent=1 // pred_fallthru
      _
    %1326 = vsyncpa [#allocation3], 1

// kernel: _forward.5
$region0: #{_forward.5}
  #allocation0 [shape = 'u32[]', space=smem, size = 0x4, offset = 0x4, fixed_abs, tag = 'smem constant byte address 0x4 - core index']
  #allocation1 [shape = 'u32[144,128]{1,0:T(1,128)}', space=vmem, size = 0x12000, scoped, tag = 'internal scratch']
  %s0 = inlined_call_operand.vmem [shape: f32[2,8,1], index: 0, kind: input, shape index: {}]
  %s1 = inlined_call_operand.vmem [shape: f32[2,1,8], index: 1, kind: input, shape index: {}]
  %s2 = inlined_call_operand.vmem [shape: f32[2,8,32], index: 2, kind: input, shape index: {}]
  %s3 = inlined_call_operand.vmem [shape: f32[2,64,16], index: 3, kind: input, shape index: {}]
  %s4 = inlined_call_operand.vmem [shape: f32[2,1,16], index: 4, kind: input, shape index: {}]
  %s5 = inlined_call_operand.vmem [shape: f32[32,192], index: 5, kind: input, shape index: {}]
  %s6 = inlined_call_operand.vmem [shape: f32[16,40], index: 6, kind: input, shape index: {}]
  %s7 = inlined_call_operand.vmem [shape: f32[16,2168], index: 7, kind: input, shape index: {}]
  %s8 = inlined_call_operand.vmem [shape: f32[192,16], index: 8, kind: input, shape index: {}]
  %s9 = inlined_call_operand.vmem [shape: f32[4,16], index: 9, kind: input, shape index: {}]
  %s10 = inlined_call_operand.vmem [shape: f32[64,32], index: 10, kind: input, shape index: {}]
  %s11 = inlined_call_operand.vmem [shape: f32[32,16], index: 11, kind: input, shape index: {}]
  %s12 = inlined_call_operand.vmem [shape: f32[2048,16], index: 12, kind: input, shape index: {}]
  %s13 = inlined_call_operand.vmem [shape: f32[1,2736], index: 13, kind: input, shape index: {}]
  %s14 = inlined_call_operand.vmem [shape: f32[2,8,32], index: 14, kind: output, shape index: {0}]
  %s15 = inlined_call_operand.vmem [shape: f32[2,64,16], index: 15, kind: output, shape index: {1}]
  %s16 = inlined_call_operand.vmem [shape: f32[2,1,16], index: 16, kind: output, shape index: {2}]
  %17 = xla_tuple %s14, %s15, %s16
  %s18 = sld [smem:[#allocation0]]
  $region105: #{_forward.5} parent=0
    _
  %s20 = ssub.s32 1, %s18
  %s21 = scalar_select 0, %s20, %s18
  loop: start=0, step=1, limit=4
  $region2: #{_forward.5} parent=0 // loop_pre_header
    _
  $region3: #{_forward.5} parent=0 // loop_header
    %s23 = sphi 0, %s27
    %p24 = scmp.ge.s32.totalorder %s23, 4
    %s33 = sphi 0, %s35
    %s36 = sphi 0, %s33
    %s37 = sphi 0, %s36
    %s53 = sphi 0, %s37
    %s59 = sphi 0, %s61
    %s62 = sphi 0, %s59
    %s63 = sphi 0, %s62
    %s79 = sphi 0, %s63
    %s85 = sphi 0, %s87
    %s88 = sphi 0, %s85
    %s89 = sphi 0, %s88
    %s105 = sphi 0, %s89
    %s111 = sphi 0, %s113
    %s114 = sphi 0, %s111
    %s115 = sphi 0, %s114
    %s131 = sphi 0, %s115
    %s137 = sphi 0, %s139
    %s140 = sphi 0, %s137
    %s141 = sphi 0, %s140
    %s157 = sphi 0, %s141
    %s161 = sphi 0, %s161
    %s163 = sphi 0, %s161
    %s164 = sphi 0, %s163
    %s178 = sphi 0, %s164
    %s182 = sphi 0, %s182
    %s184 = sphi 0, %s182
    %s185 = sphi 0, %s184
    %s199 = sphi 0, %s185
    %s203 = sphi 0, %s203
    %s205 = sphi 0, %s203
    %s206 = sphi 0, %s205
    %s220 = sphi 0, %s206
    %s224 = sphi 0, %s224
    %s226 = sphi 0, %s224
    %s227 = sphi 0, %s226
    %s241 = sphi 0, %s227
    %s245 = sphi 0, %s245
    %s247 = sphi 0, %s245
    %s248 = sphi 0, %s247
    %s262 = sphi 0, %s248
    %s266 = sphi 0, %s266
    %s268 = sphi 0, %s266
    %s269 = sphi 0, %s268
    %s283 = sphi 0, %s269
    %s287 = sphi 0, %s287
    %s289 = sphi 0, %s287
    %s290 = sphi 0, %s289
    %s304 = sphi 0, %s290
    %s308 = sphi 0, %s308
    %s310 = sphi 0, %s308
    %s311 = sphi 0, %s310
    %s325 = sphi 0, %s311
    %s329 = sphi 0, %s329
    %s331 = sphi 0, %s329
    %s332 = sphi 0, %s331
    %s346 = sphi 0, %s332
    %s352 = sphi 0, %s354
    %s355 = sphi 0, %s352
    %s356 = sphi 0, %s355
    %s372 = sphi 0, %s356
    %s378 = sphi 0, %s380
    %s381 = sphi 0, %s378
    %s382 = sphi 0, %s381
    %s398 = sphi 0, %s382
    %s404 = sphi 0, %s406
    %s407 = sphi 0, %s404
    %s408 = sphi 0, %s407
    %s424 = sphi 0, %s408
  $region4: #{_forward.5} parent=0 // loop_header_branch
    %26 = sbr.rel (%p24) target = $region8
  $region5: #{_forward.5} parent=0 // loop_body
    %s28 = ssub.s32 %s23, 1
    %s29 = ssub.s32 %s23, 2
    %s30 = sadd.s32 %s23, 1
    %s31 = ssub.s32 %s23, %s30
    %p32 = scmp.eq.s32.totalorder %s31, 0
    %s34 = sadd.s32 %s33, 1
    %s35 = scalar_select %p32, %s33, %s34
    %p38 = pneg %p32
    %p39 = scmp.eq.s32.totalorder %s23, 1
    %p40 = por %p38, %p39
    %p41 = scmp.ne.s32.totalorder %s33, %s36
    %p42 = scmp.eq.s32.totalorder %s23, 0
    %p43 = por %p41, %p42
    %p44 = scmp.ne.s32.totalorder %s33, %s36
    %p45 = scmp.eq.s32.totalorder %s28, 1
    %p46 = por %p44, %p45
    %p47 = scmp.ne.s32.totalorder %s36, %s37
    %p48 = scmp.eq.s32.totalorder %s28, 0
    %p49 = por %p47, %p48
    %p50 = scmp.ne.s32.totalorder %s36, %s37
    %p51 = scmp.eq.s32.totalorder %s29, 1
    %p52 = por %p50, %p51
    %p54 = scmp.ne.s32.totalorder %s37, %s53
    %p55 = scmp.eq.s32.totalorder %s29, 0
    %p56 = por %p54, %p55
    %s57 = ssub.s32 %s23, %s30
    %p58 = scmp.eq.s32.totalorder %s57, 0
    %s60 = sadd.s32 %s59, 1
    %s61 = scalar_select %p58, %s59, %s60
    %p64 = pneg %p58
    %p65 = scmp.eq.s32.totalorder %s23, 1
    %p66 = por %p64, %p65
    %p67 = scmp.ne.s32.totalorder %s59, %s62
    %p68 = scmp.eq.s32.totalorder %s23, 0
    %p69 = por %p67, %p68
    %p70 = scmp.ne.s32.totalorder %s59, %s62
    %p71 = scmp.eq.s32.totalorder %s28, 1
    %p72 = por %p70, %p71
    %p73 = scmp.ne.s32.totalorder %s62, %s63
    %p74 = scmp.eq.s32.totalorder %s28, 0
    %p75 = por %p73, %p74
    %p76 = scmp.ne.s32.totalorder %s62, %s63
    %p77 = scmp.eq.s32.totalorder %s29, 1
    %p78 = por %p76, %p77
    %p80 = scmp.ne.s32.totalorder %s63, %s79
    %p81 = scmp.eq.s32.totalorder %s29, 0
    %p82 = por %p80, %p81
    %s83 = ssub.s32 %s23, %s30
    %p84 = scmp.eq.s32.totalorder %s83, 0
    %s86 = sadd.s32 %s85, 1
    %s87 = scalar_select %p84, %s85, %s86
    %p90 = pneg %p84
    %p91 = scmp.eq.s32.totalorder %s23, 1
    %p92 = por %p90, %p91
    %p93 = scmp.ne.s32.totalorder %s85, %s88
    %p94 = scmp.eq.s32.totalorder %s23, 0
    %p95 = por %p93, %p94
    %p96 = scmp.ne.s32.totalorder %s85, %s88
    %p97 = scmp.eq.s32.totalorder %s28, 1
    %p98 = por %p96, %p97
    %p99 = scmp.ne.s32.totalorder %s88, %s89
    %p100 = scmp.eq.s32.totalorder %s28, 0
    %p101 = por %p99, %p100
    %p102 = scmp.ne.s32.totalorder %s88, %s89
    %p103 = scmp.eq.s32.totalorder %s29, 1
    %p104 = por %p102, %p103
    %p106 = scmp.ne.s32.totalorder %s89, %s105
    %p107 = scmp.eq.s32.totalorder %s29, 0
    %p108 = por %p106, %p107
    %s109 = ssub.s32 %s23, %s30
    %p110 = scmp.eq.s32.totalorder %s109, 0
    %s112 = sadd.s32 %s111, 1
    %s113 = scalar_select %p110, %s111, %s112
    %p116 = pneg %p110
    %p117 = scmp.eq.s32.totalorder %s23, 1
    %p118 = por %p116, %p117
    %p119 = scmp.ne.s32.totalorder %s111, %s114
    %p120 = scmp.eq.s32.totalorder %s23, 0
    %p121 = por %p119, %p120
    %p122 = scmp.ne.s32.totalorder %s111, %s114
    %p123 = scmp.eq.s32.totalorder %s28, 1
    %p124 = por %p122, %p123
    %p125 = scmp.ne.s32.totalorder %s114, %s115
    %p126 = scmp.eq.s32.totalorder %s28, 0
    %p127 = por %p125, %p126
    %p128 = scmp.ne.s32.totalorder %s114, %s115
    %p129 = scmp.eq.s32.totalorder %s29, 1
    %p130 = por %p128, %p129
    %p132 = scmp.ne.s32.totalorder %s115, %s131
    %p133 = scmp.eq.s32.totalorder %s29, 0
    %p134 = por %p132, %p133
    %s135 = ssub.s32 %s23, %s30
    %p136 = scmp.eq.s32.totalorder %s135, 0
    %s138 = sadd.s32 %s137, 1
    %s139 = scalar_select %p136, %s137, %s138
    %p142 = pneg %p136
    %p143 = scmp.eq.s32.totalorder %s23, 1
    %p144 = por %p142, %p143
    %p145 = scmp.ne.s32.totalorder %s137, %s140
    %p146 = scmp.eq.s32.totalorder %s23, 0
    %p147 = por %p145, %p146
    %p148 = scmp.ne.s32.totalorder %s137, %s140
    %p149 = scmp.eq.s32.totalorder %s28, 1
    %p150 = por %p148, %p149
    %p151 = scmp.ne.s32.totalorder %s140, %s141
    %p152 = scmp.eq.s32.totalorder %s28, 0
    %p153 = por %p151, %p152
    %p154 = scmp.ne.s32.totalorder %s140, %s141
    %p155 = scmp.eq.s32.totalorder %s29, 1
    %p156 = por %p154, %p155
    %p158 = scmp.ne.s32.totalorder %s141, %s157
    %p159 = scmp.eq.s32.totalorder %s29, 0
    %p160 = por %p158, %p159
    %s162 = sadd.s32 %s161, 1
    %p165 = scmp.eq.s32.totalorder %s23, 1
    %p166 = scmp.ne.s32.totalorder %s161, %s163
    %p167 = scmp.eq.s32.totalorder %s23, 0
    %p168 = por %p166, %p167
    %p169 = scmp.ne.s32.totalorder %s161, %s163
    %p170 = scmp.eq.s32.totalorder %s28, 1
    %p171 = por %p169, %p170
    %p172 = scmp.ne.s32.totalorder %s163, %s164
    %p173 = scmp.eq.s32.totalorder %s28, 0
    %p174 = por %p172, %p173
    %p175 = scmp.ne.s32.totalorder %s163, %s164
    %p176 = scmp.eq.s32.totalorder %s29, 1
    %p177 = por %p175, %p176
    %p179 = scmp.ne.s32.totalorder %s164, %s178
    %p180 = scmp.eq.s32.totalorder %s29, 0
    %p181 = por %p179, %p180
    %s183 = sadd.s32 %s182, 1
    %p186 = scmp.eq.s32.totalorder %s23, 1
    %p187 = scmp.ne.s32.totalorder %s182, %s184
    %p188 = scmp.eq.s32.totalorder %s23, 0
    %p189 = por %p187, %p188
    %p190 = scmp.ne.s32.totalorder %s182, %s184
    %p191 = scmp.eq.s32.totalorder %s28, 1
    %p192 = por %p190, %p191
    %p193 = scmp.ne.s32.totalorder %s184, %s185
    %p194 = scmp.eq.s32.totalorder %s28, 0
    %p195 = por %p193, %p194
    %p196 = scmp.ne.s32.totalorder %s184, %s185
    %p197 = scmp.eq.s32.totalorder %s29, 1
    %p198 = por %p196, %p197
    %p200 = scmp.ne.s32.totalorder %s185, %s199
    %p201 = scmp.eq.s32.totalorder %s29, 0
    %p202 = por %p200, %p201
    %s204 = sadd.s32 %s203, 1
    %p207 = scmp.eq.s32.totalorder %s23, 1
    %p208 = scmp.ne.s32.totalorder %s203, %s205
    %p209 = scmp.eq.s32.totalorder %s23, 0
    %p210 = por %p208, %p209
    %p211 = scmp.ne.s32.totalorder %s203, %s205
    %p212 = scmp.eq.s32.totalorder %s28, 1
    %p213 = por %p211, %p212
    %p214 = scmp.ne.s32.totalorder %s205, %s206
    %p215 = scmp.eq.s32.totalorder %s28, 0
    %p216 = por %p214, %p215
    %p217 = scmp.ne.s32.totalorder %s205, %s206
    %p218 = scmp.eq.s32.totalorder %s29, 1
    %p219 = por %p217, %p218
    %p221 = scmp.ne.s32.totalorder %s206, %s220
    %p222 = scmp.eq.s32.totalorder %s29, 0
    %p223 = por %p221, %p222
    %s225 = sadd.s32 %s224, 1
    %p228 = scmp.eq.s32.totalorder %s23, 1
    %p229 = scmp.ne.s32.totalorder %s224, %s226
    %p230 = scmp.eq.s32.totalorder %s23, 0
    %p231 = por %p229, %p230
    %p232 = scmp.ne.s32.totalorder %s224, %s226
    %p233 = scmp.eq.s32.totalorder %s28, 1
    %p234 = por %p232, %p233
    %p235 = scmp.ne.s32.totalorder %s226, %s227
    %p236 = scmp.eq.s32.totalorder %s28, 0
    %p237 = por %p235, %p236
    %p238 = scmp.ne.s32.totalorder %s226, %s227
    %p239 = scmp.eq.s32.totalorder %s29, 1
    %p240 = por %p238, %p239
    %p242 = scmp.ne.s32.totalorder %s227, %s241
    %p243 = scmp.eq.s32.totalorder %s29, 0
    %p244 = por %p242, %p243
    %s246 = sadd.s32 %s245, 1
    %p249 = scmp.eq.s32.totalorder %s23, 1
    %p250 = scmp.ne.s32.totalorder %s245, %s247
    %p251 = scmp.eq.s32.totalorder %s23, 0
    %p252 = por %p250, %p251
    %p253 = scmp.ne.s32.totalorder %s245, %s247
    %p254 = scmp.eq.s32.totalorder %s28, 1
    %p255 = por %p253, %p254
    %p256 = scmp.ne.s32.totalorder %s247, %s248
    %p257 = scmp.eq.s32.totalorder %s28, 0
    %p258 = por %p256, %p257
    %p259 = scmp.ne.s32.totalorder %s247, %s248
    %p260 = scmp.eq.s32.totalorder %s29, 1
    %p261 = por %p259, %p260
    %p263 = scmp.ne.s32.totalorder %s248, %s262
    %p264 = scmp.eq.s32.totalorder %s29, 0
    %p265 = por %p263, %p264
    %s267 = sadd.s32 %s266, 1
    %p270 = scmp.eq.s32.totalorder %s23, 1
    %p271 = scmp.ne.s32.totalorder %s266, %s268
    %p272 = scmp.eq.s32.totalorder %s23, 0
    %p273 = por %p271, %p272
    %p274 = scmp.ne.s32.totalorder %s266, %s268
    %p275 = scmp.eq.s32.totalorder %s28, 1
    %p276 = por %p274, %p275
    %p277 = scmp.ne.s32.totalorder %s268, %s269
    %p278 = scmp.eq.s32.totalorder %s28, 0
    %p279 = por %p277, %p278
    %p280 = scmp.ne.s32.totalorder %s268, %s269
    %p281 = scmp.eq.s32.totalorder %s29, 1
    %p282 = por %p280, %p281
    %p284 = scmp.ne.s32.totalorder %s269, %s283
    %p285 = scmp.eq.s32.totalorder %s29, 0
    %p286 = por %p284, %p285
    %s288 = sadd.s32 %s287, 1
    %p291 = scmp.eq.s32.totalorder %s23, 1
    %p292 = scmp.ne.s32.totalorder %s287, %s289
    %p293 = scmp.eq.s32.totalorder %s23, 0
    %p294 = por %p292, %p293
    %p295 = scmp.ne.s32.totalorder %s287, %s289
    %p296 = scmp.eq.s32.totalorder %s28, 1
    %p297 = por %p295, %p296
    %p298 = scmp.ne.s32.totalorder %s289, %s290
    %p299 = scmp.eq.s32.totalorder %s28, 0
    %p300 = por %p298, %p299
    %p301 = scmp.ne.s32.totalorder %s289, %s290
    %p302 = scmp.eq.s32.totalorder %s29, 1
    %p303 = por %p301, %p302
    %p305 = scmp.ne.s32.totalorder %s290, %s304
    %p306 = scmp.eq.s32.totalorder %s29, 0
    %p307 = por %p305, %p306
    %s309 = sadd.s32 %s308, 1
    %p312 = scmp.eq.s32.totalorder %s23, 1
    %p313 = scmp.ne.s32.totalorder %s308, %s310
    %p314 = scmp.eq.s32.totalorder %s23, 0
    %p315 = por %p313, %p314
    %p316 = scmp.ne.s32.totalorder %s308, %s310
    %p317 = scmp.eq.s32.totalorder %s28, 1
    %p318 = por %p316, %p317
    %p319 = scmp.ne.s32.totalorder %s310, %s311
    %p320 = scmp.eq.s32.totalorder %s28, 0
    %p321 = por %p319, %p320
    %p322 = scmp.ne.s32.totalorder %s310, %s311
    %p323 = scmp.eq.s32.totalorder %s29, 1
    %p324 = por %p322, %p323
    %p326 = scmp.ne.s32.totalorder %s311, %s325
    %p327 = scmp.eq.s32.totalorder %s29, 0
    %p328 = por %p326, %p327
    %s330 = sadd.s32 %s329, 1
    %p333 = scmp.eq.s32.totalorder %s23, 1
    %p334 = scmp.ne.s32.totalorder %s329, %s331
    %p335 = scmp.eq.s32.totalorder %s23, 0
    %p336 = por %p334, %p335
    %p337 = scmp.ne.s32.totalorder %s329, %s331
    %p338 = scmp.eq.s32.totalorder %s28, 1
    %p339 = por %p337, %p338
    %p340 = scmp.ne.s32.totalorder %s331, %s332
    %p341 = scmp.eq.s32.totalorder %s28, 0
    %p342 = por %p340, %p341
    %p343 = scmp.ne.s32.totalorder %s331, %s332
    %p344 = scmp.eq.s32.totalorder %s29, 1
    %p345 = por %p343, %p344
    %p347 = scmp.ne.s32.totalorder %s332, %s346
    %p348 = scmp.eq.s32.totalorder %s29, 0
    %p349 = por %p347, %p348
    %s350 = ssub.s32 %s23, %s30
    %p351 = scmp.eq.s32.totalorder %s350, 0
    %s353 = sadd.s32 %s352, 1
    %s354 = scalar_select %p351, %s352, %s353
    %p357 = pneg %p351
    %p358 = scmp.eq.s32.totalorder %s23, 1
    %p359 = por %p357, %p358
    %p360 = scmp.ne.s32.totalorder %s352, %s355
    %p361 = scmp.eq.s32.totalorder %s23, 0
    %p362 = por %p360, %p361
    %p363 = scmp.ne.s32.totalorder %s352, %s355
    %p364 = scmp.eq.s32.totalorder %s28, 1
    %p365 = por %p363, %p364
    %p366 = scmp.ne.s32.totalorder %s355, %s356
    %p367 = scmp.eq.s32.totalorder %s28, 0
    %p368 = por %p366, %p367
    %p369 = scmp.ne.s32.totalorder %s355, %s356
    %p370 = scmp.eq.s32.totalorder %s29, 1
    %p371 = por %p369, %p370
    %p373 = scmp.ne.s32.totalorder %s356, %s372
    %p374 = scmp.eq.s32.totalorder %s29, 0
    %p375 = por %p373, %p374
    %s376 = ssub.s32 %s23, %s30
    %p377 = scmp.eq.s32.totalorder %s376, 0
    %s379 = sadd.s32 %s378, 1
    %s380 = scalar_select %p377, %s378, %s379
    %p383 = pneg %p377
    %p384 = scmp.eq.s32.totalorder %s23, 1
    %p385 = por %p383, %p384
    %p386 = scmp.ne.s32.totalorder %s378, %s381
    %p387 = scmp.eq.s32.totalorder %s23, 0
    %p388 = por %p386, %p387
    %p389 = scmp.ne.s32.totalorder %s378, %s381
    %p390 = scmp.eq.s32.totalorder %s28, 1
    %p391 = por %p389, %p390
    %p392 = scmp.ne.s32.totalorder %s381, %s382
    %p393 = scmp.eq.s32.totalorder %s28, 0
    %p394 = por %p392, %p393
    %p395 = scmp.ne.s32.totalorder %s381, %s382
    %p396 = scmp.eq.s32.totalorder %s29, 1
    %p397 = por %p395, %p396
    %p399 = scmp.ne.s32.totalorder %s382, %s398
    %p400 = scmp.eq.s32.totalorder %s29, 0
    %p401 = por %p399, %p400
    %s402 = ssub.s32 %s23, %s30
    %p403 = scmp.eq.s32.totalorder %s402, 0
    %s405 = sadd.s32 %s404, 1
    %s406 = scalar_select %p403, %s404, %s405
    %p409 = pneg %p403
    %p410 = scmp.eq.s32.totalorder %s23, 1
    %p411 = por %p409, %p410
    %p412 = scmp.ne.s32.totalorder %s404, %s407
    %p413 = scmp.eq.s32.totalorder %s23, 0
    %p414 = por %p412, %p413
    %p415 = scmp.ne.s32.totalorder %s404, %s407
    %p416 = scmp.eq.s32.totalorder %s28, 1
    %p417 = por %p415, %p416
    %p418 = scmp.ne.s32.totalorder %s407, %s408
    %p419 = scmp.eq.s32.totalorder %s28, 0
    %p420 = por %p418, %p419
    %p421 = scmp.ne.s32.totalorder %s407, %s408
    %p422 = scmp.eq.s32.totalorder %s29, 1
    %p423 = por %p421, %p422
    %p425 = scmp.ne.s32.totalorder %s408, %s424
    %p426 = scmp.eq.s32.totalorder %s29, 0
    %p427 = por %p425, %p426
    %p428 = scmp.le.s32.totalorder 1, %s23
    %p429 = scmp.lt.s32.totalorder %s23, 3
    %p430 = pnand %p428, %p429
    %p431 = pneg %p430
    // Predicated region
    $region9: #{_forward.5} parent=5 // pred_check
      _
    $region10: #{_forward.5} parent=5 // pred_check_branch
      %433 = sbr.rel (%p430) target = $region12
    $region11: #{_forward.5} parent=5 // pred_region
      %s434 = ssub.s32 %s23, 1
      // Predicated region
      $region13: #{_forward.5} parent=11 // pred_check
        %p435 = pneg %p174
      $region14: #{_forward.5} parent=11 // pred_check_branch
        %437 = sbr.rel (%p435) target = $region16
      $region15: #{_forward.5} parent=11 // pred_region
        _
      $region16: #{_forward.5} parent=11 // pred_fallthru
        _
      // Predicated region
      $region17: #{_forward.5} parent=11 // pred_check
        %p438 = pneg %p195
      $region18: #{_forward.5} parent=11 // pred_check_branch
        %440 = sbr.rel (%p438) target = $region20
      $region19: #{_forward.5} parent=11 // pred_region
        _
      $region20: #{_forward.5} parent=11 // pred_fallthru
        _
      // Predicated region
      $region21: #{_forward.5} parent=11 // pred_check
        %p441 = pneg %p216
      $region22: #{_forward.5} parent=11 // pred_check_branch
        %443 = sbr.rel (%p441) target = $region24
      $region23: #{_forward.5} parent=11 // pred_region
        _
      $region24: #{_forward.5} parent=11 // pred_fallthru
        _
      // Predicated region
      $region25: #{_forward.5} parent=11 // pred_check
        %p444 = pneg %p237
      $region26: #{_forward.5} parent=11 // pred_check_branch
        %446 = sbr.rel (%p444) target = $region28
      $region27: #{_forward.5} parent=11 // pred_region
        _
      $region28: #{_forward.5} parent=11 // pred_fallthru
        _
      // Predicated region
      $region29: #{_forward.5} parent=11 // pred_check
        %p447 = pneg %p258
      $region30: #{_forward.5} parent=11 // pred_check_branch
        %449 = sbr.rel (%p447) target = $region32
      $region31: #{_forward.5} parent=11 // pred_region
        _
      $region32: #{_forward.5} parent=11 // pred_fallthru
        _
      // Predicated region
      $region33: #{_forward.5} parent=11 // pred_check
        %p450 = pneg %p279
      $region34: #{_forward.5} parent=11 // pred_check_branch
        %452 = sbr.rel (%p450) target = $region36
      $region35: #{_forward.5} parent=11 // pred_region
        _
      $region36: #{_forward.5} parent=11 // pred_fallthru
        _
      // Predicated region
      $region37: #{_forward.5} parent=11 // pred_check
        %p453 = pneg %p300
      $region38: #{_forward.5} parent=11 // pred_check_branch
        %455 = sbr.rel (%p453) target = $region40
      $region39: #{_forward.5} parent=11 // pred_region
        _
      $region40: #{_forward.5} parent=11 // pred_fallthru
        _
      // Predicated region
      $region41: #{_forward.5} parent=11 // pred_check
        %p456 = pneg %p321
      $region42: #{_forward.5} parent=11 // pred_check_branch
        %458 = sbr.rel (%p456) target = $region44
      $region43: #{_forward.5} parent=11 // pred_region
        _
      $region44: #{_forward.5} parent=11 // pred_fallthru
        _
      // Predicated region
      $region45: #{_forward.5} parent=11 // pred_check
        %p459 = pneg %p342
      $region46: #{_forward.5} parent=11 // pred_check_branch
        %461 = sbr.rel (%p459) target = $region48
      $region47: #{_forward.5} parent=11 // pred_region
        _
      $region48: #{_forward.5} parent=11 // pred_fallthru
        _
    $region12: #{_forward.5} parent=5 // pred_fallthru
      _
    %p462 = scmp.lt.s32.totalorder %s23, 2
    // Predicated region
    $region49: #{_forward.5} parent=5 // pred_check
      %p463 = pneg %p462
    $region50: #{_forward.5} parent=5 // pred_check_branch
      %465 = sbr.rel (%p463) target = $region52
    $region51: #{_forward.5} parent=5 // pred_region
      // Predicated region
      $region53: #{_forward.5} parent=51 // pred_check
        %p466 = pneg %p43
      $region54: #{_forward.5} parent=51 // pred_check_branch
        %468 = sbr.rel (%p466) target = $region56
      $region55: #{_forward.5} parent=51 // pred_region
        %p469 = scmp.lt.s32.totalorder %s23, 1
        %s470 = scalar_select %p469, %s23, 1
        %s471 = smul.addr %s470, 8
        %s472 = scalar_lea.vmem %s0, %s471
      $region56: #{_forward.5} parent=51 // pred_fallthru
        _
      // Predicated region
      $region57: #{_forward.5} parent=51 // pred_check
        %p473 = pneg %p69
      $region58: #{_forward.5} parent=51 // pred_check_branch
        %475 = sbr.rel (%p473) target = $region60
      $region59: #{_forward.5} parent=51 // pred_region
        %p476 = scmp.lt.s32.totalorder %s23, 1
        %s477 = scalar_select %p476, %s23, 1
        %s478 = scalar_lea.vmem %s1, %s477
      $region60: #{_forward.5} parent=51 // pred_fallthru
        _
      // Predicated region
      $region61: #{_forward.5} parent=51 // pred_check
        %p479 = pneg %p95
      $region62: #{_forward.5} parent=51 // pred_check_branch
        %481 = sbr.rel (%p479) target = $region64
      $region63: #{_forward.5} parent=51 // pred_region
        %p482 = scmp.lt.s32.totalorder %s23, 1
        %s483 = scalar_select %p482, %s23, 1
        %s484 = smul.addr %s483, 8
        %s485 = scalar_lea.vmem %s2, %s484
      $region64: #{_forward.5} parent=51 // pred_fallthru
        _
      // Predicated region
      $region65: #{_forward.5} parent=51 // pred_check
        %p486 = pneg %p121
      $region66: #{_forward.5} parent=51 // pred_check_branch
        %488 = sbr.rel (%p486) target = $region68
      $region67: #{_forward.5} parent=51 // pred_region
        %p489 = scmp.lt.s32.totalorder %s23, 1
        %s490 = scalar_select %p489, %s23, 1
        %s491 = smul.addr %s490, 8
        %s492 = smul.addr %s491, 8
        %s493 = scalar_lea.vmem %s3, %s492
      $region68: #{_forward.5} parent=51 // pred_fallthru
        _
      // Predicated region
      $region69: #{_forward.5} parent=51 // pred_check
        %p494 = pneg %p147
      $region70: #{_forward.5} parent=51 // pred_check_branch
        %496 = sbr.rel (%p494) target = $region72
      $region71: #{_forward.5} parent=51 // pred_region
        %p497 = scmp.lt.s32.totalorder %s23, 1
        %s498 = scalar_select %p497, %s23, 1
        %s499 = scalar_lea.vmem %s4, %s498
      $region72: #{_forward.5} parent=51 // pred_fallthru
        _
    $region52: #{_forward.5} parent=5 // pred_fallthru
      _
    %p500 = scmp.le.s32.totalorder 1, %s23
    %p501 = scmp.lt.s32.totalorder %s23, 3
    %p502 = pnand %p500, %p501
    %p503 = pneg %p502
    // Predicated region
    $region73: #{_forward.5} parent=5 // pred_check
      _
    $region74: #{_forward.5} parent=5 // pred_check_branch
      %505 = sbr.rel (%p502) target = $region76
    $region75: #{_forward.5} parent=5 // pred_region
      %s506 = ssub.s32 %s23, 1
      %p507 = scmp.lt.s32.totalorder %s28, 1
      %s508 = scalar_select %p507, %s28, 1
      %s509 = smul.addr %s508, 8
      %s510 = scalar_lea.vmem %s0, %s509
      %p511 = pneg %p49
      %p512 = pneg %p46
      %p513 = scmp.lt.s32.totalorder %s28, 1
      %s514 = scalar_select %p513, %s28, 1
      %s515 = scalar_lea.vmem %s1, %s514
      %p516 = pneg %p75
      %p517 = pneg %p72
      %p518 = scmp.lt.s32.totalorder %s28, 1
      %s519 = scalar_select %p518, %s28, 1
      %s520 = smul.addr %s519, 8
      %s521 = scalar_lea.vmem %s2, %s520
      %p522 = pneg %p101
      %p523 = pneg %p98
      %p524 = scmp.lt.s32.totalorder %s28, 1
      %s525 = scalar_select %p524, %s28, 1
      %s526 = smul.addr %s525, 8
      %s527 = smul.addr %s526, 8
      %s528 = scalar_lea.vmem %s3, %s527
      %p529 = pneg %p127
      %p530 = pneg %p124
      %p531 = scmp.lt.s32.totalorder %s28, 1
      %s532 = scalar_select %p531, %s28, 1
      %s533 = scalar_lea.vmem %s4, %s532
      %p534 = pneg %p153
      %p535 = pneg %p150
      %p536 = pneg %p174
      %p537 = pneg %p171
      %p538 = pneg %p195
      %p539 = pneg %p192
      %p540 = pneg %p216
      %p541 = pneg %p213
      %p542 = pneg %p237
      %p543 = pneg %p234
      %p544 = pneg %p258
      %p545 = pneg %p255
      %p546 = pneg %p279
      %p547 = pneg %p276
      %p548 = pneg %p300
      %p549 = pneg %p297
      %p550 = pneg %p321
      %p551 = pneg %p318
      %p552 = pneg %p342
      %p553 = pneg %p339
      %p554 = pneg %p368
      %p555 = pneg %p365
      %p556 = scmp.lt.s32.totalorder %s28, 1
      %s557 = scalar_select %p556, %s28, 1
      %s558 = smul.addr %s557, 8
      %s559 = scalar_lea.vmem %s14, %s558
      %p560 = pneg %p394
      %p561 = pneg %p391
      %p562 = scmp.lt.s32.totalorder %s28, 1
      %s563 = scalar_select %p562, %s28, 1
      %s564 = smul.addr %s563, 8
      %s565 = smul.addr %s564, 8
      %s566 = scalar_lea.vmem %s15, %s565
      %p567 = pneg %p420
      %p568 = pneg %p417
      %p569 = scmp.lt.s32.totalorder %s28, 1
      %s570 = scalar_select %p569, %s28, 1
      %s571 = scalar_lea.vmem %s16, %s570
      %p572 = scmp.lt.s32.totalorder %s28, 1
      %s573 = scalar_select %p572, %s28, 1
      %s574 = smul.addr %s573, 8
      %s575 = scalar_lea.vmem %s0, %s574
      %p576 = scmp.lt.s32.totalorder %s28, 1
      %s577 = scalar_select %p576, %s28, 1
      %s578 = scalar_lea.vmem %s1, %s577
      %p579 = scmp.lt.s32.totalorder %s28, 1
      %s580 = scalar_select %p579, %s28, 1
      %s581 = smul.addr %s580, 8
      %s582 = scalar_lea.vmem %s2, %s581
      %p583 = scmp.lt.s32.totalorder %s28, 1
      %s584 = scalar_select %p583, %s28, 1
      %s585 = smul.addr %s584, 8
      %s586 = smul.addr %s585, 8
      %s587 = scalar_lea.vmem %s3, %s586
      %p588 = scmp.lt.s32.totalorder %s28, 1
      %s589 = scalar_select %p588, %s28, 1
      %s590 = scalar_lea.vmem %s4, %s589
      %p591 = scmp.lt.s32.totalorder %s28, 1
      %s592 = scalar_select %p591, %s28, 1
      %s593 = smul.addr %s592, 8
      %s594 = scalar_lea.vmem %s14, %s593
      %p595 = scmp.lt.s32.totalorder %s28, 1
      %s596 = scalar_select %p595, %s28, 1
      %s597 = smul.addr %s596, 8
      %s598 = smul.addr %s597, 8
      %s599 = scalar_lea.vmem %s15, %s598
      %p600 = scmp.lt.s32.totalorder %s28, 1
      %s601 = scalar_select %p600, %s28, 1
      %s602 = scalar_lea.vmem %s16, %s601
      %v603 = vld [vmem:[%s575] sm:$0xff]
      %v604 = vld [vmem:[%s578] sm:$0x1]
      %v605 = vld [vmem:[%s582] sm:$0xff]
      %v606 = vld [vmem:[%s587] sm:$0xff]
      %v607 = vld [vmem:[%s587 + $0x8] sm:$0xff]
      %v608 = vld [vmem:[%s587 + $0x10] sm:$0xff]
      %v609 = vld [vmem:[%s587 + $0x18] sm:$0xff]
      %v610 = vld [vmem:[%s587 + $0x20] sm:$0xff]
      %v611 = vld [vmem:[%s587 + $0x28] sm:$0xff]
      %v612 = vld [vmem:[%s587 + $0x30] sm:$0xff]
      %v613 = vld [vmem:[%s587 + $0x38] sm:$0xff]
      %v614 = vld [vmem:[%s590] sm:$0x1]
      %v615 = vlaneseq
      %v616 = vshrl.u32 %v615, 7
      %v617 = vadd.s32 %v616, 8
      %v618 = vadd.s32 %v616, 16
      %v619 = vadd.s32 %v616, 24
      %v620 = vadd.s32 %v616, 32
      %v621 = vadd.s32 %v616, 40
      %v622 = vadd.s32 %v616, 48
      %v623 = vadd.s32 %v616, 56
      %v624 = vlaneseq
      %v625 = vand.u32 %v624, 127
      %v626 = vmul.u32 %v625, 8
      %vm627 = vcmp.ge.s32.totalorder %v616, %v626
      %vm628 = vcmp.ge.s32.totalorder %v617, %v626
      %vm629 = vcmp.ge.s32.totalorder %v618, %v626
      %vm630 = vcmp.ge.s32.totalorder %v619, %v626
      %vm631 = vcmp.ge.s32.totalorder %v620, %v626
      %vm632 = vcmp.ge.s32.totalorder %v621, %v626
      %vm633 = vcmp.ge.s32.totalorder %v622, %v626
      %vm634 = vcmp.ge.s32.totalorder %v623, %v626
      %v635 = vadd.s32 %v625, 1
      %v636 = vmul.u32 %v635, 8
      %vm637 = vcmp.lt.s32.totalorder %v616, %v636
      %vm638 = vcmp.lt.s32.totalorder %v617, %v636
      %vm639 = vcmp.lt.s32.totalorder %v618, %v636
      %vm640 = vcmp.lt.s32.totalorder %v619, %v636
      %vm641 = vcmp.lt.s32.totalorder %v620, %v636
      %vm642 = vcmp.lt.s32.totalorder %v621, %v636
      %vm643 = vcmp.lt.s32.totalorder %v622, %v636
      %vm644 = vcmp.lt.s32.totalorder %v623, %v636
      %vm645 = vmand %vm627, %vm637
      %vm646 = vmand %vm628, %vm638
      %vm647 = vmand %vm629, %vm639
      %vm648 = vmand %vm630, %vm640
      %vm649 = vmand %vm631, %vm641
      %vm650 = vmand %vm632, %vm642
      %vm651 = vmand %vm633, %vm643
      %vm652 = vmand %vm634, %vm644
      %v653 = vsel %vm645, 1, 0
      %v654 = vsel %vm646, 1, 0
      %v655 = vsel %vm647, 1, 0
      %v656 = vsel %vm648, 1, 0
      %v657 = vsel %vm649, 1, 0
      %v658 = vsel %vm650, 1, 0
      %v659 = vsel %vm651, 1, 0
      %v660 = vsel %vm652, 1, 0
      %v661 = vcvt.s32.f32 %v653
      %v662 = vcvt.s32.f32 %v654
      %v663 = vcvt.s32.f32 %v655
      %v664 = vcvt.s32.f32 %v656
      %v665 = vcvt.s32.f32 %v657
      %v666 = vcvt.s32.f32 %v658
      %v667 = vcvt.s32.f32 %v659
      %v668 = vcvt.s32.f32 %v660
      %v669 = vmul.u32 %v616, 8
      %vm670 = vcmp.ge.s32.totalorder %v625, %v669
      %v671 = vadd.s32 %v616, 1
      %v672 = vmul.u32 %v671, 8
      %vm673 = vcmp.lt.s32.totalorder %v625, %v672
      %vm674 = vmand %vm670, %vm673
      %v675 = vsel %vm674, 1, 0
      %v676 = vcvt.s32.f32 %v675
      %v678 = vlaneseq
      %v679 = vshrl.u32 %v678, 7
      %v680 = vsub.s32 0, %v679
      %v681 = vrot.slane %v604, %v680
      %v683 = vmul.f32 %v661, %v681
      %v684 = vmul.f32 %v662, %v681
      %v685 = vmul.f32 %v663, %v681
      %v686 = vmul.f32 %v664, %v681
      %v687 = vmul.f32 %v665, %v681
      %v688 = vmul.f32 %v666, %v681
      %v689 = vmul.f32 %v667, %v681
      %v690 = vmul.f32 %v668, %v681
      %vm691 = vcmask 64512
      %v692 = vsel %vm691, %v683, 0.0
      %693 = vadd.xlane.f32.xlu0 %v692
      %v694 = vpop.xlane.xlu0 %693
      %v695 = vsel %vm691, %v684, 0.0
      %696 = vadd.xlane.f32.xlu0 %v695
      %v697 = vpop.xlane.xlu0 %696
      %v698 = vsel %vm691, %v685, 0.0
      %699 = vadd.xlane.f32.xlu0 %v698
      %v700 = vpop.xlane.xlu0 %699
      %v701 = vsel %vm691, %v686, 0.0
      %702 = vadd.xlane.f32.xlu0 %v701
      %v703 = vpop.xlane.xlu0 %702
      %v704 = vsel %vm691, %v687, 0.0
      %705 = vadd.xlane.f32.xlu0 %v704
      %v706 = vpop.xlane.xlu0 %705
      %v707 = vsel %vm691, %v688, 0.0
      %708 = vadd.xlane.f32.xlu0 %v707
      %v709 = vpop.xlane.xlu0 %708
      %v710 = vsel %vm691, %v689, 0.0
      %711 = vadd.xlane.f32.xlu0 %v710
      %v712 = vpop.xlane.xlu0 %711
      %v713 = vsel %vm691, %v690, 0.0
      %714 = vadd.xlane.f32.xlu0 %v713
      %v715 = vpop.xlane.xlu0 %714
      %v716 = vmul.f32 %v694, %v603
      %v717 = vmul.f32 %v697, %v603
      %v718 = vmul.f32 %v700, %v603
      %v719 = vmul.f32 %v703, %v603
      %v720 = vmul.f32 %v706, %v603
      %v721 = vmul.f32 %v709, %v603
      %v722 = vmul.f32 %v712, %v603
      %v723 = vmul.f32 %v715, %v603
      %v724 = vld [vmem:[%s5] sm:$0xff]
      %v725 = vld [vmem:[%s5 + $0x10] sm:$0xff]
      %v726 = vld [vmem:[%s5 + $0x20] sm:$0xff]
      %v727 = vld [vmem:[%s5 + $0x30] sm:$0xff]
      %v728 = vld [vmem:[%s13] sm:$0x1]
      %v730 = vlaneseq
      %v731 = vshrl.u32 %v730, 7
      %v732 = vsub.s32 0, %v731
      %v733 = vrot.slane %v728, %v732
      %vm735 = vcmask 261120
      %v737 = vsel %vm735, %v605, 0
      %739 = vmatprep.subr.mxu0 0.0
      %740 = vmatpush1.msra.mxu0 %v724
      %741 = vmatprep.subr.mxu0 0.0
      %742 = vmatpush1.msra.mxu0 %v725
      %743 = vmatprep.subr.mxu0 0.0
      %744 = vmatpush1.msra.mxu0 %v726
      %745 = vmatprep.subr.mxu0 0.0
      %746 = vmatpush1.msra.mxu0 %v727
      %747 = vmatprep.subr.mxu0 0.0
      %748 = vmatpush1.msra.mxu0 0.0
      %749 = vmatprep.subr.mxu0 0.0
      %750 = vmatpush1.msra.mxu0 0.0
      %751 = vmatprep.subr.mxu0 0.0
      %752 = vmatpush1.msra.mxu0 0.0
      %753 = vmatprep.subr.mxu0 0.0
      %754 = vmatpush1.msra.mxu0 0.0
      %755 = vmatprep.subr.mxu0 0.0
      %756 = vmatpush1.msra.mxu0 0.0
      %757 = vmatprep.subr.mxu0 0.0
      %758 = vmatpush1.msra.mxu0 0.0
      %759 = vmatprep.subr.mxu0 0.0
      %760 = vmatpush1.msra.mxu0 0.0
      %761 = vmatprep.subr.mxu0 0.0
      %762 = vmatpush1.msra.mxu0 0.0
      %763 = vmatprep.subr.mxu0 0.0
      %764 = vmatpush1.msra.mxu0 0.0
      %765 = vmatprep.subr.mxu0 0.0
      %766 = vmatpush1.msra.mxu0 0.0
      %767 = vmatprep.subr.mxu0 0.0
      %768 = vmatpush1.msra.mxu0 0.0
      %769 = vmatprep.subr.mxu0 0.0
      %770 = vmatpush1.msra.mxu0 0.0
      %771 = vmatprep.subr.mxu0 0.0
      %772 = vmatpush1.msra.mxu0 0.0
      %773 = vmatprep.subr.mxu0 0.0
      %774 = vmatpush1.msra.mxu0 0.0
      %775 = vmatprep.subr.mxu0 0.0
      %776 = vmatpush1.msra.mxu0 0.0
      %777 = vmatprep.subr.mxu0 0.0
      %778 = vmatpush1.msra.mxu0 0.0
      %779 = vmatprep.subr.mxu0 0.0
      %780 = vmatpush1.msra.mxu0 0.0
      %781 = vmatprep.subr.mxu0 0.0
      %782 = vmatpush1.msra.mxu0 0.0
      %783 = vmatprep.subr.mxu0 0.0
      %784 = vmatpush1.msra.mxu0 0.0
      %785 = vmatprep.subr.mxu0 0.0
      %786 = vmatpush1.msra.mxu0 0.0
      %787 = vmatprep.subr.mxu0 0.0
      %788 = vmatpush1.msra.mxu0 0.0
      %789 = vmatprep.subr.mxu0 0.0
      %790 = vmatpush1.msra.mxu0 0.0
      %791 = vmatprep.subr.mxu0 0.0
      %792 = vmatpush1.msra.mxu0 0.0
      %793 = vmatprep.subr.mxu0 0.0
      %794 = vmatpush1.msra.mxu0 0.0
      %795 = vmatprep.subr.mxu0 0.0
      %796 = vmatpush1.msra.mxu0 0.0
      %797 = vmatprep.subr.mxu0 0.0
      %798 = vmatpush1.msra.mxu0 0.0
      %799 = vmatprep.subr.mxu0 0.0
      %800 = vmatpush1.msra.mxu0 0.0
      %801 = vmatprep.subr.mxu0 0.0
      %802 = vmatpush1.msra.mxu0 0.0
      %803 = vmatprep.mubr.f32.mxu0 0.0
      %804 = vmatmul.mubr.f32.gmra.mrb[0].mxu0 %v737
      %v805 = vpop.f32.mrb[0].mxu0
      %v806 = vadd.f32 %v733, %v805
      %v807 = vpop.f32.mrb[0].mxu0
      %808 = vdwg.mxu0
      %810 = vset.pattern.permute.xlu0 0
      %811 = vperm.xlu0 %810, %v603
      %v812 = vpop.permute.xlu0 %811
      %v814 = vmul.f32 %v806, %v812
      %v816 = vsel %vm691, %v661, 0
      %v819 = vsel %vm691, %v662, 0
      %v822 = vsel %vm691, %v663, 0
      %v825 = vsel %vm691, %v664, 0
      %v828 = vsel %vm691, %v665, 0
      %v831 = vsel %vm691, %v666, 0
      %v834 = vsel %vm691, %v667, 0
      %v837 = vsel %vm691, %v668, 0
      %839 = vmatprep.subr.mxu0 0.0
      %840 = vmatpush1.msra.mxu0 %v814
      %841 = vmatprep.subr.mxu0 0.0
      %842 = vmatpush1.msra.mxu0 0.0
      %843 = vmatprep.subr.mxu0 0.0
      %844 = vmatpush1.msra.mxu0 0.0
      %845 = vmatprep.subr.mxu0 0.0
      %846 = vmatpush1.msra.mxu0 0.0
      %847 = vmatprep.subr.mxu0 0.0
      %848 = vmatpush1.msra.mxu0 0.0
      %849 = vmatprep.subr.mxu0 0.0
      %850 = vmatpush1.msra.mxu0 0.0
      %851 = vmatprep.subr.mxu0 0.0
      %852 = vmatpush1.msra.mxu0 0.0
      %853 = vmatprep.subr.mxu0 0.0
      %854 = vmatpush1.msra.mxu0 0.0
      %855 = vmatprep.subr.mxu0 0.0
      %856 = vmatpush1.msra.mxu0 0.0
      %857 = vmatprep.subr.mxu0 0.0
      %858 = vmatpush1.msra.mxu0 0.0
      %859 = vmatprep.subr.mxu0 0.0
      %860 = vmatpush1.msra.mxu0 0.0
      %861 = vmatprep.subr.mxu0 0.0
      %862 = vmatpush1.msra.mxu0 0.0
      %863 = vmatprep.subr.mxu0 0.0
      %864 = vmatpush1.msra.mxu0 0.0
      %865 = vmatprep.subr.mxu0 0.0
      %866 = vmatpush1.msra.mxu0 0.0
      %867 = vmatprep.subr.mxu0 0.0
      %868 = vmatpush1.msra.mxu0 0.0
      %869 = vmatprep.subr.mxu0 0.0
      %870 = vmatpush1.msra.mxu0 0.0
      %871 = vmatprep.subr.mxu0 0.0
      %872 = vmatpush1.msra.mxu0 0.0
      %873 = vmatprep.subr.mxu0 0.0
      %874 = vmatpush1.msra.mxu0 0.0
      %875 = vmatprep.subr.mxu0 0.0
      %876 = vmatpush1.msra.mxu0 0.0
      %877 = vmatprep.subr.mxu0 0.0
      %878 = vmatpush1.msra.mxu0 0.0
      %879 = vmatprep.subr.mxu0 0.0
      %880 = vmatpush1.msra.mxu0 0.0
      %881 = vmatprep.subr.mxu0 0.0
      %882 = vmatpush1.msra.mxu0 0.0
      %883 = vmatprep.subr.mxu0 0.0
      %884 = vmatpush1.msra.mxu0 0.0
      %885 = vmatprep.subr.mxu0 0.0
      %886 = vmatpush1.msra.mxu0 0.0
      %887 = vmatprep.subr.mxu0 0.0
      %888 = vmatpush1.msra.mxu0 0.0
      %889 = vmatprep.subr.mxu0 0.0
      %890 = vmatpush1.msra.mxu0 0.0
      %891 = vmatprep.subr.mxu0 0.0
      %892 = vmatpush1.msra.mxu0 0.0
      %893 = vmatprep.subr.mxu0 0.0
      %894 = vmatpush1.msra.mxu0 0.0
      %895 = vmatprep.subr.mxu0 0.0
      %896 = vmatpush1.msra.mxu0 0.0
      %897 = vmatprep.subr.mxu0 0.0
      %898 = vmatpush1.msra.mxu0 0.0
      %899 = vmatprep.subr.mxu0 0.0
      %900 = vmatpush1.msra.mxu0 0.0
      %901 = vmatprep.subr.mxu0 0.0
      %902 = vmatpush1.msra.mxu0 0.0
      %903 = vmatprep.mubr.f32.mxu0 0.0
      %904 = vmatmul.mubr.f32.gmra.mrb[0].mxu0 %v816
      %v905 = vpop.f32.mrb[0].mxu0
      %v906 = vadd.f32 0.0, %v905
      %v907 = vpop.f32.mrb[0].mxu0
      %908 = vmatprep.mubr.f32.mxu0 0.0
      %909 = vmatmul.mubr.f32.gmra.mrb[0].mxu0 %v819
      %v910 = vpop.f32.mrb[0].mxu0
      %v911 = vadd.f32 0.0, %v910
      %v912 = vpop.f32.mrb[0].mxu0
      %913 = vmatprep.mubr.f32.mxu0 0.0
      %914 = vmatmul.mubr.f32.gmra.mrb[0].mxu0 %v822
      %v915 = vpop.f32.mrb[0].mxu0
      %v916 = vadd.f32 0.0, %v915
      %v917 = vpop.f32.mrb[0].mxu0
      %918 = vmatprep.mubr.f32.mxu0 0.0
      %919 = vmatmul.mubr.f32.gmra.mrb[0].mxu0 %v825
      %v920 = vpop.f32.mrb[0].mxu0
      %v921 = vadd.f32 0.0, %v920
      %v922 = vpop.f32.mrb[0].mxu0
      %923 = vmatprep.mubr.f32.mxu0 0.0
      %924 = vmatmul.mubr.f32.gmra.mrb[0].mxu0 %v828
      %v925 = vpop.f32.mrb[0].mxu0
      %v926 = vadd.f32 0.0, %v925
      %v927 = vpop.f32.mrb[0].mxu0
      %928 = vmatprep.mubr.f32.mxu0 0.0
      %929 = vmatmul.mubr.f32.gmra.mrb[0].mxu0 %v831
      %v930 = vpop.f32.mrb[0].mxu0
      %v931 = vadd.f32 0.0, %v930
      %v932 = vpop.f32.mrb[0].mxu0
      %933 = vmatprep.mubr.f32.mxu0 0.0
      %934 = vmatmul.mubr.f32.gmra.mrb[0].mxu0 %v834
      %v935 = vpop.f32.mrb[0].mxu0
      %v936 = vadd.f32 0.0, %v935
      %v937 = vpop.f32.mrb[0].mxu0
      %938 = vmatprep.mubr.f32.mxu0 0.0
      %939 = vmatmul.mubr.f32.gmra.mrb[0].mxu0 %v837
      %v940 = vpop.f32.mrb[0].mxu0
      %v941 = vadd.f32 0.0, %v940
      %v942 = vpop.f32.mrb[0].mxu0
      %943 = vdwg.mxu0
      %945 = vrot.lane.b32.xlu0 %v814, 96
      %v946 = vpop.permute.xlu0 %945
      %v948 = vmul.f32 %v906, %v946
      %v949 = vmul.f32 %v911, %v946
      %v950 = vmul.f32 %v916, %v946
      %v951 = vmul.f32 %v921, %v946
      %v952 = vmul.f32 %v926, %v946
      %v953 = vmul.f32 %v931, %v946
      %v954 = vmul.f32 %v936, %v946
      %v955 = vmul.f32 %v941, %v946
      %v957 = vsel %vm735, %v948, 0
      %v960 = vsel %vm735, %v949, 0
      %v963 = vsel %vm735, %v950, 0
      %v966 = vsel %vm735, %v951, 0
      %v969 = vsel %vm735, %v952, 0
      %v972 = vsel %vm735, %v953, 0
      %v975 = vsel %vm735, %v954, 0
      %v978 = vsel %vm735, %v955, 0
      %980 = vmatprep.subr.mxu0 0.0
      %981 = vmatpush1.msra.mxu0 %v661
      %982 = vmatprep.subr.mxu0 0.0
      %983 = vmatpush1.msra.mxu0 %v662
      %984 = vmatprep.subr.mxu0 0.0
      %985 = vmatpush1.msra.mxu0 %v663
      %986 = vmatprep.subr.mxu0 0.0
      %987 = vmatpush1.msra.mxu0 %v664
      %988 = vmatprep.subr.mxu0 0.0
      %989 = vmatpush1.msra.mxu0 0.0
      %990 = vmatprep.subr.mxu0 0.0
      %991 = vmatpush1.msra.mxu0 0.0
      %992 = vmatprep.subr.mxu0 0.0
      %993 = vmatpush1.msra.mxu0 0.0
      %994 = vmatprep.subr.mxu0 0.0
      %995 = vmatpush1.msra.mxu0 0.0
      %996 = vmatprep.subr.mxu0 0.0
      %997 = vmatpush1.msra.mxu0 0.0
      %998 = vmatprep.subr.mxu0 0.0
      %999 = vmatpush1.msra.mxu0 0.0
      %1000 = vmatprep.subr.mxu0 0.0
      %1001 = vmatpush1.msra.mxu0 0.0
      %1002 = vmatprep.subr.mxu0 0.0
      %1003 = vmatpush1.msra.mxu0 0.0
      %1004 = vmatprep.subr.mxu0 0.0
      %1005 = vmatpush1.msra.mxu0 0.0
      %1006 = vmatprep.subr.mxu0 0.0
      %1007 = vmatpush1.msra.mxu0 0.0
      %1008 = vmatprep.subr.mxu0 0.0
      %1009 = vmatpush1.msra.mxu0 0.0
      %1010 = vmatprep.subr.mxu0 0.0
      %1011 = vmatpush1.msra.mxu0 0.0
      %1012 = vmatprep.subr.mxu0 0.0
      %1013 = vmatpush1.msra.mxu0 0.0
      %1014 = vmatprep.subr.mxu0 0.0
      %1015 = vmatpush1.msra.mxu0 0.0
      %1016 = vmatprep.subr.mxu0 0.0
      %1017 = vmatpush1.msra.mxu0 0.0
      %1018 = vmatprep.subr.mxu0 0.0
      %1019 = vmatpush1.msra.mxu0 0.0
      %1020 = vmatprep.subr.mxu0 0.0
      %1021 = vmatpush1.msra.mxu0 0.0
      %1022 = vmatprep.subr.mxu0 0.0
      %1023 = vmatpush1.msra.mxu0 0.0
      %1024 = vmatprep.subr.mxu0 0.0
      %1025 = vmatpush1.msra.mxu0 0.0
      %1026 = vmatprep.subr.mxu0 0.0
      %1027 = vmatpush1.msra.mxu0 0.0
      %1028 = vmatprep.subr.mxu0 0.0
      %1029 = vmatpush1.msra.mxu0 0.0
      %1030 = vmatprep.subr.mxu0 0.0
      %1031 = vmatpush1.msra.mxu0 0.0
      %1032 = vmatprep.subr.mxu0 0.0
      %1033 = vmatpush1.msra.mxu0 0.0
      %1034 = vmatprep.subr.mxu0 0.0
      %1035 = vmatpush1.msra.mxu0 0.0
      %1036 = vmatprep.subr.mxu0 0.0
      %1037 = vmatpush1.msra.mxu0 0.0
      %1038 = vmatprep.subr.mxu0 0.0
      %1039 = vmatpush1.msra.mxu0 0.0
      %1040 = vmatprep.subr.mxu0 0.0
      %1041 = vmatpush1.msra.mxu0 0.0
      %1042 = vmatprep.subr.mxu0 0.0
      %1043 = vmatpush1.msra.mxu0 0.0
      %1044 = vmatprep.mubr.f32.mxu0 0.0
      %1045 = vmatmul.mubr.f32.gmra.mrb[0].mxu0 %v957
      %v1046 = vpop.f32.mrb[0].mxu0
      %v1047 = vadd.f32 0.0, %v1046
      %v1048 = vpop.f32.mrb[0].mxu0
      %1049 = vmatprep.mubr.f32.mxu0 0.0
      %1050 = vmatmul.mubr.f32.gmra.mrb[0].mxu0 %v960
      %v1051 = vpop.f32.mrb[0].mxu0
      %v1052 = vadd.f32 0.0, %v1051
      %v1053 = vpop.f32.mrb[0].mxu0
      %1054 = vmatprep.mubr.f32.mxu0 0.0
      %1055 = vmatmul.mubr.f32.gmra.mrb[0].mxu0 %v963
      %v1056 = vpop.f32.mrb[0].mxu0
      %v1057 = vadd.f32 0.0, %v1056
      %v1058 = vpop.f32.mrb[0].mxu0
      %1059 = vmatprep.mubr.f32.mxu0 0.0
      %1060 = vmatmul.mubr.f32.gmra.mrb[0].mxu0 %v966
      %v1061 = vpop.f32.mrb[0].mxu0
      %v1062 = vadd.f32 0.0, %v1061
      %v1063 = vpop.f32.mrb[0].mxu0
      %1064 = vmatprep.mubr.f32.mxu0 0.0
      %1065 = vmatmul.mubr.f32.gmra.mrb[0].mxu0 %v969
      %v1066 = vpop.f32.mrb[0].mxu0
      %v1067 = vadd.f32 0.0, %v1066
      %v1068 = vpop.f32.mrb[0].mxu0
      %1069 = vmatprep.mubr.f32.mxu0 0.0
      %1070 = vmatmul.mubr.f32.gmra.mrb[0].mxu0 %v972
      %v1071 = vpop.f32.mrb[0].mxu0
      %v1072 = vadd.f32 0.0, %v1071
      %v1073 = vpop.f32.mrb[0].mxu0
      %1074 = vmatprep.mubr.f32.mxu0 0.0
      %1075 = vmatmul.mubr.f32.gmra.mrb[0].mxu0 %v975
      %v1076 = vpop.f32.mrb[0].mxu0
      %v1077 = vadd.f32 0.0, %v1076
      %v1078 = vpop.f32.mrb[0].mxu0
      %1079 = vmatprep.mubr.f32.mxu0 0.0
      %1080 = vmatmul.mubr.f32.gmra.mrb[0].mxu0 %v978
      %v1081 = vpop.f32.mrb[0].mxu0
      %v1082 = vadd.f32 0.0, %v1081
      %v1083 = vpop.f32.mrb[0].mxu0
      %1084 = vdwg.mxu0
      %v1085 = vmul.f32 %v1047, 0.35355338
      %v1086 = vmul.f32 %v1052, 0.35355338
      %v1087 = vmul.f32 %v1057, 0.35355338
      %v1088 = vmul.f32 %v1062, 0.35355338
      %v1089 = vmul.f32 %v1067, 0.35355338
      %v1090 = vmul.f32 %v1072, 0.35355338
      %v1091 = vmul.f32 %v1077, 0.35355338
      %v1092 = vmul.f32 %v1082, 0.35355338
      %v1093 = vld [vmem:[%s6] sm:$0xff]
      %v1094 = vld [vmem:[%s6 + $0x8] sm:$0xff]
      %1095 = vrot.lane.b32.xlu0 %v733, 32
      %v1096 = vpop.permute.xlu0 %1095
      %vm1098 = vcmask 130048
      %v1100 = vsel %vm1098, %v606, 0
      %v1103 = vsel %vm1098, %v607, 0
      %v1106 = vsel %vm1098, %v608, 0
      %v1109 = vsel %vm1098, %v609, 0
      %v1112 = vsel %vm1098, %v610, 0
      %v1115 = vsel %vm1098, %v611, 0
      %v1118 = vsel %vm1098, %v612, 0
      %v1121 = vsel %vm1098, %v613, 0
      %1123 = vmatprep.subr.mxu0 0.0
      %1124 = vmatpush1.msra.mxu0 %v1093
      %1125 = vmatprep.subr.mxu0 0.0
      %1126 = vmatpush1.msra.mxu0 %v1094
      %1127 = vmatprep.subr.mxu0 0.0
      %1128 = vmatpush1.msra.mxu0 0.0
      %1129 = vmatprep.subr.mxu0 0.0
      %1130 = vmatpush1.msra.mxu0 0.0
      %1131 = vmatprep.subr.mxu0 0.0
      %1132 = vmatpush1.msra.mxu0 0.0
      %1133 = vmatprep.subr.mxu0 0.0
      %1134 = vmatpush1.msra.mxu0 0.0
      %1135 = vmatprep.subr.mxu0 0.0
      %1136 = vmatpush1.msra.mxu0 0.0
      %1137 = vmatprep.subr.mxu0 0.0
      %1138 = vmatpush1.msra.mxu0 0.0
      %1139 = vmatprep.subr.mxu0 0.0
      %1140 = vmatpush1.msra.mxu0 0.0
      %1141 = vmatprep.subr.mxu0 0.0
      %1142 = vmatpush1.msra.mxu0 0.0
      %1143 = vmatprep.subr.mxu0 0.0
      %1144 = vmatpush1.msra.mxu0 0.0
      %1145 = vmatprep.subr.mxu0 0.0
      %1146 = vmatpush1.msra.mxu0 0.0
      %1147 = vmatprep.subr.mxu0 0.0
      %1148 = vmatpush1.msra.mxu0 0.0
      %1149 = vmatprep.subr.mxu0 0.0
      %1150 = vmatpush1.msra.mxu0 0.0
      %1151 = vmatprep.subr.mxu0 0.0
      %1152 = vmatpush1.msra.mxu0 0.0
      %1153 = vmatprep.subr.mxu0 0.0
      %1154 = vmatpush1.msra.mxu0 0.0
      %1155 = vmatprep.subr.mxu0 0.0
      %1156 = vmatpush1.msra.mxu0 0.0
      %1157 = vmatprep.subr.mxu0 0.0
      %1158 = vmatpush1.msra.mxu0 0.0
      %1159 = vmatprep.subr.mxu0 0.0
      %1160 = vmatpush1.msra.mxu0 0.0
      %1161 = vmatprep.subr.mxu0 0.0
      %1162 = vmatpush1.msra.mxu0 0.0
      %1163 = vmatprep.subr.mxu0 0.0
      %1164 = vmatpush1.msra.mxu0 0.0
      %1165 = vmatprep.subr.mxu0 0.0
      %1166 = vmatpush1.msra.mxu0 0.0
      %1167 = vmatprep.subr.mxu0 0.0
      %1168 = vmatpush1.msra.mxu0 0.0
      %1169 = vmatprep.subr.mxu0 0.0
      %1170 = vmatpush1.msra.mxu0 0.0
      %1171 = vmatprep.subr.mxu0 0.0
      %1172 = vmatpush1.msra.mxu0 0.0
      %1173 = vmatprep.subr.mxu0 0.0
      %1174 = vmatpush1.msra.mxu0 0.0
      %1175 = vmatprep.subr.mxu0 0.0
      %1176 = vmatpush1.msra.mxu0 0.0
      %1177 = vmatprep.subr.mxu0 0.0
      %1178 = vmatpush1.msra.mxu0 0.0
      %1179 = vmatprep.subr.mxu0 0.0
      %1180 = vmatpush1.msra.mxu0 0.0
      %1181 = vmatprep.subr.mxu0 0.0
      %1182 = vmatpush1.msra.mxu0 0.0
      %1183 = vmatprep.subr.mxu0 0.0
      %1184 = vmatpush1.msra.mxu0 0.0
      %1185 = vmatprep.subr.mxu0 0.0
      %1186 = vmatpush1.msra.mxu0 0.0
      %1187 = vmatprep.mubr.f32.mxu0 0.0
      %1188 = vmatmul.mubr.f32.gmra.mrb[0].mxu0 %v1100
      %v1189 = vpop.f32.mrb[0].mxu0
      %v1190 = vadd.f32 %v1096, %v1189
      %v1191 = vpop.f32.mrb[0].mxu0
      %1192 = vmatprep.mubr.f32.mxu0 0.0
      %1193 = vmatmul.mubr.f32.gmra.mrb[0].mxu0 %v1103
      %v1194 = vpop.f32.mrb[0].mxu0
      %v1195 = vadd.f32 %v1096, %v1194
      %v1196 = vpop.f32.mrb[0].mxu0
      %1197 = vmatprep.mubr.f32.mxu0 0.0
      %1198 = vmatmul.mubr.f32.gmra.mrb[0].mxu0 %v1106
      %v1199 = vpop.f32.mrb[0].mxu0
      %v1200 = vadd.f32 %v1096, %v1199
      %v1201 = vpop.f32.mrb[0].mxu0
      %1202 = vmatprep.mubr.f32.mxu0 0.0
      %1203 = vmatmul.mubr.f32.gmra.mrb[0].mxu0 %v1109
      %v1204 = vpop.f32.mrb[0].mxu0
      %v1205 = vadd.f32 %v1096, %v1204
      %v1206 = vpop.f32.mrb[0].mxu0
      %1207 = vmatprep.mubr.f32.mxu0 0.0
      %1208 = vmatmul.mubr.f32.gmra.mrb[0].mxu0 %v1112
      %v1209 = vpop.f32.mrb[0].mxu0
      %v1210 = vadd.f32 %v1096, %v1209
      %v1211 = vpop.f32.mrb[0].mxu0
      %1212 = vmatprep.mubr.f32.mxu0 0.0
      %1213 = vmatmul.mubr.f32.gmra.mrb[0].mxu0 %v1115
      %v1214 = vpop.f32.mrb[0].mxu0
      %v1215 = vadd.f32 %v1096, %v1214
      %v1216 = vpop.f32.mrb[0].mxu0
      %1217 = vmatprep.mubr.f32.mxu0 0.0
      %1218 = vmatmul.mubr.f32.gmra.mrb[0].mxu0 %v1118
      %v1219 = vpop.f32.mrb[0].mxu0
      %v1220 = vadd.f32 %v1096, %v1219
      %v1221 = vpop.f32.mrb[0].mxu0
      %1222 = vmatprep.mubr.f32.mxu0 0.0
      %1223 = vmatmul.mubr.f32.gmra.mrb[0].mxu0 %v1121
      %v1224 = vpop.f32.mrb[0].mxu0
      %v1225 = vadd.f32 %v1096, %v1224
      %v1226 = vpop.f32.mrb[0].mxu0
      %1227 = vdwg.mxu0
      %1229 = vset.pattern.permute.xlu0 0
      %1230 = vperm.xlu0 %1229, %v716
      %v1231 = vpop.permute.xlu0 %1230
      %1234 = vset.pattern.permute.xlu0 0
      %1235 = vperm.xlu0 %1234, %v717
      %v1236 = vpop.permute.xlu0 %1235
      %1239 = vset.pattern.permute.xlu0 0
      %1240 = vperm.xlu0 %1239, %v718
      %v1241 = vpop.permute.xlu0 %1240
      %1244 = vset.pattern.permute.xlu0 0
      %1245 = vperm.xlu0 %1244, %v719
      %v1246 = vpop.permute.xlu0 %1245
      %1249 = vset.pattern.permute.xlu0 0
      %1250 = vperm.xlu0 %1249, %v720
      %v1251 = vpop.permute.xlu0 %1250
      %1254 = vset.pattern.permute.xlu0 0
      %1255 = vperm.xlu0 %1254, %v721
      %v1256 = vpop.permute.xlu0 %1255
      %1259 = vset.pattern.permute.xlu0 0
      %1260 = vperm.xlu0 %1259, %v722
      %v1261 = vpop.permute.xlu0 %1260
      %1264 = vset.pattern.permute.xlu0 0
      %1265 = vperm.xlu0 %1264, %v723
      %v1266 = vpop.permute.xlu0 %1265
      %v1268 = vmul.f32 %v1190, %v1231
      %v1269 = vmul.f32 %v1195, %v1236
      %v1270 = vmul.f32 %v1200, %v1241
      %v1271 = vmul.f32 %v1205, %v1246
      %v1272 = vmul.f32 %v1210, %v1251
      %v1273 = vmul.f32 %v1215, %v1256
      %v1274 = vmul.f32 %v1220, %v1261
      %v1275 = vmul.f32 %v1225, %v1266
      %v1276 = vadd.f32 %v1268, 1.0
      %v1277 = vadd.f32 %v1269, 1.0
      %v1278 = vadd.f32 %v1270, 1.0
      %v1279 = vadd.f32 %v1271, 1.0
      %v1280 = vadd.f32 %v1272, 1.0
      %v1281 = vadd.f32 %v1273, 1.0
      %v1282 = vadd.f32 %v1274, 1.0
      %v1283 = vadd.f32 %v1275, 1.0
      %v1284 = vmul.f32 %v1085, %v1276
      %v1285 = vmul.f32 %v1086, %v1277
      %v1286 = vmul.f32 %v1087, %v1278
      %v1287 = vmul.f32 %v1088, %v1279
      %v1288 = vmul.f32 %v1089, %v1280
      %v1289 = vmul.f32 %v1090, %v1281
      %v1290 = vmul.f32 %v1091, %v1282
      %v1291 = vmul.f32 %v1092, %v1283
      %1300 = vrot.lane.b32.xlu0 %v1268, 124
      %v1301 = vpop.permute.xlu0 %1300
      %1302 = vrot.lane.b32.xlu0 %v1269, 124
      %v1303 = vpop.permute.xlu0 %1302
      %1304 = vrot.lane.b32.xlu0 %v1270, 124
      %v1305 = vpop.permute.xlu0 %1304
      %1306 = vrot.lane.b32.xlu0 %v1271, 124
      %v1307 = vpop.permute.xlu0 %1306
      %1308 = vrot.lane.b32.xlu0 %v1272, 124
      %v1309 = vpop.permute.xlu0 %1308
      %1310 = vrot.lane.b32.xlu0 %v1273, 124
      %v1311 = vpop.permute.xlu0 %1310
      %1312 = vrot.lane.b32.xlu0 %v1274, 124
      %v1313 = vpop.permute.xlu0 %1312
      %1314 = vrot.lane.b32.xlu0 %v1275, 124
      %v1315 = vpop.permute.xlu0 %1314
      %v1324 = vadd.f32 %v1284, %v1301
      %v1325 = vadd.f32 %v1285, %v1303
      %v1326 = vadd.f32 %v1286, %v1305
      %v1327 = vadd.f32 %v1287, %v1307
      %v1328 = vadd.f32 %v1288, %v1309
      %v1329 = vadd.f32 %v1289, %v1311
      %v1330 = vadd.f32 %v1290, %v1313
      %v1331 = vadd.f32 %v1291, %v1315
      %v1332 = vld [vmem:[%s7] sm:$0xff]
      %v1333 = vld [vmem:[%s7 + $0x88] sm:$0xff]
      %1334 = vrot.lane.b32.xlu0 %v733, 24
      %v1335 = vpop.permute.xlu0 %1334
      %v1338 = vsel %vm1098, %v614, 0
      %1340 = vmatprep.subr.mxu0 0.0
      %1341 = vmatpush1.msra.mxu0 %v1332
      %1342 = vmatprep.subr.mxu0 0.0
      %1343 = vmatpush1.msra.mxu0 %v1333
      %1344 = vmatprep.subr.mxu0 0.0
      %1345 = vmatpush1.msra.mxu0 0.0
      %1346 = vmatprep.subr.mxu0 0.0
      %1347 = vmatpush1.msra.mxu0 0.0
      %1348 = vmatprep.subr.mxu0 0.0
      %1349 = vmatpush1.msra.mxu0 0.0
      %1350 = vmatprep.subr.mxu0 0.0
      %1351 = vmatpush1.msra.mxu0 0.0
      %1352 = vmatprep.subr.mxu0 0.0
      %1353 = vmatpush1.msra.mxu0 0.0
      %1354 = vmatprep.subr.mxu0 0.0
      %1355 = vmatpush1.msra.mxu0 0.0
      %1356 = vmatprep.subr.mxu0 0.0
      %1357 = vmatpush1.msra.mxu0 0.0
      %1358 = vmatprep.subr.mxu0 0.0
      %1359 = vmatpush1.msra.mxu0 0.0
      %1360 = vmatprep.subr.mxu0 0.0
      %1361 = vmatpush1.msra.mxu0 0.0
      %1362 = vmatprep.subr.mxu0 0.0
      %1363 = vmatpush1.msra.mxu0 0.0
      %1364 = vmatprep.subr.mxu0 0.0
      %1365 = vmatpush1.msra.mxu0 0.0
      %1366 = vmatprep.subr.mxu0 0.0
      %1367 = vmatpush1.msra.mxu0 0.0
      %1368 = vmatprep.subr.mxu0 0.0
      %1369 = vmatpush1.msra.mxu0 0.0
      %1370 = vmatprep.subr.mxu0 0.0
      %1371 = vmatpush1.msra.mxu0 0.0
      %1372 = vmatprep.subr.mxu0 0.0
      %1373 = vmatpush1.msra.mxu0 0.0
      %1374 = vmatprep.subr.mxu0 0.0
      %1375 = vmatpush1.msra.mxu0 0.0
      %1376 = vmatprep.subr.mxu0 0.0
      %1377 = vmatpush1.msra.mxu0 0.0
      %1378 = vmatprep.subr.mxu0 0.0
      %1379 = vmatpush1.msra.mxu0 0.0
      %1380 = vmatprep.subr.mxu0 0.0
      %1381 = vmatpush1.msra.mxu0 0.0
      %1382 = vmatprep.subr.mxu0 0.0
      %1383 = vmatpush1.msra.mxu0 0.0
      %1384 = vmatprep.subr.mxu0 0.0
      %1385 = vmatpush1.msra.mxu0 0.0
      %1386 = vmatprep.subr.mxu0 0.0
      %1387 = vmatpush1.msra.mxu0 0.0
      %1388 = vmatprep.subr.mxu0 0.0
      %1389 = vmatpush1.msra.mxu0 0.0
      %1390 = vmatprep.subr.mxu0 0.0
      %1391 = vmatpush1.msra.mxu0 0.0
      %1392 = vmatprep.subr.mxu0 0.0
      %1393 = vmatpush1.msra.mxu0 0.0
      %1394 = vmatprep.subr.mxu0 0.0
      %1395 = vmatpush1.msra.mxu0 0.0
      %1396 = vmatprep.subr.mxu0 0.0
      %1397 = vmatpush1.msra.mxu0 0.0
      %1398 = vmatprep.subr.mxu0 0.0
      %1399 = vmatpush1.msra.mxu0 0.0
      %1400 = vmatprep.subr.mxu0 0.0
      %1401 = vmatpush1.msra.mxu0 0.0
      %1402 = vmatprep.subr.mxu0 0.0
      %1403 = vmatpush1.msra.mxu0 0.0
      %1404 = vmatprep.mubr.f32.mxu0 0.0
      %1405 = vmatmul.mubr.f32.gmra.mrb[0].mxu0 %v1338
      %v1406 = vpop.f32.mrb[0].mxu0
      %v1407 = vadd.f32 %v1335, %v1406
      %v1408 = vpop.f32.mrb[0].mxu0
      %1409 = vdwg.mxu0
      %v1410 = vld [vmem:[%s13] sm:$0x3]
      %1413 = vrot.lane.b32.xlu0 %v1332, 120
      %v1414 = vpop.permute.xlu0 %1413
      %1415 = vrot.lane.b32.xlu0 %v1333, 120
      %v1416 = vpop.permute.xlu0 %1415
      %v1420 = vlaneseq
      %v1421 = vshrl.u32 %v1420, 7
      %v1422 = vsub.s32 0, %v1421
      %v1423 = vrot.slane %v1410, %v1422
      %v1424 = vlaneseq
      %v1425 = vshrl.u32 %v1424, 7
      %v1426 = vsub.s32 1, %v1425
      %v1427 = vrot.slane %v1410, %v1426
      %1428 = vrot.lane.b32.xlu0 %v1423, 16
      %v1429 = vpop.permute.xlu0 %1428
      %1430 = vrot.lane.b32.xlu0 %v1427, 16
      %v1431 = vpop.permute.xlu0 %1430
      %v1432 = vsel %vm1098, %v1429, %v1431
      %1434 = vmatprep.subr.mxu0 0.0
      %1435 = vmatpush1.msra.mxu0 %v1414
      %1436 = vmatprep.subr.mxu0 0.0
      %1437 = vmatpush1.msra.mxu0 %v1416
      %1438 = vmatprep.subr.mxu0 0.0
      %1439 = vmatpush1.msra.mxu0 0.0
      %1440 = vmatprep.subr.mxu0 0.0
      %1441 = vmatpush1.msra.mxu0 0.0
      %1442 = vmatprep.subr.mxu0 0.0
      %1443 = vmatpush1.msra.mxu0 0.0
      %1444 = vmatprep.subr.mxu0 0.0
      %1445 = vmatpush1.msra.mxu0 0.0
      %1446 = vmatprep.subr.mxu0 0.0
      %1447 = vmatpush1.msra.mxu0 0.0
      %1448 = vmatprep.subr.mxu0 0.0
      %1449 = vmatpush1.msra.mxu0 0.0
      %1450 = vmatprep.subr.mxu0 0.0
      %1451 = vmatpush1.msra.mxu0 0.0
      %1452 = vmatprep.subr.mxu0 0.0
      %1453 = vmatpush1.msra.mxu0 0.0
      %1454 = vmatprep.subr.mxu0 0.0
      %1455 = vmatpush1.msra.mxu0 0.0
      %1456 = vmatprep.subr.mxu0 0.0
      %1457 = vmatpush1.msra.mxu0 0.0
      %1458 = vmatprep.subr.mxu0 0.0
      %1459 = vmatpush1.msra.mxu0 0.0
      %1460 = vmatprep.subr.mxu0 0.0
      %1461 = vmatpush1.msra.mxu0 0.0
      %1462 = vmatprep.subr.mxu0 0.0
      %1463 = vmatpush1.msra.mxu0 0.0
      %1464 = vmatprep.subr.mxu0 0.0
      %1465 = vmatpush1.msra.mxu0 0.0
      %1466 = vmatprep.subr.mxu0 0.0
      %1467 = vmatpush1.msra.mxu0 0.0
      %1468 = vmatprep.subr.mxu0 0.0
      %1469 = vmatpush1.msra.mxu0 0.0
      %1470 = vmatprep.subr.mxu0 0.0
      %1471 = vmatpush1.msra.mxu0 0.0
      %1472 = vmatprep.subr.mxu0 0.0
      %1473 = vmatpush1.msra.mxu0 0.0
      %1474 = vmatprep.subr.mxu0 0.0
      %1475 = vmatpush1.msra.mxu0 0.0
      %1476 = vmatprep.subr.mxu0 0.0
      %1477 = vmatpush1.msra.mxu0 0.0
      %1478 = vmatprep.subr.mxu0 0.0
      %1479 = vmatpush1.msra.mxu0 0.0
      %1480 = vmatprep.subr.mxu0 0.0
      %1481 = vmatpush1.msra.mxu0 0.0
      %1482 = vmatprep.subr.mxu0 0.0
      %1483 = vmatpush1.msra.mxu0 0.0
      %1484 = vmatprep.subr.mxu0 0.0
      %1485 = vmatpush1.msra.mxu0 0.0
      %1486 = vmatprep.subr.mxu0 0.0
      %1487 = vmatpush1.msra.mxu0 0.0
      %1488 = vmatprep.subr.mxu0 0.0
      %1489 = vmatpush1.msra.mxu0 0.0
      %1490 = vmatprep.subr.mxu0 0.0
      %1491 = vmatpush1.msra.mxu0 0.0
      %1492 = vmatprep.subr.mxu0 0.0
      %1493 = vmatpush1.msra.mxu0 0.0
      %1494 = vmatprep.subr.mxu0 0.0
      %1495 = vmatpush1.msra.mxu0 0.0
      %1496 = vmatprep.subr.mxu0 0.0
      %1497 = vmatpush1.msra.mxu0 0.0
      %1498 = vmatprep.mubr.f32.mxu0 0.0
      %1499 = vmatmul.mubr.f32.gmra.mrb[0].mxu0 %v1338
      %v1500 = vpop.f32.mrb[0].mxu0
      %v1501 = vadd.f32 %v1432, %v1500
      %v1502 = vpop.f32.mrb[0].mxu0
      %1503 = vdwg.mxu0
      %v1504 = vadd.f32 %v1407, 1.0
      %v1505 = vlaneseq
      %v1506 = vshrl.u32 %v1505, 7
      %v1507 = vsub.s32 0, %v1506
      %v1508 = vrot.slane %v1504, %v1507
      %1517 = vrot.lane.b32.xlu0 %v1324, 4
      %v1518 = vpop.permute.xlu0 %1517
      %1519 = vrot.lane.b32.xlu0 %v1325, 4
      %v1520 = vpop.permute.xlu0 %1519
      %1521 = vrot.lane.b32.xlu0 %v1326, 4
      %v1522 = vpop.permute.xlu0 %1521
      %1523 = vrot.lane.b32.xlu0 %v1327, 4
      %v1524 = vpop.permute.xlu0 %1523
      %1525 = vrot.lane.b32.xlu0 %v1328, 4
      %v1526 = vpop.permute.xlu0 %1525
      %1527 = vrot.lane.b32.xlu0 %v1329, 4
      %v1528 = vpop.permute.xlu0 %1527
      %1529 = vrot.lane.b32.xlu0 %v1330, 4
      %v1530 = vpop.permute.xlu0 %1529
      %1531 = vrot.lane.b32.xlu0 %v1331, 4
      %v1532 = vpop.permute.xlu0 %1531
      %v1541 = vmul.f32 %v1508, %v1518
      %v1542 = vmul.f32 %v1508, %v1520
      %v1543 = vmul.f32 %v1508, %v1522
      %v1544 = vmul.f32 %v1508, %v1524
      %v1545 = vmul.f32 %v1508, %v1526
      %v1546 = vmul.f32 %v1508, %v1528
      %v1547 = vmul.f32 %v1508, %v1530
      %v1548 = vmul.f32 %v1508, %v1532
      %v1549 = vlaneseq
      %v1550 = vshrl.u32 %v1549, 7
      %v1551 = vsub.s32 0, %v1550
      %v1552 = vrot.slane %v1407, %v1551
      %1561 = vrot.lane.b32.xlu0 %v1541, 124
      %v1562 = vpop.permute.xlu0 %1561
      %1563 = vrot.lane.b32.xlu0 %v1542, 124
      %v1564 = vpop.permute.xlu0 %1563
      %1565 = vrot.lane.b32.xlu0 %v1543, 124
      %v1566 = vpop.permute.xlu0 %1565
      %1567 = vrot.lane.b32.xlu0 %v1544, 124
      %v1568 = vpop.permute.xlu0 %1567
      %1569 = vrot.lane.b32.xlu0 %v1545, 124
      %v1570 = vpop.permute.xlu0 %1569
      %1571 = vrot.lane.b32.xlu0 %v1546, 124
      %v1572 = vpop.permute.xlu0 %1571
      %1573 = vrot.lane.b32.xlu0 %v1547, 124
      %v1574 = vpop.permute.xlu0 %1573
      %1575 = vrot.lane.b32.xlu0 %v1548, 124
      %v1576 = vpop.permute.xlu0 %1575
      %v1585 = vadd.f32 %v1552, %v1562
      %v1586 = vadd.f32 %v1552, %v1564
      %v1587 = vadd.f32 %v1552, %v1566
      %v1588 = vadd.f32 %v1552, %v1568
      %v1589 = vadd.f32 %v1552, %v1570
      %v1590 = vadd.f32 %v1552, %v1572
      %v1591 = vadd.f32 %v1552, %v1574
      %v1592 = vadd.f32 %v1552, %v1576
      %v1593 = vld [vmem:[%s9] sm:$0xf]
      %v1594 = vld [vmem:[%s13 + $0x1] sm:$0x1]
      %v1596 = vlaneseq
      %v1597 = vshrl.u32 %v1596, 7
      %v1598 = vsub.s32 0, %v1597
      %v1599 = vrot.slane %v1594, %v1598
      %1600 = vrot.lane.b32.xlu0 %v1599, 32
      %v1601 = vpop.permute.xlu0 %1600
      %vm1603 = vcmask 31744
      %v1605 = vsel %vm1603, %v1585, 0
      %v1608 = vsel %vm1603, %v1586, 0
      %v1611 = vsel %vm1603, %v1587, 0
      %v1614 = vsel %vm1603, %v1588, 0
      %v1617 = vsel %vm1603, %v1589, 0
      %v1620 = vsel %vm1603, %v1590, 0
      %v1623 = vsel %vm1603, %v1591, 0
      %v1626 = vsel %vm1603, %v1592, 0
      %vm1628 = vcmask 1043456
      %v1630 = vsel %vm1628, %v1593, 0
      %1632 = vmatprep.subr.mxu0 0.0
      %1633 = vmatpush1.msra.mxu0 %v1630
      %1634 = vmatprep.subr.mxu0 0.0
      %1635 = vmatpush1.msra.mxu0 0.0
      %1636 = vmatprep.subr.mxu0 0.0
      %1637 = vmatpush1.msra.mxu0 0.0
      %1638 = vmatprep.subr.mxu0 0.0
      %1639 = vmatpush1.msra.mxu0 0.0
      %1640 = vmatprep.subr.mxu0 0.0
      %1641 = vmatpush1.msra.mxu0 0.0
      %1642 = vmatprep.subr.mxu0 0.0
      %1643 = vmatpush1.msra.mxu0 0.0
      %1644 = vmatprep.subr.mxu0 0.0
      %1645 = vmatpush1.msra.mxu0 0.0
      %1646 = vmatprep.subr.mxu0 0.0
      %1647 = vmatpush1.msra.mxu0 0.0
      %1648 = vmatprep.subr.mxu0 0.0
      %1649 = vmatpush1.msra.mxu0 0.0
      %1650 = vmatprep.subr.mxu0 0.0
      %1651 = vmatpush1.msra.mxu0 0.0
      %1652 = vmatprep.subr.mxu0 0.0
      %1653 = vmatpush1.msra.mxu0 0.0
      %1654 = vmatprep.subr.mxu0 0.0
      %1655 = vmatpush1.msra.mxu0 0.0
      %1656 = vmatprep.subr.mxu0 0.0
      %1657 = vmatpush1.msra.mxu0 0.0
      %1658 = vmatprep.subr.mxu0 0.0
      %1659 = vmatpush1.msra.mxu0 0.0
      %1660 = vmatprep.subr.mxu0 0.0
      %1661 = vmatpush1.msra.mxu0 0.0
      %1662 = vmatprep.subr.mxu0 0.0
      %1663 = vmatpush1.msra.mxu0 0.0
      %1664 = vmatprep.subr.mxu0 0.0
      %1665 = vmatpush1.msra.mxu0 0.0
      %1666 = vmatprep.subr.mxu0 0.0
      %1667 = vmatpush1.msra.mxu0 0.0
      %1668 = vmatprep.subr.mxu0 0.0
      %1669 = vmatpush1.msra.mxu0 0.0
      %1670 = vmatprep.subr.mxu0 0.0
      %1671 = vmatpush1.msra.mxu0 0.0
      %1672 = vmatprep.subr.mxu0 0.0
      %1673 = vmatpush1.msra.mxu0 0.0
      %1674 = vmatprep.subr.mxu0 0.0
      %1675 = vmatpush1.msra.mxu0 0.0
      %1676 = vmatprep.subr.mxu0 0.0
      %1677 = vmatpush1.msra.mxu0 0.0
      %1678 = vmatprep.subr.mxu0 0.0
      %1679 = vmatpush1.msra.mxu0 0.0
      %1680 = vmatprep.subr.mxu0 0.0
      %1681 = vmatpush1.msra.mxu0 0.0
      %1682 = vmatprep.subr.mxu0 0.0
      %1683 = vmatpush1.msra.mxu0 0.0
      %1684 = vmatprep.subr.mxu0 0.0
      %1685 = vmatpush1.msra.mxu0 0.0
      %1686 = vmatprep.subr.mxu0 0.0
      %1687 = vmatpush1.msra.mxu0 0.0
      %1688 = vmatprep.subr.mxu0 0.0
      %1689 = vmatpush1.msra.mxu0 0.0
      %1690 = vmatprep.subr.mxu0 0.0
      %1691 = vmatpush1.msra.mxu0 0.0
      %1692 = vmatprep.subr.mxu0 0.0
      %1693 = vmatpush1.msra.mxu0 0.0
      %1694 = vmatprep.subr.mxu0 0.0
      %1695 = vmatpush1.msra.mxu0 0.0
      %1696 = vmatprep.mubr.f32.mxu0 0.0
      %1697 = vmatmul.mubr.f32.gmra.mrb[0].mxu0 %v1605
      %v1698 = vpop.f32.mrb[0].mxu0
      %v1699 = vadd.f32 %v1601, %v1698
      %v1700 = vpop.f32.mrb[0].mxu0
      %1701 = vmatprep.mubr.f32.mxu0 0.0
      %1702 = vmatmul.mubr.f32.gmra.mrb[0].mxu0 %v1608
      %v1703 = vpop.f32.mrb[0].mxu0
      %v1704 = vadd.f32 %v1601, %v1703
      %v1705 = vpop.f32.mrb[0].mxu0
      %1706 = vmatprep.mubr.f32.mxu0 0.0
      %1707 = vmatmul.mubr.f32.gmra.mrb[0].mxu0 %v1611
      %v1708 = vpop.f32.mrb[0].mxu0
      %v1709 = vadd.f32 %v1601, %v1708
      %v1710 = vpop.f32.mrb[0].mxu0
      %1711 = vmatprep.mubr.f32.mxu0 0.0
      %1712 = vmatmul.mubr.f32.gmra.mrb[0].mxu0 %v1614
      %v1713 = vpop.f32.mrb[0].mxu0
      %v1714 = vadd.f32 %v1601, %v1713
      %v1715 = vpop.f32.mrb[0].mxu0
      %1716 = vmatprep.mubr.f32.mxu0 0.0
      %1717 = vmatmul.mubr.f32.gmra.mrb[0].mxu0 %v1617
      %v1718 = vpop.f32.mrb[0].mxu0
      %v1719 = vadd.f32 %v1601, %v1718
      %v1720 = vpop.f32.mrb[0].mxu0
      %1721 = vmatprep.mubr.f32.mxu0 0.0
      %1722 = vmatmul.mubr.f32.gmra.mrb[0].mxu0 %v1620
      %v1723 = vpop.f32.mrb[0].mxu0
      %v1724 = vadd.f32 %v1601, %v1723
      %v1725 = vpop.f32.mrb[0].mxu0
      %1726 = vmatprep.mubr.f32.mxu0 0.0
      %1727 = vmatmul.mubr.f32.gmra.mrb[0].mxu0 %v1623
      %v1728 = vpop.f32.mrb[0].mxu0
      %v1729 = vadd.f32 %v1601, %v1728
      %v1730 = vpop.f32.mrb[0].mxu0
      %1731 = vmatprep.mubr.f32.mxu0 0.0
      %1732 = vmatmul.mubr.f32.gmra.mrb[0].mxu0 %v1626
      %v1733 = vpop.f32.mrb[0].mxu0
      %v1734 = vadd.f32 %v1601, %v1733
      %v1735 = vpop.f32.mrb[0].mxu0
      %1736 = vdwg.mxu0
      %v1737 = vmul.f32 %v1699, %v1231
      %v1738 = vmul.f32 %v1704, %v1236
      %v1739 = vmul.f32 %v1709, %v1241
      %v1740 = vmul.f32 %v1714, %v1246
      %v1741 = vmul.f32 %v1719, %v1251
      %v1742 = vmul.f32 %v1724, %v1256
      %v1743 = vmul.f32 %v1729, %v1261
      %v1744 = vmul.f32 %v1734, %v1266
      %v1745 = vadd.f32 %v606, %v1737
      %v1746 = vadd.f32 %v607, %v1738
      %v1747 = vadd.f32 %v608, %v1739
      %v1748 = vadd.f32 %v609, %v1740
      %v1749 = vadd.f32 %v610, %v1741
      %v1750 = vadd.f32 %v611, %v1742
      %v1751 = vadd.f32 %v612, %v1743
      %v1752 = vadd.f32 %v613, %v1744
      %v1753 = vld [vmem:[%s13 + $0x2] sm:$0x1]
      %v1754 = vsel %vm1098, %v1745, 0.0
      %1755 = vadd.xlane.f32.xlu0 %v1754
      %v1756 = vpop.xlane.xlu0 %1755
      %v1757 = vsel %vm1098, %v1746, 0.0
      %1758 = vadd.xlane.f32.xlu0 %v1757
      %v1759 = vpop.xlane.xlu0 %1758
      %v1760 = vsel %vm1098, %v1747, 0.0
      %1761 = vadd.xlane.f32.xlu0 %v1760
      %v1762 = vpop.xlane.xlu0 %1761
      %v1763 = vsel %vm1098, %v1748, 0.0
      %1764 = vadd.xlane.f32.xlu0 %v1763
      %v1765 = vpop.xlane.xlu0 %1764
      %v1766 = vsel %vm1098, %v1749, 0.0
      %1767 = vadd.xlane.f32.xlu0 %v1766
      %v1768 = vpop.xlane.xlu0 %1767
      %v1769 = vsel %vm1098, %v1750, 0.0
      %1770 = vadd.xlane.f32.xlu0 %v1769
      %v1771 = vpop.xlane.xlu0 %1770
      %v1772 = vsel %vm1098, %v1751, 0.0
      %1773 = vadd.xlane.f32.xlu0 %v1772
      %v1774 = vpop.xlane.xlu0 %1773
      %v1775 = vsel %vm1098, %v1752, 0.0
      %1776 = vadd.xlane.f32.xlu0 %v1775
      %v1777 = vpop.xlane.xlu0 %1776
      %v1778 = vrcp.pop 16.0
      %v1779 = vmul.f32 %v1756, %v1778
      %v1780 = vmul.f32 %v1759, %v1778
      %v1781 = vmul.f32 %v1762, %v1778
      %v1782 = vmul.f32 %v1765, %v1778
      %v1783 = vmul.f32 %v1768, %v1778
      %v1784 = vmul.f32 %v1771, %v1778
      %v1785 = vmul.f32 %v1774, %v1778
      %v1786 = vmul.f32 %v1777, %v1778
      %v1787 = vsub.f32 %v1745, %v1779
      %v1788 = vsub.f32 %v1746, %v1780
      %v1789 = vsub.f32 %v1747, %v1781
      %v1790 = vsub.f32 %v1748, %v1782
      %v1791 = vsub.f32 %v1749, %v1783
      %v1792 = vsub.f32 %v1750, %v1784
      %v1793 = vsub.f32 %v1751, %v1785
      %v1794 = vsub.f32 %v1752, %v1786
      %v1795 = vmul.f32 %v1787, %v1787
      %v1796 = vmul.f32 %v1788, %v1788
      %v1797 = vmul.f32 %v1789, %v1789
      %v1798 = vmul.f32 %v1790, %v1790
      %v1799 = vmul.f32 %v1791, %v1791
      %v1800 = vmul.f32 %v1792, %v1792
      %v1801 = vmul.f32 %v1793, %v1793
      %v1802 = vmul.f32 %v1794, %v1794
      %v1803 = vsel %vm1098, %v1795, 0.0
      %1804 = vadd.xlane.f32.xlu0 %v1803
      %v1805 = vpop.xlane.xlu0 %1804
      %v1806 = vsel %vm1098, %v1796, 0.0
      %1807 = vadd.xlane.f32.xlu0 %v1806
      %v1808 = vpop.xlane.xlu0 %1807
      %v1809 = vsel %vm1098, %v1797, 0.0
      %1810 = vadd.xlane.f32.xlu0 %v1809
      %v1811 = vpop.xlane.xlu0 %1810
      %v1812 = vsel %vm1098, %v1798, 0.0
      %1813 = vadd.xlane.f32.xlu0 %v1812
      %v1814 = vpop.xlane.xlu0 %1813
      %v1815 = vsel %vm1098, %v1799, 0.0
      %1816 = vadd.xlane.f32.xlu0 %v1815
      %v1817 = vpop.xlane.xlu0 %1816
      %v1818 = vsel %vm1098, %v1800, 0.0
      %1819 = vadd.xlane.f32.xlu0 %v1818
      %v1820 = vpop.xlane.xlu0 %1819
      %v1821 = vsel %vm1098, %v1801, 0.0
      %1822 = vadd.xlane.f32.xlu0 %v1821
      %v1823 = vpop.xlane.xlu0 %1822
      %v1824 = vsel %vm1098, %v1802, 0.0
      %1825 = vadd.xlane.f32.xlu0 %v1824
      %v1826 = vpop.xlane.xlu0 %1825
      %v1827 = vmul.f32 %v1805, %v1778
      %v1828 = vmul.f32 %v1808, %v1778
      %v1829 = vmul.f32 %v1811, %v1778
      %v1830 = vmul.f32 %v1814, %v1778
      %v1831 = vmul.f32 %v1817, %v1778
      %v1832 = vmul.f32 %v1820, %v1778
      %v1833 = vmul.f32 %v1823, %v1778
      %v1834 = vmul.f32 %v1826, %v1778
      %v1835 = vadd.f32 %v1827, 1e-05
      %v1836 = vadd.f32 %v1828, 1e-05
      %v1837 = vadd.f32 %v1829, 1e-05
      %v1838 = vadd.f32 %v1830, 1e-05
      %v1839 = vadd.f32 %v1831, 1e-05
      %v1840 = vadd.f32 %v1832, 1e-05
      %v1841 = vadd.f32 %v1833, 1e-05
      %v1842 = vadd.f32 %v1834, 1e-05
      %v1843 = vrsqrt.pop %v1835
      %v1844 = vrsqrt.pop %v1836
      %v1845 = vrsqrt.pop %v1837
      %v1846 = vrsqrt.pop %v1838
      %v1847 = vrsqrt.pop %v1839
      %v1848 = vrsqrt.pop %v1840
      %v1849 = vrsqrt.pop %v1841
      %v1850 = vrsqrt.pop %v1842
      %v1851 = vmul.f32 %v1787, %v1843
      %v1852 = vmul.f32 %v1788, %v1844
      %v1853 = vmul.f32 %v1789, %v1845
      %v1854 = vmul.f32 %v1790, %v1846
      %v1855 = vmul.f32 %v1791, %v1847
      %v1856 = vmul.f32 %v1792, %v1848
      %v1857 = vmul.f32 %v1793, %v1849
      %v1858 = vmul.f32 %v1794, %v1850
      %v1860 = vlaneseq
      %v1861 = vshrl.u32 %v1860, 7
      %v1862 = vsub.s32 0, %v1861
      %v1863 = vrot.slane %v1753, %v1862
      %1864 = vrot.lane.b32.xlu0 %v1863, 48
      %v1865 = vpop.permute.xlu0 %1864
      %v1867 = vmul.f32 %v1851, %v1865
      %v1868 = vmul.f32 %v1852, %v1865
      %v1869 = vmul.f32 %v1853, %v1865
      %v1870 = vmul.f32 %v1854, %v1865
      %v1871 = vmul.f32 %v1855, %v1865
      %v1872 = vmul.f32 %v1856, %v1865
      %v1873 = vmul.f32 %v1857, %v1865
      %v1874 = vmul.f32 %v1858, %v1865
      %1875 = vrot.lane.b32.xlu0 %v1863, 32
      %v1876 = vpop.permute.xlu0 %1875
      %v1878 = vadd.f32 %v1867, %v1876
      %v1879 = vadd.f32 %v1868, %v1876
      %v1880 = vadd.f32 %v1869, %v1876
      %v1881 = vadd.f32 %v1870, %v1876
      %v1882 = vadd.f32 %v1871, %v1876
      %v1883 = vadd.f32 %v1872, %v1876
      %v1884 = vadd.f32 %v1873, %v1876
      %v1885 = vadd.f32 %v1874, %v1876
      %v1886 = vld [vmem:[%s13 + $0x3] sm:$0x3]
      %v1888 = vlaneseq
      %v1889 = vshrl.u32 %v1888, 7
      %v1890 = vsub.s32 0, %v1889
      %v1891 = vrot.slane %v1886, %v1890
      %v1892 = vlaneseq
      %v1893 = vshrl.u32 %v1892, 7
      %v1894 = vsub.s32 1, %v1893
      %v1895 = vrot.slane %v1886, %v1894
      %1898 = vrot.lane.b32.xlu0 %v1093, 120
      %v1899 = vpop.permute.xlu0 %1898
      %1900 = vrot.lane.b32.xlu0 %v1094, 120
      %v1901 = vpop.permute.xlu0 %1900
      %1904 = vrot.lane.b32.xlu0 %v1891, 16
      %v1905 = vpop.permute.xlu0 %1904
      %1906 = vrot.lane.b32.xlu0 %v1895, 16
      %v1907 = vpop.permute.xlu0 %1906
      %v1908 = vsel %vm1098, %v1905, %v1907
      %v1911 = vsel %vm1098, %v1878, 0
      %v1914 = vsel %vm1098, %v1879, 0
      %v1917 = vsel %vm1098, %v1880, 0
      %v1920 = vsel %vm1098, %v1881, 0
      %v1923 = vsel %vm1098, %v1882, 0
      %v1926 = vsel %vm1098, %v1883, 0
      %v1929 = vsel %vm1098, %v1884, 0
      %v1932 = vsel %vm1098, %v1885, 0
      %1934 = vmatprep.subr.mxu0 0.0
      %1935 = vmatpush1.msra.mxu0 %v1899
      %1936 = vmatprep.subr.mxu0 0.0
      %1937 = vmatpush1.msra.mxu0 %v1901
      %1938 = vmatprep.subr.mxu0 0.0
      %1939 = vmatpush1.msra.mxu0 0.0
      %1940 = vmatprep.subr.mxu0 0.0
      %1941 = vmatpush1.msra.mxu0 0.0
      %1942 = vmatprep.subr.mxu0 0.0
      %1943 = vmatpush1.msra.mxu0 0.0
      %1944 = vmatprep.subr.mxu0 0.0
      %1945 = vmatpush1.msra.mxu0 0.0
      %1946 = vmatprep.subr.mxu0 0.0
      %1947 = vmatpush1.msra.mxu0 0.0
      %1948 = vmatprep.subr.mxu0 0.0
      %1949 = vmatpush1.msra.mxu0 0.0
      %1950 = vmatprep.subr.mxu0 0.0
      %1951 = vmatpush1.msra.mxu0 0.0
      %1952 = vmatprep.subr.mxu0 0.0
      %1953 = vmatpush1.msra.mxu0 0.0
      %1954 = vmatprep.subr.mxu0 0.0
      %1955 = vmatpush1.msra.mxu0 0.0
      %1956 = vmatprep.subr.mxu0 0.0
      %1957 = vmatpush1.msra.mxu0 0.0
      %1958 = vmatprep.subr.mxu0 0.0
      %1959 = vmatpush1.msra.mxu0 0.0
      %1960 = vmatprep.subr.mxu0 0.0
      %1961 = vmatpush1.msra.mxu0 0.0
      %1962 = vmatprep.subr.mxu0 0.0
      %1963 = vmatpush1.msra.mxu0 0.0
      %1964 = vmatprep.subr.mxu0 0.0
      %1965 = vmatpush1.msra.mxu0 0.0
      %1966 = vmatprep.subr.mxu0 0.0
      %1967 = vmatpush1.msra.mxu0 0.0
      %1968 = vmatprep.subr.mxu0 0.0
      %1969 = vmatpush1.msra.mxu0 0.0
      %1970 = vmatprep.subr.mxu0 0.0
      %1971 = vmatpush1.msra.mxu0 0.0
      %1972 = vmatprep.subr.mxu0 0.0
      %1973 = vmatpush1.msra.mxu0 0.0
      %1974 = vmatprep.subr.mxu0 0.0
      %1975 = vmatpush1.msra.mxu0 0.0
      %1976 = vmatprep.subr.mxu0 0.0
      %1977 = vmatpush1.msra.mxu0 0.0
      %1978 = vmatprep.subr.mxu0 0.0
      %1979 = vmatpush1.msra.mxu0 0.0
      %1980 = vmatprep.subr.mxu0 0.0
      %1981 = vmatpush1.msra.mxu0 0.0
      %1982 = vmatprep.subr.mxu0 0.0
      %1983 = vmatpush1.msra.mxu0 0.0
      %1984 = vmatprep.subr.mxu0 0.0
      %1985 = vmatpush1.msra.mxu0 0.0
      %1986 = vmatprep.subr.mxu0 0.0
      %1987 = vmatpush1.msra.mxu0 0.0
      %1988 = vmatprep.subr.mxu0 0.0
      %1989 = vmatpush1.msra.mxu0 0.0
      %1990 = vmatprep.subr.mxu0 0.0
      %1991 = vmatpush1.msra.mxu0 0.0
      %1992 = vmatprep.subr.mxu0 0.0
      %1993 = vmatpush1.msra.mxu0 0.0
      %1994 = vmatprep.subr.mxu0 0.0
      %1995 = vmatpush1.msra.mxu0 0.0
      %1996 = vmatprep.subr.mxu0 0.0
      %1997 = vmatpush1.msra.mxu0 0.0
      %1998 = vmatprep.mubr.f32.mxu0 0.0
      %1999 = vmatmul.mubr.f32.gmra.mrb[0].mxu0 %v1911
      %v2000 = vpop.f32.mrb[0].mxu0
      %v2001 = vadd.f32 %v1908, %v2000
      %v2002 = vpop.f32.mrb[0].mxu0
      %2003 = vmatprep.mubr.f32.mxu0 0.0
      %2004 = vmatmul.mubr.f32.gmra.mrb[0].mxu0 %v1914
      %v2005 = vpop.f32.mrb[0].mxu0
      %v2006 = vadd.f32 %v1908, %v2005
      %v2007 = vpop.f32.mrb[0].mxu0
      %2008 = vmatprep.mubr.f32.mxu0 0.0
      %2009 = vmatmul.mubr.f32.gmra.mrb[0].mxu0 %v1917
      %v2010 = vpop.f32.mrb[0].mxu0
      %v2011 = vadd.f32 %v1908, %v2010
      %v2012 = vpop.f32.mrb[0].mxu0
      %2013 = vmatprep.mubr.f32.mxu0 0.0
      %2014 = vmatmul.mubr.f32.gmra.mrb[0].mxu0 %v1920
      %v2015 = vpop.f32.mrb[0].mxu0
      %v2016 = vadd.f32 %v1908, %v2015
      %v2017 = vpop.f32.mrb[0].mxu0
      %2018 = vmatprep.mubr.f32.mxu0 0.0
      %2019 = vmatmul.mubr.f32.gmra.mrb[0].mxu0 %v1923
      %v2020 = vpop.f32.mrb[0].mxu0
      %v2021 = vadd.f32 %v1908, %v2020
      %v2022 = vpop.f32.mrb[0].mxu0
      %2023 = vmatprep.mubr.f32.mxu0 0.0
      %2024 = vmatmul.mubr.f32.gmra.mrb[0].mxu0 %v1926
      %v2025 = vpop.f32.mrb[0].mxu0
      %v2026 = vadd.f32 %v1908, %v2025
      %v2027 = vpop.f32.mrb[0].mxu0
      %2028 = vmatprep.mubr.f32.mxu0 0.0
      %2029 = vmatmul.mubr.f32.gmra.mrb[0].mxu0 %v1929
      %v2030 = vpop.f32.mrb[0].mxu0
      %v2031 = vadd.f32 %v1908, %v2030
      %v2032 = vpop.f32.mrb[0].mxu0
      %2033 = vmatprep.mubr.f32.mxu0 0.0
      %2034 = vmatmul.mubr.f32.gmra.mrb[0].mxu0 %v1932
      %v2035 = vpop.f32.mrb[0].mxu0
      %v2036 = vadd.f32 %v1908, %v2035
      %v2037 = vpop.f32.mrb[0].mxu0
      %2038 = vdwg.mxu0
      %v2039 = vmax.f32 %v2001, 0.0
      %v2040 = vmax.f32 %v2006, 0.0
      %v2041 = vmax.f32 %v2011, 0.0
      %v2042 = vmax.f32 %v2016, 0.0
      %v2043 = vmax.f32 %v2021, 0.0
      %v2044 = vmax.f32 %v2026, 0.0
      %v2045 = vmax.f32 %v2031, 0.0
      %v2046 = vmax.f32 %v2036, 0.0
      %v2047 = vld [vmem:[%s11] sm:$0xff]
      %v2048 = vld [vmem:[%s11 + $0x8] sm:$0xff]
      %v2049 = vld [vmem:[%s11 + $0x10] sm:$0xff]
      %v2050 = vld [vmem:[%s11 + $0x18] sm:$0xff]
      %v2052 = vsel %vm735, %v2039, 0
      %v2055 = vsel %vm735, %v2040, 0
      %v2058 = vsel %vm735, %v2041, 0
      %v2061 = vsel %vm735, %v2042, 0
      %v2064 = vsel %vm735, %v2043, 0
      %v2067 = vsel %vm735, %v2044, 0
      %v2070 = vsel %vm735, %v2045, 0
      %v2073 = vsel %vm735, %v2046, 0
      %2075 = vmatprep.subr.mxu0 0.0
      %2076 = vmatpush1.msra.mxu0 %v2047
      %2077 = vmatprep.subr.mxu0 0.0
      %2078 = vmatpush1.msra.mxu0 %v2048
      %2079 = vmatprep.subr.mxu0 0.0
      %2080 = vmatpush1.msra.mxu0 %v2049
      %2081 = vmatprep.subr.mxu0 0.0
      %2082 = vmatpush1.msra.mxu0 %v2050
      %2083 = vmatprep.subr.mxu0 0.0
      %2084 = vmatpush1.msra.mxu0 0.0
      %2085 = vmatprep.subr.mxu0 0.0
      %2086 = vmatpush1.msra.mxu0 0.0
      %2087 = vmatprep.subr.mxu0 0.0
      %2088 = vmatpush1.msra.mxu0 0.0
      %2089 = vmatprep.subr.mxu0 0.0
      %2090 = vmatpush1.msra.mxu0 0.0
      %2091 = vmatprep.subr.mxu0 0.0
      %2092 = vmatpush1.msra.mxu0 0.0
      %2093 = vmatprep.subr.mxu0 0.0
      %2094 = vmatpush1.msra.mxu0 0.0
      %2095 = vmatprep.subr.mxu0 0.0
      %2096 = vmatpush1.msra.mxu0 0.0
      %2097 = vmatprep.subr.mxu0 0.0
      %2098 = vmatpush1.msra.mxu0 0.0
      %2099 = vmatprep.subr.mxu0 0.0
      %2100 = vmatpush1.msra.mxu0 0.0
      %2101 = vmatprep.subr.mxu0 0.0
      %2102 = vmatpush1.msra.mxu0 0.0
      %2103 = vmatprep.subr.mxu0 0.0
      %2104 = vmatpush1.msra.mxu0 0.0
      %2105 = vmatprep.subr.mxu0 0.0
      %2106 = vmatpush1.msra.mxu0 0.0
      %2107 = vmatprep.subr.mxu0 0.0
      %2108 = vmatpush1.msra.mxu0 0.0
      %2109 = vmatprep.subr.mxu0 0.0
      %2110 = vmatpush1.msra.mxu0 0.0
      %2111 = vmatprep.subr.mxu0 0.0
      %2112 = vmatpush1.msra.mxu0 0.0
      %2113 = vmatprep.subr.mxu0 0.0
      %2114 = vmatpush1.msra.mxu0 0.0
      %2115 = vmatprep.subr.mxu0 0.0
      %2116 = vmatpush1.msra.mxu0 0.0
      %2117 = vmatprep.subr.mxu0 0.0
      %2118 = vmatpush1.msra.mxu0 0.0
      %2119 = vmatprep.subr.mxu0 0.0
      %2120 = vmatpush1.msra.mxu0 0.0
      %2121 = vmatprep.subr.mxu0 0.0
      %2122 = vmatpush1.msra.mxu0 0.0
      %2123 = vmatprep.subr.mxu0 0.0
      %2124 = vmatpush1.msra.mxu0 0.0
      %2125 = vmatprep.subr.mxu0 0.0
      %2126 = vmatpush1.msra.mxu0 0.0
      %2127 = vmatprep.subr.mxu0 0.0
      %2128 = vmatpush1.msra.mxu0 0.0
      %2129 = vmatprep.subr.mxu0 0.0
      %2130 = vmatpush1.msra.mxu0 0.0
      %2131 = vmatprep.subr.mxu0 0.0
      %2132 = vmatpush1.msra.mxu0 0.0
      %2133 = vmatprep.subr.mxu0 0.0
      %2134 = vmatpush1.msra.mxu0 0.0
      %2135 = vmatprep.subr.mxu0 0.0
      %2136 = vmatpush1.msra.mxu0 0.0
      %2137 = vmatprep.subr.mxu0 0.0
      %2138 = vmatpush1.msra.mxu0 0.0
      %2139 = vmatprep.mubr.f32.mxu0 0.0
      %2140 = vmatmul.mubr.f32.gmra.mrb[0].mxu0 %v2052
      %v2141 = vpop.f32.mrb[0].mxu0
      %v2142 = vadd.f32 0.0, %v2141
      %v2143 = vpop.f32.mrb[0].mxu0
      %2144 = vmatprep.mubr.f32.mxu0 0.0
      %2145 = vmatmul.mubr.f32.gmra.mrb[0].mxu0 %v2055
      %v2146 = vpop.f32.mrb[0].mxu0
      %v2147 = vadd.f32 0.0, %v2146
      %v2148 = vpop.f32.mrb[0].mxu0
      %2149 = vmatprep.mubr.f32.mxu0 0.0
      %2150 = vmatmul.mubr.f32.gmra.mrb[0].mxu0 %v2058
      %v2151 = vpop.f32.mrb[0].mxu0
      %v2152 = vadd.f32 0.0, %v2151
      %v2153 = vpop.f32.mrb[0].mxu0
      %2154 = vmatprep.mubr.f32.mxu0 0.0
      %2155 = vmatmul.mubr.f32.gmra.mrb[0].mxu0 %v2061
      %v2156 = vpop.f32.mrb[0].mxu0
      %v2157 = vadd.f32 0.0, %v2156
      %v2158 = vpop.f32.mrb[0].mxu0
      %2159 = vmatprep.mubr.f32.mxu0 0.0
      %2160 = vmatmul.mubr.f32.gmra.mrb[0].mxu0 %v2064
      %v2161 = vpop.f32.mrb[0].mxu0
      %v2162 = vadd.f32 0.0, %v2161
      %v2163 = vpop.f32.mrb[0].mxu0
      %2164 = vmatprep.mubr.f32.mxu0 0.0
      %2165 = vmatmul.mubr.f32.gmra.mrb[0].mxu0 %v2067
      %v2166 = vpop.f32.mrb[0].mxu0
      %v2167 = vadd.f32 0.0, %v2166
      %v2168 = vpop.f32.mrb[0].mxu0
      %2169 = vmatprep.mubr.f32.mxu0 0.0
      %2170 = vmatmul.mubr.f32.gmra.mrb[0].mxu0 %v2070
      %v2171 = vpop.f32.mrb[0].mxu0
      %v2172 = vadd.f32 0.0, %v2171
      %v2173 = vpop.f32.mrb[0].mxu0
      %2174 = vmatprep.mubr.f32.mxu0 0.0
      %2175 = vmatmul.mubr.f32.gmra.mrb[0].mxu0 %v2073
      %v2176 = vpop.f32.mrb[0].mxu0
      %v2177 = vadd.f32 0.0, %v2176
      %v2178 = vpop.f32.mrb[0].mxu0
      %2179 = vdwg.mxu0
      %v2180 = vadd.f32 %v1878, %v2142
      %v2181 = vadd.f32 %v1879, %v2147
      %v2182 = vadd.f32 %v1880, %v2152
      %v2183 = vadd.f32 %v1881, %v2157
      %v2184 = vadd.f32 %v1882, %v2162
      %v2185 = vadd.f32 %v1883, %v2167
      %v2186 = vadd.f32 %v1884, %v2172
      %v2187 = vadd.f32 %v1885, %v2177
      %v2188 = vld [vmem:[%s13 + $0x4] sm:$0x1]
      %v2190 = vlaneseq
      %v2191 = vshrl.u32 %v2190, 7
      %v2192 = vsub.s32 0, %v2191
      %v2193 = vrot.slane %v2188, %v2192
      %2194 = vrot.lane.b32.xlu0 %v2193, 112
      %v2195 = vpop.permute.xlu0 %2194
      %v2197 = vadd.f32 %v2180, %v2195
      %v2198 = vadd.f32 %v2181, %v2195
      %v2199 = vadd.f32 %v2182, %v2195
      %v2200 = vadd.f32 %v2183, %v2195
      %v2201 = vadd.f32 %v2184, %v2195
      %v2202 = vadd.f32 %v2185, %v2195
      %v2203 = vadd.f32 %v2186, %v2195
      %v2204 = vadd.f32 %v2187, %v2195
      %v2205 = vld [vmem:[%s13 + $0x14] sm:$0x1]
      %v2206 = vld [vmem:[%s13 + $0x15] sm:$0x1]
      %v2207 = vsel %vm1098, %v2197, 0.0
      %2208 = vadd.xlane.f32.xlu0 %v2207
      %v2209 = vpop.xlane.xlu0 %2208
      %v2210 = vsel %vm1098, %v2198, 0.0
      %2211 = vadd.xlane.f32.xlu0 %v2210
      %v2212 = vpop.xlane.xlu0 %2211
      %v2213 = vsel %vm1098, %v2199, 0.0
      %2214 = vadd.xlane.f32.xlu0 %v2213
      %v2215 = vpop.xlane.xlu0 %2214
      %v2216 = vsel %vm1098, %v2200, 0.0
      %2217 = vadd.xlane.f32.xlu0 %v2216
      %v2218 = vpop.xlane.xlu0 %2217
      %v2219 = vsel %vm1098, %v2201, 0.0
      %2220 = vadd.xlane.f32.xlu0 %v2219
      %v2221 = vpop.xlane.xlu0 %2220
      %v2222 = vsel %vm1098, %v2202, 0.0
      %2223 = vadd.xlane.f32.xlu0 %v2222
      %v2224 = vpop.xlane.xlu0 %2223
      %v2225 = vsel %vm1098, %v2203, 0.0
      %2226 = vadd.xlane.f32.xlu0 %v2225
      %v2227 = vpop.xlane.xlu0 %2226
      %v2228 = vsel %vm1098, %v2204, 0.0
      %2229 = vadd.xlane.f32.xlu0 %v2228
      %v2230 = vpop.xlane.xlu0 %2229
      %v2231 = vmul.f32 %v2209, %v1778
      %v2232 = vmul.f32 %v2212, %v1778
      %v2233 = vmul.f32 %v2215, %v1778
      %v2234 = vmul.f32 %v2218, %v1778
      %v2235 = vmul.f32 %v2221, %v1778
      %v2236 = vmul.f32 %v2224, %v1778
      %v2237 = vmul.f32 %v2227, %v1778
      %v2238 = vmul.f32 %v2230, %v1778
      %v2239 = vsub.f32 %v2197, %v2231
      %v2240 = vsub.f32 %v2198, %v2232
      %v2241 = vsub.f32 %v2199, %v2233
      %v2242 = vsub.f32 %v2200, %v2234
      %v2243 = vsub.f32 %v2201, %v2235
      %v2244 = vsub.f32 %v2202, %v2236
      %v2245 = vsub.f32 %v2203, %v2237
      %v2246 = vsub.f32 %v2204, %v2238
      %v2247 = vmul.f32 %v2239, %v2239
      %v2248 = vmul.f32 %v2240, %v2240
      %v2249 = vmul.f32 %v2241, %v2241
      %v2250 = vmul.f32 %v2242, %v2242
      %v2251 = vmul.f32 %v2243, %v2243
      %v2252 = vmul.f32 %v2244, %v2244
      %v2253 = vmul.f32 %v2245, %v2245
      %v2254 = vmul.f32 %v2246, %v2246
      %v2255 = vsel %vm1098, %v2247, 0.0
      %2256 = vadd.xlane.f32.xlu0 %v2255
      %v2257 = vpop.xlane.xlu0 %2256
      %v2258 = vsel %vm1098, %v2248, 0.0
      %2259 = vadd.xlane.f32.xlu0 %v2258
      %v2260 = vpop.xlane.xlu0 %2259
      %v2261 = vsel %vm1098, %v2249, 0.0
      %2262 = vadd.xlane.f32.xlu0 %v2261
      %v2263 = vpop.xlane.xlu0 %2262
      %v2264 = vsel %vm1098, %v2250, 0.0
      %2265 = vadd.xlane.f32.xlu0 %v2264
      %v2266 = vpop.xlane.xlu0 %2265
      %v2267 = vsel %vm1098, %v2251, 0.0
      %2268 = vadd.xlane.f32.xlu0 %v2267
      %v2269 = vpop.xlane.xlu0 %2268
      %v2270 = vsel %vm1098, %v2252, 0.0
      %2271 = vadd.xlane.f32.xlu0 %v2270
      %v2272 = vpop.xlane.xlu0 %2271
      %v2273 = vsel %vm1098, %v2253, 0.0
      %2274 = vadd.xlane.f32.xlu0 %v2273
      %v2275 = vpop.xlane.xlu0 %2274
      %v2276 = vsel %vm1098, %v2254, 0.0
      %2277 = vadd.xlane.f32.xlu0 %v2276
      %v2278 = vpop.xlane.xlu0 %2277
      %v2279 = vmul.f32 %v2257, %v1778
      %v2280 = vmul.f32 %v2260, %v1778
      %v2281 = vmul.f32 %v2263, %v1778
      %v2282 = vmul.f32 %v2266, %v1778
      %v2283 = vmul.f32 %v2269, %v1778
      %v2284 = vmul.f32 %v2272, %v1778
      %v2285 = vmul.f32 %v2275, %v1778
      %v2286 = vmul.f32 %v2278, %v1778
      %v2287 = vadd.f32 %v2279, 1e-05
      %v2288 = vadd.f32 %v2280, 1e-05
      %v2289 = vadd.f32 %v2281, 1e-05
      %v2290 = vadd.f32 %v2282, 1e-05
      %v2291 = vadd.f32 %v2283, 1e-05
      %v2292 = vadd.f32 %v2284, 1e-05
      %v2293 = vadd.f32 %v2285, 1e-05
      %v2294 = vadd.f32 %v2286, 1e-05
      %v2295 = vrsqrt.pop %v2287
      %v2296 = vrsqrt.pop %v2288
      %v2297 = vrsqrt.pop %v2289
      %v2298 = vrsqrt.pop %v2290
      %v2299 = vrsqrt.pop %v2291
      %v2300 = vrsqrt.pop %v2292
      %v2301 = vrsqrt.pop %v2293
      %v2302 = vrsqrt.pop %v2294
      %v2303 = vmul.f32 %v2239, %v2295
      %v2304 = vmul.f32 %v2240, %v2296
      %v2305 = vmul.f32 %v2241, %v2297
      %v2306 = vmul.f32 %v2242, %v2298
      %v2307 = vmul.f32 %v2243, %v2299
      %v2308 = vmul.f32 %v2244, %v2300
      %v2309 = vmul.f32 %v2245, %v2301
      %v2310 = vmul.f32 %v2246, %v2302
      %v2312 = vlaneseq
      %v2313 = vshrl.u32 %v2312, 7
      %v2314 = vsub.s32 0, %v2313
      %v2315 = vrot.slane %v2205, %v2314
      %2316 = vrot.lane.b32.xlu0 %v2315, 16
      %v2317 = vpop.permute.xlu0 %2316
      %v2319 = vmul.f32 %v2303, %v2317
      %v2320 = vmul.f32 %v2304, %v2317
      %v2321 = vmul.f32 %v2305, %v2317
      %v2322 = vmul.f32 %v2306, %v2317
      %v2323 = vmul.f32 %v2307, %v2317
      %v2324 = vmul.f32 %v2308, %v2317
      %v2325 = vmul.f32 %v2309, %v2317
      %v2326 = vmul.f32 %v2310, %v2317
      %v2328 = vlaneseq
      %v2329 = vshrl.u32 %v2328, 7
      %v2330 = vsub.s32 0, %v2329
      %v2331 = vrot.slane %v2206, %v2330
      %v2333 = vadd.f32 %v2319, %v2331
      %v2334 = vadd.f32 %v2320, %v2331
      %v2335 = vadd.f32 %v2321, %v2331
      %v2336 = vadd.f32 %v2322, %v2331
      %v2337 = vadd.f32 %v2323, %v2331
      %v2338 = vadd.f32 %v2324, %v2331
      %v2339 = vadd.f32 %v2325, %v2331
      %v2340 = vadd.f32 %v2326, %v2331
      %vm2341 = vcmp.gt.f32.partialorder %v603, 0.0
      %v2342 = vsel %vm2341, 1, 0
      %2343 = vset.pattern.permute.xlu0 0
      %2344 = vperm.xlu0 %2343, %v2342
      %v2345 = vpop.permute.xlu0 %2344
      %vm2346 = vcmp.eq.s32.totalorder %v2345, 1
      %v2347 = vsel %vm2346, %v1324, -1e+30
      %v2348 = vsel %vm2346, %v1325, -1e+30
      %v2349 = vsel %vm2346, %v1326, -1e+30
      %v2350 = vsel %vm2346, %v1327, -1e+30
      %v2351 = vsel %vm2346, %v1328, -1e+30
      %v2352 = vsel %vm2346, %v1329, -1e+30
      %v2353 = vsel %vm2346, %v1330, -1e+30
      %v2354 = vsel %vm2346, %v1331, -1e+30
      %v2355 = vsel %vm1603, %v2347, -inf
      %v2356 = vsel %vm1603, %v2348, -inf
      %v2357 = vsel %vm1603, %v2349, -inf
      %v2358 = vsel %vm1603, %v2350, -inf
      %v2359 = vsel %vm1603, %v2351, -inf
      %v2360 = vmax.f32 %v2355, %v2359
      %v2361 = vsel %vm1603, %v2352, -inf
      %v2362 = vmax.f32 %v2356, %v2361
      %v2363 = vsel %vm1603, %v2353, -inf
      %v2364 = vmax.f32 %v2357, %v2363
      %v2365 = vsel %vm1603, %v2354, -inf
      %v2366 = vmax.f32 %v2358, %v2365
      %v2367 = vmax.f32 %v2360, %v2362
      %v2368 = vmax.f32 %v2364, %v2366
      %v2369 = vmax.f32 %v2367, %v2368
      %v2370 = vrot.slane %v2369, 4
      %v2371 = vmax.f32 %v2369, %v2370
      %v2372 = vrot.slane %v2371, 2
      %v2373 = vmax.f32 %v2371, %v2372
      %v2374 = vrot.slane %v2373, 1
      %v2375 = vmax.f32 %v2373, %v2374
      %v2376 = vsub.f32 %v2347, %v2375
      %v2377 = vsub.f32 %v2348, %v2375
      %v2378 = vsub.f32 %v2349, %v2375
      %v2379 = vsub.f32 %v2350, %v2375
      %v2380 = vsub.f32 %v2351, %v2375
      %v2381 = vsub.f32 %v2352, %v2375
      %v2382 = vsub.f32 %v2353, %v2375
      %v2383 = vsub.f32 %v2354, %v2375
      %v2384 = vmul.f32 %v2376, 1.442695
      %v2385 = vpow.pop %v2384
      %v2386 = vmul.f32 %v2377, 1.442695
      %v2387 = vpow.pop %v2386
      %v2388 = vmul.f32 %v2378, 1.442695
      %v2389 = vpow.pop %v2388
      %v2390 = vmul.f32 %v2379, 1.442695
      %v2391 = vpow.pop %v2390
      %v2392 = vmul.f32 %v2380, 1.442695
      %v2393 = vpow.pop %v2392
      %v2394 = vmul.f32 %v2381, 1.442695
      %v2395 = vpow.pop %v2394
      %v2396 = vmul.f32 %v2382, 1.442695
      %v2397 = vpow.pop %v2396
      %v2398 = vmul.f32 %v2383, 1.442695
      %v2399 = vpow.pop %v2398
      %vm2400 = vcmask 523264
      %v2402 = vsel %vm2400, %v676, 0
      %2404 = vmatprep.subr.mxu0 0.0
      %2405 = vmatpush1.msra.mxu0 %v2385
      %2406 = vmatprep.subr.mxu0 0.0
      %2407 = vmatpush1.msra.mxu0 %v2387
      %2408 = vmatprep.subr.mxu0 0.0
      %2409 = vmatpush1.msra.mxu0 %v2389
      %2410 = vmatprep.subr.mxu0 0.0
      %2411 = vmatpush1.msra.mxu0 %v2391
      %2412 = vmatprep.subr.mxu0 0.0
      %2413 = vmatpush1.msra.mxu0 %v2393
      %2414 = vmatprep.subr.mxu0 0.0
      %2415 = vmatpush1.msra.mxu0 %v2395
      %2416 = vmatprep.subr.mxu0 0.0
      %2417 = vmatpush1.msra.mxu0 %v2397
      %2418 = vmatprep.subr.mxu0 0.0
      %2419 = vmatpush1.msra.mxu0 %v2399
      %2420 = vmatprep.subr.mxu0 0.0
      %2421 = vmatpush1.msra.mxu0 0.0
      %2422 = vmatprep.subr.mxu0 0.0
      %2423 = vmatpush1.msra.mxu0 0.0
      %2424 = vmatprep.subr.mxu0 0.0
      %2425 = vmatpush1.msra.mxu0 0.0
      %2426 = vmatprep.subr.mxu0 0.0
      %2427 = vmatpush1.msra.mxu0 0.0
      %2428 = vmatprep.subr.mxu0 0.0
      %2429 = vmatpush1.msra.mxu0 0.0
      %2430 = vmatprep.subr.mxu0 0.0
      %2431 = vmatpush1.msra.mxu0 0.0
      %2432 = vmatprep.subr.mxu0 0.0
      %2433 = vmatpush1.msra.mxu0 0.0
      %2434 = vmatprep.subr.mxu0 0.0
      %2435 = vmatpush1.msra.mxu0 0.0
      %2436 = vmatprep.subr.mxu0 0.0
      %2437 = vmatpush1.msra.mxu0 0.0
      %2438 = vmatprep.subr.mxu0 0.0
      %2439 = vmatpush1.msra.mxu0 0.0
      %2440 = vmatprep.subr.mxu0 0.0
      %2441 = vmatpush1.msra.mxu0 0.0
      %2442 = vmatprep.subr.mxu0 0.0
      %2443 = vmatpush1.msra.mxu0 0.0
      %2444 = vmatprep.subr.mxu0 0.0
      %2445 = vmatpush1.msra.mxu0 0.0
      %2446 = vmatprep.subr.mxu0 0.0
      %2447 = vmatpush1.msra.mxu0 0.0
      %2448 = vmatprep.subr.mxu0 0.0
      %2449 = vmatpush1.msra.mxu0 0.0
      %2450 = vmatprep.subr.mxu0 0.0
      %2451 = vmatpush1.msra.mxu0 0.0
      %2452 = vmatprep.subr.mxu0 0.0
      %2453 = vmatpush1.msra.mxu0 0.0
      %2454 = vmatprep.subr.mxu0 0.0
      %2455 = vmatpush1.msra.mxu0 0.0
      %2456 = vmatprep.subr.mxu0 0.0
      %2457 = vmatpush1.msra.mxu0 0.0
      %2458 = vmatprep.subr.mxu0 0.0
      %2459 = vmatpush1.msra.mxu0 0.0
      %2460 = vmatprep.subr.mxu0 0.0
      %2461 = vmatpush1.msra.mxu0 0.0
      %2462 = vmatprep.subr.mxu0 0.0
      %2463 = vmatpush1.msra.mxu0 0.0
      %2464 = vmatprep.subr.mxu0 0.0
      %2465 = vmatpush1.msra.mxu0 0.0
      %2466 = vmatprep.subr.mxu0 0.0
      %2467 = vmatpush1.msra.mxu0 0.0
      %2468 = vmatprep.mubr.f32.mxu0 0.0
      %2469 = vmatmul.mubr.f32.gmra.mrb[0].mxu0 %v2402
      %v2470 = vpop.f32.mrb[0].mxu0
      %v2471 = vadd.f32 0.0, %v2470
      %v2472 = vpop.f32.mrb[0].mxu0
      %2473 = vdwg.mxu0
      %vm2474 = vcmp.gt.f32.partialorder %v2471, 0.0
      %v2475 = vrcp.pop %v2471
      %v2476 = vmul.f32 1.0, %v2475
      %v2477 = vsel %vm2474, %v2476, 0.0
      %2478 = vmatprep.subr.mxu0 0.0
      %2479 = vmatpush1.msra.mxu0 %v2477
      %2480 = vmatprep.subr.mxu0 0.0
      %2481 = vmatpush1.msra.mxu0 0.0
      %2482 = vmatprep.subr.mxu0 0.0
      %2483 = vmatpush1.msra.mxu0 0.0
      %2484 = vmatprep.subr.mxu0 0.0
      %2485 = vmatpush1.msra.mxu0 0.0
      %2486 = vmatprep.subr.mxu0 0.0
      %2487 = vmatpush1.msra.mxu0 0.0
      %2488 = vmatprep.subr.mxu0 0.0
      %2489 = vmatpush1.msra.mxu0 0.0
      %2490 = vmatprep.subr.mxu0 0.0
      %2491 = vmatpush1.msra.mxu0 0.0
      %2492 = vmatprep.subr.mxu0 0.0
      %2493 = vmatpush1.msra.mxu0 0.0
      %2494 = vmatprep.subr.mxu0 0.0
      %2495 = vmatpush1.msra.mxu0 0.0
      %2496 = vmatprep.subr.mxu0 0.0
      %2497 = vmatpush1.msra.mxu0 0.0
      %2498 = vmatprep.subr.mxu0 0.0
      %2499 = vmatpush1.msra.mxu0 0.0
      %2500 = vmatprep.subr.mxu0 0.0
      %2501 = vmatpush1.msra.mxu0 0.0
      %2502 = vmatprep.subr.mxu0 0.0
      %2503 = vmatpush1.msra.mxu0 0.0
      %2504 = vmatprep.subr.mxu0 0.0
      %2505 = vmatpush1.msra.mxu0 0.0
      %2506 = vmatprep.subr.mxu0 0.0
      %2507 = vmatpush1.msra.mxu0 0.0
      %2508 = vmatprep.subr.mxu0 0.0
      %2509 = vmatpush1.msra.mxu0 0.0
      %2510 = vmatprep.subr.mxu0 0.0
      %2511 = vmatpush1.msra.mxu0 0.0
      %2512 = vmatprep.subr.mxu0 0.0
      %2513 = vmatpush1.msra.mxu0 0.0
      %2514 = vmatprep.subr.mxu0 0.0
      %2515 = vmatpush1.msra.mxu0 0.0
      %2516 = vmatprep.subr.mxu0 0.0
      %2517 = vmatpush1.msra.mxu0 0.0
      %2518 = vmatprep.subr.mxu0 0.0
      %2519 = vmatpush1.msra.mxu0 0.0
      %2520 = vmatprep.subr.mxu0 0.0
      %2521 = vmatpush1.msra.mxu0 0.0
      %2522 = vmatprep.subr.mxu0 0.0
      %2523 = vmatpush1.msra.mxu0 0.0
      %2524 = vmatprep.subr.mxu0 0.0
      %2525 = vmatpush1.msra.mxu0 0.0
      %2526 = vmatprep.subr.mxu0 0.0
      %2527 = vmatpush1.msra.mxu0 0.0
      %2528 = vmatprep.subr.mxu0 0.0
      %2529 = vmatpush1.msra.mxu0 0.0
      %2530 = vmatprep.subr.mxu0 0.0
      %2531 = vmatpush1.msra.mxu0 0.0
      %2532 = vmatprep.subr.mxu0 0.0
      %2533 = vmatpush1.msra.mxu0 0.0
      %2534 = vmatprep.subr.mxu0 0.0
      %2535 = vmatpush1.msra.mxu0 0.0
      %2536 = vmatprep.subr.mxu0 0.0
      %2537 = vmatpush1.msra.mxu0 0.0
      %2538 = vmatprep.subr.mxu0 0.0
      %2539 = vmatpush1.msra.mxu0 0.0
      %2540 = vmatprep.subr.mxu0 0.0
      %2541 = vmatpush1.msra.mxu0 0.0
      %2542 = vmatprep.mubr.f32.mxu0 0.0
      %2543 = vmatmul.mubr.f32.gmra.mrb[0].mxu0 %v816
      %v2544 = vpop.f32.mrb[0].mxu0
      %v2545 = vadd.f32 0.0, %v2544
      %v2546 = vpop.f32.mrb[0].mxu0
      %2547 = vmatprep.mubr.f32.mxu0 0.0
      %2548 = vmatmul.mubr.f32.gmra.mrb[0].mxu0 %v819
      %v2549 = vpop.f32.mrb[0].mxu0
      %v2550 = vadd.f32 0.0, %v2549
      %v2551 = vpop.f32.mrb[0].mxu0
      %2552 = vmatprep.mubr.f32.mxu0 0.0
      %2553 = vmatmul.mubr.f32.gmra.mrb[0].mxu0 %v822
      %v2554 = vpop.f32.mrb[0].mxu0
      %v2555 = vadd.f32 0.0, %v2554
      %v2556 = vpop.f32.mrb[0].mxu0
      %2557 = vmatprep.mubr.f32.mxu0 0.0
      %2558 = vmatmul.mubr.f32.gmra.mrb[0].mxu0 %v825
      %v2559 = vpop.f32.mrb[0].mxu0
      %v2560 = vadd.f32 0.0, %v2559
      %v2561 = vpop.f32.mrb[0].mxu0
      %2562 = vmatprep.mubr.f32.mxu0 0.0
      %2563 = vmatmul.mubr.f32.gmra.mrb[0].mxu0 %v828
      %v2564 = vpop.f32.mrb[0].mxu0
      %v2565 = vadd.f32 0.0, %v2564
      %v2566 = vpop.f32.mrb[0].mxu0
      %2567 = vmatprep.mubr.f32.mxu0 0.0
      %2568 = vmatmul.mubr.f32.gmra.mrb[0].mxu0 %v831
      %v2569 = vpop.f32.mrb[0].mxu0
      %v2570 = vadd.f32 0.0, %v2569
      %v2571 = vpop.f32.mrb[0].mxu0
      %2572 = vmatprep.mubr.f32.mxu0 0.0
      %2573 = vmatmul.mubr.f32.gmra.mrb[0].mxu0 %v834
      %v2574 = vpop.f32.mrb[0].mxu0
      %v2575 = vadd.f32 0.0, %v2574
      %v2576 = vpop.f32.mrb[0].mxu0
      %2577 = vmatprep.mubr.f32.mxu0 0.0
      %2578 = vmatmul.mubr.f32.gmra.mrb[0].mxu0 %v837
      %v2579 = vpop.f32.mrb[0].mxu0
      %v2580 = vadd.f32 0.0, %v2579
      %v2581 = vpop.f32.mrb[0].mxu0
      %2582 = vdwg.mxu0
      %v2583 = vmul.f32 %v2385, %v2545
      %v2584 = vmul.f32 %v2387, %v2550
      %v2585 = vmul.f32 %v2389, %v2555
      %v2586 = vmul.f32 %v2391, %v2560
      %v2587 = vmul.f32 %v2393, %v2565
      %v2588 = vmul.f32 %v2395, %v2570
      %v2589 = vmul.f32 %v2397, %v2575
      %v2590 = vmul.f32 %v2399, %v2580
      %v2592 = vsel %vm1603, %v2583, 0
      %v2595 = vsel %vm1603, %v2584, 0
      %v2598 = vsel %vm1603, %v2585, 0
      %v2601 = vsel %vm1603, %v2586, 0
      %v2604 = vsel %vm1603, %v2587, 0
      %v2607 = vsel %vm1603, %v2588, 0
      %v2610 = vsel %vm1603, %v2589, 0
      %v2613 = vsel %vm1603, %v2590, 0
      %v2615 = vsel %vm1628, %v676, 0
      %2617 = vmatprep.subr.mxu0 0.0
      %2618 = vmatpush1.msra.mxu0 %v2615
      %2619 = vmatprep.subr.mxu0 0.0
      %2620 = vmatpush1.msra.mxu0 0.0
      %2621 = vmatprep.subr.mxu0 0.0
      %2622 = vmatpush1.msra.mxu0 0.0
      %2623 = vmatprep.subr.mxu0 0.0
      %2624 = vmatpush1.msra.mxu0 0.0
      %2625 = vmatprep.subr.mxu0 0.0
      %2626 = vmatpush1.msra.mxu0 0.0
      %2627 = vmatprep.subr.mxu0 0.0
      %2628 = vmatpush1.msra.mxu0 0.0
      %2629 = vmatprep.subr.mxu0 0.0
      %2630 = vmatpush1.msra.mxu0 0.0
      %2631 = vmatprep.subr.mxu0 0.0
      %2632 = vmatpush1.msra.mxu0 0.0
      %2633 = vmatprep.subr.mxu0 0.0
      %2634 = vmatpush1.msra.mxu0 0.0
      %2635 = vmatprep.subr.mxu0 0.0
      %2636 = vmatpush1.msra.mxu0 0.0
      %2637 = vmatprep.subr.mxu0 0.0
      %2638 = vmatpush1.msra.mxu0 0.0
      %2639 = vmatprep.subr.mxu0 0.0
      %2640 = vmatpush1.msra.mxu0 0.0
      %2641 = vmatprep.subr.mxu0 0.0
      %2642 = vmatpush1.msra.mxu0 0.0
      %2643 = vmatprep.subr.mxu0 0.0
      %2644 = vmatpush1.msra.mxu0 0.0
      %2645 = vmatprep.subr.mxu0 0.0
      %2646 = vmatpush1.msra.mxu0 0.0
      %2647 = vmatprep.subr.mxu0 0.0
      %2648 = vmatpush1.msra.mxu0 0.0
      %2649 = vmatprep.subr.mxu0 0.0
      %2650 = vmatpush1.msra.mxu0 0.0
      %2651 = vmatprep.subr.mxu0 0.0
      %2652 = vmatpush1.msra.mxu0 0.0
      %2653 = vmatprep.subr.mxu0 0.0
      %2654 = vmatpush1.msra.mxu0 0.0
      %2655 = vmatprep.subr.mxu0 0.0
      %2656 = vmatpush1.msra.mxu0 0.0
      %2657 = vmatprep.subr.mxu0 0.0
      %2658 = vmatpush1.msra.mxu0 0.0
      %2659 = vmatprep.subr.mxu0 0.0
      %2660 = vmatpush1.msra.mxu0 0.0
      %2661 = vmatprep.subr.mxu0 0.0
      %2662 = vmatpush1.msra.mxu0 0.0
      %2663 = vmatprep.subr.mxu0 0.0
      %2664 = vmatpush1.msra.mxu0 0.0
      %2665 = vmatprep.subr.mxu0 0.0
      %2666 = vmatpush1.msra.mxu0 0.0
      %2667 = vmatprep.subr.mxu0 0.0
      %2668 = vmatpush1.msra.mxu0 0.0
      %2669 = vmatprep.subr.mxu0 0.0
      %2670 = vmatpush1.msra.mxu0 0.0
      %2671 = vmatprep.subr.mxu0 0.0
      %2672 = vmatpush1.msra.mxu0 0.0
      %2673 = vmatprep.subr.mxu0 0.0
      %2674 = vmatpush1.msra.mxu0 0.0
      %2675 = vmatprep.subr.mxu0 0.0
      %2676 = vmatpush1.msra.mxu0 0.0
      %2677 = vmatprep.subr.mxu0 0.0
      %2678 = vmatpush1.msra.mxu0 0.0
      %2679 = vmatprep.subr.mxu0 0.0
      %2680 = vmatpush1.msra.mxu0 0.0
      %2681 = vmatprep.mubr.f32.mxu0 0.0
      %2682 = vmatmul.mubr.f32.gmra.mrb[0].mxu0 %v2592
      %v2683 = vpop.f32.mrb[0].mxu0
      %v2684 = vadd.f32 0.0, %v2683
      %v2685 = vpop.f32.mrb[0].mxu0
      %2686 = vmatprep.mubr.f32.mxu0 0.0
      %2687 = vmatmul.mubr.f32.gmra.mrb[0].mxu0 %v2595
      %v2688 = vpop.f32.mrb[0].mxu0
      %v2689 = vadd.f32 0.0, %v2688
      %v2690 = vpop.f32.mrb[0].mxu0
      %2691 = vmatprep.mubr.f32.mxu0 0.0
      %2692 = vmatmul.mubr.f32.gmra.mrb[0].mxu0 %v2598
      %v2693 = vpop.f32.mrb[0].mxu0
      %v2694 = vadd.f32 0.0, %v2693
      %v2695 = vpop.f32.mrb[0].mxu0
      %2696 = vmatprep.mubr.f32.mxu0 0.0
      %2697 = vmatmul.mubr.f32.gmra.mrb[0].mxu0 %v2601
      %v2698 = vpop.f32.mrb[0].mxu0
      %v2699 = vadd.f32 0.0, %v2698
      %v2700 = vpop.f32.mrb[0].mxu0
      %2701 = vmatprep.mubr.f32.mxu0 0.0
      %2702 = vmatmul.mubr.f32.gmra.mrb[0].mxu0 %v2604
      %v2703 = vpop.f32.mrb[0].mxu0
      %v2704 = vadd.f32 0.0, %v2703
      %v2705 = vpop.f32.mrb[0].mxu0
      %2706 = vmatprep.mubr.f32.mxu0 0.0
      %2707 = vmatmul.mubr.f32.gmra.mrb[0].mxu0 %v2607
      %v2708 = vpop.f32.mrb[0].mxu0
      %v2709 = vadd.f32 0.0, %v2708
      %v2710 = vpop.f32.mrb[0].mxu0
      %2711 = vmatprep.mubr.f32.mxu0 0.0
      %2712 = vmatmul.mubr.f32.gmra.mrb[0].mxu0 %v2610
      %v2713 = vpop.f32.mrb[0].mxu0
      %v2714 = vadd.f32 0.0, %v2713
      %v2715 = vpop.f32.mrb[0].mxu0
      %2716 = vmatprep.mubr.f32.mxu0 0.0
      %2717 = vmatmul.mubr.f32.gmra.mrb[0].mxu0 %v2613
      %v2718 = vpop.f32.mrb[0].mxu0
      %v2719 = vadd.f32 0.0, %v2718
      %v2720 = vpop.f32.mrb[0].mxu0
      %2721 = vdwg.mxu0
      %2722 = vrot.lane.b32.xlu0 %v814, 64
      %v2723 = vpop.permute.xlu0 %2722
      %v2725 = vmul.f32 %v2684, %v2723
      %v2726 = vmul.f32 %v2689, %v2723
      %v2727 = vmul.f32 %v2694, %v2723
      %v2728 = vmul.f32 %v2699, %v2723
      %v2729 = vmul.f32 %v2704, %v2723
      %v2730 = vmul.f32 %v2709, %v2723
      %v2731 = vmul.f32 %v2714, %v2723
      %v2732 = vmul.f32 %v2719, %v2723
      %2733 = vmatprep.subr.mxu0 0.0
      %2734 = vmatpush1.msra.mxu0 %v2725
      %2735 = vmatprep.subr.mxu0 0.0
      %2736 = vmatpush1.msra.mxu0 %v2726
      %2737 = vmatprep.subr.mxu0 0.0
      %2738 = vmatpush1.msra.mxu0 %v2727
      %2739 = vmatprep.subr.mxu0 0.0
      %2740 = vmatpush1.msra.mxu0 %v2728
      %2741 = vmatprep.subr.mxu0 0.0
      %2742 = vmatpush1.msra.mxu0 %v2729
      %2743 = vmatprep.subr.mxu0 0.0
      %2744 = vmatpush1.msra.mxu0 %v2730
      %2745 = vmatprep.subr.mxu0 0.0
      %2746 = vmatpush1.msra.mxu0 %v2731
      %2747 = vmatprep.subr.mxu0 0.0
      %2748 = vmatpush1.msra.mxu0 %v2732
      %2749 = vmatprep.subr.mxu0 0.0
      %2750 = vmatpush1.msra.mxu0 0.0
      %2751 = vmatprep.subr.mxu0 0.0
      %2752 = vmatpush1.msra.mxu0 0.0
      %2753 = vmatprep.subr.mxu0 0.0
      %2754 = vmatpush1.msra.mxu0 0.0
      %2755 = vmatprep.subr.mxu0 0.0
      %2756 = vmatpush1.msra.mxu0 0.0
      %2757 = vmatprep.subr.mxu0 0.0
      %2758 = vmatpush1.msra.mxu0 0.0
      %2759 = vmatprep.subr.mxu0 0.0
      %2760 = vmatpush1.msra.mxu0 0.0
      %2761 = vmatprep.subr.mxu0 0.0
      %2762 = vmatpush1.msra.mxu0 0.0
      %2763 = vmatprep.subr.mxu0 0.0
      %2764 = vmatpush1.msra.mxu0 0.0
      %2765 = vmatprep.subr.mxu0 0.0
      %2766 = vmatpush1.msra.mxu0 0.0
      %2767 = vmatprep.subr.mxu0 0.0
      %2768 = vmatpush1.msra.mxu0 0.0
      %2769 = vmatprep.subr.mxu0 0.0
      %2770 = vmatpush1.msra.mxu0 0.0
      %2771 = vmatprep.subr.mxu0 0.0
      %2772 = vmatpush1.msra.mxu0 0.0
      %2773 = vmatprep.subr.mxu0 0.0
      %2774 = vmatpush1.msra.mxu0 0.0
      %2775 = vmatprep.subr.mxu0 0.0
      %2776 = vmatpush1.msra.mxu0 0.0
      %2777 = vmatprep.subr.mxu0 0.0
      %2778 = vmatpush1.msra.mxu0 0.0
      %2779 = vmatprep.subr.mxu0 0.0
      %2780 = vmatpush1.msra.mxu0 0.0
      %2781 = vmatprep.subr.mxu0 0.0
      %2782 = vmatpush1.msra.mxu0 0.0
      %2783 = vmatprep.subr.mxu0 0.0
      %2784 = vmatpush1.msra.mxu0 0.0
      %2785 = vmatprep.subr.mxu0 0.0
      %2786 = vmatpush1.msra.mxu0 0.0
      %2787 = vmatprep.subr.mxu0 0.0
      %2788 = vmatpush1.msra.mxu0 0.0
      %2789 = vmatprep.subr.mxu0 0.0
      %2790 = vmatpush1.msra.mxu0 0.0
      %2791 = vmatprep.subr.mxu0 0.0
      %2792 = vmatpush1.msra.mxu0 0.0
      %2793 = vmatprep.subr.mxu0 0.0
      %2794 = vmatpush1.msra.mxu0 0.0
      %2795 = vmatprep.subr.mxu0 0.0
      %2796 = vmatpush1.msra.mxu0 0.0
      %2797 = vmatprep.mubr.f32.mxu0 0.0
      %2798 = vmatmul.mubr.f32.gmra.mrb[0].mxu0 %v2402
      %v2799 = vpop.f32.mrb[0].mxu0
      %v2800 = vadd.f32 0.0, %v2799
      %v2801 = vpop.f32.mrb[0].mxu0
      %2802 = vdwg.mxu0
      %v2803 = vadd.f32 %v1501, 1.0
      %v2804 = vlaneseq
      %v2805 = vshrl.u32 %v2804, 7
      %v2806 = vsub.s32 0, %v2805
      %v2807 = vrot.slane %v2803, %v2806
      %2809 = vrot.lane.b32.xlu0 %v2800, 32
      %v2810 = vpop.permute.xlu0 %2809
      %v2812 = vmul.f32 %v2807, %v2810
      %v2813 = vlaneseq
      %v2814 = vshrl.u32 %v2813, 7
      %v2815 = vsub.s32 0, %v2814
      %v2816 = vrot.slane %v1501, %v2815
      %2818 = vrot.lane.b32.xlu0 %v2812, 96
      %v2819 = vpop.permute.xlu0 %2818
      %v2821 = vadd.f32 %v2816, %v2819
      %2826 = vrot.lane.b32.xlu0 %v724, 32
      %v2827 = vpop.permute.xlu0 %2826
      %2828 = vrot.lane.b32.xlu0 %v725, 32
      %v2829 = vpop.permute.xlu0 %2828
      %2830 = vrot.lane.b32.xlu0 %v726, 32
      %v2831 = vpop.permute.xlu0 %2830
      %2832 = vrot.lane.b32.xlu0 %v727, 32
      %v2833 = vpop.permute.xlu0 %2832
      %2838 = vrot.lane.b32.xlu0 %v1599, 64
      %v2839 = vpop.permute.xlu0 %2838
      %v2842 = vsel %vm735, %v2821, 0
      %2844 = vmatprep.subr.mxu0 0.0
      %2845 = vmatpush1.msra.mxu0 %v2827
      %2846 = vmatprep.subr.mxu0 0.0
      %2847 = vmatpush1.msra.mxu0 %v2829
      %2848 = vmatprep.subr.mxu0 0.0
      %2849 = vmatpush1.msra.mxu0 %v2831
      %2850 = vmatprep.subr.mxu0 0.0
      %2851 = vmatpush1.msra.mxu0 %v2833
      %2852 = vmatprep.subr.mxu0 0.0
      %2853 = vmatpush1.msra.mxu0 0.0
      %2854 = vmatprep.subr.mxu0 0.0
      %2855 = vmatpush1.msra.mxu0 0.0
      %2856 = vmatprep.subr.mxu0 0.0
      %2857 = vmatpush1.msra.mxu0 0.0
      %2858 = vmatprep.subr.mxu0 0.0
      %2859 = vmatpush1.msra.mxu0 0.0
      %2860 = vmatprep.subr.mxu0 0.0
      %2861 = vmatpush1.msra.mxu0 0.0
      %2862 = vmatprep.subr.mxu0 0.0
      %2863 = vmatpush1.msra.mxu0 0.0
      %2864 = vmatprep.subr.mxu0 0.0
      %2865 = vmatpush1.msra.mxu0 0.0
      %2866 = vmatprep.subr.mxu0 0.0
      %2867 = vmatpush1.msra.mxu0 0.0
      %2868 = vmatprep.subr.mxu0 0.0
      %2869 = vmatpush1.msra.mxu0 0.0
      %2870 = vmatprep.subr.mxu0 0.0
      %2871 = vmatpush1.msra.mxu0 0.0
      %2872 = vmatprep.subr.mxu0 0.0
      %2873 = vmatpush1.msra.mxu0 0.0
      %2874 = vmatprep.subr.mxu0 0.0
      %2875 = vmatpush1.msra.mxu0 0.0
      %2876 = vmatprep.subr.mxu0 0.0
      %2877 = vmatpush1.msra.mxu0 0.0
      %2878 = vmatprep.subr.mxu0 0.0
      %2879 = vmatpush1.msra.mxu0 0.0
      %2880 = vmatprep.subr.mxu0 0.0
      %2881 = vmatpush1.msra.mxu0 0.0
      %2882 = vmatprep.subr.mxu0 0.0
      %2883 = vmatpush1.msra.mxu0 0.0
      %2884 = vmatprep.subr.mxu0 0.0
      %2885 = vmatpush1.msra.mxu0 0.0
      %2886 = vmatprep.subr.mxu0 0.0
      %2887 = vmatpush1.msra.mxu0 0.0
      %2888 = vmatprep.subr.mxu0 0.0
      %2889 = vmatpush1.msra.mxu0 0.0
      %2890 = vmatprep.subr.mxu0 0.0
      %2891 = vmatpush1.msra.mxu0 0.0
      %2892 = vmatprep.subr.mxu0 0.0
      %2893 = vmatpush1.msra.mxu0 0.0
      %2894 = vmatprep.subr.mxu0 0.0
      %2895 = vmatpush1.msra.mxu0 0.0
      %2896 = vmatprep.subr.mxu0 0.0
      %2897 = vmatpush1.msra.mxu0 0.0
      %2898 = vmatprep.subr.mxu0 0.0
      %2899 = vmatpush1.msra.mxu0 0.0
      %2900 = vmatprep.subr.mxu0 0.0
      %2901 = vmatpush1.msra.mxu0 0.0
      %2902 = vmatprep.subr.mxu0 0.0
      %2903 = vmatpush1.msra.mxu0 0.0
      %2904 = vmatprep.subr.mxu0 0.0
      %2905 = vmatpush1.msra.mxu0 0.0
      %2906 = vmatprep.subr.mxu0 0.0
      %2907 = vmatpush1.msra.mxu0 0.0
      %2908 = vmatprep.mubr.f32.mxu0 0.0
      %2909 = vmatmul.mubr.f32.gmra.mrb[0].mxu0 %v2842
      %v2910 = vpop.f32.mrb[0].mxu0
      %v2911 = vadd.f32 %v2839, %v2910
      %v2912 = vpop.f32.mrb[0].mxu0
      %2913 = vdwg.mxu0
      %v2914 = vmul.f32 %v2911, %v812
      %v2915 = vsel %vm735, %v605, 0.0
      %v2916 = vrot.slane %v2915, 4
      %v2917 = vadd.f32 %v2915, %v2916
      %v2918 = vrot.slane %v2917, 2
      %v2919 = vadd.f32 %v2917, %v2918
      %v2920 = vrot.slane %v2919, 1
      %v2921 = vadd.f32 %v2919, %v2920
      %v2922 = vrcp.pop 8.0
      %v2923 = vmul.f32 %v2921, %v2922
      %v2924 = vsel %vm735, %v605, inf
      %v2925 = vrot.slane %v2924, 4
      %v2926 = vmin.f32 %v2924, %v2925
      %v2927 = vrot.slane %v2926, 2
      %v2928 = vmin.f32 %v2926, %v2927
      %v2929 = vrot.slane %v2928, 1
      %v2930 = vmin.f32 %v2928, %v2929
      %v2931 = vsel %vm735, %v605, -inf
      %v2932 = vrot.slane %v2931, 4
      %v2933 = vmax.f32 %v2931, %v2932
      %v2934 = vrot.slane %v2933, 2
      %v2935 = vmax.f32 %v2933, %v2934
      %v2936 = vrot.slane %v2935, 1
      %v2937 = vmax.f32 %v2935, %v2936
      %v2938 = vsub.f32 %v605, %v2923
      %v2939 = vmul.f32 %v2938, %v2938
      %v2940 = vsel %vm735, %v2939, 0.0
      %v2941 = vrot.slane %v2940, 4
      %v2942 = vadd.f32 %v2940, %v2941
      %v2943 = vrot.slane %v2942, 2
      %v2944 = vadd.f32 %v2942, %v2943
      %v2945 = vrot.slane %v2944, 1
      %v2946 = vadd.f32 %v2944, %v2945
      %v2947 = vrcp.pop 7.0
      %v2948 = vmul.f32 %v2946, %v2947
      %v2949 = vrsqrt.pop %v2948
      %v2950 = vmul.f32 %v2948, %v2949
      %vm2951 = vcmp.eq.f32.partialorder %v2948, inf
      %v2952 = vsel %vm2951, %v2948, %v2950
      %vm2953 = vcmp.eq.f32.partialorder %v2948, 0.0
      %v2954 = vand.u32 %v2948, 2147483648
      %v2955 = vsel %vm2953, %v2954, %v2952
      %v2956 = vsel %vm1098, %v606, 0.0
      %v2957 = vsel %vm1098, %v607, 0.0
      %v2958 = vadd.f32 %v2956, %v2957
      %v2959 = vsel %vm1098, %v608, 0.0
      %v2960 = vadd.f32 %v2958, %v2959
      %v2961 = vsel %vm1098, %v609, 0.0
      %v2962 = vadd.f32 %v2960, %v2961
      %v2963 = vsel %vm1098, %v610, 0.0
      %v2964 = vadd.f32 %v2962, %v2963
      %v2965 = vsel %vm1098, %v611, 0.0
      %v2966 = vadd.f32 %v2964, %v2965
      %v2967 = vsel %vm1098, %v612, 0.0
      %v2968 = vadd.f32 %v2966, %v2967
      %v2969 = vsel %vm1098, %v613, 0.0
      %v2970 = vadd.f32 %v2968, %v2969
      %v2971 = vrot.slane %v2970, 4
      %v2972 = vadd.f32 %v2970, %v2971
      %v2973 = vrot.slane %v2972, 2
      %v2974 = vadd.f32 %v2972, %v2973
      %v2975 = vrot.slane %v2974, 1
      %v2976 = vadd.f32 %v2974, %v2975
      %v2977 = vrcp.pop 64.0
      %v2978 = vmul.f32 %v2976, %v2977
      %v2979 = vsel %vm1098, %v606, inf
      %v2980 = vsel %vm1098, %v607, inf
      %v2981 = vsel %vm1098, %v608, inf
      %v2982 = vsel %vm1098, %v609, inf
      %v2983 = vsel %vm1098, %v610, inf
      %v2984 = vmin.f32 %v2979, %v2983
      %v2985 = vsel %vm1098, %v611, inf
      %v2986 = vmin.f32 %v2980, %v2985
      %v2987 = vsel %vm1098, %v612, inf
      %v2988 = vmin.f32 %v2981, %v2987
      %v2989 = vsel %vm1098, %v613, inf
      %v2990 = vmin.f32 %v2982, %v2989
      %v2991 = vmin.f32 %v2984, %v2986
      %v2992 = vmin.f32 %v2988, %v2990
      %v2993 = vmin.f32 %v2991, %v2992
      %v2994 = vrot.slane %v2993, 4
      %v2995 = vmin.f32 %v2993, %v2994
      %v2996 = vrot.slane %v2995, 2
      %v2997 = vmin.f32 %v2995, %v2996
      %v2998 = vrot.slane %v2997, 1
      %v2999 = vmin.f32 %v2997, %v2998
      %v3000 = vsel %vm1098, %v606, -inf
      %v3001 = vsel %vm1098, %v607, -inf
      %v3002 = vsel %vm1098, %v608, -inf
      %v3003 = vsel %vm1098, %v609, -inf
      %v3004 = vsel %vm1098, %v610, -inf
      %v3005 = vmax.f32 %v3000, %v3004
      %v3006 = vsel %vm1098, %v611, -inf
      %v3007 = vmax.f32 %v3001, %v3006
      %v3008 = vsel %vm1098, %v612, -inf
      %v3009 = vmax.f32 %v3002, %v3008
      %v3010 = vsel %vm1098, %v613, -inf
      %v3011 = vmax.f32 %v3003, %v3010
      %v3012 = vmax.f32 %v3005, %v3007
      %v3013 = vmax.f32 %v3009, %v3011
      %v3014 = vmax.f32 %v3012, %v3013
      %v3015 = vrot.slane %v3014, 4
      %v3016 = vmax.f32 %v3014, %v3015
      %v3017 = vrot.slane %v3016, 2
      %v3018 = vmax.f32 %v3016, %v3017
      %v3019 = vrot.slane %v3018, 1
      %v3020 = vmax.f32 %v3018, %v3019
      %v3021 = vsub.f32 %v606, %v2978
      %v3022 = vsub.f32 %v607, %v2978
      %v3023 = vsub.f32 %v608, %v2978
      %v3024 = vsub.f32 %v609, %v2978
      %v3025 = vsub.f32 %v610, %v2978
      %v3026 = vsub.f32 %v611, %v2978
      %v3027 = vsub.f32 %v612, %v2978
      %v3028 = vsub.f32 %v613, %v2978
      %v3029 = vmul.f32 %v3021, %v3021
      %v3030 = vmul.f32 %v3022, %v3022
      %v3031 = vmul.f32 %v3023, %v3023
      %v3032 = vmul.f32 %v3024, %v3024
      %v3033 = vmul.f32 %v3025, %v3025
      %v3034 = vmul.f32 %v3026, %v3026
      %v3035 = vmul.f32 %v3027, %v3027
      %v3036 = vmul.f32 %v3028, %v3028
      %v3037 = vsel %vm1098, %v3029, 0.0
      %v3038 = vsel %vm1098, %v3030, 0.0
      %v3039 = vadd.f32 %v3037, %v3038
      %v3040 = vsel %vm1098, %v3031, 0.0
      %v3041 = vadd.f32 %v3039, %v3040
      %v3042 = vsel %vm1098, %v3032, 0.0
      %v3043 = vadd.f32 %v3041, %v3042
      %v3044 = vsel %vm1098, %v3033, 0.0
      %v3045 = vadd.f32 %v3043, %v3044
      %v3046 = vsel %vm1098, %v3034, 0.0
      %v3047 = vadd.f32 %v3045, %v3046
      %v3048 = vsel %vm1098, %v3035, 0.0
      %v3049 = vadd.f32 %v3047, %v3048
      %v3050 = vsel %vm1098, %v3036, 0.0
      %v3051 = vadd.f32 %v3049, %v3050
      %v3052 = vrot.slane %v3051, 4
      %v3053 = vadd.f32 %v3051, %v3052
      %v3054 = vrot.slane %v3053, 2
      %v3055 = vadd.f32 %v3053, %v3054
      %v3056 = vrot.slane %v3055, 1
      %v3057 = vadd.f32 %v3055, %v3056
      %v3058 = vrcp.pop 63.0
      %v3059 = vmul.f32 %v3057, %v3058
      %v3060 = vrsqrt.pop %v3059
      %v3061 = vmul.f32 %v3059, %v3060
      %vm3062 = vcmp.eq.f32.partialorder %v3059, inf
      %v3063 = vsel %vm3062, %v3059, %v3061
      %vm3064 = vcmp.eq.f32.partialorder %v3059, 0.0
      %v3065 = vand.u32 %v3059, 2147483648
      %v3066 = vsel %vm3064, %v3065, %v3063
      %3068 = vrot.lane.b32.xlu0 %v2930, 32
      %v3069 = vpop.permute.xlu0 %3068
      %3072 = vrot.lane.b32.xlu0 %v2937, 64
      %v3073 = vpop.permute.xlu0 %3072
      %3076 = vrot.lane.b32.xlu0 %v2955, 96
      %v3077 = vpop.permute.xlu0 %3076
      %3080 = vrot.lane.b32.xlu0 %v2999, 16
      %v3081 = vpop.permute.xlu0 %3080
      %3084 = vrot.lane.b32.xlu0 %v3020, 32
      %v3085 = vpop.permute.xlu0 %3084
      %3088 = vrot.lane.b32.xlu0 %v3066, 48
      %v3089 = vpop.permute.xlu0 %3088
      %v3091 = vsel %vm735, %v2923, %v3069
      %v3092 = vsel %vm2400, %v3091, %v3073
      %vm3093 = vcmask 785408
      %v3094 = vsel %vm3093, %v3092, %v3077
      %v3095 = vsel %vm1098, %v2978, %v3081
      %v3096 = vsel %vm735, %v3095, %v3085
      %vm3097 = vcmask 392192
      %v3098 = vsel %vm3097, %v3096, %v3089
      %v3099 = vld [vmem:[%s8] sm:$0xff]
      %v3100 = vld [vmem:[%s8 + $0x8] sm:$0xff]
      %v3101 = vld [vmem:[%s8 + $0x10] sm:$0xff]
      %v3102 = vld [vmem:[%s8 + $0x18] sm:$0xff]
      %v3103 = vld [vmem:[%s8 + $0x20] sm:$0xff]
      %v3104 = vld [vmem:[%s8 + $0x28] sm:$0xff]
      %v3105 = vld [vmem:[%s8 + $0x30] sm:$0xff]
      %v3106 = vld [vmem:[%s8 + $0x38] sm:$0xff]
      %v3107 = vld [vmem:[%s8 + $0x40] sm:$0xff]
      %v3108 = vld [vmem:[%s8 + $0x48] sm:$0xff]
      %v3109 = vld [vmem:[%s8 + $0x50] sm:$0xff]
      %v3110 = vld [vmem:[%s8 + $0x58] sm:$0xff]
      %v3111 = vld [vmem:[%s8 + $0x60] sm:$0xff]
      %v3112 = vld [vmem:[%s8 + $0x68] sm:$0xff]
      %v3113 = vld [vmem:[%s8 + $0x70] sm:$0xff]
      %v3114 = vld [vmem:[%s8 + $0x78] sm:$0xff]
      %v3115 = vld [vmem:[%s8 + $0x80] sm:$0xff]
      %v3116 = vld [vmem:[%s8 + $0x88] sm:$0xff]
      %v3117 = vld [vmem:[%s8 + $0x90] sm:$0xff]
      %v3118 = vld [vmem:[%s8 + $0x98] sm:$0xff]
      %v3119 = vld [vmem:[%s8 + $0xa0] sm:$0xff]
      %v3120 = vld [vmem:[%s8 + $0xa8] sm:$0xff]
      %v3121 = vld [vmem:[%s8 + $0xb0] sm:$0xff]
      %v3122 = vld [vmem:[%s8 + $0xb8] sm:$0xff]
      %v3124 = vsel %vm2400, %v3098, 0
      %3126 = vmatprep.subr.mxu0 0.0
      %3127 = vmatpush1.msra.mxu0 %v3099
      %3128 = vmatprep.subr.mxu0 0.0
      %3129 = vmatpush1.msra.mxu0 %v3100
      %3130 = vmatprep.subr.mxu0 0.0
      %3131 = vmatpush1.msra.mxu0 %v3101
      %3132 = vmatprep.subr.mxu0 0.0
      %3133 = vmatpush1.msra.mxu0 %v3102
      %3134 = vmatprep.subr.mxu0 0.0
      %3135 = vmatpush1.msra.mxu0 %v3103
      %3136 = vmatprep.subr.mxu0 0.0
      %3137 = vmatpush1.msra.mxu0 %v3104
      %3138 = vmatprep.subr.mxu0 0.0
      %3139 = vmatpush1.msra.mxu0 %v3105
      %3140 = vmatprep.subr.mxu0 0.0
      %3141 = vmatpush1.msra.mxu0 %v3106
      %3142 = vmatprep.subr.mxu0 0.0
      %3143 = vmatpush1.msra.mxu0 %v3107
      %3144 = vmatprep.subr.mxu0 0.0
      %3145 = vmatpush1.msra.mxu0 %v3108
      %3146 = vmatprep.subr.mxu0 0.0
      %3147 = vmatpush1.msra.mxu0 %v3109
      %3148 = vmatprep.subr.mxu0 0.0
      %3149 = vmatpush1.msra.mxu0 %v3110
      %3150 = vmatprep.subr.mxu0 0.0
      %3151 = vmatpush1.msra.mxu0 %v3111
      %3152 = vmatprep.subr.mxu0 0.0
      %3153 = vmatpush1.msra.mxu0 %v3112
      %3154 = vmatprep.subr.mxu0 0.0
      %3155 = vmatpush1.msra.mxu0 %v3113
      %3156 = vmatprep.subr.mxu0 0.0
      %3157 = vmatpush1.msra.mxu0 %v3114
      %3158 = vmatprep.subr.mxu0 0.0
      %3159 = vmatpush1.msra.mxu0 %v3115
      %3160 = vmatprep.subr.mxu0 0.0
      %3161 = vmatpush1.msra.mxu0 %v3116
      %3162 = vmatprep.subr.mxu0 0.0
      %3163 = vmatpush1.msra.mxu0 %v3117
      %3164 = vmatprep.subr.mxu0 0.0
      %3165 = vmatpush1.msra.mxu0 %v3118
      %3166 = vmatprep.subr.mxu0 0.0
      %3167 = vmatpush1.msra.mxu0 %v3119
      %3168 = vmatprep.subr.mxu0 0.0
      %3169 = vmatpush1.msra.mxu0 %v3120
      %3170 = vmatprep.subr.mxu0 0.0
      %3171 = vmatpush1.msra.mxu0 %v3121
      %3172 = vmatprep.subr.mxu0 0.0
      %3173 = vmatpush1.msra.mxu0 %v3122
      %3174 = vmatprep.subr.mxu0 0.0
      %3175 = vmatpush1.msra.mxu0 0.0
      %3176 = vmatprep.subr.mxu0 0.0
      %3177 = vmatpush1.msra.mxu0 0.0
      %3178 = vmatprep.subr.mxu0 0.0
      %3179 = vmatpush1.msra.mxu0 0.0
      %3180 = vmatprep.subr.mxu0 0.0
      %3181 = vmatpush1.msra.mxu0 0.0
      %3182 = vmatprep.subr.mxu0 0.0
      %3183 = vmatpush1.msra.mxu0 0.0
      %3184 = vmatprep.subr.mxu0 0.0
      %3185 = vmatpush1.msra.mxu0 0.0
      %3186 = vmatprep.subr.mxu0 0.0
      %3187 = vmatpush1.msra.mxu0 0.0
      %3188 = vmatprep.subr.mxu0 0.0
      %3189 = vmatpush1.msra.mxu0 0.0
      %3190 = vmatprep.mubr.f32.mxu0 %v3124
      %3191 = vmatmul.mubr.f32.gmra.mrb[0].mxu0 %v3094
      %v3192 = vpop.f32.mrb[0].mxu0
      %v3193 = vadd.f32 0.0, %v3192
      %v3194 = vpop.f32.mrb[0].mxu0
      %3195 = vdwg.mxu0
      %3196 = vrot.lane.b32.xlu0 %v1332, 56
      %v3197 = vpop.permute.xlu0 %3196
      %3198 = vrot.lane.b32.xlu0 %v1333, 56
      %v3199 = vpop.permute.xlu0 %3198
      %3202 = vmatprep.subr.mxu0 0.0
      %3203 = vmatpush1.msra.mxu0 %v3197
      %3204 = vmatprep.subr.mxu0 0.0
      %3205 = vmatpush1.msra.mxu0 %v3199
      %3206 = vmatprep.subr.mxu0 0.0
      %3207 = vmatpush1.msra.mxu0 0.0
      %3208 = vmatprep.subr.mxu0 0.0
      %3209 = vmatpush1.msra.mxu0 0.0
      %3210 = vmatprep.subr.mxu0 0.0
      %3211 = vmatpush1.msra.mxu0 0.0
      %3212 = vmatprep.subr.mxu0 0.0
      %3213 = vmatpush1.msra.mxu0 0.0
      %3214 = vmatprep.subr.mxu0 0.0
      %3215 = vmatpush1.msra.mxu0 0.0
      %3216 = vmatprep.subr.mxu0 0.0
      %3217 = vmatpush1.msra.mxu0 0.0
      %3218 = vmatprep.subr.mxu0 0.0
      %3219 = vmatpush1.msra.mxu0 0.0
      %3220 = vmatprep.subr.mxu0 0.0
      %3221 = vmatpush1.msra.mxu0 0.0
      %3222 = vmatprep.subr.mxu0 0.0
      %3223 = vmatpush1.msra.mxu0 0.0
      %3224 = vmatprep.subr.mxu0 0.0
      %3225 = vmatpush1.msra.mxu0 0.0
      %3226 = vmatprep.subr.mxu0 0.0
      %3227 = vmatpush1.msra.mxu0 0.0
      %3228 = vmatprep.subr.mxu0 0.0
      %3229 = vmatpush1.msra.mxu0 0.0
      %3230 = vmatprep.subr.mxu0 0.0
      %3231 = vmatpush1.msra.mxu0 0.0
      %3232 = vmatprep.subr.mxu0 0.0
      %3233 = vmatpush1.msra.mxu0 0.0
      %3234 = vmatprep.subr.mxu0 0.0
      %3235 = vmatpush1.msra.mxu0 0.0
      %3236 = vmatprep.subr.mxu0 0.0
      %3237 = vmatpush1.msra.mxu0 0.0
      %3238 = vmatprep.subr.mxu0 0.0
      %3239 = vmatpush1.msra.mxu0 0.0
      %3240 = vmatprep.subr.mxu0 0.0
      %3241 = vmatpush1.msra.mxu0 0.0
      %3242 = vmatprep.subr.mxu0 0.0
      %3243 = vmatpush1.msra.mxu0 0.0
      %3244 = vmatprep.subr.mxu0 0.0
      %3245 = vmatpush1.msra.mxu0 0.0
      %3246 = vmatprep.subr.mxu0 0.0
      %3247 = vmatpush1.msra.mxu0 0.0
      %3248 = vmatprep.subr.mxu0 0.0
      %3249 = vmatpush1.msra.mxu0 0.0
      %3250 = vmatprep.subr.mxu0 0.0
      %3251 = vmatpush1.msra.mxu0 0.0
      %3252 = vmatprep.subr.mxu0 0.0
      %3253 = vmatpush1.msra.mxu0 0.0
      %3254 = vmatprep.subr.mxu0 0.0
      %3255 = vmatpush1.msra.mxu0 0.0
      %3256 = vmatprep.subr.mxu0 0.0
      %3257 = vmatpush1.msra.mxu0 0.0
      %3258 = vmatprep.subr.mxu0 0.0
      %3259 = vmatpush1.msra.mxu0 0.0
      %3260 = vmatprep.subr.mxu0 0.0
      %3261 = vmatpush1.msra.mxu0 0.0
      %3262 = vmatprep.subr.mxu0 0.0
      %3263 = vmatpush1.msra.mxu0 0.0
      %3264 = vmatprep.subr.mxu0 0.0
      %3265 = vmatpush1.msra.mxu0 0.0
      %3266 = vmatprep.mubr.f32.mxu0 0.0
      %3267 = vmatmul.mubr.f32.gmra.mrb[0].mxu0 %v1338
      %v3268 = vpop.f32.mrb[0].mxu0
      %v3269 = vadd.f32 %v3193, %v3268
      %v3270 = vpop.f32.mrb[0].mxu0
      %3271 = vdwg.mxu0
      %3272 = vrot.lane.b32.xlu0 %v1599, 80
      %v3273 = vpop.permute.xlu0 %3272
      %v3275 = vadd.f32 %v3269, %v3273
      %3276 = vrot.lane.b32.xlu0 %v1332, 40
      %v3277 = vpop.permute.xlu0 %3276
      %3278 = vrot.lane.b32.xlu0 %v1333, 40
      %v3279 = vpop.permute.xlu0 %3278
      %3282 = vrot.lane.b32.xlu0 %v1599, 16
      %v3283 = vpop.permute.xlu0 %3282
      %v3286 = vsel %vm1098, %v3275, 0
      %3288 = vmatprep.subr.mxu0 0.0
      %3289 = vmatpush1.msra.mxu0 %v3277
      %3290 = vmatprep.subr.mxu0 0.0
      %3291 = vmatpush1.msra.mxu0 %v3279
      %3292 = vmatprep.subr.mxu0 0.0
      %3293 = vmatpush1.msra.mxu0 0.0
      %3294 = vmatprep.subr.mxu0 0.0
      %3295 = vmatpush1.msra.mxu0 0.0
      %3296 = vmatprep.subr.mxu0 0.0
      %3297 = vmatpush1.msra.mxu0 0.0
      %3298 = vmatprep.subr.mxu0 0.0
      %3299 = vmatpush1.msra.mxu0 0.0
      %3300 = vmatprep.subr.mxu0 0.0
      %3301 = vmatpush1.msra.mxu0 0.0
      %3302 = vmatprep.subr.mxu0 0.0
      %3303 = vmatpush1.msra.mxu0 0.0
      %3304 = vmatprep.subr.mxu0 0.0
      %3305 = vmatpush1.msra.mxu0 0.0
      %3306 = vmatprep.subr.mxu0 0.0
      %3307 = vmatpush1.msra.mxu0 0.0
      %3308 = vmatprep.subr.mxu0 0.0
      %3309 = vmatpush1.msra.mxu0 0.0
      %3310 = vmatprep.subr.mxu0 0.0
      %3311 = vmatpush1.msra.mxu0 0.0
      %3312 = vmatprep.subr.mxu0 0.0
      %3313 = vmatpush1.msra.mxu0 0.0
      %3314 = vmatprep.subr.mxu0 0.0
      %3315 = vmatpush1.msra.mxu0 0.0
      %3316 = vmatprep.subr.mxu0 0.0
      %3317 = vmatpush1.msra.mxu0 0.0
      %3318 = vmatprep.subr.mxu0 0.0
      %3319 = vmatpush1.msra.mxu0 0.0
      %3320 = vmatprep.subr.mxu0 0.0
      %3321 = vmatpush1.msra.mxu0 0.0
      %3322 = vmatprep.subr.mxu0 0.0
      %3323 = vmatpush1.msra.mxu0 0.0
      %3324 = vmatprep.subr.mxu0 0.0
      %3325 = vmatpush1.msra.mxu0 0.0
      %3326 = vmatprep.subr.mxu0 0.0
      %3327 = vmatpush1.msra.mxu0 0.0
      %3328 = vmatprep.subr.mxu0 0.0
      %3329 = vmatpush1.msra.mxu0 0.0
      %3330 = vmatprep.subr.mxu0 0.0
      %3331 = vmatpush1.msra.mxu0 0.0
      %3332 = vmatprep.subr.mxu0 0.0
      %3333 = vmatpush1.msra.mxu0 0.0
      %3334 = vmatprep.subr.mxu0 0.0
      %3335 = vmatpush1.msra.mxu0 0.0
      %3336 = vmatprep.subr.mxu0 0.0
      %3337 = vmatpush1.msra.mxu0 0.0
      %3338 = vmatprep.subr.mxu0 0.0
      %3339 = vmatpush1.msra.mxu0 0.0
      %3340 = vmatprep.subr.mxu0 0.0
      %3341 = vmatpush1.msra.mxu0 0.0
      %3342 = vmatprep.subr.mxu0 0.0
      %3343 = vmatpush1.msra.mxu0 0.0
      %3344 = vmatprep.subr.mxu0 0.0
      %3345 = vmatpush1.msra.mxu0 0.0
      %3346 = vmatprep.subr.mxu0 0.0
      %3347 = vmatpush1.msra.mxu0 0.0
      %3348 = vmatprep.subr.mxu0 0.0
      %3349 = vmatpush1.msra.mxu0 0.0
      %3350 = vmatprep.subr.mxu0 0.0
      %3351 = vmatpush1.msra.mxu0 0.0
      %3352 = vmatprep.mubr.f32.mxu0 0.0
      %3353 = vmatmul.mubr.f32.gmra.mrb[0].mxu0 %v3286
      %v3354 = vpop.f32.mrb[0].mxu0
      %v3355 = vadd.f32 %v3283, %v3354
      %v3356 = vpop.f32.mrb[0].mxu0
      %3357 = vdwg.mxu0
      %v3358 = vmax.f32 %v3355, 0.0
      %3359 = vrot.lane.b32.xlu0 %v1332, 24
      %v3360 = vpop.permute.xlu0 %3359
      %3361 = vrot.lane.b32.xlu0 %v1333, 24
      %v3362 = vpop.permute.xlu0 %3361
      %v3366 = vsel %vm1098, %v3358, 0
      %3368 = vmatprep.subr.mxu0 0.0
      %3369 = vmatpush1.msra.mxu0 %v3360
      %3370 = vmatprep.subr.mxu0 0.0
      %3371 = vmatpush1.msra.mxu0 %v3362
      %3372 = vmatprep.subr.mxu0 0.0
      %3373 = vmatpush1.msra.mxu0 0.0
      %3374 = vmatprep.subr.mxu0 0.0
      %3375 = vmatpush1.msra.mxu0 0.0
      %3376 = vmatprep.subr.mxu0 0.0
      %3377 = vmatpush1.msra.mxu0 0.0
      %3378 = vmatprep.subr.mxu0 0.0
      %3379 = vmatpush1.msra.mxu0 0.0
      %3380 = vmatprep.subr.mxu0 0.0
      %3381 = vmatpush1.msra.mxu0 0.0
      %3382 = vmatprep.subr.mxu0 0.0
      %3383 = vmatpush1.msra.mxu0 0.0
      %3384 = vmatprep.subr.mxu0 0.0
      %3385 = vmatpush1.msra.mxu0 0.0
      %3386 = vmatprep.subr.mxu0 0.0
      %3387 = vmatpush1.msra.mxu0 0.0
      %3388 = vmatprep.subr.mxu0 0.0
      %3389 = vmatpush1.msra.mxu0 0.0
      %3390 = vmatprep.subr.mxu0 0.0
      %3391 = vmatpush1.msra.mxu0 0.0
      %3392 = vmatprep.subr.mxu0 0.0
      %3393 = vmatpush1.msra.mxu0 0.0
      %3394 = vmatprep.subr.mxu0 0.0
      %3395 = vmatpush1.msra.mxu0 0.0
      %3396 = vmatprep.subr.mxu0 0.0
      %3397 = vmatpush1.msra.mxu0 0.0
      %3398 = vmatprep.subr.mxu0 0.0
      %3399 = vmatpush1.msra.mxu0 0.0
      %3400 = vmatprep.subr.mxu0 0.0
      %3401 = vmatpush1.msra.mxu0 0.0
      %3402 = vmatprep.subr.mxu0 0.0
      %3403 = vmatpush1.msra.mxu0 0.0
      %3404 = vmatprep.subr.mxu0 0.0
      %3405 = vmatpush1.msra.mxu0 0.0
      %3406 = vmatprep.subr.mxu0 0.0
      %3407 = vmatpush1.msra.mxu0 0.0
      %3408 = vmatprep.subr.mxu0 0.0
      %3409 = vmatpush1.msra.mxu0 0.0
      %3410 = vmatprep.subr.mxu0 0.0
      %3411 = vmatpush1.msra.mxu0 0.0
      %3412 = vmatprep.subr.mxu0 0.0
      %3413 = vmatpush1.msra.mxu0 0.0
      %3414 = vmatprep.subr.mxu0 0.0
      %3415 = vmatpush1.msra.mxu0 0.0
      %3416 = vmatprep.subr.mxu0 0.0
      %3417 = vmatpush1.msra.mxu0 0.0
      %3418 = vmatprep.subr.mxu0 0.0
      %3419 = vmatpush1.msra.mxu0 0.0
      %3420 = vmatprep.subr.mxu0 0.0
      %3421 = vmatpush1.msra.mxu0 0.0
      %3422 = vmatprep.subr.mxu0 0.0
      %3423 = vmatpush1.msra.mxu0 0.0
      %3424 = vmatprep.subr.mxu0 0.0
      %3425 = vmatpush1.msra.mxu0 0.0
      %3426 = vmatprep.subr.mxu0 0.0
      %3427 = vmatpush1.msra.mxu0 0.0
      %3428 = vmatprep.subr.mxu0 0.0
      %3429 = vmatpush1.msra.mxu0 0.0
      %3430 = vmatprep.subr.mxu0 0.0
      %3431 = vmatpush1.msra.mxu0 0.0
      %3432 = vmatprep.mubr.f32.mxu0 0.0
      %3433 = vmatmul.mubr.f32.gmra.mrb[0].mxu0 %v3366
      %v3434 = vpop.f32.mrb[0].mxu0
      %v3435 = vadd.f32 %v1753, %v3434
      %v3436 = vpop.f32.mrb[0].mxu0
      %3437 = vdwg.mxu0
      %v3438 = vadd.f32 %v605, %v2914
      %v3439 = vsel %vm735, %v3438, 0.0
      %3440 = vadd.xlane.f32.xlu0 %v3439
      %v3441 = vpop.xlane.xlu0 %3440
      %v3442 = vrcp.pop 32.0
      %v3443 = vmul.f32 %v3441, %v3442
      %v3444 = vsub.f32 %v3438, %v3443
      %v3445 = vmul.f32 %v3444, %v3444
      %v3446 = vsel %vm735, %v3445, 0.0
      %3447 = vadd.xlane.f32.xlu0 %v3446
      %v3448 = vpop.xlane.xlu0 %3447
      %v3449 = vmul.f32 %v3448, %v3442
      %v3450 = vadd.f32 %v3449, 1e-05
      %v3451 = vrsqrt.pop %v3450
      %v3452 = vmul.f32 %v3444, %v3451
      %3453 = vrot.lane.b32.xlu0 %v1863, 112
      %v3454 = vpop.permute.xlu0 %3453
      %v3456 = vmul.f32 %v3452, %v3454
      %3457 = vrot.lane.b32.xlu0 %v1863, 80
      %v3458 = vpop.permute.xlu0 %3457
      %v3460 = vadd.f32 %v3456, %v3458
      %v3461 = vadd.f32 %v614, %v3435
      %v3462 = vld [vmem:[%s13 + $0x3] sm:$0x1]
      %vm3463 = vcmask 122880
      %v3464 = vsel %vm3463, %v3461, 0.0
      %3465 = vadd.xlane.f32.xlu0 %v3464
      %v3466 = vpop.xlane.xlu0 %3465
      %v3467 = vmul.f32 %v3466, %v1778
      %v3468 = vsub.f32 %v3461, %v3467
      %v3469 = vmul.f32 %v3468, %v3468
      %v3470 = vsel %vm3463, %v3469, 0.0
      %3471 = vadd.xlane.f32.xlu0 %v3470
      %v3472 = vpop.xlane.xlu0 %3471
      %v3473 = vmul.f32 %v3472, %v1778
      %v3474 = vadd.f32 %v3473, 1e-05
      %v3475 = vrsqrt.pop %v3474
      %v3476 = vmul.f32 %v3468, %v3475
      %3477 = vrot.lane.b32.xlu0 %v1753, 16
      %v3478 = vpop.permute.xlu0 %3477
      %v3480 = vmul.f32 %v3476, %v3478
      %v3481 = vadd.f32 %v3480, %v3462
      %v3482 = vld [vmem:[%s5 + $0x8] sm:$0xff]
      %v3483 = vld [vmem:[%s5 + $0x18] sm:$0xff]
      %v3484 = vld [vmem:[%s5 + $0x28] sm:$0xff]
      %v3485 = vld [vmem:[%s5 + $0x38] sm:$0xff]
      %v3487 = vlaneseq
      %v3488 = vshrl.u32 %v3487, 7
      %v3489 = vsub.s32 0, %v3488
      %v3490 = vrot.slane %v3462, %v3489
      %3491 = vrot.lane.b32.xlu0 %v3490, 112
      %v3492 = vpop.permute.xlu0 %3491
      %v3495 = vsel %vm735, %v3460, 0
      %3497 = vmatprep.subr.mxu0 0.0
      %3498 = vmatpush1.msra.mxu0 %v3482
      %3499 = vmatprep.subr.mxu0 0.0
      %3500 = vmatpush1.msra.mxu0 %v3483
      %3501 = vmatprep.subr.mxu0 0.0
      %3502 = vmatpush1.msra.mxu0 %v3484
      %3503 = vmatprep.subr.mxu0 0.0
      %3504 = vmatpush1.msra.mxu0 %v3485
      %3505 = vmatprep.subr.mxu0 0.0
      %3506 = vmatpush1.msra.mxu0 0.0
      %3507 = vmatprep.subr.mxu0 0.0
      %3508 = vmatpush1.msra.mxu0 0.0
      %3509 = vmatprep.subr.mxu0 0.0
      %3510 = vmatpush1.msra.mxu0 0.0
      %3511 = vmatprep.subr.mxu0 0.0
      %3512 = vmatpush1.msra.mxu0 0.0
      %3513 = vmatprep.subr.mxu0 0.0
      %3514 = vmatpush1.msra.mxu0 0.0
      %3515 = vmatprep.subr.mxu0 0.0
      %3516 = vmatpush1.msra.mxu0 0.0
      %3517 = vmatprep.subr.mxu0 0.0
      %3518 = vmatpush1.msra.mxu0 0.0
      %3519 = vmatprep.subr.mxu0 0.0
      %3520 = vmatpush1.msra.mxu0 0.0
      %3521 = vmatprep.subr.mxu0 0.0
      %3522 = vmatpush1.msra.mxu0 0.0
      %3523 = vmatprep.subr.mxu0 0.0
      %3524 = vmatpush1.msra.mxu0 0.0
      %3525 = vmatprep.subr.mxu0 0.0
      %3526 = vmatpush1.msra.mxu0 0.0
      %3527 = vmatprep.subr.mxu0 0.0
      %3528 = vmatpush1.msra.mxu0 0.0
      %3529 = vmatprep.subr.mxu0 0.0
      %3530 = vmatpush1.msra.mxu0 0.0
      %3531 = vmatprep.subr.mxu0 0.0
      %3532 = vmatpush1.msra.mxu0 0.0
      %3533 = vmatprep.subr.mxu0 0.0
      %3534 = vmatpush1.msra.mxu0 0.0
      %3535 = vmatprep.subr.mxu0 0.0
      %3536 = vmatpush1.msra.mxu0 0.0
      %3537 = vmatprep.subr.mxu0 0.0
      %3538 = vmatpush1.msra.mxu0 0.0
      %3539 = vmatprep.subr.mxu0 0.0
      %3540 = vmatpush1.msra.mxu0 0.0
      %3541 = vmatprep.subr.mxu0 0.0
      %3542 = vmatpush1.msra.mxu0 0.0
      %3543 = vmatprep.subr.mxu0 0.0
      %3544 = vmatpush1.msra.mxu0 0.0
      %3545 = vmatprep.subr.mxu0 0.0
      %3546 = vmatpush1.msra.mxu0 0.0
      %3547 = vmatprep.subr.mxu0 0.0
      %3548 = vmatpush1.msra.mxu0 0.0
      %3549 = vmatprep.subr.mxu0 0.0
      %3550 = vmatpush1.msra.mxu0 0.0
      %3551 = vmatprep.subr.mxu0 0.0
      %3552 = vmatpush1.msra.mxu0 0.0
      %3553 = vmatprep.subr.mxu0 0.0
      %3554 = vmatpush1.msra.mxu0 0.0
      %3555 = vmatprep.subr.mxu0 0.0
      %3556 = vmatpush1.msra.mxu0 0.0
      %3557 = vmatprep.subr.mxu0 0.0
      %3558 = vmatpush1.msra.mxu0 0.0
      %3559 = vmatprep.subr.mxu0 0.0
      %3560 = vmatpush1.msra.mxu0 0.0
      %3561 = vmatprep.mubr.f32.mxu0 0.0
      %3562 = vmatmul.mubr.f32.gmra.mrb[0].mxu0 %v3495
      %v3563 = vpop.f32.mrb[0].mxu0
      %v3564 = vadd.f32 %v3492, %v3563
      %v3565 = vpop.f32.mrb[0].mxu0
      %3566 = vdwg.mxu0
      %v3567 = vmax.f32 %v3564, 0.0
      %v3568 = vld [vmem:[%s10] sm:$0xff]
      %v3569 = vld [vmem:[%s10 + $0x8] sm:$0xff]
      %v3570 = vld [vmem:[%s10 + $0x10] sm:$0xff]
      %v3571 = vld [vmem:[%s10 + $0x18] sm:$0xff]
      %v3572 = vld [vmem:[%s10 + $0x20] sm:$0xff]
      %v3573 = vld [vmem:[%s10 + $0x28] sm:$0xff]
      %v3574 = vld [vmem:[%s10 + $0x30] sm:$0xff]
      %v3575 = vld [vmem:[%s10 + $0x38] sm:$0xff]
      %v3577 = vsel %vm2400, %v3567, 0
      %3579 = vmatprep.subr.mxu0 0.0
      %3580 = vmatpush1.msra.mxu0 %v3568
      %3581 = vmatprep.subr.mxu0 0.0
      %3582 = vmatpush1.msra.mxu0 %v3569
      %3583 = vmatprep.subr.mxu0 0.0
      %3584 = vmatpush1.msra.mxu0 %v3570
      %3585 = vmatprep.subr.mxu0 0.0
      %3586 = vmatpush1.msra.mxu0 %v3571
      %3587 = vmatprep.subr.mxu0 0.0
      %3588 = vmatpush1.msra.mxu0 %v3572
      %3589 = vmatprep.subr.mxu0 0.0
      %3590 = vmatpush1.msra.mxu0 %v3573
      %3591 = vmatprep.subr.mxu0 0.0
      %3592 = vmatpush1.msra.mxu0 %v3574
      %3593 = vmatprep.subr.mxu0 0.0
      %3594 = vmatpush1.msra.mxu0 %v3575
      %3595 = vmatprep.subr.mxu0 0.0
      %3596 = vmatpush1.msra.mxu0 0.0
      %3597 = vmatprep.subr.mxu0 0.0
      %3598 = vmatpush1.msra.mxu0 0.0
      %3599 = vmatprep.subr.mxu0 0.0
      %3600 = vmatpush1.msra.mxu0 0.0
      %3601 = vmatprep.subr.mxu0 0.0
      %3602 = vmatpush1.msra.mxu0 0.0
      %3603 = vmatprep.subr.mxu0 0.0
      %3604 = vmatpush1.msra.mxu0 0.0
      %3605 = vmatprep.subr.mxu0 0.0
      %3606 = vmatpush1.msra.mxu0 0.0
      %3607 = vmatprep.subr.mxu0 0.0
      %3608 = vmatpush1.msra.mxu0 0.0
      %3609 = vmatprep.subr.mxu0 0.0
      %3610 = vmatpush1.msra.mxu0 0.0
      %3611 = vmatprep.subr.mxu0 0.0
      %3612 = vmatpush1.msra.mxu0 0.0
      %3613 = vmatprep.subr.mxu0 0.0
      %3614 = vmatpush1.msra.mxu0 0.0
      %3615 = vmatprep.subr.mxu0 0.0
      %3616 = vmatpush1.msra.mxu0 0.0
      %3617 = vmatprep.subr.mxu0 0.0
      %3618 = vmatpush1.msra.mxu0 0.0
      %3619 = vmatprep.subr.mxu0 0.0
      %3620 = vmatpush1.msra.mxu0 0.0
      %3621 = vmatprep.subr.mxu0 0.0
      %3622 = vmatpush1.msra.mxu0 0.0
      %3623 = vmatprep.subr.mxu0 0.0
      %3624 = vmatpush1.msra.mxu0 0.0
      %3625 = vmatprep.subr.mxu0 0.0
      %3626 = vmatpush1.msra.mxu0 0.0
      %3627 = vmatprep.subr.mxu0 0.0
      %3628 = vmatpush1.msra.mxu0 0.0
      %3629 = vmatprep.subr.mxu0 0.0
      %3630 = vmatpush1.msra.mxu0 0.0
      %3631 = vmatprep.subr.mxu0 0.0
      %3632 = vmatpush1.msra.mxu0 0.0
      %3633 = vmatprep.subr.mxu0 0.0
      %3634 = vmatpush1.msra.mxu0 0.0
      %3635 = vmatprep.subr.mxu0 0.0
      %3636 = vmatpush1.msra.mxu0 0.0
      %3637 = vmatprep.subr.mxu0 0.0
      %3638 = vmatpush1.msra.mxu0 0.0
      %3639 = vmatprep.subr.mxu0 0.0
      %3640 = vmatpush1.msra.mxu0 0.0
      %3641 = vmatprep.subr.mxu0 0.0
      %3642 = vmatpush1.msra.mxu0 0.0
      %3643 = vmatprep.mubr.f32.mxu0 0.0
      %3644 = vmatmul.mubr.f32.gmra.mrb[0].mxu0 %v3577
      %v3645 = vpop.f32.mrb[0].mxu0
      %v3646 = vadd.f32 0.0, %v3645
      %v3647 = vpop.f32.mrb[0].mxu0
      %3648 = vdwg.mxu0
      %v3649 = vadd.f32 %v3460, %v3646
      %3650 = vrot.lane.b32.xlu0 %v3490, 48
      %v3651 = vpop.permute.xlu0 %3650
      %v3653 = vadd.f32 %v3649, %v3651
      %v3654 = vsel %vm735, %v3653, 0.0
      %3655 = vadd.xlane.f32.xlu0 %v3654
      %v3656 = vpop.xlane.xlu0 %3655
      %v3657 = vmul.f32 %v3656, %v3442
      %v3658 = vsub.f32 %v3653, %v3657
      %v3659 = vmul.f32 %v3658, %v3658
      %v3660 = vsel %vm735, %v3659, 0.0
      %3661 = vadd.xlane.f32.xlu0 %v3660
      %v3662 = vpop.xlane.xlu0 %3661
      %v3663 = vmul.f32 %v3662, %v3442
      %v3664 = vadd.f32 %v3663, 1e-05
      %v3665 = vrsqrt.pop %v3664
      %v3666 = vmul.f32 %v3658, %v3665
      %3667 = vrot.lane.b32.xlu0 %v2315, 80
      %v3668 = vpop.permute.xlu0 %3667
      %v3670 = vmul.f32 %v3666, %v3668
      %3671 = vrot.lane.b32.xlu0 %v2315, 48
      %v3672 = vpop.permute.xlu0 %3671
      %v3674 = vadd.f32 %v3670, %v3672
      %v3675 = vld [vmem:[%s7] sm:$0xff]
      %v3676 = vld [vmem:[%s7 + $0x8] sm:$0xff]
      %v3677 = vld [vmem:[%s7 + $0x10] sm:$0xff]
      %v3678 = vld [vmem:[%s7 + $0x18] sm:$0xff]
      %v3679 = vld [vmem:[%s7 + $0x20] sm:$0xff]
      %v3680 = vld [vmem:[%s7 + $0x28] sm:$0xff]
      %v3681 = vld [vmem:[%s7 + $0x30] sm:$0xff]
      %v3682 = vld [vmem:[%s7 + $0x38] sm:$0xff]
      %v3683 = vld [vmem:[%s7 + $0x40] sm:$0xff]
      %v3684 = vld [vmem:[%s7 + $0x48] sm:$0xff]
      %v3685 = vld [vmem:[%s7 + $0x50] sm:$0xff]
      %v3686 = vld [vmem:[%s7 + $0x58] sm:$0xff]
      %v3687 = vld [vmem:[%s7 + $0x60] sm:$0xff]
      %v3688 = vld [vmem:[%s7 + $0x68] sm:$0xff]
      %v3689 = vld [vmem:[%s7 + $0x70] sm:$0xff]
      %v3690 = vld [vmem:[%s7 + $0x78] sm:$0xff]
      %v3691 = vld [vmem:[%s7 + $0x80] sm:$0xff]
      %v3692 = vld [vmem:[%s7 + $0x88] sm:$0xff]
      %v3693 = vld [vmem:[%s7 + $0x90] sm:$0xff]
      %v3694 = vld [vmem:[%s7 + $0x98] sm:$0xff]
      %v3695 = vld [vmem:[%s7 + $0xa0] sm:$0xff]
      %v3696 = vld [vmem:[%s7 + $0xa8] sm:$0xff]
      %v3697 = vld [vmem:[%s7 + $0xb0] sm:$0xff]
      %v3698 = vld [vmem:[%s7 + $0xb8] sm:$0xff]
      %v3699 = vld [vmem:[%s7 + $0xc0] sm:$0xff]
      %v3700 = vld [vmem:[%s7 + $0xc8] sm:$0xff]
      %v3701 = vld [vmem:[%s7 + $0xd0] sm:$0xff]
      %v3702 = vld [vmem:[%s7 + $0xd8] sm:$0xff]
      %v3703 = vld [vmem:[%s7 + $0xe0] sm:$0xff]
      %v3704 = vld [vmem:[%s7 + $0xe8] sm:$0xff]
      %v3705 = vld [vmem:[%s7 + $0xf0] sm:$0xff]
      %v3706 = vld [vmem:[%s7 + $0xf8] sm:$0xff]
      %v3707 = vld [vmem:[%s7 + $0x100] sm:$0xff]
      %v3708 = vld [vmem:[%s7 + $0x108] sm:$0xff]
      %v3709 = vld [vmem:[%s13 + $0x4] sm:$0xff]
      %v3710 = vld [vmem:[%s13 + $0xc] sm:$0xff]
      %3745 = vrot.lane.b32.xlu0 %v3675, 8
      %v3746 = vpop.permute.xlu0 %3745
      %3747 = vrot.lane.b32.xlu0 %v3676, 8
      %v3748 = vpop.permute.xlu0 %3747
      %3749 = vrot.lane.b32.xlu0 %v3677, 8
      %v3750 = vpop.permute.xlu0 %3749
      %3751 = vrot.lane.b32.xlu0 %v3678, 8
      %v3752 = vpop.permute.xlu0 %3751
      %3753 = vrot.lane.b32.xlu0 %v3679, 8
      %v3754 = vpop.permute.xlu0 %3753
      %3755 = vrot.lane.b32.xlu0 %v3680, 8
      %v3756 = vpop.permute.xlu0 %3755
      %3757 = vrot.lane.b32.xlu0 %v3681, 8
      %v3758 = vpop.permute.xlu0 %3757
      %3759 = vrot.lane.b32.xlu0 %v3682, 8
      %v3760 = vpop.permute.xlu0 %3759
      %3761 = vrot.lane.b32.xlu0 %v3683, 8
      %v3762 = vpop.permute.xlu0 %3761
      %3763 = vrot.lane.b32.xlu0 %v3684, 8
      %v3764 = vpop.permute.xlu0 %3763
      %3765 = vrot.lane.b32.xlu0 %v3685, 8
      %v3766 = vpop.permute.xlu0 %3765
      %3767 = vrot.lane.b32.xlu0 %v3686, 8
      %v3768 = vpop.permute.xlu0 %3767
      %3769 = vrot.lane.b32.xlu0 %v3687, 8
      %v3770 = vpop.permute.xlu0 %3769
      %3771 = vrot.lane.b32.xlu0 %v3688, 8
      %v3772 = vpop.permute.xlu0 %3771
      %3773 = vrot.lane.b32.xlu0 %v3689, 8
      %v3774 = vpop.permute.xlu0 %3773
      %3775 = vrot.lane.b32.xlu0 %v3690, 8
      %v3776 = vpop.permute.xlu0 %3775
      %3777 = vrot.lane.b32.xlu0 %v3691, 8
      %v3778 = vpop.permute.xlu0 %3777
      %3779 = vrot.lane.b32.xlu0 %v3692, 8
      %v3780 = vpop.permute.xlu0 %3779
      %3781 = vrot.lane.b32.xlu0 %v3693, 8
      %v3782 = vpop.permute.xlu0 %3781
      %3783 = vrot.lane.b32.xlu0 %v3694, 8
      %v3784 = vpop.permute.xlu0 %3783
      %3785 = vrot.lane.b32.xlu0 %v3695, 8
      %v3786 = vpop.permute.xlu0 %3785
      %3787 = vrot.lane.b32.xlu0 %v3696, 8
      %v3788 = vpop.permute.xlu0 %3787
      %3789 = vrot.lane.b32.xlu0 %v3697, 8
      %v3790 = vpop.permute.xlu0 %3789
      %3791 = vrot.lane.b32.xlu0 %v3698, 8
      %v3792 = vpop.permute.xlu0 %3791
      %3793 = vrot.lane.b32.xlu0 %v3699, 8
      %v3794 = vpop.permute.xlu0 %3793
      %3795 = vrot.lane.b32.xlu0 %v3700, 8
      %v3796 = vpop.permute.xlu0 %3795
      %3797 = vrot.lane.b32.xlu0 %v3701, 8
      %v3798 = vpop.permute.xlu0 %3797
      %3799 = vrot.lane.b32.xlu0 %v3702, 8
      %v3800 = vpop.permute.xlu0 %3799
      %3801 = vrot.lane.b32.xlu0 %v3703, 8
      %v3802 = vpop.permute.xlu0 %3801
      %3803 = vrot.lane.b32.xlu0 %v3704, 8
      %v3804 = vpop.permute.xlu0 %3803
      %3805 = vrot.lane.b32.xlu0 %v3705, 8
      %v3806 = vpop.permute.xlu0 %3805
      %3807 = vrot.lane.b32.xlu0 %v3706, 8
      %v3808 = vpop.permute.xlu0 %3807
      %3809 = vrot.lane.b32.xlu0 %v3707, 8
      %v3810 = vpop.permute.xlu0 %3809
      %3811 = vrot.lane.b32.xlu0 %v3708, 8
      %v3812 = vpop.permute.xlu0 %3811
      %v3813 = vsel %vm691, %v3746, %v3748
      %v3814 = vsel %vm691, %v3748, %v3750
      %v3815 = vsel %vm691, %v3750, %v3752
      %v3816 = vsel %vm691, %v3752, %v3754
      %v3817 = vsel %vm691, %v3754, %v3756
      %v3818 = vsel %vm691, %v3756, %v3758
      %v3819 = vsel %vm691, %v3758, %v3760
      %v3820 = vsel %vm691, %v3760, %v3762
      %v3821 = vsel %vm691, %v3762, %v3764
      %v3822 = vsel %vm691, %v3764, %v3766
      %v3823 = vsel %vm691, %v3766, %v3768
      %v3824 = vsel %vm691, %v3768, %v3770
      %v3825 = vsel %vm691, %v3770, %v3772
      %v3826 = vsel %vm691, %v3772, %v3774
      %v3827 = vsel %vm691, %v3774, %v3776
      %v3828 = vsel %vm691, %v3776, %v3778
      %v3829 = vsel %vm691, %v3780, %v3782
      %v3830 = vsel %vm691, %v3782, %v3784
      %v3831 = vsel %vm691, %v3784, %v3786
      %v3832 = vsel %vm691, %v3786, %v3788
      %v3833 = vsel %vm691, %v3788, %v3790
      %v3834 = vsel %vm691, %v3790, %v3792
      %v3835 = vsel %vm691, %v3792, %v3794
      %v3836 = vsel %vm691, %v3794, %v3796
      %v3837 = vsel %vm691, %v3796, %v3798
      %v3838 = vsel %vm691, %v3798, %v3800
      %v3839 = vsel %vm691, %v3800, %v3802
      %v3840 = vsel %vm691, %v3802, %v3804
      %v3841 = vsel %vm691, %v3804, %v3806
      %v3842 = vsel %vm691, %v3806, %v3808
      %v3843 = vsel %vm691, %v3808, %v3810
      %v3844 = vsel %vm691, %v3810, %v3812
      %v3879 = vlaneseq
      %v3880 = vshrl.u32 %v3879, 7
      %v3881 = vsub.s32 0, %v3880
      %v3882 = vrot.slane %v3709, %v3881
      %v3883 = vlaneseq
      %v3884 = vshrl.u32 %v3883, 7
      %v3885 = vsub.s32 1, %v3884
      %v3886 = vrot.slane %v3709, %v3885
      %v3887 = vlaneseq
      %v3888 = vshrl.u32 %v3887, 7
      %v3889 = vsub.s32 2, %v3888
      %v3890 = vrot.slane %v3709, %v3889
      %v3891 = vlaneseq
      %v3892 = vshrl.u32 %v3891, 7
      %v3893 = vsub.s32 3, %v3892
      %v3894 = vrot.slane %v3709, %v3893
      %v3895 = vlaneseq
      %v3896 = vshrl.u32 %v3895, 7
      %v3897 = vsub.s32 4, %v3896
      %v3898 = vrot.slane %v3709, %v3897
      %v3899 = vlaneseq
      %v3900 = vshrl.u32 %v3899, 7
      %v3901 = vsub.s32 5, %v3900
      %v3902 = vrot.slane %v3709, %v3901
      %v3903 = vlaneseq
      %v3904 = vshrl.u32 %v3903, 7
      %v3905 = vsub.s32 6, %v3904
      %v3906 = vrot.slane %v3709, %v3905
      %v3907 = vlaneseq
      %v3908 = vshrl.u32 %v3907, 7
      %v3909 = vsub.s32 7, %v3908
      %v3910 = vrot.slane %v3709, %v3909
      %v3911 = vlaneseq
      %v3912 = vshrl.u32 %v3911, 7
      %v3913 = vsub.s32 0, %v3912
      %v3914 = vrot.slane %v3710, %v3913
      %v3915 = vlaneseq
      %v3916 = vshrl.u32 %v3915, 7
      %v3917 = vsub.s32 1, %v3916
      %v3918 = vrot.slane %v3710, %v3917
      %v3919 = vlaneseq
      %v3920 = vshrl.u32 %v3919, 7
      %v3921 = vsub.s32 2, %v3920
      %v3922 = vrot.slane %v3710, %v3921
      %v3923 = vlaneseq
      %v3924 = vshrl.u32 %v3923, 7
      %v3925 = vsub.s32 3, %v3924
      %v3926 = vrot.slane %v3710, %v3925
      %v3927 = vlaneseq
      %v3928 = vshrl.u32 %v3927, 7
      %v3929 = vsub.s32 4, %v3928
      %v3930 = vrot.slane %v3710, %v3929
      %v3931 = vlaneseq
      %v3932 = vshrl.u32 %v3931, 7
      %v3933 = vsub.s32 5, %v3932
      %v3934 = vrot.slane %v3710, %v3933
      %v3935 = vlaneseq
      %v3936 = vshrl.u32 %v3935, 7
      %v3937 = vsub.s32 6, %v3936
      %v3938 = vrot.slane %v3710, %v3937
      %v3939 = vlaneseq
      %v3940 = vshrl.u32 %v3939, 7
      %v3941 = vsub.s32 7, %v3940
      %v3942 = vrot.slane %v3710, %v3941
      %3943 = vrot.lane.b32.xlu0 %v3882, 96
      %v3944 = vpop.permute.xlu0 %3943
      %3945 = vrot.lane.b32.xlu0 %v3886, 96
      %v3946 = vpop.permute.xlu0 %3945
      %3947 = vrot.lane.b32.xlu0 %v3890, 96
      %v3948 = vpop.permute.xlu0 %3947
      %3949 = vrot.lane.b32.xlu0 %v3894, 96
      %v3950 = vpop.permute.xlu0 %3949
      %3951 = vrot.lane.b32.xlu0 %v3898, 96
      %v3952 = vpop.permute.xlu0 %3951
      %3953 = vrot.lane.b32.xlu0 %v3902, 96
      %v3954 = vpop.permute.xlu0 %3953
      %3955 = vrot.lane.b32.xlu0 %v3906, 96
      %v3956 = vpop.permute.xlu0 %3955
      %3957 = vrot.lane.b32.xlu0 %v3910, 96
      %v3958 = vpop.permute.xlu0 %3957
      %3959 = vrot.lane.b32.xlu0 %v3914, 96
      %v3960 = vpop.permute.xlu0 %3959
      %3961 = vrot.lane.b32.xlu0 %v3918, 96
      %v3962 = vpop.permute.xlu0 %3961
      %3963 = vrot.lane.b32.xlu0 %v3922, 96
      %v3964 = vpop.permute.xlu0 %3963
      %3965 = vrot.lane.b32.xlu0 %v3926, 96
      %v3966 = vpop.permute.xlu0 %3965
      %3967 = vrot.lane.b32.xlu0 %v3930, 96
      %v3968 = vpop.permute.xlu0 %3967
      %3969 = vrot.lane.b32.xlu0 %v3934, 96
      %v3970 = vpop.permute.xlu0 %3969
      %3971 = vrot.lane.b32.xlu0 %v3938, 96
      %v3972 = vpop.permute.xlu0 %3971
      %3973 = vrot.lane.b32.xlu0 %v3942, 96
      %v3974 = vpop.permute.xlu0 %3973
      %3975 = vrot.lane.b32.xlu0 %v2315, 96
      %v3976 = vpop.permute.xlu0 %3975
      %v3977 = vsel %vm3093, %v3944, %v3946
      %v3978 = vsel %vm3093, %v3946, %v3948
      %v3979 = vsel %vm3093, %v3948, %v3950
      %v3980 = vsel %vm3093, %v3950, %v3952
      %v3981 = vsel %vm3093, %v3952, %v3954
      %v3982 = vsel %vm3093, %v3954, %v3956
      %v3983 = vsel %vm3093, %v3956, %v3958
      %v3984 = vsel %vm3093, %v3958, %v3960
      %v3985 = vsel %vm3093, %v3960, %v3962
      %v3986 = vsel %vm3093, %v3962, %v3964
      %v3987 = vsel %vm3093, %v3964, %v3966
      %v3988 = vsel %vm3093, %v3966, %v3968
      %v3989 = vsel %vm3093, %v3968, %v3970
      %v3990 = vsel %vm3093, %v3970, %v3972
      %v3991 = vsel %vm3093, %v3972, %v3974
      %v3992 = vsel %vm3093, %v3974, %v3976
      %v4010 = vsel %vm1098, %v3481, 0
      %4012 = vmatprep.subr.mxu0 %v3814
      %4013 = vmatpush1.msra.mxu0 %v3813
      %4014 = vmatprep.subr.mxu0 %v3830
      %4015 = vmatpush1.msra.mxu0 %v3829
      %4016 = vmatprep.subr.mxu0 0.0
      %4017 = vmatpush1.msra.mxu0 0.0
      %4018 = vmatprep.subr.mxu0 0.0
      %4019 = vmatpush1.msra.mxu0 0.0
      %4020 = vmatprep.subr.mxu0 0.0
      %4021 = vmatpush1.msra.mxu0 0.0
      %4022 = vmatprep.subr.mxu0 0.0
      %4023 = vmatpush1.msra.mxu0 0.0
      %4024 = vmatprep.subr.mxu0 0.0
      %4025 = vmatpush1.msra.mxu0 0.0
      %4026 = vmatprep.subr.mxu0 0.0
      %4027 = vmatpush1.msra.mxu0 0.0
      %4028 = vmatprep.subr.mxu0 0.0
      %4029 = vmatpush1.msra.mxu0 0.0
      %4030 = vmatprep.subr.mxu0 0.0
      %4031 = vmatpush1.msra.mxu0 0.0
      %4032 = vmatprep.subr.mxu0 0.0
      %4033 = vmatpush1.msra.mxu0 0.0
      %4034 = vmatprep.subr.mxu0 0.0
      %4035 = vmatpush1.msra.mxu0 0.0
      %4036 = vmatprep.subr.mxu0 0.0
      %4037 = vmatpush1.msra.mxu0 0.0
      %4038 = vmatprep.subr.mxu0 0.0
      %4039 = vmatpush1.msra.mxu0 0.0
      %4040 = vmatprep.subr.mxu0 0.0
      %4041 = vmatpush1.msra.mxu0 0.0
      %4042 = vmatprep.subr.mxu0 0.0
      %4043 = vmatpush1.msra.mxu0 0.0
      %4044 = vmatprep.subr.mxu0 0.0
      %4045 = vmatpush1.msra.mxu0 0.0
      %4046 = vmatprep.subr.mxu0 0.0
      %4047 = vmatpush1.msra.mxu0 0.0
      %4048 = vmatprep.subr.mxu0 0.0
      %4049 = vmatpush1.msra.mxu0 0.0
      %4050 = vmatprep.subr.mxu0 0.0
      %4051 = vmatpush1.msra.mxu0 0.0
      %4052 = vmatprep.subr.mxu0 0.0
      %4053 = vmatpush1.msra.mxu0 0.0
      %4054 = vmatprep.subr.mxu0 0.0
      %4055 = vmatpush1.msra.mxu0 0.0
      %4056 = vmatprep.subr.mxu0 0.0
      %4057 = vmatpush1.msra.mxu0 0.0
      %4058 = vmatprep.subr.mxu0 0.0
      %4059 = vmatpush1.msra.mxu0 0.0
      %4060 = vmatprep.subr.mxu0 0.0
      %4061 = vmatpush1.msra.mxu0 0.0
      %4062 = vmatprep.subr.mxu0 0.0
      %4063 = vmatpush1.msra.mxu0 0.0
      %4064 = vmatprep.subr.mxu0 0.0
      %4065 = vmatpush1.msra.mxu0 0.0
      %4066 = vmatprep.subr.mxu0 0.0
      %4067 = vmatpush1.msra.mxu0 0.0
      %4068 = vmatprep.subr.mxu0 0.0
      %4069 = vmatpush1.msra.mxu0 0.0
      %4070 = vmatprep.subr.mxu0 0.0
      %4071 = vmatpush1.msra.mxu0 0.0
      %4072 = vmatprep.subr.mxu0 0.0
      %4073 = vmatpush1.msra.mxu0 0.0
      %4074 = vmatprep.subr.mxu0 0.0
      %4075 = vmatpush1.msra.mxu0 0.0
      %4076 = vmatprep.mubr.f32.mxu0 0.0
      %4077 = vmatmul.mubr.f32.gmra.mrb[0].mxu0 %v4010
      %v4078 = vpop.f32.mrb[0].mxu0
      %v4079 = vadd.f32 %v3977, %v4078
      %v4080 = vpop.f32.mrb[0].mxu0
      %v4081 = vadd.f32 %v3978, %v4080
      %4082 = vdwg.mxu0
      %4083 = vmatprep.subr.mxu0 %v3816
      %4084 = vmatpush1.msra.mxu0 %v3815
      %4085 = vmatprep.subr.mxu0 %v3832
      %4086 = vmatpush1.msra.mxu0 %v3831
      %4087 = vmatprep.subr.mxu0 0.0
      %4088 = vmatpush1.msra.mxu0 0.0
      %4089 = vmatprep.subr.mxu0 0.0
      %4090 = vmatpush1.msra.mxu0 0.0
      %4091 = vmatprep.subr.mxu0 0.0
      %4092 = vmatpush1.msra.mxu0 0.0
      %4093 = vmatprep.subr.mxu0 0.0
      %4094 = vmatpush1.msra.mxu0 0.0
      %4095 = vmatprep.subr.mxu0 0.0
      %4096 = vmatpush1.msra.mxu0 0.0
      %4097 = vmatprep.subr.mxu0 0.0
      %4098 = vmatpush1.msra.mxu0 0.0
      %4099 = vmatprep.subr.mxu0 0.0
      %4100 = vmatpush1.msra.mxu0 0.0
      %4101 = vmatprep.subr.mxu0 0.0
      %4102 = vmatpush1.msra.mxu0 0.0
      %4103 = vmatprep.subr.mxu0 0.0
      %4104 = vmatpush1.msra.mxu0 0.0
      %4105 = vmatprep.subr.mxu0 0.0
      %4106 = vmatpush1.msra.mxu0 0.0
      %4107 = vmatprep.subr.mxu0 0.0
      %4108 = vmatpush1.msra.mxu0 0.0
      %4109 = vmatprep.subr.mxu0 0.0
      %4110 = vmatpush1.msra.mxu0 0.0
      %4111 = vmatprep.subr.mxu0 0.0
      %4112 = vmatpush1.msra.mxu0 0.0
      %4113 = vmatprep.subr.mxu0 0.0
      %4114 = vmatpush1.msra.mxu0 0.0
      %4115 = vmatprep.subr.mxu0 0.0
      %4116 = vmatpush1.msra.mxu0 0.0
      %4117 = vmatprep.subr.mxu0 0.0
      %4118 = vmatpush1.msra.mxu0 0.0
      %4119 = vmatprep.subr.mxu0 0.0
      %4120 = vmatpush1.msra.mxu0 0.0
      %4121 = vmatprep.subr.mxu0 0.0
      %4122 = vmatpush1.msra.mxu0 0.0
      %4123 = vmatprep.subr.mxu0 0.0
      %4124 = vmatpush1.msra.mxu0 0.0
      %4125 = vmatprep.subr.mxu0 0.0
      %4126 = vmatpush1.msra.mxu0 0.0
      %4127 = vmatprep.subr.mxu0 0.0
      %4128 = vmatpush1.msra.mxu0 0.0
      %4129 = vmatprep.subr.mxu0 0.0
      %4130 = vmatpush1.msra.mxu0 0.0
      %4131 = vmatprep.subr.mxu0 0.0
      %4132 = vmatpush1.msra.mxu0 0.0
      %4133 = vmatprep.subr.mxu0 0.0
      %4134 = vmatpush1.msra.mxu0 0.0
      %4135 = vmatprep.subr.mxu0 0.0
      %4136 = vmatpush1.msra.mxu0 0.0
      %4137 = vmatprep.subr.mxu0 0.0
      %4138 = vmatpush1.msra.mxu0 0.0
      %4139 = vmatprep.subr.mxu0 0.0
      %4140 = vmatpush1.msra.mxu0 0.0
      %4141 = vmatprep.subr.mxu0 0.0
      %4142 = vmatpush1.msra.mxu0 0.0
      %4143 = vmatprep.subr.mxu0 0.0
      %4144 = vmatpush1.msra.mxu0 0.0
      %4145 = vmatprep.subr.mxu0 0.0
      %4146 = vmatpush1.msra.mxu0 0.0
      %4147 = vmatprep.mubr.f32.mxu0 0.0
      %4148 = vmatmul.mubr.f32.gmra.mrb[0].mxu0 %v4010
      %v4149 = vpop.f32.mrb[0].mxu0
      %v4150 = vadd.f32 %v3979, %v4149
      %v4151 = vpop.f32.mrb[0].mxu0
      %v4152 = vadd.f32 %v3980, %v4151
      %4153 = vdwg.mxu0
      %4154 = vmatprep.subr.mxu0 %v3818
      %4155 = vmatpush1.msra.mxu0 %v3817
      %4156 = vmatprep.subr.mxu0 %v3834
      %4157 = vmatpush1.msra.mxu0 %v3833
      %4158 = vmatprep.subr.mxu0 0.0
      %4159 = vmatpush1.msra.mxu0 0.0
      %4160 = vmatprep.subr.mxu0 0.0
      %4161 = vmatpush1.msra.mxu0 0.0
      %4162 = vmatprep.subr.mxu0 0.0
      %4163 = vmatpush1.msra.mxu0 0.0
      %4164 = vmatprep.subr.mxu0 0.0
      %4165 = vmatpush1.msra.mxu0 0.0
      %4166 = vmatprep.subr.mxu0 0.0
      %4167 = vmatpush1.msra.mxu0 0.0
      %4168 = vmatprep.subr.mxu0 0.0
      %4169 = vmatpush1.msra.mxu0 0.0
      %4170 = vmatprep.subr.mxu0 0.0
      %4171 = vmatpush1.msra.mxu0 0.0
      %4172 = vmatprep.subr.mxu0 0.0
      %4173 = vmatpush1.msra.mxu0 0.0
      %4174 = vmatprep.subr.mxu0 0.0
      %4175 = vmatpush1.msra.mxu0 0.0
      %4176 = vmatprep.subr.mxu0 0.0
      %4177 = vmatpush1.msra.mxu0 0.0
      %4178 = vmatprep.subr.mxu0 0.0
      %4179 = vmatpush1.msra.mxu0 0.0
      %4180 = vmatprep.subr.mxu0 0.0
      %4181 = vmatpush1.msra.mxu0 0.0
      %4182 = vmatprep.subr.mxu0 0.0
      %4183 = vmatpush1.msra.mxu0 0.0
      %4184 = vmatprep.subr.mxu0 0.0
      %4185 = vmatpush1.msra.mxu0 0.0
      %4186 = vmatprep.subr.mxu0 0.0
      %4187 = vmatpush1.msra.mxu0 0.0
      %4188 = vmatprep.subr.mxu0 0.0
      %4189 = vmatpush1.msra.mxu0 0.0
      %4190 = vmatprep.subr.mxu0 0.0
      %4191 = vmatpush1.msra.mxu0 0.0
      %4192 = vmatprep.subr.mxu0 0.0
      %4193 = vmatpush1.msra.mxu0 0.0
      %4194 = vmatprep.subr.mxu0 0.0
      %4195 = vmatpush1.msra.mxu0 0.0
      %4196 = vmatprep.subr.mxu0 0.0
      %4197 = vmatpush1.msra.mxu0 0.0
      %4198 = vmatprep.subr.mxu0 0.0
      %4199 = vmatpush1.msra.mxu0 0.0
      %4200 = vmatprep.subr.mxu0 0.0
      %4201 = vmatpush1.msra.mxu0 0.0
      %4202 = vmatprep.subr.mxu0 0.0
      %4203 = vmatpush1.msra.mxu0 0.0
      %4204 = vmatprep.subr.mxu0 0.0
      %4205 = vmatpush1.msra.mxu0 0.0
      %4206 = vmatprep.subr.mxu0 0.0
      %4207 = vmatpush1.msra.mxu0 0.0
      %4208 = vmatprep.subr.mxu0 0.0
      %4209 = vmatpush1.msra.mxu0 0.0
      %4210 = vmatprep.subr.mxu0 0.0
      %4211 = vmatpush1.msra.mxu0 0.0
      %4212 = vmatprep.subr.mxu0 0.0
      %4213 = vmatpush1.msra.mxu0 0.0
      %4214 = vmatprep.subr.mxu0 0.0
      %4215 = vmatpush1.msra.mxu0 0.0
      %4216 = vmatprep.subr.mxu0 0.0
      %4217 = vmatpush1.msra.mxu0 0.0
      %4218 = vmatprep.mubr.f32.mxu0 0.0
      %4219 = vmatmul.mubr.f32.gmra.mrb[0].mxu0 %v4010
      %v4220 = vpop.f32.mrb[0].mxu0
      %v4221 = vadd.f32 %v3981, %v4220
      %v4222 = vpop.f32.mrb[0].mxu0
      %v4223 = vadd.f32 %v3982, %v4222
      %4224 = vdwg.mxu0
      %4225 = vmatprep.subr.mxu0 %v3820
      %4226 = vmatpush1.msra.mxu0 %v3819
      %4227 = vmatprep.subr.mxu0 %v3836
      %4228 = vmatpush1.msra.mxu0 %v3835
      %4229 = vmatprep.subr.mxu0 0.0
      %4230 = vmatpush1.msra.mxu0 0.0
      %4231 = vmatprep.subr.mxu0 0.0
      %4232 = vmatpush1.msra.mxu0 0.0
      %4233 = vmatprep.subr.mxu0 0.0
      %4234 = vmatpush1.msra.mxu0 0.0
      %4235 = vmatprep.subr.mxu0 0.0
      %4236 = vmatpush1.msra.mxu0 0.0
      %4237 = vmatprep.subr.mxu0 0.0
      %4238 = vmatpush1.msra.mxu0 0.0
      %4239 = vmatprep.subr.mxu0 0.0
      %4240 = vmatpush1.msra.mxu0 0.0
      %4241 = vmatprep.subr.mxu0 0.0
      %4242 = vmatpush1.msra.mxu0 0.0
      %4243 = vmatprep.subr.mxu0 0.0
      %4244 = vmatpush1.msra.mxu0 0.0
      %4245 = vmatprep.subr.mxu0 0.0
      %4246 = vmatpush1.msra.mxu0 0.0
      %4247 = vmatprep.subr.mxu0 0.0
      %4248 = vmatpush1.msra.mxu0 0.0
      %4249 = vmatprep.subr.mxu0 0.0
      %4250 = vmatpush1.msra.mxu0 0.0
      %4251 = vmatprep.subr.mxu0 0.0
      %4252 = vmatpush1.msra.mxu0 0.0
      %4253 = vmatprep.subr.mxu0 0.0
      %4254 = vmatpush1.msra.mxu0 0.0
      %4255 = vmatprep.subr.mxu0 0.0
      %4256 = vmatpush1.msra.mxu0 0.0
      %4257 = vmatprep.subr.mxu0 0.0
      %4258 = vmatpush1.msra.mxu0 0.0
      %4259 = vmatprep.subr.mxu0 0.0
      %4260 = vmatpush1.msra.mxu0 0.0
      %4261 = vmatprep.subr.mxu0 0.0
      %4262 = vmatpush1.msra.mxu0 0.0
      %4263 = vmatprep.subr.mxu0 0.0
      %4264 = vmatpush1.msra.mxu0 0.0
      %4265 = vmatprep.subr.mxu0 0.0
      %4266 = vmatpush1.msra.mxu0 0.0
      %4267 = vmatprep.subr.mxu0 0.0
      %4268 = vmatpush1.msra.mxu0 0.0
      %4269 = vmatprep.subr.mxu0 0.0
      %4270 = vmatpush1.msra.mxu0 0.0
      %4271 = vmatprep.subr.mxu0 0.0
      %4272 = vmatpush1.msra.mxu0 0.0
      %4273 = vmatprep.subr.mxu0 0.0
      %4274 = vmatpush1.msra.mxu0 0.0
      %4275 = vmatprep.subr.mxu0 0.0
      %4276 = vmatpush1.msra.mxu0 0.0
      %4277 = vmatprep.subr.mxu0 0.0
      %4278 = vmatpush1.msra.mxu0 0.0
      %4279 = vmatprep.subr.mxu0 0.0
      %4280 = vmatpush1.msra.mxu0 0.0
      %4281 = vmatprep.subr.mxu0 0.0
      %4282 = vmatpush1.msra.mxu0 0.0
      %4283 = vmatprep.subr.mxu0 0.0
      %4284 = vmatpush1.msra.mxu0 0.0
      %4285 = vmatprep.subr.mxu0 0.0
      %4286 = vmatpush1.msra.mxu0 0.0
      %4287 = vmatprep.subr.mxu0 0.0
      %4288 = vmatpush1.msra.mxu0 0.0
      %4289 = vmatprep.mubr.f32.mxu0 0.0
      %4290 = vmatmul.mubr.f32.gmra.mrb[0].mxu0 %v4010
      %v4291 = vpop.f32.mrb[0].mxu0
      %v4292 = vadd.f32 %v3983, %v4291
      %v4293 = vpop.f32.mrb[0].mxu0
      %v4294 = vadd.f32 %v3984, %v4293
      %4295 = vdwg.mxu0
      %4296 = vmatprep.subr.mxu0 %v3822
      %4297 = vmatpush1.msra.mxu0 %v3821
      %4298 = vmatprep.subr.mxu0 %v3838
      %4299 = vmatpush1.msra.mxu0 %v3837
      %4300 = vmatprep.subr.mxu0 0.0
      %4301 = vmatpush1.msra.mxu0 0.0
      %4302 = vmatprep.subr.mxu0 0.0
      %4303 = vmatpush1.msra.mxu0 0.0
      %4304 = vmatprep.subr.mxu0 0.0
      %4305 = vmatpush1.msra.mxu0 0.0
      %4306 = vmatprep.subr.mxu0 0.0
      %4307 = vmatpush1.msra.mxu0 0.0
      %4308 = vmatprep.subr.mxu0 0.0
      %4309 = vmatpush1.msra.mxu0 0.0
      %4310 = vmatprep.subr.mxu0 0.0
      %4311 = vmatpush1.msra.mxu0 0.0
      %4312 = vmatprep.subr.mxu0 0.0
      %4313 = vmatpush1.msra.mxu0 0.0
      %4314 = vmatprep.subr.mxu0 0.0
      %4315 = vmatpush1.msra.mxu0 0.0
      %4316 = vmatprep.subr.mxu0 0.0
      %4317 = vmatpush1.msra.mxu0 0.0
      %4318 = vmatprep.subr.mxu0 0.0
      %4319 = vmatpush1.msra.mxu0 0.0
      %4320 = vmatprep.subr.mxu0 0.0
      %4321 = vmatpush1.msra.mxu0 0.0
      %4322 = vmatprep.subr.mxu0 0.0
      %4323 = vmatpush1.msra.mxu0 0.0
      %4324 = vmatprep.subr.mxu0 0.0
      %4325 = vmatpush1.msra.mxu0 0.0
      %4326 = vmatprep.subr.mxu0 0.0
      %4327 = vmatpush1.msra.mxu0 0.0
      %4328 = vmatprep.subr.mxu0 0.0
      %4329 = vmatpush1.msra.mxu0 0.0
      %4330 = vmatprep.subr.mxu0 0.0
      %4331 = vmatpush1.msra.mxu0 0.0
      %4332 = vmatprep.subr.mxu0 0.0
      %4333 = vmatpush1.msra.mxu0 0.0
      %4334 = vmatprep.subr.mxu0 0.0
      %4335 = vmatpush1.msra.mxu0 0.0
      %4336 = vmatprep.subr.mxu0 0.0
      %4337 = vmatpush1.msra.mxu0 0.0
      %4338 = vmatprep.subr.mxu0 0.0
      %4339 = vmatpush1.msra.mxu0 0.0
      %4340 = vmatprep.subr.mxu0 0.0
      %4341 = vmatpush1.msra.mxu0 0.0
      %4342 = vmatprep.subr.mxu0 0.0
      %4343 = vmatpush1.msra.mxu0 0.0
      %4344 = vmatprep.subr.mxu0 0.0
      %4345 = vmatpush1.msra.mxu0 0.0
      %4346 = vmatprep.subr.mxu0 0.0
      %4347 = vmatpush1.msra.mxu0 0.0
      %4348 = vmatprep.subr.mxu0 0.0
      %4349 = vmatpush1.msra.mxu0 0.0
      %4350 = vmatprep.subr.mxu0 0.0
      %4351 = vmatpush1.msra.mxu0 0.0
      %4352 = vmatprep.subr.mxu0 0.0
      %4353 = vmatpush1.msra.mxu0 0.0
      %4354 = vmatprep.subr.mxu0 0.0
      %4355 = vmatpush1.msra.mxu0 0.0
      %4356 = vmatprep.subr.mxu0 0.0
      %4357 = vmatpush1.msra.mxu0 0.0
      %4358 = vmatprep.subr.mxu0 0.0
      %4359 = vmatpush1.msra.mxu0 0.0
      %4360 = vmatprep.mubr.f32.mxu0 0.0
      %4361 = vmatmul.mubr.f32.gmra.mrb[0].mxu0 %v4010
      %v4362 = vpop.f32.mrb[0].mxu0
      %v4363 = vadd.f32 %v3985, %v4362
      %v4364 = vpop.f32.mrb[0].mxu0
      %v4365 = vadd.f32 %v3986, %v4364
      %4366 = vdwg.mxu0
      %4367 = vmatprep.subr.mxu0 %v3824
      %4368 = vmatpush1.msra.mxu0 %v3823
      %4369 = vmatprep.subr.mxu0 %v3840
      %4370 = vmatpush1.msra.mxu0 %v3839
      %4371 = vmatprep.subr.mxu0 0.0
      %4372 = vmatpush1.msra.mxu0 0.0
      %4373 = vmatprep.subr.mxu0 0.0
      %4374 = vmatpush1.msra.mxu0 0.0
      %4375 = vmatprep.subr.mxu0 0.0
      %4376 = vmatpush1.msra.mxu0 0.0
      %4377 = vmatprep.subr.mxu0 0.0
      %4378 = vmatpush1.msra.mxu0 0.0
      %4379 = vmatprep.subr.mxu0 0.0
      %4380 = vmatpush1.msra.mxu0 0.0
      %4381 = vmatprep.subr.mxu0 0.0
      %4382 = vmatpush1.msra.mxu0 0.0
      %4383 = vmatprep.subr.mxu0 0.0
      %4384 = vmatpush1.msra.mxu0 0.0
      %4385 = vmatprep.subr.mxu0 0.0
      %4386 = vmatpush1.msra.mxu0 0.0
      %4387 = vmatprep.subr.mxu0 0.0
      %4388 = vmatpush1.msra.mxu0 0.0
      %4389 = vmatprep.subr.mxu0 0.0
      %4390 = vmatpush1.msra.mxu0 0.0
      %4391 = vmatprep.subr.mxu0 0.0
      %4392 = vmatpush1.msra.mxu0 0.0
      %4393 = vmatprep.subr.mxu0 0.0
      %4394 = vmatpush1.msra.mxu0 0.0
      %4395 = vmatprep.subr.mxu0 0.0
      %4396 = vmatpush1.msra.mxu0 0.0
      %4397 = vmatprep.subr.mxu0 0.0
      %4398 = vmatpush1.msra.mxu0 0.0
      %4399 = vmatprep.subr.mxu0 0.0
      %4400 = vmatpush1.msra.mxu0 0.0
      %4401 = vmatprep.subr.mxu0 0.0
      %4402 = vmatpush1.msra.mxu0 0.0
      %4403 = vmatprep.subr.mxu0 0.0
      %4404 = vmatpush1.msra.mxu0 0.0
      %4405 = vmatprep.subr.mxu0 0.0
      %4406 = vmatpush1.msra.mxu0 0.0
      %4407 = vmatprep.subr.mxu0 0.0
      %4408 = vmatpush1.msra.mxu0 0.0
      %4409 = vmatprep.subr.mxu0 0.0
      %4410 = vmatpush1.msra.mxu0 0.0
      %4411 = vmatprep.subr.mxu0 0.0
      %4412 = vmatpush1.msra.mxu0 0.0
      %4413 = vmatprep.subr.mxu0 0.0
      %4414 = vmatpush1.msra.mxu0 0.0
      %4415 = vmatprep.subr.mxu0 0.0
      %4416 = vmatpush1.msra.mxu0 0.0
      %4417 = vmatprep.subr.mxu0 0.0
      %4418 = vmatpush1.msra.mxu0 0.0
      %4419 = vmatprep.subr.mxu0 0.0
      %4420 = vmatpush1.msra.mxu0 0.0
      %4421 = vmatprep.subr.mxu0 0.0
      %4422 = vmatpush1.msra.mxu0 0.0
      %4423 = vmatprep.subr.mxu0 0.0
      %4424 = vmatpush1.msra.mxu0 0.0
      %4425 = vmatprep.subr.mxu0 0.0
      %4426 = vmatpush1.msra.mxu0 0.0
      %4427 = vmatprep.subr.mxu0 0.0
      %4428 = vmatpush1.msra.mxu0 0.0
      %4429 = vmatprep.subr.mxu0 0.0
      %4430 = vmatpush1.msra.mxu0 0.0
      %4431 = vmatprep.mubr.f32.mxu0 0.0
      %4432 = vmatmul.mubr.f32.gmra.mrb[0].mxu0 %v4010
      %v4433 = vpop.f32.mrb[0].mxu0
      %v4434 = vadd.f32 %v3987, %v4433
      %v4435 = vpop.f32.mrb[0].mxu0
      %v4436 = vadd.f32 %v3988, %v4435
      %4437 = vdwg.mxu0
      %4438 = vmatprep.subr.mxu0 %v3826
      %4439 = vmatpush1.msra.mxu0 %v3825
      %4440 = vmatprep.subr.mxu0 %v3842
      %4441 = vmatpush1.msra.mxu0 %v3841
      %4442 = vmatprep.subr.mxu0 0.0
      %4443 = vmatpush1.msra.mxu0 0.0
      %4444 = vmatprep.subr.mxu0 0.0
      %4445 = vmatpush1.msra.mxu0 0.0
      %4446 = vmatprep.subr.mxu0 0.0
      %4447 = vmatpush1.msra.mxu0 0.0
      %4448 = vmatprep.subr.mxu0 0.0
      %4449 = vmatpush1.msra.mxu0 0.0
      %4450 = vmatprep.subr.mxu0 0.0
      %4451 = vmatpush1.msra.mxu0 0.0
      %4452 = vmatprep.subr.mxu0 0.0
      %4453 = vmatpush1.msra.mxu0 0.0
      %4454 = vmatprep.subr.mxu0 0.0
      %4455 = vmatpush1.msra.mxu0 0.0
      %4456 = vmatprep.subr.mxu0 0.0
      %4457 = vmatpush1.msra.mxu0 0.0
      %4458 = vmatprep.subr.mxu0 0.0
      %4459 = vmatpush1.msra.mxu0 0.0
      %4460 = vmatprep.subr.mxu0 0.0
      %4461 = vmatpush1.msra.mxu0 0.0
      %4462 = vmatprep.subr.mxu0 0.0
      %4463 = vmatpush1.msra.mxu0 0.0
      %4464 = vmatprep.subr.mxu0 0.0
      %4465 = vmatpush1.msra.mxu0 0.0
      %4466 = vmatprep.subr.mxu0 0.0
      %4467 = vmatpush1.msra.mxu0 0.0
      %4468 = vmatprep.subr.mxu0 0.0
      %4469 = vmatpush1.msra.mxu0 0.0
      %4470 = vmatprep.subr.mxu0 0.0
      %4471 = vmatpush1.msra.mxu0 0.0
      %4472 = vmatprep.subr.mxu0 0.0
      %4473 = vmatpush1.msra.mxu0 0.0
      %4474 = vmatprep.subr.mxu0 0.0
      %4475 = vmatpush1.msra.mxu0 0.0
      %4476 = vmatprep.subr.mxu0 0.0
      %4477 = vmatpush1.msra.mxu0 0.0
      %4478 = vmatprep.subr.mxu0 0.0
      %4479 = vmatpush1.msra.mxu0 0.0
      %4480 = vmatprep.subr.mxu0 0.0
      %4481 = vmatpush1.msra.mxu0 0.0
      %4482 = vmatprep.subr.mxu0 0.0
      %4483 = vmatpush1.msra.mxu0 0.0
      %4484 = vmatprep.subr.mxu0 0.0
      %4485 = vmatpush1.msra.mxu0 0.0
      %4486 = vmatprep.subr.mxu0 0.0
      %4487 = vmatpush1.msra.mxu0 0.0
      %4488 = vmatprep.subr.mxu0 0.0
      %4489 = vmatpush1.msra.mxu0 0.0
      %4490 = vmatprep.subr.mxu0 0.0
      %4491 = vmatpush1.msra.mxu0 0.0
      %4492 = vmatprep.subr.mxu0 0.0
      %4493 = vmatpush1.msra.mxu0 0.0
      %4494 = vmatprep.subr.mxu0 0.0
      %4495 = vmatpush1.msra.mxu0 0.0
      %4496 = vmatprep.subr.mxu0 0.0
      %4497 = vmatpush1.msra.mxu0 0.0
      %4498 = vmatprep.subr.mxu0 0.0
      %4499 = vmatpush1.msra.mxu0 0.0
      %4500 = vmatprep.subr.mxu0 0.0
      %4501 = vmatpush1.msra.mxu0 0.0
      %4502 = vmatprep.mubr.f32.mxu0 0.0
      %4503 = vmatmul.mubr.f32.gmra.mrb[0].mxu0 %v4010
      %v4504 = vpop.f32.mrb[0].mxu0
      %v4505 = vadd.f32 %v3989, %v4504
      %v4506 = vpop.f32.mrb[0].mxu0
      %v4507 = vadd.f32 %v3990, %v4506
      %4508 = vdwg.mxu0
      %4509 = vmatprep.subr.mxu0 %v3828
      %4510 = vmatpush1.msra.mxu0 %v3827
      %4511 = vmatprep.subr.mxu0 %v3844
      %4512 = vmatpush1.msra.mxu0 %v3843
      %4513 = vmatprep.subr.mxu0 0.0
      %4514 = vmatpush1.msra.mxu0 0.0
      %4515 = vmatprep.subr.mxu0 0.0
      %4516 = vmatpush1.msra.mxu0 0.0
      %4517 = vmatprep.subr.mxu0 0.0
      %4518 = vmatpush1.msra.mxu0 0.0
      %4519 = vmatprep.subr.mxu0 0.0
      %4520 = vmatpush1.msra.mxu0 0.0
      %4521 = vmatprep.subr.mxu0 0.0
      %4522 = vmatpush1.msra.mxu0 0.0
      %4523 = vmatprep.subr.mxu0 0.0
      %4524 = vmatpush1.msra.mxu0 0.0
      %4525 = vmatprep.subr.mxu0 0.0
      %4526 = vmatpush1.msra.mxu0 0.0
      %4527 = vmatprep.subr.mxu0 0.0
      %4528 = vmatpush1.msra.mxu0 0.0
      %4529 = vmatprep.subr.mxu0 0.0
      %4530 = vmatpush1.msra.mxu0 0.0
      %4531 = vmatprep.subr.mxu0 0.0
      %4532 = vmatpush1.msra.mxu0 0.0
      %4533 = vmatprep.subr.mxu0 0.0
      %4534 = vmatpush1.msra.mxu0 0.0
      %4535 = vmatprep.subr.mxu0 0.0
      %4536 = vmatpush1.msra.mxu0 0.0
      %4537 = vmatprep.subr.mxu0 0.0
      %4538 = vmatpush1.msra.mxu0 0.0
      %4539 = vmatprep.subr.mxu0 0.0
      %4540 = vmatpush1.msra.mxu0 0.0
      %4541 = vmatprep.subr.mxu0 0.0
      %4542 = vmatpush1.msra.mxu0 0.0
      %4543 = vmatprep.subr.mxu0 0.0
      %4544 = vmatpush1.msra.mxu0 0.0
      %4545 = vmatprep.subr.mxu0 0.0
      %4546 = vmatpush1.msra.mxu0 0.0
      %4547 = vmatprep.subr.mxu0 0.0
      %4548 = vmatpush1.msra.mxu0 0.0
      %4549 = vmatprep.subr.mxu0 0.0
      %4550 = vmatpush1.msra.mxu0 0.0
      %4551 = vmatprep.subr.mxu0 0.0
      %4552 = vmatpush1.msra.mxu0 0.0
      %4553 = vmatprep.subr.mxu0 0.0
      %4554 = vmatpush1.msra.mxu0 0.0
      %4555 = vmatprep.subr.mxu0 0.0
      %4556 = vmatpush1.msra.mxu0 0.0
      %4557 = vmatprep.subr.mxu0 0.0
      %4558 = vmatpush1.msra.mxu0 0.0
      %4559 = vmatprep.subr.mxu0 0.0
      %4560 = vmatpush1.msra.mxu0 0.0
      %4561 = vmatprep.subr.mxu0 0.0
      %4562 = vmatpush1.msra.mxu0 0.0
      %4563 = vmatprep.subr.mxu0 0.0
      %4564 = vmatpush1.msra.mxu0 0.0
      %4565 = vmatprep.subr.mxu0 0.0
      %4566 = vmatpush1.msra.mxu0 0.0
      %4567 = vmatprep.subr.mxu0 0.0
      %4568 = vmatpush1.msra.mxu0 0.0
      %4569 = vmatprep.subr.mxu0 0.0
      %4570 = vmatpush1.msra.mxu0 0.0
      %4571 = vmatprep.subr.mxu0 0.0
      %4572 = vmatpush1.msra.mxu0 0.0
      %4573 = vmatprep.mubr.f32.mxu0 0.0
      %4574 = vmatmul.mubr.f32.gmra.mrb[0].mxu0 %v4010
      %v4575 = vpop.f32.mrb[0].mxu0
      %v4576 = vadd.f32 %v3991, %v4575
      %v4577 = vpop.f32.mrb[0].mxu0
      %v4578 = vadd.f32 %v3992, %v4577
      %4579 = vdwg.mxu0
      %v4580 = vmax.f32 %v4079, 0.0
      %v4581 = vmax.f32 %v4081, 0.0
      %v4582 = vmax.f32 %v4150, 0.0
      %v4583 = vmax.f32 %v4152, 0.0
      %v4584 = vmax.f32 %v4221, 0.0
      %v4585 = vmax.f32 %v4223, 0.0
      %v4586 = vmax.f32 %v4292, 0.0
      %v4587 = vmax.f32 %v4294, 0.0
      %v4588 = vmax.f32 %v4363, 0.0
      %v4589 = vmax.f32 %v4365, 0.0
      %v4590 = vmax.f32 %v4434, 0.0
      %v4591 = vmax.f32 %v4436, 0.0
      %v4592 = vmax.f32 %v4505, 0.0
      %v4593 = vmax.f32 %v4507, 0.0
      %v4594 = vmax.f32 %v4576, 0.0
      %v4595 = vmax.f32 %v4578, 0.0
      %v4596 = vld [vmem:[%s12] sm:$0xff]
      %v4597 = vld [vmem:[%s12 + $0x8] sm:$0xff]
      %v4598 = vld [vmem:[%s12 + $0x10] sm:$0xff]
      %v4599 = vld [vmem:[%s12 + $0x18] sm:$0xff]
      %v4600 = vld [vmem:[%s12 + $0x20] sm:$0xff]
      %v4601 = vld [vmem:[%s12 + $0x28] sm:$0xff]
      %v4602 = vld [vmem:[%s12 + $0x30] sm:$0xff]
      %v4603 = vld [vmem:[%s12 + $0x38] sm:$0xff]
      %v4604 = vld [vmem:[%s12 + $0x40] sm:$0xff]
      %v4605 = vld [vmem:[%s12 + $0x48] sm:$0xff]
      %v4606 = vld [vmem:[%s12 + $0x50] sm:$0xff]
      %v4607 = vld [vmem:[%s12 + $0x58] sm:$0xff]
      %v4608 = vld [vmem:[%s12 + $0x60] sm:$0xff]
      %v4609 = vld [vmem:[%s12 + $0x68] sm:$0xff]
      %v4610 = vld [vmem:[%s12 + $0x70] sm:$0xff]
      %v4611 = vld [vmem:[%s12 + $0x78] sm:$0xff]
      %v4612 = vld [vmem:[%s12 + $0x80] sm:$0xff]
      %v4613 = vld [vmem:[%s12 + $0x88] sm:$0xff]
      %v4614 = vld [vmem:[%s12 + $0x90] sm:$0xff]
      %v4615 = vld [vmem:[%s12 + $0x98] sm:$0xff]
      %v4616 = vld [vmem:[%s12 + $0xa0] sm:$0xff]
      %v4617 = vld [vmem:[%s12 + $0xa8] sm:$0xff]
      %v4618 = vld [vmem:[%s12 + $0xb0] sm:$0xff]
      %v4619 = vld [vmem:[%s12 + $0xb8] sm:$0xff]
      %v4620 = vld [vmem:[%s12 + $0xc0] sm:$0xff]
      %v4621 = vld [vmem:[%s12 + $0xc8] sm:$0xff]
      %v4622 = vld [vmem:[%s12 + $0xd0] sm:$0xff]
      %v4623 = vld [vmem:[%s12 + $0xd8] sm:$0xff]
      %v4624 = vld [vmem:[%s12 + $0xe0] sm:$0xff]
      %v4625 = vld [vmem:[%s12 + $0xe8] sm:$0xff]
      %v4626 = vld [vmem:[%s12 + $0xf0] sm:$0xff]
      %v4627 = vld [vmem:[%s12 + $0xf8] sm:$0xff]
      %v4628 = vld [vmem:[%s12 + $0x100] sm:$0xff]
      %v4629 = vld [vmem:[%s12 + $0x108] sm:$0xff]
      %v4630 = vld [vmem:[%s12 + $0x110] sm:$0xff]
      %v4631 = vld [vmem:[%s12 + $0x118] sm:$0xff]
      %v4632 = vld [vmem:[%s12 + $0x120] sm:$0xff]
      %v4633 = vld [vmem:[%s12 + $0x128] sm:$0xff]
      %v4634 = vld [vmem:[%s12 + $0x130] sm:$0xff]
      %v4635 = vld [vmem:[%s12 + $0x138] sm:$0xff]
      %v4636 = vld [vmem:[%s12 + $0x140] sm:$0xff]
      %v4637 = vld [vmem:[%s12 + $0x148] sm:$0xff]
      %v4638 = vld [vmem:[%s12 + $0x150] sm:$0xff]
      %v4639 = vld [vmem:[%s12 + $0x158] sm:$0xff]
      %v4640 = vld [vmem:[%s12 + $0x160] sm:$0xff]
      %v4641 = vld [vmem:[%s12 + $0x168] sm:$0xff]
      %v4642 = vld [vmem:[%s12 + $0x170] sm:$0xff]
      %v4643 = vld [vmem:[%s12 + $0x178] sm:$0xff]
      %v4644 = vld [vmem:[%s12 + $0x180] sm:$0xff]
      %v4645 = vld [vmem:[%s12 + $0x188] sm:$0xff]
      %v4646 = vld [vmem:[%s12 + $0x190] sm:$0xff]
      %v4647 = vld [vmem:[%s12 + $0x198] sm:$0xff]
      %v4648 = vld [vmem:[%s12 + $0x1a0] sm:$0xff]
      %v4649 = vld [vmem:[%s12 + $0x1a8] sm:$0xff]
      %v4650 = vld [vmem:[%s12 + $0x1b0] sm:$0xff]
      %v4651 = vld [vmem:[%s12 + $0x1b8] sm:$0xff]
      %v4652 = vld [vmem:[%s12 + $0x1c0] sm:$0xff]
      %v4653 = vld [vmem:[%s12 + $0x1c8] sm:$0xff]
      %v4654 = vld [vmem:[%s12 + $0x1d0] sm:$0xff]
      %v4655 = vld [vmem:[%s12 + $0x1d8] sm:$0xff]
      %v4656 = vld [vmem:[%s12 + $0x1e0] sm:$0xff]
      %v4657 = vld [vmem:[%s12 + $0x1e8] sm:$0xff]
      %v4658 = vld [vmem:[%s12 + $0x1f0] sm:$0xff]
      %v4659 = vld [vmem:[%s12 + $0x1f8] sm:$0xff]
      %v4660 = vld [vmem:[%s12 + $0x200] sm:$0xff]
      %v4661 = vld [vmem:[%s12 + $0x208] sm:$0xff]
      %v4662 = vld [vmem:[%s12 + $0x210] sm:$0xff]
      %v4663 = vld [vmem:[%s12 + $0x218] sm:$0xff]
      %v4664 = vld [vmem:[%s12 + $0x220] sm:$0xff]
      %v4665 = vld [vmem:[%s12 + $0x228] sm:$0xff]
      %v4666 = vld [vmem:[%s12 + $0x230] sm:$0xff]
      %v4667 = vld [vmem:[%s12 + $0x238] sm:$0xff]
      %v4668 = vld [vmem:[%s12 + $0x240] sm:$0xff]
      %v4669 = vld [vmem:[%s12 + $0x248] sm:$0xff]
      %v4670 = vld [vmem:[%s12 + $0x250] sm:$0xff]
      %v4671 = vld [vmem:[%s12 + $0x258] sm:$0xff]
      %v4672 = vld [vmem:[%s12 + $0x260] sm:$0xff]
      %v4673 = vld [vmem:[%s12 + $0x268] sm:$0xff]
      %v4674 = vld [vmem:[%s12 + $0x270] sm:$0xff]
      %v4675 = vld [vmem:[%s12 + $0x278] sm:$0xff]
      %v4676 = vld [vmem:[%s12 + $0x280] sm:$0xff]
      %v4677 = vld [vmem:[%s12 + $0x288] sm:$0xff]
      %v4678 = vld [vmem:[%s12 + $0x290] sm:$0xff]
      %v4679 = vld [vmem:[%s12 + $0x298] sm:$0xff]
      %v4680 = vld [vmem:[%s12 + $0x2a0] sm:$0xff]
      %v4681 = vld [vmem:[%s12 + $0x2a8] sm:$0xff]
      %v4682 = vld [vmem:[%s12 + $0x2b0] sm:$0xff]
      %v4683 = vld [vmem:[%s12 + $0x2b8] sm:$0xff]
      %v4684 = vld [vmem:[%s12 + $0x2c0] sm:$0xff]
      %v4685 = vld [vmem:[%s12 + $0x2c8] sm:$0xff]
      %v4686 = vld [vmem:[%s12 + $0x2d0] sm:$0xff]
      %v4687 = vld [vmem:[%s12 + $0x2d8] sm:$0xff]
      %v4688 = vld [vmem:[%s12 + $0x2e0] sm:$0xff]
      %v4689 = vld [vmem:[%s12 + $0x2e8] sm:$0xff]
      %v4690 = vld [vmem:[%s12 + $0x2f0] sm:$0xff]
      %v4691 = vld [vmem:[%s12 + $0x2f8] sm:$0xff]
      %v4692 = vld [vmem:[%s12 + $0x300] sm:$0xff]
      %v4693 = vld [vmem:[%s12 + $0x308] sm:$0xff]
      %v4694 = vld [vmem:[%s12 + $0x310] sm:$0xff]
      %v4695 = vld [vmem:[%s12 + $0x318] sm:$0xff]
      %v4696 = vld [vmem:[%s12 + $0x320] sm:$0xff]
      %v4697 = vld [vmem:[%s12 + $0x328] sm:$0xff]
      %v4698 = vld [vmem:[%s12 + $0x330] sm:$0xff]
      %v4699 = vld [vmem:[%s12 + $0x338] sm:$0xff]
      %v4700 = vld [vmem:[%s12 + $0x340] sm:$0xff]
      %v4701 = vld [vmem:[%s12 + $0x348] sm:$0xff]
      %v4702 = vld [vmem:[%s12 + $0x350] sm:$0xff]
      %v4703 = vld [vmem:[%s12 + $0x358] sm:$0xff]
      %v4704 = vld [vmem:[%s12 + $0x360] sm:$0xff]
      %v4705 = vld [vmem:[%s12 + $0x368] sm:$0xff]
      %v4706 = vld [vmem:[%s12 + $0x370] sm:$0xff]
      %v4707 = vld [vmem:[%s12 + $0x378] sm:$0xff]
      %v4708 = vld [vmem:[%s12 + $0x380] sm:$0xff]
      %v4709 = vld [vmem:[%s12 + $0x388] sm:$0xff]
      %v4710 = vld [vmem:[%s12 + $0x390] sm:$0xff]
      %v4711 = vld [vmem:[%s12 + $0x398] sm:$0xff]
      %v4712 = vld [vmem:[%s12 + $0x3a0] sm:$0xff]
      %v4713 = vld [vmem:[%s12 + $0x3a8] sm:$0xff]
      %v4714 = vld [vmem:[%s12 + $0x3b0] sm:$0xff]
      %v4715 = vld [vmem:[%s12 + $0x3b8] sm:$0xff]
      %v4716 = vld [vmem:[%s12 + $0x3c0] sm:$0xff]
      %v4717 = vld [vmem:[%s12 + $0x3c8] sm:$0xff]
      %v4718 = vld [vmem:[%s12 + $0x3d0] sm:$0xff]
      %v4719 = vld [vmem:[%s12 + $0x3d8] sm:$0xff]
      %v4720 = vld [vmem:[%s12 + $0x3e0] sm:$0xff]
      %v4721 = vld [vmem:[%s12 + $0x3e8] sm:$0xff]
      %v4722 = vld [vmem:[%s12 + $0x3f0] sm:$0xff]
      %v4723 = vld [vmem:[%s12 + $0x3f8] sm:$0xff]
      %v4724 = vld [vmem:[%s12 + $0x400] sm:$0xff]
      %v4725 = vld [vmem:[%s12 + $0x408] sm:$0xff]
      %v4726 = vld [vmem:[%s12 + $0x410] sm:$0xff]
      %v4727 = vld [vmem:[%s12 + $0x418] sm:$0xff]
      %v4728 = vld [vmem:[%s12 + $0x420] sm:$0xff]
      %v4729 = vld [vmem:[%s12 + $0x428] sm:$0xff]
      %v4730 = vld [vmem:[%s12 + $0x430] sm:$0xff]
      %v4731 = vld [vmem:[%s12 + $0x438] sm:$0xff]
      %v4732 = vld [vmem:[%s12 + $0x440] sm:$0xff]
      %v4733 = vld [vmem:[%s12 + $0x448] sm:$0xff]
      %v4734 = vld [vmem:[%s12 + $0x450] sm:$0xff]
      %v4735 = vld [vmem:[%s12 + $0x458] sm:$0xff]
      %v4736 = vld [vmem:[%s12 + $0x460] sm:$0xff]
      %v4737 = vld [vmem:[%s12 + $0x468] sm:$0xff]
      %v4738 = vld [vmem:[%s12 + $0x470] sm:$0xff]
      %v4739 = vld [vmem:[%s12 + $0x478] sm:$0xff]
      %v4740 = vld [vmem:[%s12 + $0x480] sm:$0xff]
      %v4741 = vld [vmem:[%s12 + $0x488] sm:$0xff]
      %v4742 = vld [vmem:[%s12 + $0x490] sm:$0xff]
      %v4743 = vld [vmem:[%s12 + $0x498] sm:$0xff]
      %v4744 = vld [vmem:[%s12 + $0x4a0] sm:$0xff]
      %v4745 = vld [vmem:[%s12 + $0x4a8] sm:$0xff]
      %v4746 = vld [vmem:[%s12 + $0x4b0] sm:$0xff]
      %v4747 = vld [vmem:[%s12 + $0x4b8] sm:$0xff]
      %v4748 = vld [vmem:[%s12 + $0x4c0] sm:$0xff]
      %v4749 = vld [vmem:[%s12 + $0x4c8] sm:$0xff]
      %v4750 = vld [vmem:[%s12 + $0x4d0] sm:$0xff]
      %v4751 = vld [vmem:[%s12 + $0x4d8] sm:$0xff]
      %v4752 = vld [vmem:[%s12 + $0x4e0] sm:$0xff]
      %v4753 = vld [vmem:[%s12 + $0x4e8] sm:$0xff]
      %v4754 = vld [vmem:[%s12 + $0x4f0] sm:$0xff]
      %v4755 = vld [vmem:[%s12 + $0x4f8] sm:$0xff]
      %v4756 = vld [vmem:[%s12 + $0x500] sm:$0xff]
      %v4757 = vld [vmem:[%s12 + $0x508] sm:$0xff]
      %v4758 = vld [vmem:[%s12 + $0x510] sm:$0xff]
      %v4759 = vld [vmem:[%s12 + $0x518] sm:$0xff]
      %v4760 = vld [vmem:[%s12 + $0x520] sm:$0xff]
      %v4761 = vld [vmem:[%s12 + $0x528] sm:$0xff]
      %v4762 = vld [vmem:[%s12 + $0x530] sm:$0xff]
      %v4763 = vld [vmem:[%s12 + $0x538] sm:$0xff]
      %v4764 = vld [vmem:[%s12 + $0x540] sm:$0xff]
      %v4765 = vld [vmem:[%s12 + $0x548] sm:$0xff]
      %v4766 = vld [vmem:[%s12 + $0x550] sm:$0xff]
      %v4767 = vld [vmem:[%s12 + $0x558] sm:$0xff]
      %v4768 = vld [vmem:[%s12 + $0x560] sm:$0xff]
      %v4769 = vld [vmem:[%s12 + $0x568] sm:$0xff]
      %v4770 = vld [vmem:[%s12 + $0x570] sm:$0xff]
      %v4771 = vld [vmem:[%s12 + $0x578] sm:$0xff]
      %v4772 = vld [vmem:[%s12 + $0x580] sm:$0xff]
      %v4773 = vld [vmem:[%s12 + $0x588] sm:$0xff]
      %v4774 = vld [vmem:[%s12 + $0x590] sm:$0xff]
      %v4775 = vld [vmem:[%s12 + $0x598] sm:$0xff]
      %v4776 = vld [vmem:[%s12 + $0x5a0] sm:$0xff]
      %v4777 = vld [vmem:[%s12 + $0x5a8] sm:$0xff]
      %v4778 = vld [vmem:[%s12 + $0x5b0] sm:$0xff]
      %v4779 = vld [vmem:[%s12 + $0x5b8] sm:$0xff]
      %v4780 = vld [vmem:[%s12 + $0x5c0] sm:$0xff]
      %v4781 = vld [vmem:[%s12 + $0x5c8] sm:$0xff]
      %v4782 = vld [vmem:[%s12 + $0x5d0] sm:$0xff]
      %v4783 = vld [vmem:[%s12 + $0x5d8] sm:$0xff]
      %v4784 = vld [vmem:[%s12 + $0x5e0] sm:$0xff]
      %v4785 = vld [vmem:[%s12 + $0x5e8] sm:$0xff]
      %v4786 = vld [vmem:[%s12 + $0x5f0] sm:$0xff]
      %v4787 = vld [vmem:[%s12 + $0x5f8] sm:$0xff]
      %v4788 = vld [vmem:[%s12 + $0x600] sm:$0xff]
      %v4789 = vld [vmem:[%s12 + $0x608] sm:$0xff]
      %v4790 = vld [vmem:[%s12 + $0x610] sm:$0xff]
      %v4791 = vld [vmem:[%s12 + $0x618] sm:$0xff]
      %v4792 = vld [vmem:[%s12 + $0x620] sm:$0xff]
      %v4793 = vld [vmem:[%s12 + $0x628] sm:$0xff]
      %v4794 = vld [vmem:[%s12 + $0x630] sm:$0xff]
      %v4795 = vld [vmem:[%s12 + $0x638] sm:$0xff]
      %v4796 = vld [vmem:[%s12 + $0x640] sm:$0xff]
      %v4797 = vld [vmem:[%s12 + $0x648] sm:$0xff]
      %v4798 = vld [vmem:[%s12 + $0x650] sm:$0xff]
      %v4799 = vld [vmem:[%s12 + $0x658] sm:$0xff]
      %v4800 = vld [vmem:[%s12 + $0x660] sm:$0xff]
      %v4801 = vld [vmem:[%s12 + $0x668] sm:$0xff]
      %v4802 = vld [vmem:[%s12 + $0x670] sm:$0xff]
      %v4803 = vld [vmem:[%s12 + $0x678] sm:$0xff]
      %v4804 = vld [vmem:[%s12 + $0x680] sm:$0xff]
      %v4805 = vld [vmem:[%s12 + $0x688] sm:$0xff]
      %v4806 = vld [vmem:[%s12 + $0x690] sm:$0xff]
      %v4807 = vld [vmem:[%s12 + $0x698] sm:$0xff]
      %v4808 = vld [vmem:[%s12 + $0x6a0] sm:$0xff]
      %v4809 = vld [vmem:[%s12 + $0x6a8] sm:$0xff]
      %v4810 = vld [vmem:[%s12 + $0x6b0] sm:$0xff]
      %v4811 = vld [vmem:[%s12 + $0x6b8] sm:$0xff]
      %v4812 = vld [vmem:[%s12 + $0x6c0] sm:$0xff]
      %v4813 = vld [vmem:[%s12 + $0x6c8] sm:$0xff]
      %v4814 = vld [vmem:[%s12 + $0x6d0] sm:$0xff]
      %v4815 = vld [vmem:[%s12 + $0x6d8] sm:$0xff]
      %v4816 = vld [vmem:[%s12 + $0x6e0] sm:$0xff]
      %v4817 = vld [vmem:[%s12 + $0x6e8] sm:$0xff]
      %v4818 = vld [vmem:[%s12 + $0x6f0] sm:$0xff]
      %v4819 = vld [vmem:[%s12 + $0x6f8] sm:$0xff]
      %v4820 = vld [vmem:[%s12 + $0x700] sm:$0xff]
      %v4821 = vld [vmem:[%s12 + $0x708] sm:$0xff]
      %v4822 = vld [vmem:[%s12 + $0x710] sm:$0xff]
      %v4823 = vld [vmem:[%s12 + $0x718] sm:$0xff]
      %v4824 = vld [vmem:[%s12 + $0x720] sm:$0xff]
      %v4825 = vld [vmem:[%s12 + $0x728] sm:$0xff]
      %v4826 = vld [vmem:[%s12 + $0x730] sm:$0xff]
      %v4827 = vld [vmem:[%s12 + $0x738] sm:$0xff]
      %v4828 = vld [vmem:[%s12 + $0x740] sm:$0xff]
      %v4829 = vld [vmem:[%s12 + $0x748] sm:$0xff]
      %v4830 = vld [vmem:[%s12 + $0x750] sm:$0xff]
      %v4831 = vld [vmem:[%s12 + $0x758] sm:$0xff]
      %v4832 = vld [vmem:[%s12 + $0x760] sm:$0xff]
      %v4833 = vld [vmem:[%s12 + $0x768] sm:$0xff]
      %v4834 = vld [vmem:[%s12 + $0x770] sm:$0xff]
      %v4835 = vld [vmem:[%s12 + $0x778] sm:$0xff]
      %v4836 = vld [vmem:[%s12 + $0x780] sm:$0xff]
      %v4837 = vld [vmem:[%s12 + $0x788] sm:$0xff]
      %v4838 = vld [vmem:[%s12 + $0x790] sm:$0xff]
      %v4839 = vld [vmem:[%s12 + $0x798] sm:$0xff]
      %v4840 = vld [vmem:[%s12 + $0x7a0] sm:$0xff]
      %v4841 = vld [vmem:[%s12 + $0x7a8] sm:$0xff]
      %v4842 = vld [vmem:[%s12 + $0x7b0] sm:$0xff]
      %v4843 = vld [vmem:[%s12 + $0x7b8] sm:$0xff]
      %v4844 = vld [vmem:[%s12 + $0x7c0] sm:$0xff]
      %v4845 = vld [vmem:[%s12 + $0x7c8] sm:$0xff]
      %v4846 = vld [vmem:[%s12 + $0x7d0] sm:$0xff]
      %v4847 = vld [vmem:[%s12 + $0x7d8] sm:$0xff]
      %v4848 = vld [vmem:[%s12 + $0x7e0] sm:$0xff]
      %v4849 = vld [vmem:[%s12 + $0x7e8] sm:$0xff]
      %v4850 = vld [vmem:[%s12 + $0x7f0] sm:$0xff]
      %v4851 = vld [vmem:[%s12 + $0x7f8] sm:$0xff]
      %4852 = vmatprep.subr.mxu0 0.0
      %4853 = vmatpush1.msra.mxu0 %v4596
      %4854 = vmatprep.subr.mxu0 0.0
      %4855 = vmatpush1.msra.mxu0 %v4597
      %4856 = vmatprep.subr.mxu0 0.0
      %4857 = vmatpush1.msra.mxu0 %v4598
      %4858 = vmatprep.subr.mxu0 0.0
      %4859 = vmatpush1.msra.mxu0 %v4599
      %4860 = vmatprep.subr.mxu0 0.0
      %4861 = vmatpush1.msra.mxu0 %v4600
      %4862 = vmatprep.subr.mxu0 0.0
      %4863 = vmatpush1.msra.mxu0 %v4601
      %4864 = vmatprep.subr.mxu0 0.0
      %4865 = vmatpush1.msra.mxu0 %v4602
      %4866 = vmatprep.subr.mxu0 0.0
      %4867 = vmatpush1.msra.mxu0 %v4603
      %4868 = vmatprep.subr.mxu0 0.0
      %4869 = vmatpush1.msra.mxu0 %v4604
      %4870 = vmatprep.subr.mxu0 0.0
      %4871 = vmatpush1.msra.mxu0 %v4605
      %4872 = vmatprep.subr.mxu0 0.0
      %4873 = vmatpush1.msra.mxu0 %v4606
      %4874 = vmatprep.subr.mxu0 0.0
      %4875 = vmatpush1.msra.mxu0 %v4607
      %4876 = vmatprep.subr.mxu0 0.0
      %4877 = vmatpush1.msra.mxu0 %v4608
      %4878 = vmatprep.subr.mxu0 0.0
      %4879 = vmatpush1.msra.mxu0 %v4609
      %4880 = vmatprep.subr.mxu0 0.0
      %4881 = vmatpush1.msra.mxu0 %v4610
      %4882 = vmatprep.subr.mxu0 0.0
      %4883 = vmatpush1.msra.mxu0 %v4611
      %4884 = vmatprep.subr.mxu0 0.0
      %4885 = vmatpush1.msra.mxu0 %v4612
      %4886 = vmatprep.subr.mxu0 0.0
      %4887 = vmatpush1.msra.mxu0 %v4613
      %4888 = vmatprep.subr.mxu0 0.0
      %4889 = vmatpush1.msra.mxu0 %v4614
      %4890 = vmatprep.subr.mxu0 0.0
      %4891 = vmatpush1.msra.mxu0 %v4615
      %4892 = vmatprep.subr.mxu0 0.0
      %4893 = vmatpush1.msra.mxu0 %v4616
      %4894 = vmatprep.subr.mxu0 0.0
      %4895 = vmatpush1.msra.mxu0 %v4617
      %4896 = vmatprep.subr.mxu0 0.0
      %4897 = vmatpush1.msra.mxu0 %v4618
      %4898 = vmatprep.subr.mxu0 0.0
      %4899 = vmatpush1.msra.mxu0 %v4619
      %4900 = vmatprep.subr.mxu0 0.0
      %4901 = vmatpush1.msra.mxu0 %v4620
      %4902 = vmatprep.subr.mxu0 0.0
      %4903 = vmatpush1.msra.mxu0 %v4621
      %4904 = vmatprep.subr.mxu0 0.0
      %4905 = vmatpush1.msra.mxu0 %v4622
      %4906 = vmatprep.subr.mxu0 0.0
      %4907 = vmatpush1.msra.mxu0 %v4623
      %4908 = vmatprep.subr.mxu0 0.0
      %4909 = vmatpush1.msra.mxu0 %v4624
      %4910 = vmatprep.subr.mxu0 0.0
      %4911 = vmatpush1.msra.mxu0 %v4625
      %4912 = vmatprep.subr.mxu0 0.0
      %4913 = vmatpush1.msra.mxu0 %v4626
      %4914 = vmatprep.subr.mxu0 0.0
      %4915 = vmatpush1.msra.mxu0 %v4627
      %4916 = vmatprep.mubr.f32.mxu0 %v4581
      %4917 = vmatmul.mubr.f32.gmra.mrb[0].mxu0 %v4580
      %v4918 = vpop.f32.mrb[0].mxu0
      %v4919 = vadd.f32 0.0, %v4918
      %v4920 = vpop.f32.mrb[0].mxu0
      %4921 = vdwg.mxu0
      %4922 = vmatprep.subr.mxu0 0.0
      %4923 = vmatpush1.msra.mxu0 %v4628
      %4924 = vmatprep.subr.mxu0 0.0
      %4925 = vmatpush1.msra.mxu0 %v4629
      %4926 = vmatprep.subr.mxu0 0.0
      %4927 = vmatpush1.msra.mxu0 %v4630
      %4928 = vmatprep.subr.mxu0 0.0
      %4929 = vmatpush1.msra.mxu0 %v4631
      %4930 = vmatprep.subr.mxu0 0.0
      %4931 = vmatpush1.msra.mxu0 %v4632
      %4932 = vmatprep.subr.mxu0 0.0
      %4933 = vmatpush1.msra.mxu0 %v4633
      %4934 = vmatprep.subr.mxu0 0.0
      %4935 = vmatpush1.msra.mxu0 %v4634
      %4936 = vmatprep.subr.mxu0 0.0
      %4937 = vmatpush1.msra.mxu0 %v4635
      %4938 = vmatprep.subr.mxu0 0.0
      %4939 = vmatpush1.msra.mxu0 %v4636
      %4940 = vmatprep.subr.mxu0 0.0
      %4941 = vmatpush1.msra.mxu0 %v4637
      %4942 = vmatprep.subr.mxu0 0.0
      %4943 = vmatpush1.msra.mxu0 %v4638
      %4944 = vmatprep.subr.mxu0 0.0
      %4945 = vmatpush1.msra.mxu0 %v4639
      %4946 = vmatprep.subr.mxu0 0.0
      %4947 = vmatpush1.msra.mxu0 %v4640
      %4948 = vmatprep.subr.mxu0 0.0
      %4949 = vmatpush1.msra.mxu0 %v4641
      %4950 = vmatprep.subr.mxu0 0.0
      %4951 = vmatpush1.msra.mxu0 %v4642
      %4952 = vmatprep.subr.mxu0 0.0
      %4953 = vmatpush1.msra.mxu0 %v4643
      %4954 = vmatprep.subr.mxu0 0.0
      %4955 = vmatpush1.msra.mxu0 %v4644
      %4956 = vmatprep.subr.mxu0 0.0
      %4957 = vmatpush1.msra.mxu0 %v4645
      %4958 = vmatprep.subr.mxu0 0.0
      %4959 = vmatpush1.msra.mxu0 %v4646
      %4960 = vmatprep.subr.mxu0 0.0
      %4961 = vmatpush1.msra.mxu0 %v4647
      %4962 = vmatprep.subr.mxu0 0.0
      %4963 = vmatpush1.msra.mxu0 %v4648
      %4964 = vmatprep.subr.mxu0 0.0
      %4965 = vmatpush1.msra.mxu0 %v4649
      %4966 = vmatprep.subr.mxu0 0.0
      %4967 = vmatpush1.msra.mxu0 %v4650
      %4968 = vmatprep.subr.mxu0 0.0
      %4969 = vmatpush1.msra.mxu0 %v4651
      %4970 = vmatprep.subr.mxu0 0.0
      %4971 = vmatpush1.msra.mxu0 %v4652
      %4972 = vmatprep.subr.mxu0 0.0
      %4973 = vmatpush1.msra.mxu0 %v4653
      %4974 = vmatprep.subr.mxu0 0.0
      %4975 = vmatpush1.msra.mxu0 %v4654
      %4976 = vmatprep.subr.mxu0 0.0
      %4977 = vmatpush1.msra.mxu0 %v4655
      %4978 = vmatprep.subr.mxu0 0.0
      %4979 = vmatpush1.msra.mxu0 %v4656
      %4980 = vmatprep.subr.mxu0 0.0
      %4981 = vmatpush1.msra.mxu0 %v4657
      %4982 = vmatprep.subr.mxu0 0.0
      %4983 = vmatpush1.msra.mxu0 %v4658
      %4984 = vmatprep.subr.mxu0 0.0
      %4985 = vmatpush1.msra.mxu0 %v4659
      %4986 = vmatprep.mubr.f32.mxu0 %v4583
      %4987 = vmatmul.mubr.f32.gmra.mrb[0].mxu0 %v4582
      %v4988 = vpop.f32.mrb[0].mxu0
      %v4989 = vadd.f32 %v4919, %v4988
      %v4990 = vpop.f32.mrb[0].mxu0
      %4991 = vdwg.mxu0
      %4992 = vmatprep.subr.mxu0 0.0
      %4993 = vmatpush1.msra.mxu0 %v4660
      %4994 = vmatprep.subr.mxu0 0.0
      %4995 = vmatpush1.msra.mxu0 %v4661
      %4996 = vmatprep.subr.mxu0 0.0
      %4997 = vmatpush1.msra.mxu0 %v4662
      %4998 = vmatprep.subr.mxu0 0.0
      %4999 = vmatpush1.msra.mxu0 %v4663
      %5000 = vmatprep.subr.mxu0 0.0
      %5001 = vmatpush1.msra.mxu0 %v4664
      %5002 = vmatprep.subr.mxu0 0.0
      %5003 = vmatpush1.msra.mxu0 %v4665
      %5004 = vmatprep.subr.mxu0 0.0
      %5005 = vmatpush1.msra.mxu0 %v4666
      %5006 = vmatprep.subr.mxu0 0.0
      %5007 = vmatpush1.msra.mxu0 %v4667
      %5008 = vmatprep.subr.mxu0 0.0
      %5009 = vmatpush1.msra.mxu0 %v4668
      %5010 = vmatprep.subr.mxu0 0.0
      %5011 = vmatpush1.msra.mxu0 %v4669
      %5012 = vmatprep.subr.mxu0 0.0
      %5013 = vmatpush1.msra.mxu0 %v4670
      %5014 = vmatprep.subr.mxu0 0.0
      %5015 = vmatpush1.msra.mxu0 %v4671
      %5016 = vmatprep.subr.mxu0 0.0
      %5017 = vmatpush1.msra.mxu0 %v4672
      %5018 = vmatprep.subr.mxu0 0.0
      %5019 = vmatpush1.msra.mxu0 %v4673
      %5020 = vmatprep.subr.mxu0 0.0
      %5021 = vmatpush1.msra.mxu0 %v4674
      %5022 = vmatprep.subr.mxu0 0.0
      %5023 = vmatpush1.msra.mxu0 %v4675
      %5024 = vmatprep.subr.mxu0 0.0
      %5025 = vmatpush1.msra.mxu0 %v4676
      %5026 = vmatprep.subr.mxu0 0.0
      %5027 = vmatpush1.msra.mxu0 %v4677
      %5028 = vmatprep.subr.mxu0 0.0
      %5029 = vmatpush1.msra.mxu0 %v4678
      %5030 = vmatprep.subr.mxu0 0.0
      %5031 = vmatpush1.msra.mxu0 %v4679
      %5032 = vmatprep.subr.mxu0 0.0
      %5033 = vmatpush1.msra.mxu0 %v4680
      %5034 = vmatprep.subr.mxu0 0.0
      %5035 = vmatpush1.msra.mxu0 %v4681
      %5036 = vmatprep.subr.mxu0 0.0
      %5037 = vmatpush1.msra.mxu0 %v4682
      %5038 = vmatprep.subr.mxu0 0.0
      %5039 = vmatpush1.msra.mxu0 %v4683
      %5040 = vmatprep.subr.mxu0 0.0
      %5041 = vmatpush1.msra.mxu0 %v4684
      %5042 = vmatprep.subr.mxu0 0.0
      %5043 = vmatpush1.msra.mxu0 %v4685
      %5044 = vmatprep.subr.mxu0 0.0
      %5045 = vmatpush1.msra.mxu0 %v4686
      %5046 = vmatprep.subr.mxu0 0.0
      %5047 = vmatpush1.msra.mxu0 %v4687
      %5048 = vmatprep.subr.mxu0 0.0
      %5049 = vmatpush1.msra.mxu0 %v4688
      %5050 = vmatprep.subr.mxu0 0.0
      %5051 = vmatpush1.msra.mxu0 %v4689
      %5052 = vmatprep.subr.mxu0 0.0
      %5053 = vmatpush1.msra.mxu0 %v4690
      %5054 = vmatprep.subr.mxu0 0.0
      %5055 = vmatpush1.msra.mxu0 %v4691
      %5056 = vmatprep.mubr.f32.mxu0 %v4585
      %5057 = vmatmul.mubr.f32.gmra.mrb[0].mxu0 %v4584
      %v5058 = vpop.f32.mrb[0].mxu0
      %v5059 = vadd.f32 %v4989, %v5058
      %v5060 = vpop.f32.mrb[0].mxu0
      %5061 = vdwg.mxu0
      %5062 = vmatprep.subr.mxu0 0.0
      %5063 = vmatpush1.msra.mxu0 %v4692
      %5064 = vmatprep.subr.mxu0 0.0
      %5065 = vmatpush1.msra.mxu0 %v4693
      %5066 = vmatprep.subr.mxu0 0.0
      %5067 = vmatpush1.msra.mxu0 %v4694
      %5068 = vmatprep.subr.mxu0 0.0
      %5069 = vmatpush1.msra.mxu0 %v4695
      %5070 = vmatprep.subr.mxu0 0.0
      %5071 = vmatpush1.msra.mxu0 %v4696
      %5072 = vmatprep.subr.mxu0 0.0
      %5073 = vmatpush1.msra.mxu0 %v4697
      %5074 = vmatprep.subr.mxu0 0.0
      %5075 = vmatpush1.msra.mxu0 %v4698
      %5076 = vmatprep.subr.mxu0 0.0
      %5077 = vmatpush1.msra.mxu0 %v4699
      %5078 = vmatprep.subr.mxu0 0.0
      %5079 = vmatpush1.msra.mxu0 %v4700
      %5080 = vmatprep.subr.mxu0 0.0
      %5081 = vmatpush1.msra.mxu0 %v4701
      %5082 = vmatprep.subr.mxu0 0.0
      %5083 = vmatpush1.msra.mxu0 %v4702
      %5084 = vmatprep.subr.mxu0 0.0
      %5085 = vmatpush1.msra.mxu0 %v4703
      %5086 = vmatprep.subr.mxu0 0.0
      %5087 = vmatpush1.msra.mxu0 %v4704
      %5088 = vmatprep.subr.mxu0 0.0
      %5089 = vmatpush1.msra.mxu0 %v4705
      %5090 = vmatprep.subr.mxu0 0.0
      %5091 = vmatpush1.msra.mxu0 %v4706
      %5092 = vmatprep.subr.mxu0 0.0
      %5093 = vmatpush1.msra.mxu0 %v4707
      %5094 = vmatprep.subr.mxu0 0.0
      %5095 = vmatpush1.msra.mxu0 %v4708
      %5096 = vmatprep.subr.mxu0 0.0
      %5097 = vmatpush1.msra.mxu0 %v4709
      %5098 = vmatprep.subr.mxu0 0.0
      %5099 = vmatpush1.msra.mxu0 %v4710
      %5100 = vmatprep.subr.mxu0 0.0
      %5101 = vmatpush1.msra.mxu0 %v4711
      %5102 = vmatprep.subr.mxu0 0.0
      %5103 = vmatpush1.msra.mxu0 %v4712
      %5104 = vmatprep.subr.mxu0 0.0
      %5105 = vmatpush1.msra.mxu0 %v4713
      %5106 = vmatprep.subr.mxu0 0.0
      %5107 = vmatpush1.msra.mxu0 %v4714
      %5108 = vmatprep.subr.mxu0 0.0
      %5109 = vmatpush1.msra.mxu0 %v4715
      %5110 = vmatprep.subr.mxu0 0.0
      %5111 = vmatpush1.msra.mxu0 %v4716
      %5112 = vmatprep.subr.mxu0 0.0
      %5113 = vmatpush1.msra.mxu0 %v4717
      %5114 = vmatprep.subr.mxu0 0.0
      %5115 = vmatpush1.msra.mxu0 %v4718
      %5116 = vmatprep.subr.mxu0 0.0
      %5117 = vmatpush1.msra.mxu0 %v4719
      %5118 = vmatprep.subr.mxu0 0.0
      %5119 = vmatpush1.msra.mxu0 %v4720
      %5120 = vmatprep.subr.mxu0 0.0
      %5121 = vmatpush1.msra.mxu0 %v4721
      %5122 = vmatprep.subr.mxu0 0.0
      %5123 = vmatpush1.msra.mxu0 %v4722
      %5124 = vmatprep.subr.mxu0 0.0
      %5125 = vmatpush1.msra.mxu0 %v4723
      %5126 = vmatprep.mubr.f32.mxu0 %v4587
      %5127 = vmatmul.mubr.f32.gmra.mrb[0].mxu0 %v4586
      %v5128 = vpop.f32.mrb[0].mxu0
      %v5129 = vadd.f32 %v5059, %v5128
      %v5130 = vpop.f32.mrb[0].mxu0
      %5131 = vdwg.mxu0
      %5132 = vmatprep.subr.mxu0 0.0
      %5133 = vmatpush1.msra.mxu0 %v4724
      %5134 = vmatprep.subr.mxu0 0.0
      %5135 = vmatpush1.msra.mxu0 %v4725
      %5136 = vmatprep.subr.mxu0 0.0
      %5137 = vmatpush1.msra.mxu0 %v4726
      %5138 = vmatprep.subr.mxu0 0.0
      %5139 = vmatpush1.msra.mxu0 %v4727
      %5140 = vmatprep.subr.mxu0 0.0
      %5141 = vmatpush1.msra.mxu0 %v4728
      %5142 = vmatprep.subr.mxu0 0.0
      %5143 = vmatpush1.msra.mxu0 %v4729
      %5144 = vmatprep.subr.mxu0 0.0
      %5145 = vmatpush1.msra.mxu0 %v4730
      %5146 = vmatprep.subr.mxu0 0.0
      %5147 = vmatpush1.msra.mxu0 %v4731
      %5148 = vmatprep.subr.mxu0 0.0
      %5149 = vmatpush1.msra.mxu0 %v4732
      %5150 = vmatprep.subr.mxu0 0.0
      %5151 = vmatpush1.msra.mxu0 %v4733
      %5152 = vmatprep.subr.mxu0 0.0
      %5153 = vmatpush1.msra.mxu0 %v4734
      %5154 = vmatprep.subr.mxu0 0.0
      %5155 = vmatpush1.msra.mxu0 %v4735
      %5156 = vmatprep.subr.mxu0 0.0
      %5157 = vmatpush1.msra.mxu0 %v4736
      %5158 = vmatprep.subr.mxu0 0.0
      %5159 = vmatpush1.msra.mxu0 %v4737
      %5160 = vmatprep.subr.mxu0 0.0
      %5161 = vmatpush1.msra.mxu0 %v4738
      %5162 = vmatprep.subr.mxu0 0.0
      %5163 = vmatpush1.msra.mxu0 %v4739
      %5164 = vmatprep.subr.mxu0 0.0
      %5165 = vmatpush1.msra.mxu0 %v4740
      %5166 = vmatprep.subr.mxu0 0.0
      %5167 = vmatpush1.msra.mxu0 %v4741
      %5168 = vmatprep.subr.mxu0 0.0
      %5169 = vmatpush1.msra.mxu0 %v4742
      %5170 = vmatprep.subr.mxu0 0.0
      %5171 = vmatpush1.msra.mxu0 %v4743
      %5172 = vmatprep.subr.mxu0 0.0
      %5173 = vmatpush1.msra.mxu0 %v4744
      %5174 = vmatprep.subr.mxu0 0.0
      %5175 = vmatpush1.msra.mxu0 %v4745
      %5176 = vmatprep.subr.mxu0 0.0
      %5177 = vmatpush1.msra.mxu0 %v4746
      %5178 = vmatprep.subr.mxu0 0.0
      %5179 = vmatpush1.msra.mxu0 %v4747
      %5180 = vmatprep.subr.mxu0 0.0
      %5181 = vmatpush1.msra.mxu0 %v4748
      %5182 = vmatprep.subr.mxu0 0.0
      %5183 = vmatpush1.msra.mxu0 %v4749
      %5184 = vmatprep.subr.mxu0 0.0
      %5185 = vmatpush1.msra.mxu0 %v4750
      %5186 = vmatprep.subr.mxu0 0.0
      %5187 = vmatpush1.msra.mxu0 %v4751
      %5188 = vmatprep.subr.mxu0 0.0
      %5189 = vmatpush1.msra.mxu0 %v4752
      %5190 = vmatprep.subr.mxu0 0.0
      %5191 = vmatpush1.msra.mxu0 %v4753
      %5192 = vmatprep.subr.mxu0 0.0
      %5193 = vmatpush1.msra.mxu0 %v4754
      %5194 = vmatprep.subr.mxu0 0.0
      %5195 = vmatpush1.msra.mxu0 %v4755
      %5196 = vmatprep.mubr.f32.mxu0 %v4589
      %5197 = vmatmul.mubr.f32.gmra.mrb[0].mxu0 %v4588
      %v5198 = vpop.f32.mrb[0].mxu0
      %v5199 = vadd.f32 %v5129, %v5198
      %v5200 = vpop.f32.mrb[0].mxu0
      %5201 = vdwg.mxu0
      %5202 = vmatprep.subr.mxu0 0.0
      %5203 = vmatpush1.msra.mxu0 %v4756
      %5204 = vmatprep.subr.mxu0 0.0
      %5205 = vmatpush1.msra.mxu0 %v4757
      %5206 = vmatprep.subr.mxu0 0.0
      %5207 = vmatpush1.msra.mxu0 %v4758
      %5208 = vmatprep.subr.mxu0 0.0
      %5209 = vmatpush1.msra.mxu0 %v4759
      %5210 = vmatprep.subr.mxu0 0.0
      %5211 = vmatpush1.msra.mxu0 %v4760
      %5212 = vmatprep.subr.mxu0 0.0
      %5213 = vmatpush1.msra.mxu0 %v4761
      %5214 = vmatprep.subr.mxu0 0.0
      %5215 = vmatpush1.msra.mxu0 %v4762
      %5216 = vmatprep.subr.mxu0 0.0
      %5217 = vmatpush1.msra.mxu0 %v4763
      %5218 = vmatprep.subr.mxu0 0.0
      %5219 = vmatpush1.msra.mxu0 %v4764
      %5220 = vmatprep.subr.mxu0 0.0
      %5221 = vmatpush1.msra.mxu0 %v4765
      %5222 = vmatprep.subr.mxu0 0.0
      %5223 = vmatpush1.msra.mxu0 %v4766
      %5224 = vmatprep.subr.mxu0 0.0
      %5225 = vmatpush1.msra.mxu0 %v4767
      %5226 = vmatprep.subr.mxu0 0.0
      %5227 = vmatpush1.msra.mxu0 %v4768
      %5228 = vmatprep.subr.mxu0 0.0
      %5229 = vmatpush1.msra.mxu0 %v4769
      %5230 = vmatprep.subr.mxu0 0.0
      %5231 = vmatpush1.msra.mxu0 %v4770
      %5232 = vmatprep.subr.mxu0 0.0
      %5233 = vmatpush1.msra.mxu0 %v4771
      %5234 = vmatprep.subr.mxu0 0.0
      %5235 = vmatpush1.msra.mxu0 %v4772
      %5236 = vmatprep.subr.mxu0 0.0
      %5237 = vmatpush1.msra.mxu0 %v4773
      %5238 = vmatprep.subr.mxu0 0.0
      %5239 = vmatpush1.msra.mxu0 %v4774
      %5240 = vmatprep.subr.mxu0 0.0
      %5241 = vmatpush1.msra.mxu0 %v4775
      %5242 = vmatprep.subr.mxu0 0.0
      %5243 = vmatpush1.msra.mxu0 %v4776
      %5244 = vmatprep.subr.mxu0 0.0
      %5245 = vmatpush1.msra.mxu0 %v4777
      %5246 = vmatprep.subr.mxu0 0.0
      %5247 = vmatpush1.msra.mxu0 %v4778
      %5248 = vmatprep.subr.mxu0 0.0
      %5249 = vmatpush1.msra.mxu0 %v4779
      %5250 = vmatprep.subr.mxu0 0.0
      %5251 = vmatpush1.msra.mxu0 %v4780
      %5252 = vmatprep.subr.mxu0 0.0
      %5253 = vmatpush1.msra.mxu0 %v4781
      %5254 = vmatprep.subr.mxu0 0.0
      %5255 = vmatpush1.msra.mxu0 %v4782
      %5256 = vmatprep.subr.mxu0 0.0
      %5257 = vmatpush1.msra.mxu0 %v4783
      %5258 = vmatprep.subr.mxu0 0.0
      %5259 = vmatpush1.msra.mxu0 %v4784
      %5260 = vmatprep.subr.mxu0 0.0
      %5261 = vmatpush1.msra.mxu0 %v4785
      %5262 = vmatprep.subr.mxu0 0.0
      %5263 = vmatpush1.msra.mxu0 %v4786
      %5264 = vmatprep.subr.mxu0 0.0
      %5265 = vmatpush1.msra.mxu0 %v4787
      %5266 = vmatprep.mubr.f32.mxu0 %v4591
      %5267 = vmatmul.mubr.f32.gmra.mrb[0].mxu0 %v4590
      %v5268 = vpop.f32.mrb[0].mxu0
      %v5269 = vadd.f32 %v5199, %v5268
      %v5270 = vpop.f32.mrb[0].mxu0
      %5271 = vdwg.mxu0
      %5272 = vmatprep.subr.mxu0 0.0
      %5273 = vmatpush1.msra.mxu0 %v4788
      %5274 = vmatprep.subr.mxu0 0.0
      %5275 = vmatpush1.msra.mxu0 %v4789
      %5276 = vmatprep.subr.mxu0 0.0
      %5277 = vmatpush1.msra.mxu0 %v4790
      %5278 = vmatprep.subr.mxu0 0.0
      %5279 = vmatpush1.msra.mxu0 %v4791
      %5280 = vmatprep.subr.mxu0 0.0
      %5281 = vmatpush1.msra.mxu0 %v4792
      %5282 = vmatprep.subr.mxu0 0.0
      %5283 = vmatpush1.msra.mxu0 %v4793
      %5284 = vmatprep.subr.mxu0 0.0
      %5285 = vmatpush1.msra.mxu0 %v4794
      %5286 = vmatprep.subr.mxu0 0.0
      %5287 = vmatpush1.msra.mxu0 %v4795
      %5288 = vmatprep.subr.mxu0 0.0
      %5289 = vmatpush1.msra.mxu0 %v4796
      %5290 = vmatprep.subr.mxu0 0.0
      %5291 = vmatpush1.msra.mxu0 %v4797
      %5292 = vmatprep.subr.mxu0 0.0
      %5293 = vmatpush1.msra.mxu0 %v4798
      %5294 = vmatprep.subr.mxu0 0.0
      %5295 = vmatpush1.msra.mxu0 %v4799
      %5296 = vmatprep.subr.mxu0 0.0
      %5297 = vmatpush1.msra.mxu0 %v4800
      %5298 = vmatprep.subr.mxu0 0.0
      %5299 = vmatpush1.msra.mxu0 %v4801
      %5300 = vmatprep.subr.mxu0 0.0
      %5301 = vmatpush1.msra.mxu0 %v4802
      %5302 = vmatprep.subr.mxu0 0.0
      %5303 = vmatpush1.msra.mxu0 %v4803
      %5304 = vmatprep.subr.mxu0 0.0
      %5305 = vmatpush1.msra.mxu0 %v4804
      %5306 = vmatprep.subr.mxu0 0.0
      %5307 = vmatpush1.msra.mxu0 %v4805
      %5308 = vmatprep.subr.mxu0 0.0
      %5309 = vmatpush1.msra.mxu0 %v4806
      %5310 = vmatprep.subr.mxu0 0.0
      %5311 = vmatpush1.msra.mxu0 %v4807
      %5312 = vmatprep.subr.mxu0 0.0
      %5313 = vmatpush1.msra.mxu0 %v4808
      %5314 = vmatprep.subr.mxu0 0.0
      %5315 = vmatpush1.msra.mxu0 %v4809
      %5316 = vmatprep.subr.mxu0 0.0
      %5317 = vmatpush1.msra.mxu0 %v4810
      %5318 = vmatprep.subr.mxu0 0.0
      %5319 = vmatpush1.msra.mxu0 %v4811
      %5320 = vmatprep.subr.mxu0 0.0
      %5321 = vmatpush1.msra.mxu0 %v4812
      %5322 = vmatprep.subr.mxu0 0.0
      %5323 = vmatpush1.msra.mxu0 %v4813
      %5324 = vmatprep.subr.mxu0 0.0
      %5325 = vmatpush1.msra.mxu0 %v4814
      %5326 = vmatprep.subr.mxu0 0.0
      %5327 = vmatpush1.msra.mxu0 %v4815
      %5328 = vmatprep.subr.mxu0 0.0
      %5329 = vmatpush1.msra.mxu0 %v4816
      %5330 = vmatprep.subr.mxu0 0.0
      %5331 = vmatpush1.msra.mxu0 %v4817
      %5332 = vmatprep.subr.mxu0 0.0
      %5333 = vmatpush1.msra.mxu0 %v4818
      %5334 = vmatprep.subr.mxu0 0.0
      %5335 = vmatpush1.msra.mxu0 %v4819
      %5336 = vmatprep.mubr.f32.mxu0 %v4593
      %5337 = vmatmul.mubr.f32.gmra.mrb[0].mxu0 %v4592
      %v5338 = vpop.f32.mrb[0].mxu0
      %v5339 = vadd.f32 %v5269, %v5338
      %v5340 = vpop.f32.mrb[0].mxu0
      %5341 = vdwg.mxu0
      %5342 = vmatprep.subr.mxu0 0.0
      %5343 = vmatpush1.msra.mxu0 %v4820
      %5344 = vmatprep.subr.mxu0 0.0
      %5345 = vmatpush1.msra.mxu0 %v4821
      %5346 = vmatprep.subr.mxu0 0.0
      %5347 = vmatpush1.msra.mxu0 %v4822
      %5348 = vmatprep.subr.mxu0 0.0
      %5349 = vmatpush1.msra.mxu0 %v4823
      %5350 = vmatprep.subr.mxu0 0.0
      %5351 = vmatpush1.msra.mxu0 %v4824
      %5352 = vmatprep.subr.mxu0 0.0
      %5353 = vmatpush1.msra.mxu0 %v4825
      %5354 = vmatprep.subr.mxu0 0.0
      %5355 = vmatpush1.msra.mxu0 %v4826
      %5356 = vmatprep.subr.mxu0 0.0
      %5357 = vmatpush1.msra.mxu0 %v4827
      %5358 = vmatprep.subr.mxu0 0.0
      %5359 = vmatpush1.msra.mxu0 %v4828
      %5360 = vmatprep.subr.mxu0 0.0
      %5361 = vmatpush1.msra.mxu0 %v4829
      %5362 = vmatprep.subr.mxu0 0.0
      %5363 = vmatpush1.msra.mxu0 %v4830
      %5364 = vmatprep.subr.mxu0 0.0
      %5365 = vmatpush1.msra.mxu0 %v4831
      %5366 = vmatprep.subr.mxu0 0.0
      %5367 = vmatpush1.msra.mxu0 %v4832
      %5368 = vmatprep.subr.mxu0 0.0
      %5369 = vmatpush1.msra.mxu0 %v4833
      %5370 = vmatprep.subr.mxu0 0.0
      %5371 = vmatpush1.msra.mxu0 %v4834
      %5372 = vmatprep.subr.mxu0 0.0
      %5373 = vmatpush1.msra.mxu0 %v4835
      %5374 = vmatprep.subr.mxu0 0.0
      %5375 = vmatpush1.msra.mxu0 %v4836
      %5376 = vmatprep.subr.mxu0 0.0
      %5377 = vmatpush1.msra.mxu0 %v4837
      %5378 = vmatprep.subr.mxu0 0.0
      %5379 = vmatpush1.msra.mxu0 %v4838
      %5380 = vmatprep.subr.mxu0 0.0
      %5381 = vmatpush1.msra.mxu0 %v4839
      %5382 = vmatprep.subr.mxu0 0.0
      %5383 = vmatpush1.msra.mxu0 %v4840
      %5384 = vmatprep.subr.mxu0 0.0
      %5385 = vmatpush1.msra.mxu0 %v4841
      %5386 = vmatprep.subr.mxu0 0.0
      %5387 = vmatpush1.msra.mxu0 %v4842
      %5388 = vmatprep.subr.mxu0 0.0
      %5389 = vmatpush1.msra.mxu0 %v4843
      %5390 = vmatprep.subr.mxu0 0.0
      %5391 = vmatpush1.msra.mxu0 %v4844
      %5392 = vmatprep.subr.mxu0 0.0
      %5393 = vmatpush1.msra.mxu0 %v4845
      %5394 = vmatprep.subr.mxu0 0.0
      %5395 = vmatpush1.msra.mxu0 %v4846
      %5396 = vmatprep.subr.mxu0 0.0
      %5397 = vmatpush1.msra.mxu0 %v4847
      %5398 = vmatprep.subr.mxu0 0.0
      %5399 = vmatpush1.msra.mxu0 %v4848
      %5400 = vmatprep.subr.mxu0 0.0
      %5401 = vmatpush1.msra.mxu0 %v4849
      %5402 = vmatprep.subr.mxu0 0.0
      %5403 = vmatpush1.msra.mxu0 %v4850
      %5404 = vmatprep.subr.mxu0 0.0
      %5405 = vmatpush1.msra.mxu0 %v4851
      %5406 = vmatprep.mubr.f32.mxu0 %v4595
      %5407 = vmatmul.mubr.f32.gmra.mrb[0].mxu0 %v4594
      %v5408 = vpop.f32.mrb[0].mxu0
      %v5409 = vadd.f32 %v5339, %v5408
      %v5410 = vpop.f32.mrb[0].mxu0
      %5411 = vdwg.mxu0
      %v5412 = vadd.f32 %v3481, %v5409
      %5413 = vrot.lane.b32.xlu0 %v2205, 96
      %v5414 = vpop.permute.xlu0 %5413
      %v5416 = vadd.f32 %v5412, %v5414
      %v5417 = vsel %vm3463, %v5416, 0.0
      %5418 = vadd.xlane.f32.xlu0 %v5417
      %v5419 = vpop.xlane.xlu0 %5418
      %v5420 = vmul.f32 %v5419, %v1778
      %v5421 = vsub.f32 %v5416, %v5420
      %v5422 = vmul.f32 %v5421, %v5421
      %v5423 = vsel %vm3463, %v5422, 0.0
      %5424 = vadd.xlane.f32.xlu0 %v5423
      %v5425 = vpop.xlane.xlu0 %5424
      %v5426 = vmul.f32 %v5425, %v1778
      %v5427 = vadd.f32 %v5426, 1e-05
      %v5428 = vrsqrt.pop %v5427
      %v5429 = vmul.f32 %v5421, %v5428
      %5430 = vrot.lane.b32.xlu0 %v2206, 112
      %v5431 = vpop.permute.xlu0 %5430
      %v5433 = vmul.f32 %v5429, %v5431
      %5434 = vrot.lane.b32.xlu0 %v2206, 96
      %v5435 = vpop.permute.xlu0 %5434
      %v5437 = vadd.f32 %v5433, %v5435
      %5438 = vst.msk [vmem:[%s594] sm:$0xff] %vm735, %v3674
      %5439 = vst.msk [vmem:[%s599] sm:$0xff] %vm1098, %v2333
      %5440 = vst.msk [vmem:[%s599 + $0x8] sm:$0xff] %vm1098, %v2334
      %5441 = vst.msk [vmem:[%s599 + $0x10] sm:$0xff] %vm1098, %v2335
      %5442 = vst.msk [vmem:[%s599 + $0x18] sm:$0xff] %vm1098, %v2336
      %5443 = vst.msk [vmem:[%s599 + $0x20] sm:$0xff] %vm1098, %v2337
      %5444 = vst.msk [vmem:[%s599 + $0x28] sm:$0xff] %vm1098, %v2338
      %5445 = vst.msk [vmem:[%s599 + $0x30] sm:$0xff] %vm1098, %v2339
      %5446 = vst.msk [vmem:[%s599 + $0x38] sm:$0xff] %vm1098, %v2340
      %5447 = vst.msk [vmem:[%s602] sm:$0x1] %vm3463, %v5437
      %p5448 = scmp.lt.s32.totalorder %s28, 1
      %s5449 = scalar_select %p5448, %s28, 1
      %s5450 = smul.addr %s5449, 8
      %s5451 = scalar_lea.vmem %s14, %s5450
      %p5452 = scmp.lt.s32.totalorder %s28, 1
      %s5453 = scalar_select %p5452, %s28, 1
      %s5454 = smul.addr %s5453, 8
      %s5455 = smul.addr %s5454, 8
      %s5456 = scalar_lea.vmem %s15, %s5455
      %p5457 = scmp.lt.s32.totalorder %s28, 1
      %s5458 = scalar_select %p5457, %s28, 1
      %s5459 = scalar_lea.vmem %s16, %s5458
      // Predicated region
      $region77: #{_forward.5} parent=75 // pred_check
        %p5460 = pneg %p365
      $region78: #{_forward.5} parent=75 // pred_check_branch
        %5462 = sbr.rel (%p5460) target = $region80
      $region79: #{_forward.5} parent=75 // pred_region
        _
      $region80: #{_forward.5} parent=75 // pred_fallthru
        _
      // Predicated region
      $region81: #{_forward.5} parent=75 // pred_check
        %p5463 = pneg %p391
      $region82: #{_forward.5} parent=75 // pred_check_branch
        %5465 = sbr.rel (%p5463) target = $region84
      $region83: #{_forward.5} parent=75 // pred_region
        _
      $region84: #{_forward.5} parent=75 // pred_fallthru
        _
      // Predicated region
      $region85: #{_forward.5} parent=75 // pred_check
        %p5466 = pneg %p417
      $region86: #{_forward.5} parent=75 // pred_check_branch
        %5468 = sbr.rel (%p5466) target = $region88
      $region87: #{_forward.5} parent=75 // pred_region
        _
      $region88: #{_forward.5} parent=75 // pred_fallthru
        _
    $region76: #{_forward.5} parent=5 // pred_fallthru
      _
    %p5469 = scmp.le.s32.totalorder 2, %s23
    // Predicated region
    $region89: #{_forward.5} parent=5 // pred_check
      %p5470 = pneg %p5469
    $region90: #{_forward.5} parent=5 // pred_check_branch
      %5472 = sbr.rel (%p5470) target = $region92
    $region91: #{_forward.5} parent=5 // pred_region
      %s5473 = ssub.s32 %s23, 2
      // Predicated region
      $region93: #{_forward.5} parent=91 // pred_check
        %p5474 = pneg %p371
      $region94: #{_forward.5} parent=91 // pred_check_branch
        %5476 = sbr.rel (%p5474) target = $region96
      $region95: #{_forward.5} parent=91 // pred_region
        %p5477 = scmp.lt.s32.totalorder %s29, 1
        %s5478 = scalar_select %p5477, %s29, 1
        %s5479 = smul.addr %s5478, 8
        %s5480 = scalar_lea.vmem %s14, %s5479
      $region96: #{_forward.5} parent=91 // pred_fallthru
        _
      // Predicated region
      $region97: #{_forward.5} parent=91 // pred_check
        %p5481 = pneg %p397
      $region98: #{_forward.5} parent=91 // pred_check_branch
        %5483 = sbr.rel (%p5481) target = $region100
      $region99: #{_forward.5} parent=91 // pred_region
        %p5484 = scmp.lt.s32.totalorder %s29, 1
        %s5485 = scalar_select %p5484, %s29, 1
        %s5486 = smul.addr %s5485, 8
        %s5487 = smul.addr %s5486, 8
        %s5488 = scalar_lea.vmem %s15, %s5487
      $region100: #{_forward.5} parent=91 // pred_fallthru
        _
      // Predicated region
      $region101: #{_forward.5} parent=91 // pred_check
        %p5489 = pneg %p423
      $region102: #{_forward.5} parent=91 // pred_check_branch
        %5491 = sbr.rel (%p5489) target = $region104
      $region103: #{_forward.5} parent=91 // pred_region
        %p5492 = scmp.lt.s32.totalorder %s29, 1
        %s5493 = scalar_select %p5492, %s29, 1
        %s5494 = scalar_lea.vmem %s16, %s5493
      $region104: #{_forward.5} parent=91 // pred_fallthru
        _
    $region92: #{_forward.5} parent=5 // pred_fallthru
      _
  $region6: #{_forward.5} parent=0 // loop_footer
    %s27 = sadd.s32 1, %s23
  $region7: #{_forward.5} parent=0 // loop_footer_branch
    %22 = sbr.rel target = $region3
  $region8: #{_forward.5} parent=0 // loop_exit
    _

</llo_original>
